<compile_context>
chip_gen: v6e
topology: v6e:2x2x1
jax: 0.10.0
libtpu: 0.0.40
codegen_flags: <defaults>
</compile_context>

<pallas_src>
import functools

import jax
import jax.numpy as jnp
from jax import lax
from jax.experimental import pallas as pl
from jax.experimental.pallas import tpu as pltpu

C_PAD = 128      # lane-dense channel padding
SUB_TILE = 16    # bf16 sublane tile (rows) -> alignment unit for the flat slab


def _round_up(n, m):
    return (n + m - 1) // m * m


def _rcnn_modulator_kernel(z_ref, x_ref, wz_ref, bz_ref, wx_ref, bx_ref,
                           wo_ref, bo_ref, out_ref, *, wp, n_rows):
    """z_ref / x_ref : (n_flat, 128) bf16 flattened, zero-padded feature maps.
    wz_ref / wx_ref  : (9, 128, 128) bf16, tap t = dh*3+dw, each (Cin, Cout).
    wo_ref           : (128, 128) bf16 1x1 weight (Cin, Cout).
    bz/bx/bo         : (1, 128) f32 biases.
    out_ref          : (n_out, 128) f32 with n_out = H * wp (wp = aligned W+2)."""
    n_out = out_ref.shape[0]

    def conv3x3(ref, w_ref, b_ref):
        # wp is a multiple of 16, so the three dh slabs are tile-aligned views
        # (no shifted copies on the load path).
        slabs = [ref[dh * wp: dh * wp + n_rows, :] for dh in range(3)]
        acc = None
        for dw in range(3):
            r = jnp.dot(slabs[0], w_ref[dw],
                        preferred_element_type=jnp.float32)
            r = r + jnp.dot(slabs[1], w_ref[3 + dw],
                            preferred_element_type=jnp.float32)
            r = r + jnp.dot(slabs[2], w_ref[6 + dw],
                            preferred_element_type=jnp.float32)
            if dw:
                # dw shift of the f32 partial sum: circular sublane rotate on
                # the XLU (off the vld/vst critical path).  Rows >= n_out see
                # wrapped data but are sliced away below.
                r = pltpu.roll(r, n_rows - dw, axis=0)
            acc = r if acc is None else acc + r
        return acc[:n_out] + b_ref[...]        # aligned view + bias broadcast

    z_feat = conv3x3(z_ref, wz_ref, bz_ref)    # proj_z(z)  (the "modulator")
    x_feat = conv3x3(x_ref, wx_ref, bx_ref)    # proj_x(x)
    mod = (x_feat * z_feat).astype(jnp.bfloat16)
    out_ref[...] = jnp.dot(mod, wo_ref[...],
                           preferred_element_type=jnp.float32) + bo_ref[...]


def prepare_params(params, c_pad=C_PAD):
    """PyTorch Conv2d params -> kernel layout.  Call ONCE at module init; the
    re-layout must not sit on the per-frame forward path."""
    wz, bz, wx, bx, wo, bo = params
    c = wz.shape[0]

    def taps3x3(w):                    # OIHW (C,C,3,3) -> (9, 128, 128) bf16
        w = jnp.transpose(w, (2, 3, 1, 0))                    # (3,3,Cin,Cout)
        w = jnp.pad(w, ((0, 0), (0, 0), (0, c_pad - c), (0, c_pad - c)))
        return w.reshape(9, c_pad, c_pad).astype(jnp.bfloat16)

    def bias(b):                       # (C,) -> (1, 128) f32
        return jnp.pad(b, (0, c_pad - c)).reshape(1, c_pad).astype(jnp.float32)

    wo_k = jnp.transpose(wo[:, :, 0, 0], (1, 0))              # (Cin, Cout)
    wo_k = jnp.pad(wo_k, ((0, c_pad - c), (0, c_pad - c))).astype(jnp.bfloat16)
    return (taps3x3(wz), bias(bz), taps3x3(wx), bias(bx), wo_k, bias(bo))


@jax.jit
def rcnn_modulator(z, x, kernel_params):
    """z, x: (1, C, H, W) f32 NCHW (batch must be 1).  kernel_params comes from
    prepare_params() (pre-laid-out, bf16).  Returns (1, C, H, W) f32."""
    assert z.shape[0] == 1 and x.shape[0] == 1 and z.shape == x.shape
    c, h, w = x.shape[1], x.shape[2], x.shape[3]
    wp = _round_up(w + 2, SUB_TILE)    # tile-aligned padded width
    n_out = h * wp                     # output rows computed in-kernel
    n_rows = n_out + SUB_TILE          # per-dh slab rows (covers the +dw halo)
    n_flat = (h + 3) * wp              # flat slab rows  (>= 2*wp + n_rows)

    def prep(a):
        # bf16 cast first (halves the transpose traffic), then a single fused
        # halo + channel pad and a free reshape to the flat kernel layout.
        hwc = jnp.transpose(a[0].astype(jnp.bfloat16), (1, 2, 0))   # (H,W,C)
        padded = jnp.pad(hwc, ((1, 2), (1, wp - 1 - w), (0, C_PAD - c)))
        return padded.reshape(n_flat, C_PAD)
        # TODO(synk): at tracker level keep features in this slab layout
        # between modules so the NCHW<->slab re-layout is paid once per frame.

    z_flat, x_flat = prep(z), prep(x)

    flops = 2 * C_PAD * C_PAD * (18 * n_rows + n_out)
    bytes_accessed = (2 * n_flat * C_PAD * 2      # z, x slabs (bf16)
                      + 19 * C_PAD * C_PAD * 2    # conv + 1x1 weights (bf16)
                      + 3 * C_PAD * 4             # biases (f32)
                      + n_out * C_PAD * 4)        # output slab (f32)

    out_flat = pl.pallas_call(
        functools.partial(_rcnn_modulator_kernel, wp=wp, n_rows=n_rows),
        out_shape=jax.ShapeDtypeStruct((n_out, C_PAD), jnp.float32),
        in_specs=[pl.BlockSpec(memory_space=pltpu.MemorySpace.VMEM)] * 8,
        out_specs=pl.BlockSpec(memory_space=pltpu.MemorySpace.VMEM),
        compiler_params=pltpu.CompilerParams(
            vmem_limit_bytes=32 * 1024 * 1024),
        cost_estimate=pl.CostEstimate(flops=flops, transcendentals=0,
                                      bytes_accessed=bytes_accessed),
    )(z_flat, x_flat, *kernel_params)

    # (H*wp, 128) -> (H, wp, 128); slice the valid window BEFORE the
    # minor-dim transpose back to NCHW.  Columns j >= W of each row are
    # padded/garbage by construction and are discarded here.
    out_hwc = out_flat.reshape(h, wp, C_PAD)[:, :w, :c]
    return jnp.transpose(out_hwc, (2, 0, 1))[None]


def _ref_forward(z, x, params):
    """Plain-JAX f32 reference (lax conv, PyTorch OIHW weights)."""
    wz, bz, wx, bx, wo, bo = params
    dn = ('NCHW', 'OIHW', 'NCHW')
    zf = lax.conv_general_dilated(z, wz, (1, 1), 'SAME',
                                  dimension_numbers=dn) + bz[None, :, None, None]
    xf = lax.conv_general_dilated(x, wx, (1, 1), 'SAME',
                                  dimension_numbers=dn) + bx[None, :, None, None]
    out = lax.conv_general_dilated(xf * zf, wo, (1, 1), 'SAME',
                                   dimension_numbers=dn) + bo[None, :, None, None]
    return out


def make_params(key, channels):
    """Deterministic synthetic weights in PyTorch Conv2d layout (std=0.01)."""
    k = jax.random.split(key, 6)
    wz = 0.01 * jax.random.normal(k[0], (channels, channels, 3, 3), jnp.float32)
    bz = 0.01 * jax.random.normal(k[1], (channels,), jnp.float32)
    wx = 0.01 * jax.random.normal(k[2], (channels, channels, 3, 3), jnp.float32)
    bx = 0.01 * jax.random.normal(k[3], (channels,), jnp.float32)
    wo = 0.01 * jax.random.normal(k[4], (channels, channels, 1, 1), jnp.float32)
    bo = 0.01 * jax.random.normal(k[5], (channels,), jnp.float32)
    return (wz, bz, wx, bx, wo, bo)


if __name__ == "__main__":
    C, H, W = 32, 16, 16          # small synthetic shapes; batch must be 1
    key = jax.random.PRNGKey(0)
    kz, kx, kp = jax.random.split(key, 3)

    z = jax.random.normal(kz, (1, C, H, W), jnp.float32)   # template features
    x = jax.random.normal(kx, (1, C, H, W), jnp.float32)   # search features
    params = make_params(kp, C)

    # One-time, init-path weight re-layout (hoisted out of the forward).
    kparams = jax.block_until_ready(prepare_params(params))

    out = jax.block_until_ready(rcnn_modulator(z, x, kparams))
    ref = jax.block_until_ready(_ref_forward(z, x, params))

    assert out.shape == (1, C, H, W)
    err = float(jnp.max(jnp.abs(out - ref)))
    # bf16 matmuls with f32 accumulation: error stays well below 1e-3 here.
    assert err < 1e-3, f"max abs err {err}"
    print("KERNEL_OK")
</pallas_src>

<mosaic_0001>
module attributes {stable_mosaic.version = 11 : i64} {
  func.func @_rcnn_modulator_kernel(%arg0: memref<608x128xbf16, #tpu.memory_space<vmem>>, %arg1: memref<608x128xbf16, #tpu.memory_space<vmem>>, %arg2: memref<9x128x128xbf16, #tpu.memory_space<vmem>>, %arg3: memref<1x128xf32, #tpu.memory_space<vmem>>, %arg4: memref<9x128x128xbf16, #tpu.memory_space<vmem>>, %arg5: memref<1x128xf32, #tpu.memory_space<vmem>>, %arg6: memref<128x128xbf16, #tpu.memory_space<vmem>>, %arg7: memref<1x128xf32, #tpu.memory_space<vmem>>, %arg8: memref<512x128xf32, #tpu.memory_space<vmem>>) attributes {dimension_semantics = [], scalar_prefetch = 0 : i64, scratch_operands = 0 : i64, tpu.core_type = #tpu.core_type<tc>} {
    %c0 = arith.constant 0 : index
    %c0_0 = arith.constant 0 : index
    %0 = vector.load %arg0[%c0, %c0_0] : memref<608x128xbf16, #tpu.memory_space<vmem>>, vector<528x128xbf16>
    %c32 = arith.constant 32 : index
    %c0_1 = arith.constant 0 : index
    %1 = vector.load %arg0[%c32, %c0_1] : memref<608x128xbf16, #tpu.memory_space<vmem>>, vector<528x128xbf16>
    %c64 = arith.constant 64 : index
    %c0_2 = arith.constant 0 : index
    %2 = vector.load %arg0[%c64, %c0_2] : memref<608x128xbf16, #tpu.memory_space<vmem>>, vector<528x128xbf16>
    %c0_3 = arith.constant 0 : index
    %c0_4 = arith.constant 0 : index
    %c0_5 = arith.constant 0 : index
    %3 = vector.load %arg2[%c0_3, %c0_4, %c0_5] : memref<9x128x128xbf16, #tpu.memory_space<vmem>>, vector<1x128x128xbf16>
    %4 = vector.shape_cast %3 : vector<1x128x128xbf16> to vector<128x128xbf16>
    %cst = arith.constant dense<0.000000e+00> : vector<528x128xf32>
    %5 = tpu.matmul %0, %4, %cst {dimension_numbers = #tpu.dot_dimension_numbers<[1], [0], [0], [1], [0, 0, 1, 1], [], []>} : vector<528x128xbf16>, vector<128x128xbf16>, vector<528x128xf32> -> vector<528x128xf32>
    %c3 = arith.constant 3 : index
    %c0_6 = arith.constant 0 : index
    %c0_7 = arith.constant 0 : index
    %6 = vector.load %arg2[%c3, %c0_6, %c0_7] : memref<9x128x128xbf16, #tpu.memory_space<vmem>>, vector<1x128x128xbf16>
    %7 = vector.shape_cast %6 : vector<1x128x128xbf16> to vector<128x128xbf16>
    %cst_8 = arith.constant dense<0.000000e+00> : vector<528x128xf32>
    %8 = tpu.matmul %1, %7, %cst_8 {dimension_numbers = #tpu.dot_dimension_numbers<[1], [0], [0], [1], [0, 0, 1, 1], [], []>} : vector<528x128xbf16>, vector<128x128xbf16>, vector<528x128xf32> -> vector<528x128xf32>
    %9 = arith.addf %5, %8 : vector<528x128xf32>
    %c6 = arith.constant 6 : index
    %c0_9 = arith.constant 0 : index
    %c0_10 = arith.constant 0 : index
    %10 = vector.load %arg2[%c6, %c0_9, %c0_10] : memref<9x128x128xbf16, #tpu.memory_space<vmem>>, vector<1x128x128xbf16>
    %11 = vector.shape_cast %10 : vector<1x128x128xbf16> to vector<128x128xbf16>
    %cst_11 = arith.constant dense<0.000000e+00> : vector<528x128xf32>
    %12 = tpu.matmul %2, %11, %cst_11 {dimension_numbers = #tpu.dot_dimension_numbers<[1], [0], [0], [1], [0, 0, 1, 1], [], []>} : vector<528x128xbf16>, vector<128x128xbf16>, vector<528x128xf32> -> vector<528x128xf32>
    %13 = arith.addf %9, %12 : vector<528x128xf32>
    %c1 = arith.constant 1 : index
    %c0_12 = arith.constant 0 : index
    %c0_13 = arith.constant 0 : index
    %14 = vector.load %arg2[%c1, %c0_12, %c0_13] : memref<9x128x128xbf16, #tpu.memory_space<vmem>>, vector<1x128x128xbf16>
    %15 = vector.shape_cast %14 : vector<1x128x128xbf16> to vector<128x128xbf16>
    %cst_14 = arith.constant dense<0.000000e+00> : vector<528x128xf32>
    %16 = tpu.matmul %0, %15, %cst_14 {dimension_numbers = #tpu.dot_dimension_numbers<[1], [0], [0], [1], [0, 0, 1, 1], [], []>} : vector<528x128xbf16>, vector<128x128xbf16>, vector<528x128xf32> -> vector<528x128xf32>
    %c4 = arith.constant 4 : index
    %c0_15 = arith.constant 0 : index
    %c0_16 = arith.constant 0 : index
    %17 = vector.load %arg2[%c4, %c0_15, %c0_16] : memref<9x128x128xbf16, #tpu.memory_space<vmem>>, vector<1x128x128xbf16>
    %18 = vector.shape_cast %17 : vector<1x128x128xbf16> to vector<128x128xbf16>
    %cst_17 = arith.constant dense<0.000000e+00> : vector<528x128xf32>
    %19 = tpu.matmul %1, %18, %cst_17 {dimension_numbers = #tpu.dot_dimension_numbers<[1], [0], [0], [1], [0, 0, 1, 1], [], []>} : vector<528x128xbf16>, vector<128x128xbf16>, vector<528x128xf32> -> vector<528x128xf32>
    %20 = arith.addf %16, %19 : vector<528x128xf32>
    %c7 = arith.constant 7 : index
    %c0_18 = arith.constant 0 : index
    %c0_19 = arith.constant 0 : index
    %21 = vector.load %arg2[%c7, %c0_18, %c0_19] : memref<9x128x128xbf16, #tpu.memory_space<vmem>>, vector<1x128x128xbf16>
    %22 = vector.shape_cast %21 : vector<1x128x128xbf16> to vector<128x128xbf16>
    %cst_20 = arith.constant dense<0.000000e+00> : vector<528x128xf32>
    %23 = tpu.matmul %2, %22, %cst_20 {dimension_numbers = #tpu.dot_dimension_numbers<[1], [0], [0], [1], [0, 0, 1, 1], [], []>} : vector<528x128xbf16>, vector<128x128xbf16>, vector<528x128xf32> -> vector<528x128xf32>
    %24 = arith.addf %20, %23 : vector<528x128xf32>
    %c527_i32 = arith.constant 527 : i32
    %25 = tpu.dynamic_rotate %24 by %c527_i32 dim 0 : vector<528x128xf32>, i32 -> vector<528x128xf32>
    %26 = arith.addf %13, %25 : vector<528x128xf32>
    %c2 = arith.constant 2 : index
    %c0_21 = arith.constant 0 : index
    %c0_22 = arith.constant 0 : index
    %27 = vector.load %arg2[%c2, %c0_21, %c0_22] : memref<9x128x128xbf16, #tpu.memory_space<vmem>>, vector<1x128x128xbf16>
    %28 = vector.shape_cast %27 : vector<1x128x128xbf16> to vector<128x128xbf16>
    %cst_23 = arith.constant dense<0.000000e+00> : vector<528x128xf32>
    %29 = tpu.matmul %0, %28, %cst_23 {dimension_numbers = #tpu.dot_dimension_numbers<[1], [0], [0], [1], [0, 0, 1, 1], [], []>} : vector<528x128xbf16>, vector<128x128xbf16>, vector<528x128xf32> -> vector<528x128xf32>
    %c5 = arith.constant 5 : index
    %c0_24 = arith.constant 0 : index
    %c0_25 = arith.constant 0 : index
    %30 = vector.load %arg2[%c5, %c0_24, %c0_25] : memref<9x128x128xbf16, #tpu.memory_space<vmem>>, vector<1x128x128xbf16>
    %31 = vector.shape_cast %30 : vector<1x128x128xbf16> to vector<128x128xbf16>
    %cst_26 = arith.constant dense<0.000000e+00> : vector<528x128xf32>
    %32 = tpu.matmul %1, %31, %cst_26 {dimension_numbers = #tpu.dot_dimension_numbers<[1], [0], [0], [1], [0, 0, 1, 1], [], []>} : vector<528x128xbf16>, vector<128x128xbf16>, vector<528x128xf32> -> vector<528x128xf32>
    %33 = arith.addf %29, %32 : vector<528x128xf32>
    %c8 = arith.constant 8 : index
    %c0_27 = arith.constant 0 : index
    %c0_28 = arith.constant 0 : index
    %34 = vector.load %arg2[%c8, %c0_27, %c0_28] : memref<9x128x128xbf16, #tpu.memory_space<vmem>>, vector<1x128x128xbf16>
    %35 = vector.shape_cast %34 : vector<1x128x128xbf16> to vector<128x128xbf16>
    %cst_29 = arith.constant dense<0.000000e+00> : vector<528x128xf32>
    %36 = tpu.matmul %2, %35, %cst_29 {dimension_numbers = #tpu.dot_dimension_numbers<[1], [0], [0], [1], [0, 0, 1, 1], [], []>} : vector<528x128xbf16>, vector<128x128xbf16>, vector<528x128xf32> -> vector<528x128xf32>
    %37 = arith.addf %33, %36 : vector<528x128xf32>
    %c526_i32 = arith.constant 526 : i32
    %38 = tpu.dynamic_rotate %37 by %c526_i32 dim 0 : vector<528x128xf32>, i32 -> vector<528x128xf32>
    %39 = arith.addf %26, %38 : vector<528x128xf32>
    %40 = vector.extract_strided_slice %39 {offsets = [0, 0], sizes = [512, 128], strides = [1, 1]} : vector<528x128xf32> to vector<512x128xf32>
    %c0_30 = arith.constant 0 : index
    %c0_31 = arith.constant 0 : index
    %41 = vector.load %arg3[%c0_30, %c0_31] : memref<1x128xf32, #tpu.memory_space<vmem>>, vector<1x128xf32>
    %42 = vector.broadcast %41 : vector<1x128xf32> to vector<512x128xf32>
    %43 = arith.addf %40, %42 : vector<512x128xf32>
    %c0_32 = arith.constant 0 : index
    %c0_33 = arith.constant 0 : index
    %44 = vector.load %arg1[%c0_32, %c0_33] : memref<608x128xbf16, #tpu.memory_space<vmem>>, vector<528x128xbf16>
    %c32_34 = arith.constant 32 : index
    %c0_35 = arith.constant 0 : index
    %45 = vector.load %arg1[%c32_34, %c0_35] : memref<608x128xbf16, #tpu.memory_space<vmem>>, vector<528x128xbf16>
    %c64_36 = arith.constant 64 : index
    %c0_37 = arith.constant 0 : index
    %46 = vector.load %arg1[%c64_36, %c0_37] : memref<608x128xbf16, #tpu.memory_space<vmem>>, vector<528x128xbf16>
    %c0_38 = arith.constant 0 : index
    %c0_39 = arith.constant 0 : index
    %c0_40 = arith.constant 0 : index
    %47 = vector.load %arg4[%c0_38, %c0_39, %c0_40] : memref<9x128x128xbf16, #tpu.memory_space<vmem>>, vector<1x128x128xbf16>
    %48 = vector.shape_cast %47 : vector<1x128x128xbf16> to vector<128x128xbf16>
    %cst_41 = arith.constant dense<0.000000e+00> : vector<528x128xf32>
    %49 = tpu.matmul %44, %48, %cst_41 {dimension_numbers = #tpu.dot_dimension_numbers<[1], [0], [0], [1], [0, 0, 1, 1], [], []>} : vector<528x128xbf16>, vector<128x128xbf16>, vector<528x128xf32> -> vector<528x128xf32>
    %c3_42 = arith.constant 3 : index
    %c0_43 = arith.constant 0 : index
    %c0_44 = arith.constant 0 : index
    %50 = vector.load %arg4[%c3_42, %c0_43, %c0_44] : memref<9x128x128xbf16, #tpu.memory_space<vmem>>, vector<1x128x128xbf16>
    %51 = vector.shape_cast %50 : vector<1x128x128xbf16> to vector<128x128xbf16>
    %cst_45 = arith.constant dense<0.000000e+00> : vector<528x128xf32>
    %52 = tpu.matmul %45, %51, %cst_45 {dimension_numbers = #tpu.dot_dimension_numbers<[1], [0], [0], [1], [0, 0, 1, 1], [], []>} : vector<528x128xbf16>, vector<128x128xbf16>, vector<528x128xf32> -> vector<528x128xf32>
    %53 = arith.addf %49, %52 : vector<528x128xf32>
    %c6_46 = arith.constant 6 : index
    %c0_47 = arith.constant 0 : index
    %c0_48 = arith.constant 0 : index
    %54 = vector.load %arg4[%c6_46, %c0_47, %c0_48] : memref<9x128x128xbf16, #tpu.memory_space<vmem>>, vector<1x128x128xbf16>
    %55 = vector.shape_cast %54 : vector<1x128x128xbf16> to vector<128x128xbf16>
    %cst_49 = arith.constant dense<0.000000e+00> : vector<528x128xf32>
    %56 = tpu.matmul %46, %55, %cst_49 {dimension_numbers = #tpu.dot_dimension_numbers<[1], [0], [0], [1], [0, 0, 1, 1], [], []>} : vector<528x128xbf16>, vector<128x128xbf16>, vector<528x128xf32> -> vector<528x128xf32>
    %57 = arith.addf %53, %56 : vector<528x128xf32>
    %c1_50 = arith.constant 1 : index
    %c0_51 = arith.constant 0 : index
    %c0_52 = arith.constant 0 : index
    %58 = vector.load %arg4[%c1_50, %c0_51, %c0_52] : memref<9x128x128xbf16, #tpu.memory_space<vmem>>, vector<1x128x128xbf16>
    %59 = vector.shape_cast %58 : vector<1x128x128xbf16> to vector<128x128xbf16>
    %cst_53 = arith.constant dense<0.000000e+00> : vector<528x128xf32>
    %60 = tpu.matmul %44, %59, %cst_53 {dimension_numbers = #tpu.dot_dimension_numbers<[1], [0], [0], [1], [0, 0, 1, 1], [], []>} : vector<528x128xbf16>, vector<128x128xbf16>, vector<528x128xf32> -> vector<528x128xf32>
    %c4_54 = arith.constant 4 : index
    %c0_55 = arith.constant 0 : index
    %c0_56 = arith.constant 0 : index
    %61 = vector.load %arg4[%c4_54, %c0_55, %c0_56] : memref<9x128x128xbf16, #tpu.memory_space<vmem>>, vector<1x128x128xbf16>
    %62 = vector.shape_cast %61 : vector<1x128x128xbf16> to vector<128x128xbf16>
    %cst_57 = arith.constant dense<0.000000e+00> : vector<528x128xf32>
    %63 = tpu.matmul %45, %62, %cst_57 {dimension_numbers = #tpu.dot_dimension_numbers<[1], [0], [0], [1], [0, 0, 1, 1], [], []>} : vector<528x128xbf16>, vector<128x128xbf16>, vector<528x128xf32> -> vector<528x128xf32>
    %64 = arith.addf %60, %63 : vector<528x128xf32>
    %c7_58 = arith.constant 7 : index
    %c0_59 = arith.constant 0 : index
    %c0_60 = arith.constant 0 : index
    %65 = vector.load %arg4[%c7_58, %c0_59, %c0_60] : memref<9x128x128xbf16, #tpu.memory_space<vmem>>, vector<1x128x128xbf16>
    %66 = vector.shape_cast %65 : vector<1x128x128xbf16> to vector<128x128xbf16>
    %cst_61 = arith.constant dense<0.000000e+00> : vector<528x128xf32>
    %67 = tpu.matmul %46, %66, %cst_61 {dimension_numbers = #tpu.dot_dimension_numbers<[1], [0], [0], [1], [0, 0, 1, 1], [], []>} : vector<528x128xbf16>, vector<128x128xbf16>, vector<528x128xf32> -> vector<528x128xf32>
    %68 = arith.addf %64, %67 : vector<528x128xf32>
    %c527_i32_62 = arith.constant 527 : i32
    %69 = tpu.dynamic_rotate %68 by %c527_i32_62 dim 0 : vector<528x128xf32>, i32 -> vector<528x128xf32>
    %70 = arith.addf %57, %69 : vector<528x128xf32>
    %c2_63 = arith.constant 2 : index
    %c0_64 = arith.constant 0 : index
    %c0_65 = arith.constant 0 : index
    %71 = vector.load %arg4[%c2_63, %c0_64, %c0_65] : memref<9x128x128xbf16, #tpu.memory_space<vmem>>, vector<1x128x128xbf16>
    %72 = vector.shape_cast %71 : vector<1x128x128xbf16> to vector<128x128xbf16>
    %cst_66 = arith.constant dense<0.000000e+00> : vector<528x128xf32>
    %73 = tpu.matmul %44, %72, %cst_66 {dimension_numbers = #tpu.dot_dimension_numbers<[1], [0], [0], [1], [0, 0, 1, 1], [], []>} : vector<528x128xbf16>, vector<128x128xbf16>, vector<528x128xf32> -> vector<528x128xf32>
    %c5_67 = arith.constant 5 : index
    %c0_68 = arith.constant 0 : index
    %c0_69 = arith.constant 0 : index
    %74 = vector.load %arg4[%c5_67, %c0_68, %c0_69] : memref<9x128x128xbf16, #tpu.memory_space<vmem>>, vector<1x128x128xbf16>
    %75 = vector.shape_cast %74 : vector<1x128x128xbf16> to vector<128x128xbf16>
    %cst_70 = arith.constant dense<0.000000e+00> : vector<528x128xf32>
    %76 = tpu.matmul %45, %75, %cst_70 {dimension_numbers = #tpu.dot_dimension_numbers<[1], [0], [0], [1], [0, 0, 1, 1], [], []>} : vector<528x128xbf16>, vector<128x128xbf16>, vector<528x128xf32> -> vector<528x128xf32>
    %77 = arith.addf %73, %76 : vector<528x128xf32>
    %c8_71 = arith.constant 8 : index
    %c0_72 = arith.constant 0 : index
    %c0_73 = arith.constant 0 : index
    %78 = vector.load %arg4[%c8_71, %c0_72, %c0_73] : memref<9x128x128xbf16, #tpu.memory_space<vmem>>, vector<1x128x128xbf16>
    %79 = vector.shape_cast %78 : vector<1x128x128xbf16> to vector<128x128xbf16>
    %cst_74 = arith.constant dense<0.000000e+00> : vector<528x128xf32>
    %80 = tpu.matmul %46, %79, %cst_74 {dimension_numbers = #tpu.dot_dimension_numbers<[1], [0], [0], [1], [0, 0, 1, 1], [], []>} : vector<528x128xbf16>, vector<128x128xbf16>, vector<528x128xf32> -> vector<528x128xf32>
    %81 = arith.addf %77, %80 : vector<528x128xf32>
    %c526_i32_75 = arith.constant 526 : i32
    %82 = tpu.dynamic_rotate %81 by %c526_i32_75 dim 0 : vector<528x128xf32>, i32 -> vector<528x128xf32>
    %83 = arith.addf %70, %82 : vector<528x128xf32>
    %84 = vector.extract_strided_slice %83 {offsets = [0, 0], sizes = [512, 128], strides = [1, 1]} : vector<528x128xf32> to vector<512x128xf32>
    %c0_76 = arith.constant 0 : index
    %c0_77 = arith.constant 0 : index
    %85 = vector.load %arg5[%c0_76, %c0_77] : memref<1x128xf32, #tpu.memory_space<vmem>>, vector<1x128xf32>
    %86 = vector.broadcast %85 : vector<1x128xf32> to vector<512x128xf32>
    %87 = arith.addf %84, %86 : vector<512x128xf32>
    %88 = arith.mulf %87, %43 : vector<512x128xf32>
    %89 = arith.truncf %88 : vector<512x128xf32> to vector<512x128xbf16>
    %c0_78 = arith.constant 0 : index
    %c0_79 = arith.constant 0 : index
    %90 = vector.load %arg6[%c0_78, %c0_79] : memref<128x128xbf16, #tpu.memory_space<vmem>>, vector<128x128xbf16>
    %cst_80 = arith.constant dense<0.000000e+00> : vector<512x128xf32>
    %91 = tpu.matmul %89, %90, %cst_80 {dimension_numbers = #tpu.dot_dimension_numbers<[1], [0], [0], [1], [0, 0, 1, 1], [], []>} : vector<512x128xbf16>, vector<128x128xbf16>, vector<512x128xf32> -> vector<512x128xf32>
    %c0_81 = arith.constant 0 : index
    %c0_82 = arith.constant 0 : index
    %92 = vector.load %arg7[%c0_81, %c0_82] : memref<1x128xf32, #tpu.memory_space<vmem>>, vector<1x128xf32>
    %93 = vector.broadcast %92 : vector<1x128xf32> to vector<512x128xf32>
    %94 = arith.addf %91, %93 : vector<512x128xf32>
    %c0_83 = arith.constant 0 : index
    %c0_84 = arith.constant 0 : index
    %95 = vector.load %arg8[%c0_83, %c0_84] : memref<512x128xf32, #tpu.memory_space<vmem>>, vector<512x128xf32>
    tpu.vector_store %arg8[%c0_83, %c0_84], %94 {strides = array<i32>} : memref<512x128xf32, #tpu.memory_space<vmem>>, vector<512x128xf32>,
    return
  }
}

</mosaic_0001>

<llo_original>
// kernel: rcnn_modulator.1
$region0: #{rcnn_modulator.1}
  #allocation0 [shape = 'u32[]', space=smem, size = 0x4, offset = 0x4, fixed_abs, tag = 'smem constant byte address 0x4 - core index']
  #allocation1 [shape = 'u32[144,128]{1,0:T(1,128)}', space=vmem, size = 0x12000, scoped, tag = 'internal scratch']
  %s0 = inlined_call_operand.vmem [shape: bf16[608,128], index: 0, kind: input, shape index: {}]
  %s1 = inlined_call_operand.vmem [shape: bf16[608,128], index: 1, kind: input, shape index: {}]
  %s2 = inlined_call_operand.vmem [shape: bf16[9,128,128], index: 2, kind: input, shape index: {}]
  %s3 = inlined_call_operand.vmem [shape: f32[1,128], index: 3, kind: input, shape index: {}]
  %s4 = inlined_call_operand.vmem [shape: bf16[9,128,128], index: 4, kind: input, shape index: {}]
  %s5 = inlined_call_operand.vmem [shape: f32[1,128], index: 5, kind: input, shape index: {}]
  %s6 = inlined_call_operand.vmem [shape: bf16[128,128], index: 6, kind: input, shape index: {}]
  %s7 = inlined_call_operand.vmem [shape: f32[1,128], index: 7, kind: input, shape index: {}]
  %s8 = inlined_call_operand.vmem [shape: f32[512,128], index: 8, kind: output, shape index: {}]
  %s9 = sld [smem:[#allocation0]]
  $region42: #{rcnn_modulator.1} parent=0
    _
  %s11 = ssub.s32 1, %s9
  %s12 = scalar_select 0, %s11, %s9
  // Predicated region
  $region2: #{rcnn_modulator.1} parent=0 // pred_check
    _
  $region3: #{rcnn_modulator.1} parent=0 // pred_check_branch
    %14 = sbr.rel (0) target = $region5
  $region4: #{rcnn_modulator.1} parent=0 // pred_region
    _
  $region5: #{rcnn_modulator.1} parent=0 // pred_fallthru
    _
  // Predicated region
  $region6: #{rcnn_modulator.1} parent=0 // pred_check
    _
  $region7: #{rcnn_modulator.1} parent=0 // pred_check_branch
    %16 = sbr.rel (0) target = $region9
  $region8: #{rcnn_modulator.1} parent=0 // pred_region
    _
  $region9: #{rcnn_modulator.1} parent=0 // pred_fallthru
    _
  // Predicated region
  $region10: #{rcnn_modulator.1} parent=0 // pred_check
    _
  $region11: #{rcnn_modulator.1} parent=0 // pred_check_branch
    %18 = sbr.rel (0) target = $region13
  $region12: #{rcnn_modulator.1} parent=0 // pred_region
    _
  $region13: #{rcnn_modulator.1} parent=0 // pred_fallthru
    _
  // Predicated region
  $region14: #{rcnn_modulator.1} parent=0 // pred_check
    _
  $region15: #{rcnn_modulator.1} parent=0 // pred_check_branch
    %20 = sbr.rel (0) target = $region17
  $region16: #{rcnn_modulator.1} parent=0 // pred_region
    _
  $region17: #{rcnn_modulator.1} parent=0 // pred_fallthru
    _
  // Predicated region
  $region18: #{rcnn_modulator.1} parent=0 // pred_check
    _
  $region19: #{rcnn_modulator.1} parent=0 // pred_check_branch
    %22 = sbr.rel (0) target = $region21
  $region20: #{rcnn_modulator.1} parent=0 // pred_region
    _
  $region21: #{rcnn_modulator.1} parent=0 // pred_fallthru
    _
  // Predicated region
  $region22: #{rcnn_modulator.1} parent=0 // pred_check
    _
  $region23: #{rcnn_modulator.1} parent=0 // pred_check_branch
    %24 = sbr.rel (0) target = $region25
  $region24: #{rcnn_modulator.1} parent=0 // pred_region
    _
  $region25: #{rcnn_modulator.1} parent=0 // pred_fallthru
    _
  // Predicated region
  $region26: #{rcnn_modulator.1} parent=0 // pred_check
    _
  $region27: #{rcnn_modulator.1} parent=0 // pred_check_branch
    %26 = sbr.rel (0) target = $region29
  $region28: #{rcnn_modulator.1} parent=0 // pred_region
    _
  $region29: #{rcnn_modulator.1} parent=0 // pred_fallthru
    _
  // Predicated region
  $region30: #{rcnn_modulator.1} parent=0 // pred_check
    _
  $region31: #{rcnn_modulator.1} parent=0 // pred_check_branch
    %28 = sbr.rel (0) target = $region33
  $region32: #{rcnn_modulator.1} parent=0 // pred_region
    _
  $region33: #{rcnn_modulator.1} parent=0 // pred_fallthru
    _
  %v30 = vld [vmem:[%s0] sm:$0xf]
  %v31 = vld [vmem:[%s0 + $0x4] sm:$0xf]
  %v32 = vld [vmem:[%s0 + $0x8] sm:$0xf]
  %v33 = vld [vmem:[%s0 + $0xc] sm:$0xf]
  %v34 = vld [vmem:[%s0 + $0x10] sm:$0xf]
  %v35 = vld [vmem:[%s0 + $0x14] sm:$0xf]
  %v36 = vld [vmem:[%s0 + $0x18] sm:$0xf]
  %v37 = vld [vmem:[%s0 + $0x1c] sm:$0xf]
  %v38 = vld [vmem:[%s0 + $0x20] sm:$0xf]
  %v39 = vld [vmem:[%s0 + $0x24] sm:$0xf]
  %v40 = vld [vmem:[%s0 + $0x28] sm:$0xf]
  %v41 = vld [vmem:[%s0 + $0x2c] sm:$0xf]
  %v42 = vld [vmem:[%s0 + $0x30] sm:$0xf]
  %v43 = vld [vmem:[%s0 + $0x34] sm:$0xf]
  %v44 = vld [vmem:[%s0 + $0x38] sm:$0xf]
  %v45 = vld [vmem:[%s0 + $0x3c] sm:$0xf]
  %v46 = vld [vmem:[%s0 + $0x40] sm:$0xf]
  %v47 = vld [vmem:[%s0 + $0x44] sm:$0xf]
  %v48 = vld [vmem:[%s0 + $0x48] sm:$0xf]
  %v49 = vld [vmem:[%s0 + $0x4c] sm:$0xf]
  %v50 = vld [vmem:[%s0 + $0x50] sm:$0xf]
  %v51 = vld [vmem:[%s0 + $0x54] sm:$0xf]
  %v52 = vld [vmem:[%s0 + $0x58] sm:$0xf]
  %v53 = vld [vmem:[%s0 + $0x5c] sm:$0xf]
  %v54 = vld [vmem:[%s0 + $0x60] sm:$0xf]
  %v55 = vld [vmem:[%s0 + $0x64] sm:$0xf]
  %v56 = vld [vmem:[%s0 + $0x68] sm:$0xf]
  %v57 = vld [vmem:[%s0 + $0x6c] sm:$0xf]
  %v58 = vld [vmem:[%s0 + $0x70] sm:$0xf]
  %v59 = vld [vmem:[%s0 + $0x74] sm:$0xf]
  %v60 = vld [vmem:[%s0 + $0x78] sm:$0xf]
  %v61 = vld [vmem:[%s0 + $0x7c] sm:$0xf]
  %v62 = vld [vmem:[%s0 + $0x80] sm:$0xf]
  %v63 = vld [vmem:[%s0 + $0x84] sm:$0xf]
  %v64 = vld [vmem:[%s0 + $0x88] sm:$0xf]
  %v65 = vld [vmem:[%s0 + $0x8c] sm:$0xf]
  %v66 = vld [vmem:[%s0 + $0x90] sm:$0xf]
  %v67 = vld [vmem:[%s0 + $0x94] sm:$0xf]
  %v68 = vld [vmem:[%s0 + $0x98] sm:$0xf]
  %v69 = vld [vmem:[%s0 + $0x9c] sm:$0xf]
  %v70 = vld [vmem:[%s0 + $0xa0] sm:$0xf]
  %v71 = vld [vmem:[%s0 + $0xa4] sm:$0xf]
  %v72 = vld [vmem:[%s0 + $0xa8] sm:$0xf]
  %v73 = vld [vmem:[%s0 + $0xac] sm:$0xf]
  %v74 = vld [vmem:[%s0 + $0xb0] sm:$0xf]
  %v75 = vld [vmem:[%s0 + $0xb4] sm:$0xf]
  %v76 = vld [vmem:[%s0 + $0xb8] sm:$0xf]
  %v77 = vld [vmem:[%s0 + $0xbc] sm:$0xf]
  %v78 = vld [vmem:[%s0 + $0xc0] sm:$0xf]
  %v79 = vld [vmem:[%s0 + $0xc4] sm:$0xf]
  %v80 = vld [vmem:[%s0 + $0xc8] sm:$0xf]
  %v81 = vld [vmem:[%s0 + $0xcc] sm:$0xf]
  %v82 = vld [vmem:[%s0 + $0xd0] sm:$0xf]
  %v83 = vld [vmem:[%s0 + $0xd4] sm:$0xf]
  %v84 = vld [vmem:[%s0 + $0xd8] sm:$0xf]
  %v85 = vld [vmem:[%s0 + $0xdc] sm:$0xf]
  %v86 = vld [vmem:[%s0 + $0xe0] sm:$0xf]
  %v87 = vld [vmem:[%s0 + $0xe4] sm:$0xf]
  %v88 = vld [vmem:[%s0 + $0xe8] sm:$0xf]
  %v89 = vld [vmem:[%s0 + $0xec] sm:$0xf]
  %v90 = vld [vmem:[%s0 + $0xf0] sm:$0xf]
  %v91 = vld [vmem:[%s0 + $0xf4] sm:$0xf]
  %v92 = vld [vmem:[%s0 + $0xf8] sm:$0xf]
  %v93 = vld [vmem:[%s0 + $0xfc] sm:$0xf]
  %v94 = vld [vmem:[%s0 + $0x100] sm:$0xf]
  %v95 = vld [vmem:[%s0 + $0x104] sm:$0xf]
  %v96 = vld [vmem:[%s0 + $0x108] sm:$0xf]
  %v97 = vld [vmem:[%s0 + $0x10c] sm:$0xf]
  %v98 = vld [vmem:[%s0 + $0x110] sm:$0xf]
  %v99 = vld [vmem:[%s0 + $0x114] sm:$0xf]
  %v100 = vld [vmem:[%s0 + $0x118] sm:$0xf]
  %v101 = vld [vmem:[%s0 + $0x11c] sm:$0xf]
  %v102 = vld [vmem:[%s0 + $0x120] sm:$0xf]
  %v103 = vld [vmem:[%s0 + $0x124] sm:$0xf]
  %v104 = vld [vmem:[%s2] sm:$0xf]
  %v105 = vld [vmem:[%s2 + $0x4] sm:$0xf]
  %v106 = vld [vmem:[%s2 + $0x8] sm:$0xf]
  %v107 = vld [vmem:[%s2 + $0xc] sm:$0xf]
  %v108 = vld [vmem:[%s2 + $0x10] sm:$0xf]
  %v109 = vld [vmem:[%s2 + $0x14] sm:$0xf]
  %v110 = vld [vmem:[%s2 + $0x18] sm:$0xf]
  %v111 = vld [vmem:[%s2 + $0x1c] sm:$0xf]
  %v112 = vld [vmem:[%s2 + $0x20] sm:$0xf]
  %v113 = vld [vmem:[%s2 + $0x24] sm:$0xf]
  %v114 = vld [vmem:[%s2 + $0x28] sm:$0xf]
  %v115 = vld [vmem:[%s2 + $0x2c] sm:$0xf]
  %v116 = vld [vmem:[%s2 + $0x30] sm:$0xf]
  %v117 = vld [vmem:[%s2 + $0x34] sm:$0xf]
  %v118 = vld [vmem:[%s2 + $0x38] sm:$0xf]
  %v119 = vld [vmem:[%s2 + $0x3c] sm:$0xf]
  %s120 = scalar_lea.vmem %s2, 192
  %v121 = vld [vmem:[%s120] sm:$0xf]
  %v122 = vld [vmem:[%s120 + $0x4] sm:$0xf]
  %v123 = vld [vmem:[%s120 + $0x8] sm:$0xf]
  %v124 = vld [vmem:[%s120 + $0xc] sm:$0xf]
  %v125 = vld [vmem:[%s120 + $0x10] sm:$0xf]
  %v126 = vld [vmem:[%s120 + $0x14] sm:$0xf]
  %v127 = vld [vmem:[%s120 + $0x18] sm:$0xf]
  %v128 = vld [vmem:[%s120 + $0x1c] sm:$0xf]
  %v129 = vld [vmem:[%s120 + $0x20] sm:$0xf]
  %v130 = vld [vmem:[%s120 + $0x24] sm:$0xf]
  %v131 = vld [vmem:[%s120 + $0x28] sm:$0xf]
  %v132 = vld [vmem:[%s120 + $0x2c] sm:$0xf]
  %v133 = vld [vmem:[%s120 + $0x30] sm:$0xf]
  %v134 = vld [vmem:[%s120 + $0x34] sm:$0xf]
  %v135 = vld [vmem:[%s120 + $0x38] sm:$0xf]
  %v136 = vld [vmem:[%s120 + $0x3c] sm:$0xf]
  %v203 = vunpack.c.l.b16 %v34
  %v204 = vunpack.c.l.b16 %v35
  %v205 = vunpack.c.l.b16 %v36
  %v206 = vunpack.c.l.b16 %v37
  %v207 = vunpack.c.l.b16 %v38
  %v208 = vunpack.c.l.b16 %v39
  %v209 = vunpack.c.l.b16 %v40
  %v210 = vunpack.c.l.b16 %v41
  %v211 = vunpack.c.l.b16 %v42
  %v212 = vunpack.c.l.b16 %v43
  %v213 = vunpack.c.l.b16 %v44
  %v214 = vunpack.c.l.b16 %v45
  %v215 = vunpack.c.l.b16 %v46
  %v216 = vunpack.c.l.b16 %v47
  %v217 = vunpack.c.l.b16 %v48
  %v218 = vunpack.c.l.b16 %v49
  %v219 = vunpack.c.l.b16 %v50
  %v220 = vunpack.c.l.b16 %v51
  %v221 = vunpack.c.l.b16 %v52
  %v222 = vunpack.c.l.b16 %v53
  %v223 = vunpack.c.l.b16 %v54
  %v224 = vunpack.c.l.b16 %v55
  %v225 = vunpack.c.l.b16 %v56
  %v226 = vunpack.c.l.b16 %v57
  %v227 = vunpack.c.l.b16 %v58
  %v228 = vunpack.c.l.b16 %v59
  %v229 = vunpack.c.l.b16 %v60
  %v230 = vunpack.c.l.b16 %v61
  %v231 = vunpack.c.l.b16 %v62
  %v232 = vunpack.c.l.b16 %v63
  %v233 = vunpack.c.l.b16 %v64
  %v234 = vunpack.c.l.b16 %v65
  %v235 = vunpack.c.l.b16 %v66
  %v236 = vunpack.c.l.b16 %v67
  %v237 = vunpack.c.l.b16 %v68
  %v238 = vunpack.c.l.b16 %v69
  %v239 = vunpack.c.l.b16 %v70
  %v240 = vunpack.c.l.b16 %v71
  %v241 = vunpack.c.l.b16 %v72
  %v242 = vunpack.c.l.b16 %v73
  %v243 = vunpack.c.l.b16 %v74
  %v244 = vunpack.c.l.b16 %v75
  %v245 = vunpack.c.l.b16 %v76
  %v246 = vunpack.c.l.b16 %v77
  %v247 = vunpack.c.l.b16 %v78
  %v248 = vunpack.c.l.b16 %v79
  %v249 = vunpack.c.l.b16 %v80
  %v250 = vunpack.c.l.b16 %v81
  %v251 = vunpack.c.l.b16 %v82
  %v252 = vunpack.c.l.b16 %v83
  %v253 = vunpack.c.l.b16 %v84
  %v254 = vunpack.c.l.b16 %v85
  %v255 = vunpack.c.l.b16 %v86
  %v256 = vunpack.c.l.b16 %v87
  %v257 = vunpack.c.l.b16 %v88
  %v258 = vunpack.c.l.b16 %v89
  %v259 = vunpack.c.l.b16 %v90
  %v260 = vunpack.c.l.b16 %v91
  %v261 = vunpack.c.l.b16 %v92
  %v262 = vunpack.c.l.b16 %v93
  %v263 = vunpack.c.l.b16 %v94
  %v264 = vunpack.c.l.b16 %v95
  %v265 = vunpack.c.l.b16 %v96
  %v266 = vunpack.c.l.b16 %v97
  %v267 = vunpack.c.l.b16 %v98
  %v268 = vunpack.c.l.b16 %v99
  %v269 = vpack.c.b16 %v204, %v203
  %v270 = vpack.c.b16 %v206, %v205
  %v271 = vpack.c.b16 %v208, %v207
  %v272 = vpack.c.b16 %v210, %v209
  %v273 = vpack.c.b16 %v212, %v211
  %v274 = vpack.c.b16 %v214, %v213
  %v275 = vpack.c.b16 %v216, %v215
  %v276 = vpack.c.b16 %v218, %v217
  %v277 = vpack.c.b16 %v220, %v219
  %v278 = vpack.c.b16 %v222, %v221
  %v279 = vpack.c.b16 %v224, %v223
  %v280 = vpack.c.b16 %v226, %v225
  %v281 = vpack.c.b16 %v228, %v227
  %v282 = vpack.c.b16 %v230, %v229
  %v283 = vpack.c.b16 %v232, %v231
  %v284 = vpack.c.b16 %v234, %v233
  %v285 = vpack.c.b16 %v236, %v235
  %v286 = vpack.c.b16 %v238, %v237
  %v287 = vpack.c.b16 %v240, %v239
  %v288 = vpack.c.b16 %v242, %v241
  %v289 = vpack.c.b16 %v244, %v243
  %v290 = vpack.c.b16 %v246, %v245
  %v291 = vpack.c.b16 %v248, %v247
  %v292 = vpack.c.b16 %v250, %v249
  %v293 = vpack.c.b16 %v252, %v251
  %v294 = vpack.c.b16 %v254, %v253
  %v295 = vpack.c.b16 %v256, %v255
  %v296 = vpack.c.b16 %v258, %v257
  %v297 = vpack.c.b16 %v260, %v259
  %v298 = vpack.c.b16 %v262, %v261
  %v299 = vpack.c.b16 %v264, %v263
  %v300 = vpack.c.b16 %v266, %v265
  %v301 = vpack.c.b16 %v268, %v267
  %v351 = vunpack.c.l.b16 %v121
  %v352 = vunpack.c.l.b16 %v122
  %v353 = vunpack.c.l.b16 %v123
  %v354 = vunpack.c.l.b16 %v124
  %v355 = vunpack.c.l.b16 %v125
  %v356 = vunpack.c.l.b16 %v126
  %v357 = vunpack.c.l.b16 %v127
  %v358 = vunpack.c.l.b16 %v128
  %v359 = vunpack.c.l.b16 %v129
  %v360 = vunpack.c.l.b16 %v130
  %v361 = vunpack.c.l.b16 %v131
  %v362 = vunpack.c.l.b16 %v132
  %v363 = vunpack.c.l.b16 %v133
  %v364 = vunpack.c.l.b16 %v134
  %v365 = vunpack.c.l.b16 %v135
  %v366 = vunpack.c.l.b16 %v136
  %v367 = vpack.c.b16 %v352, %v351
  %v368 = vpack.c.b16 %v354, %v353
  %v369 = vpack.c.b16 %v356, %v355
  %v370 = vpack.c.b16 %v358, %v357
  %v371 = vpack.c.b16 %v360, %v359
  %v372 = vpack.c.b16 %v362, %v361
  %v373 = vpack.c.b16 %v364, %v363
  %v374 = vpack.c.b16 %v366, %v365
  %383 = vmatprep.subr.bf16.mxu0 0
  %384 = vmatpush1.bf16.msra.mxu0 %v374
  %385 = vmatprep.subr.bf16.mxu0 0
  %386 = vmatpush1.bf16.msra.mxu0 %v373
  %387 = vmatprep.subr.bf16.mxu0 0
  %388 = vmatpush1.bf16.msra.mxu0 %v372
  %389 = vmatprep.subr.bf16.mxu0 0
  %390 = vmatpush1.bf16.msra.mxu0 %v371
  %391 = vmatprep.subr.bf16.mxu0 0
  %392 = vmatpush1.bf16.msra.mxu0 %v370
  %393 = vmatprep.subr.bf16.mxu0 0
  %394 = vmatpush1.bf16.msra.mxu0 %v369
  %395 = vmatprep.subr.bf16.mxu0 0
  %396 = vmatpush1.bf16.msra.mxu0 %v368
  %397 = vmatprep.subr.bf16.mxu0 0
  %398 = vmatpush1.bf16.msra.mxu0 %v367
  %399 = vmatprep.subr.bf16.mxu0 0
  %400 = vmatpush2.bf16.msra.mxu0 0
  %401 = vmatprep.subr.bf16.mxu0 0
  %402 = vmatpush2.bf16.msra.mxu0 0
  %403 = vmatprep.subr.bf16.mxu0 0
  %404 = vmatpush2.bf16.msra.mxu0 0
  %405 = vmatprep.subr.bf16.mxu0 0
  %406 = vmatpush2.bf16.msra.mxu0 0
  %407 = vmatprep.subr.bf16.mxu0 0
  %408 = vmatpush2.bf16.msra.mxu0 0
  %409 = vmatprep.subr.bf16.mxu0 0
  %410 = vmatpush2.bf16.msra.mxu0 0
  %411 = vmatprep.subr.bf16.mxu0 0
  %412 = vmatpush2.bf16.msra.mxu0 0
  %413 = vmatprep.subr.bf16.mxu0 0
  %414 = vmatpush2.bf16.msra.mxu0 0
  %415 = vmatprep.mubr.bf16.mxu0 0
  %416 = vmatmul.mubr.bf16.gmra.mxu0 %v269
  %v417 = vpop.f32.mrf.mxu0
  %v418 = vadd.f32 0.0, %v417
  %v419 = vpop.f32.mrf.mxu0
  %v420 = vpop.f32.mrf.mxu0
  %v421 = vadd.f32 0.0, %v420
  %v422 = vpop.f32.mrf.mxu0
  %423 = vmatprep.mubr.bf16.mxu0 0
  %424 = vmatmul.mubr.bf16.gmra.mxu0 %v270
  %v425 = vpop.f32.mrf.mxu0
  %v426 = vadd.f32 0.0, %v425
  %v427 = vpop.f32.mrf.mxu0
  %v428 = vpop.f32.mrf.mxu0
  %v429 = vadd.f32 0.0, %v428
  %v430 = vpop.f32.mrf.mxu0
  %431 = vmatprep.mubr.bf16.mxu0 0
  %432 = vmatmul.mubr.bf16.gmra.mxu0 %v271
  %v433 = vpop.f32.mrf.mxu0
  %v434 = vadd.f32 0.0, %v433
  %v435 = vpop.f32.mrf.mxu0
  %v436 = vpop.f32.mrf.mxu0
  %v437 = vadd.f32 0.0, %v436
  %v438 = vpop.f32.mrf.mxu0
  %439 = vmatprep.mubr.bf16.mxu0 0
  %440 = vmatmul.mubr.bf16.gmra.mxu0 %v272
  %v441 = vpop.f32.mrf.mxu0
  %v442 = vadd.f32 0.0, %v441
  %v443 = vpop.f32.mrf.mxu0
  %v444 = vpop.f32.mrf.mxu0
  %v445 = vadd.f32 0.0, %v444
  %v446 = vpop.f32.mrf.mxu0
  %447 = vmatprep.mubr.bf16.mxu0 0
  %448 = vmatmul.mubr.bf16.gmra.mxu0 %v273
  %v449 = vpop.f32.mrf.mxu0
  %v450 = vadd.f32 0.0, %v449
  %v451 = vpop.f32.mrf.mxu0
  %v452 = vpop.f32.mrf.mxu0
  %v453 = vadd.f32 0.0, %v452
  %v454 = vpop.f32.mrf.mxu0
  %455 = vmatprep.mubr.bf16.mxu0 0
  %456 = vmatmul.mubr.bf16.gmra.mxu0 %v274
  %v457 = vpop.f32.mrf.mxu0
  %v458 = vadd.f32 0.0, %v457
  %v459 = vpop.f32.mrf.mxu0
  %v460 = vpop.f32.mrf.mxu0
  %v461 = vadd.f32 0.0, %v460
  %v462 = vpop.f32.mrf.mxu0
  %463 = vmatprep.mubr.bf16.mxu0 0
  %464 = vmatmul.mubr.bf16.gmra.mxu0 %v275
  %v465 = vpop.f32.mrf.mxu0
  %v466 = vadd.f32 0.0, %v465
  %v467 = vpop.f32.mrf.mxu0
  %v468 = vpop.f32.mrf.mxu0
  %v469 = vadd.f32 0.0, %v468
  %v470 = vpop.f32.mrf.mxu0
  %471 = vmatprep.mubr.bf16.mxu0 0
  %472 = vmatmul.mubr.bf16.gmra.mxu0 %v276
  %v473 = vpop.f32.mrf.mxu0
  %v474 = vadd.f32 0.0, %v473
  %v475 = vpop.f32.mrf.mxu0
  %v476 = vpop.f32.mrf.mxu0
  %v477 = vadd.f32 0.0, %v476
  %v478 = vpop.f32.mrf.mxu0
  %479 = vmatprep.mubr.bf16.mxu0 0
  %480 = vmatmul.mubr.bf16.gmra.mxu0 %v277
  %v481 = vpop.f32.mrf.mxu0
  %v482 = vadd.f32 0.0, %v481
  %v483 = vpop.f32.mrf.mxu0
  %v484 = vpop.f32.mrf.mxu0
  %v485 = vadd.f32 0.0, %v484
  %v486 = vpop.f32.mrf.mxu0
  %487 = vmatprep.mubr.bf16.mxu0 0
  %488 = vmatmul.mubr.bf16.gmra.mxu0 %v278
  %v489 = vpop.f32.mrf.mxu0
  %v490 = vadd.f32 0.0, %v489
  %v491 = vpop.f32.mrf.mxu0
  %v492 = vpop.f32.mrf.mxu0
  %v493 = vadd.f32 0.0, %v492
  %v494 = vpop.f32.mrf.mxu0
  %495 = vmatprep.mubr.bf16.mxu0 0
  %496 = vmatmul.mubr.bf16.gmra.mxu0 %v279
  %v497 = vpop.f32.mrf.mxu0
  %v498 = vadd.f32 0.0, %v497
  %v499 = vpop.f32.mrf.mxu0
  %v500 = vpop.f32.mrf.mxu0
  %v501 = vadd.f32 0.0, %v500
  %v502 = vpop.f32.mrf.mxu0
  %503 = vmatprep.mubr.bf16.mxu0 0
  %504 = vmatmul.mubr.bf16.gmra.mxu0 %v280
  %v505 = vpop.f32.mrf.mxu0
  %v506 = vadd.f32 0.0, %v505
  %v507 = vpop.f32.mrf.mxu0
  %v508 = vpop.f32.mrf.mxu0
  %v509 = vadd.f32 0.0, %v508
  %v510 = vpop.f32.mrf.mxu0
  %511 = vmatprep.mubr.bf16.mxu0 0
  %512 = vmatmul.mubr.bf16.gmra.mxu0 %v281
  %v513 = vpop.f32.mrf.mxu0
  %v514 = vadd.f32 0.0, %v513
  %v515 = vpop.f32.mrf.mxu0
  %v516 = vpop.f32.mrf.mxu0
  %v517 = vadd.f32 0.0, %v516
  %v518 = vpop.f32.mrf.mxu0
  %519 = vmatprep.mubr.bf16.mxu0 0
  %520 = vmatmul.mubr.bf16.gmra.mxu0 %v282
  %v521 = vpop.f32.mrf.mxu0
  %v522 = vadd.f32 0.0, %v521
  %v523 = vpop.f32.mrf.mxu0
  %v524 = vpop.f32.mrf.mxu0
  %v525 = vadd.f32 0.0, %v524
  %v526 = vpop.f32.mrf.mxu0
  %527 = vmatprep.mubr.bf16.mxu0 0
  %528 = vmatmul.mubr.bf16.gmra.mxu0 %v283
  %v529 = vpop.f32.mrf.mxu0
  %v530 = vadd.f32 0.0, %v529
  %v531 = vpop.f32.mrf.mxu0
  %v532 = vpop.f32.mrf.mxu0
  %v533 = vadd.f32 0.0, %v532
  %v534 = vpop.f32.mrf.mxu0
  %535 = vmatprep.mubr.bf16.mxu0 0
  %536 = vmatmul.mubr.bf16.gmra.mxu0 %v284
  %v537 = vpop.f32.mrf.mxu0
  %v538 = vadd.f32 0.0, %v537
  %v539 = vpop.f32.mrf.mxu0
  %v540 = vpop.f32.mrf.mxu0
  %v541 = vadd.f32 0.0, %v540
  %v542 = vpop.f32.mrf.mxu0
  %543 = vmatprep.mubr.bf16.mxu0 0
  %544 = vmatmul.mubr.bf16.gmra.mxu0 %v285
  %v545 = vpop.f32.mrf.mxu0
  %v546 = vadd.f32 0.0, %v545
  %v547 = vpop.f32.mrf.mxu0
  %v548 = vpop.f32.mrf.mxu0
  %v549 = vadd.f32 0.0, %v548
  %v550 = vpop.f32.mrf.mxu0
  %551 = vmatprep.mubr.bf16.mxu0 0
  %552 = vmatmul.mubr.bf16.gmra.mxu0 %v286
  %v553 = vpop.f32.mrf.mxu0
  %v554 = vadd.f32 0.0, %v553
  %v555 = vpop.f32.mrf.mxu0
  %v556 = vpop.f32.mrf.mxu0
  %v557 = vadd.f32 0.0, %v556
  %v558 = vpop.f32.mrf.mxu0
  %559 = vmatprep.mubr.bf16.mxu0 0
  %560 = vmatmul.mubr.bf16.gmra.mxu0 %v287
  %v561 = vpop.f32.mrf.mxu0
  %v562 = vadd.f32 0.0, %v561
  %v563 = vpop.f32.mrf.mxu0
  %v564 = vpop.f32.mrf.mxu0
  %v565 = vadd.f32 0.0, %v564
  %v566 = vpop.f32.mrf.mxu0
  %567 = vmatprep.mubr.bf16.mxu0 0
  %568 = vmatmul.mubr.bf16.gmra.mxu0 %v288
  %v569 = vpop.f32.mrf.mxu0
  %v570 = vadd.f32 0.0, %v569
  %v571 = vpop.f32.mrf.mxu0
  %v572 = vpop.f32.mrf.mxu0
  %v573 = vadd.f32 0.0, %v572
  %v574 = vpop.f32.mrf.mxu0
  %575 = vmatprep.mubr.bf16.mxu0 0
  %576 = vmatmul.mubr.bf16.gmra.mxu0 %v289
  %v577 = vpop.f32.mrf.mxu0
  %v578 = vadd.f32 0.0, %v577
  %v579 = vpop.f32.mrf.mxu0
  %v580 = vpop.f32.mrf.mxu0
  %v581 = vadd.f32 0.0, %v580
  %v582 = vpop.f32.mrf.mxu0
  %583 = vmatprep.mubr.bf16.mxu0 0
  %584 = vmatmul.mubr.bf16.gmra.mxu0 %v290
  %v585 = vpop.f32.mrf.mxu0
  %v586 = vadd.f32 0.0, %v585
  %v587 = vpop.f32.mrf.mxu0
  %v588 = vpop.f32.mrf.mxu0
  %v589 = vadd.f32 0.0, %v588
  %v590 = vpop.f32.mrf.mxu0
  %591 = vmatprep.mubr.bf16.mxu0 0
  %592 = vmatmul.mubr.bf16.gmra.mxu0 %v291
  %v593 = vpop.f32.mrf.mxu0
  %v594 = vadd.f32 0.0, %v593
  %v595 = vpop.f32.mrf.mxu0
  %v596 = vpop.f32.mrf.mxu0
  %v597 = vadd.f32 0.0, %v596
  %v598 = vpop.f32.mrf.mxu0
  %599 = vmatprep.mubr.bf16.mxu0 0
  %600 = vmatmul.mubr.bf16.gmra.mxu0 %v292
  %v601 = vpop.f32.mrf.mxu0
  %v602 = vadd.f32 0.0, %v601
  %v603 = vpop.f32.mrf.mxu0
  %v604 = vpop.f32.mrf.mxu0
  %v605 = vadd.f32 0.0, %v604
  %v606 = vpop.f32.mrf.mxu0
  %607 = vmatprep.mubr.bf16.mxu0 0
  %608 = vmatmul.mubr.bf16.gmra.mxu0 %v293
  %v609 = vpop.f32.mrf.mxu0
  %v610 = vadd.f32 0.0, %v609
  %v611 = vpop.f32.mrf.mxu0
  %v612 = vpop.f32.mrf.mxu0
  %v613 = vadd.f32 0.0, %v612
  %v614 = vpop.f32.mrf.mxu0
  %615 = vmatprep.mubr.bf16.mxu0 0
  %616 = vmatmul.mubr.bf16.gmra.mxu0 %v294
  %v617 = vpop.f32.mrf.mxu0
  %v618 = vadd.f32 0.0, %v617
  %v619 = vpop.f32.mrf.mxu0
  %v620 = vpop.f32.mrf.mxu0
  %v621 = vadd.f32 0.0, %v620
  %v622 = vpop.f32.mrf.mxu0
  %623 = vmatprep.mubr.bf16.mxu0 0
  %624 = vmatmul.mubr.bf16.gmra.mxu0 %v295
  %v625 = vpop.f32.mrf.mxu0
  %v626 = vadd.f32 0.0, %v625
  %v627 = vpop.f32.mrf.mxu0
  %v628 = vpop.f32.mrf.mxu0
  %v629 = vadd.f32 0.0, %v628
  %v630 = vpop.f32.mrf.mxu0
  %631 = vmatprep.mubr.bf16.mxu0 0
  %632 = vmatmul.mubr.bf16.gmra.mxu0 %v296
  %v633 = vpop.f32.mrf.mxu0
  %v634 = vadd.f32 0.0, %v633
  %v635 = vpop.f32.mrf.mxu0
  %v636 = vpop.f32.mrf.mxu0
  %v637 = vadd.f32 0.0, %v636
  %v638 = vpop.f32.mrf.mxu0
  %639 = vmatprep.mubr.bf16.mxu0 0
  %640 = vmatmul.mubr.bf16.gmra.mxu0 %v297
  %v641 = vpop.f32.mrf.mxu0
  %v642 = vadd.f32 0.0, %v641
  %v643 = vpop.f32.mrf.mxu0
  %v644 = vpop.f32.mrf.mxu0
  %v645 = vadd.f32 0.0, %v644
  %v646 = vpop.f32.mrf.mxu0
  %647 = vmatprep.mubr.bf16.mxu0 0
  %648 = vmatmul.mubr.bf16.gmra.mxu0 %v298
  %v649 = vpop.f32.mrf.mxu0
  %v650 = vadd.f32 0.0, %v649
  %v651 = vpop.f32.mrf.mxu0
  %v652 = vpop.f32.mrf.mxu0
  %v653 = vadd.f32 0.0, %v652
  %v654 = vpop.f32.mrf.mxu0
  %655 = vmatprep.mubr.bf16.mxu0 0
  %656 = vmatmul.mubr.bf16.gmra.mxu0 %v299
  %v657 = vpop.f32.mrf.mxu0
  %v658 = vadd.f32 0.0, %v657
  %v659 = vpop.f32.mrf.mxu0
  %v660 = vpop.f32.mrf.mxu0
  %v661 = vadd.f32 0.0, %v660
  %v662 = vpop.f32.mrf.mxu0
  %663 = vmatprep.mubr.bf16.mxu0 0
  %664 = vmatmul.mubr.bf16.gmra.mxu0 %v300
  %v665 = vpop.f32.mrf.mxu0
  %v666 = vadd.f32 0.0, %v665
  %v667 = vpop.f32.mrf.mxu0
  %v668 = vpop.f32.mrf.mxu0
  %v669 = vadd.f32 0.0, %v668
  %v670 = vpop.f32.mrf.mxu0
  %671 = vmatprep.mubr.bf16.mxu0 0
  %672 = vmatmul.mubr.bf16.gmra.mxu0 %v301
  %v673 = vpop.f32.mrf.mxu0
  %v674 = vpop.f32.mrf.mxu0
  %v675 = vpop.f32.mrf.mxu0
  %v676 = vpop.f32.mrf.mxu0
  %677 = vdwg.mxu0
  %v682 = vunpack.c.l.b16 %v30
  %v683 = vunpack.c.l.b16 %v31
  %v684 = vunpack.c.l.b16 %v32
  %v685 = vunpack.c.l.b16 %v33
  %v686 = vpack.c.b16 %v683, %v682
  %v687 = vpack.c.b16 %v685, %v684
  %v706 = vunpack.c.l.b16 %v104
  %v707 = vunpack.c.l.b16 %v105
  %v708 = vunpack.c.l.b16 %v106
  %v709 = vunpack.c.l.b16 %v107
  %v710 = vunpack.c.l.b16 %v108
  %v711 = vunpack.c.l.b16 %v109
  %v712 = vunpack.c.l.b16 %v110
  %v713 = vunpack.c.l.b16 %v111
  %v714 = vunpack.c.l.b16 %v112
  %v715 = vunpack.c.l.b16 %v113
  %v716 = vunpack.c.l.b16 %v114
  %v717 = vunpack.c.l.b16 %v115
  %v718 = vunpack.c.l.b16 %v116
  %v719 = vunpack.c.l.b16 %v117
  %v720 = vunpack.c.l.b16 %v118
  %v721 = vunpack.c.l.b16 %v119
  %v722 = vpack.c.b16 %v707, %v706
  %v723 = vpack.c.b16 %v709, %v708
  %v724 = vpack.c.b16 %v711, %v710
  %v725 = vpack.c.b16 %v713, %v712
  %v726 = vpack.c.b16 %v715, %v714
  %v727 = vpack.c.b16 %v717, %v716
  %v728 = vpack.c.b16 %v719, %v718
  %v729 = vpack.c.b16 %v721, %v720
  %738 = vmatprep.subr.bf16.mxu0 0
  %739 = vmatpush1.bf16.msra.mxu0 %v729
  %740 = vmatprep.subr.bf16.mxu0 0
  %741 = vmatpush1.bf16.msra.mxu0 %v728
  %742 = vmatprep.subr.bf16.mxu0 0
  %743 = vmatpush1.bf16.msra.mxu0 %v727
  %744 = vmatprep.subr.bf16.mxu0 0
  %745 = vmatpush1.bf16.msra.mxu0 %v726
  %746 = vmatprep.subr.bf16.mxu0 0
  %747 = vmatpush1.bf16.msra.mxu0 %v725
  %748 = vmatprep.subr.bf16.mxu0 0
  %749 = vmatpush1.bf16.msra.mxu0 %v724
  %750 = vmatprep.subr.bf16.mxu0 0
  %751 = vmatpush1.bf16.msra.mxu0 %v723
  %752 = vmatprep.subr.bf16.mxu0 0
  %753 = vmatpush1.bf16.msra.mxu0 %v722
  %754 = vmatprep.subr.bf16.mxu0 0
  %755 = vmatpush2.bf16.msra.mxu0 0
  %756 = vmatprep.subr.bf16.mxu0 0
  %757 = vmatpush2.bf16.msra.mxu0 0
  %758 = vmatprep.subr.bf16.mxu0 0
  %759 = vmatpush2.bf16.msra.mxu0 0
  %760 = vmatprep.subr.bf16.mxu0 0
  %761 = vmatpush2.bf16.msra.mxu0 0
  %762 = vmatprep.subr.bf16.mxu0 0
  %763 = vmatpush2.bf16.msra.mxu0 0
  %764 = vmatprep.subr.bf16.mxu0 0
  %765 = vmatpush2.bf16.msra.mxu0 0
  %766 = vmatprep.subr.bf16.mxu0 0
  %767 = vmatpush2.bf16.msra.mxu0 0
  %768 = vmatprep.subr.bf16.mxu0 0
  %769 = vmatpush2.bf16.msra.mxu0 0
  %770 = vmatprep.mubr.bf16.mxu0 0
  %771 = vmatmul.mubr.bf16.gmra.mxu0 %v686
  %v772 = vpop.f32.mrf.mxu0
  %v773 = vadd.f32 %v418, %v772
  %v774 = vpop.f32.mrf.mxu0
  %v775 = vpop.f32.mrf.mxu0
  %v776 = vadd.f32 %v421, %v775
  %v777 = vpop.f32.mrf.mxu0
  %778 = vmatprep.mubr.bf16.mxu0 0
  %779 = vmatmul.mubr.bf16.gmra.mxu0 %v687
  %v780 = vpop.f32.mrf.mxu0
  %v781 = vadd.f32 %v426, %v780
  %v782 = vpop.f32.mrf.mxu0
  %v783 = vpop.f32.mrf.mxu0
  %v784 = vadd.f32 %v429, %v783
  %v785 = vpop.f32.mrf.mxu0
  %786 = vmatprep.mubr.bf16.mxu0 0
  %787 = vmatmul.mubr.bf16.gmra.mxu0 %v269
  %v788 = vpop.f32.mrf.mxu0
  %v789 = vadd.f32 %v434, %v788
  %v790 = vpop.f32.mrf.mxu0
  %v791 = vpop.f32.mrf.mxu0
  %v792 = vadd.f32 %v437, %v791
  %v793 = vpop.f32.mrf.mxu0
  %794 = vmatprep.mubr.bf16.mxu0 0
  %795 = vmatmul.mubr.bf16.gmra.mxu0 %v270
  %v796 = vpop.f32.mrf.mxu0
  %v797 = vadd.f32 %v442, %v796
  %v798 = vpop.f32.mrf.mxu0
  %v799 = vpop.f32.mrf.mxu0
  %v800 = vadd.f32 %v445, %v799
  %v801 = vpop.f32.mrf.mxu0
  %802 = vmatprep.mubr.bf16.mxu0 0
  %803 = vmatmul.mubr.bf16.gmra.mxu0 %v271
  %v804 = vpop.f32.mrf.mxu0
  %v805 = vadd.f32 %v450, %v804
  %v806 = vpop.f32.mrf.mxu0
  %v807 = vpop.f32.mrf.mxu0
  %v808 = vadd.f32 %v453, %v807
  %v809 = vpop.f32.mrf.mxu0
  %810 = vmatprep.mubr.bf16.mxu0 0
  %811 = vmatmul.mubr.bf16.gmra.mxu0 %v272
  %v812 = vpop.f32.mrf.mxu0
  %v813 = vadd.f32 %v458, %v812
  %v814 = vpop.f32.mrf.mxu0
  %v815 = vpop.f32.mrf.mxu0
  %v816 = vadd.f32 %v461, %v815
  %v817 = vpop.f32.mrf.mxu0
  %818 = vmatprep.mubr.bf16.mxu0 0
  %819 = vmatmul.mubr.bf16.gmra.mxu0 %v273
  %v820 = vpop.f32.mrf.mxu0
  %v821 = vadd.f32 %v466, %v820
  %v822 = vpop.f32.mrf.mxu0
  %v823 = vpop.f32.mrf.mxu0
  %v824 = vadd.f32 %v469, %v823
  %v825 = vpop.f32.mrf.mxu0
  %826 = vmatprep.mubr.bf16.mxu0 0
  %827 = vmatmul.mubr.bf16.gmra.mxu0 %v274
  %v828 = vpop.f32.mrf.mxu0
  %v829 = vadd.f32 %v474, %v828
  %v830 = vpop.f32.mrf.mxu0
  %v831 = vpop.f32.mrf.mxu0
  %v832 = vadd.f32 %v477, %v831
  %v833 = vpop.f32.mrf.mxu0
  %834 = vmatprep.mubr.bf16.mxu0 0
  %835 = vmatmul.mubr.bf16.gmra.mxu0 %v275
  %v836 = vpop.f32.mrf.mxu0
  %v837 = vadd.f32 %v482, %v836
  %v838 = vpop.f32.mrf.mxu0
  %v839 = vpop.f32.mrf.mxu0
  %v840 = vadd.f32 %v485, %v839
  %v841 = vpop.f32.mrf.mxu0
  %842 = vmatprep.mubr.bf16.mxu0 0
  %843 = vmatmul.mubr.bf16.gmra.mxu0 %v276
  %v844 = vpop.f32.mrf.mxu0
  %v845 = vadd.f32 %v490, %v844
  %v846 = vpop.f32.mrf.mxu0
  %v847 = vpop.f32.mrf.mxu0
  %v848 = vadd.f32 %v493, %v847
  %v849 = vpop.f32.mrf.mxu0
  %850 = vmatprep.mubr.bf16.mxu0 0
  %851 = vmatmul.mubr.bf16.gmra.mxu0 %v277
  %v852 = vpop.f32.mrf.mxu0
  %v853 = vadd.f32 %v498, %v852
  %v854 = vpop.f32.mrf.mxu0
  %v855 = vpop.f32.mrf.mxu0
  %v856 = vadd.f32 %v501, %v855
  %v857 = vpop.f32.mrf.mxu0
  %858 = vmatprep.mubr.bf16.mxu0 0
  %859 = vmatmul.mubr.bf16.gmra.mxu0 %v278
  %v860 = vpop.f32.mrf.mxu0
  %v861 = vadd.f32 %v506, %v860
  %v862 = vpop.f32.mrf.mxu0
  %v863 = vpop.f32.mrf.mxu0
  %v864 = vadd.f32 %v509, %v863
  %v865 = vpop.f32.mrf.mxu0
  %866 = vmatprep.mubr.bf16.mxu0 0
  %867 = vmatmul.mubr.bf16.gmra.mxu0 %v279
  %v868 = vpop.f32.mrf.mxu0
  %v869 = vadd.f32 %v514, %v868
  %v870 = vpop.f32.mrf.mxu0
  %v871 = vpop.f32.mrf.mxu0
  %v872 = vadd.f32 %v517, %v871
  %v873 = vpop.f32.mrf.mxu0
  %874 = vmatprep.mubr.bf16.mxu0 0
  %875 = vmatmul.mubr.bf16.gmra.mxu0 %v280
  %v876 = vpop.f32.mrf.mxu0
  %v877 = vadd.f32 %v522, %v876
  %v878 = vpop.f32.mrf.mxu0
  %v879 = vpop.f32.mrf.mxu0
  %v880 = vadd.f32 %v525, %v879
  %v881 = vpop.f32.mrf.mxu0
  %882 = vmatprep.mubr.bf16.mxu0 0
  %883 = vmatmul.mubr.bf16.gmra.mxu0 %v281
  %v884 = vpop.f32.mrf.mxu0
  %v885 = vadd.f32 %v530, %v884
  %v886 = vpop.f32.mrf.mxu0
  %v887 = vpop.f32.mrf.mxu0
  %v888 = vadd.f32 %v533, %v887
  %v889 = vpop.f32.mrf.mxu0
  %890 = vmatprep.mubr.bf16.mxu0 0
  %891 = vmatmul.mubr.bf16.gmra.mxu0 %v282
  %v892 = vpop.f32.mrf.mxu0
  %v893 = vadd.f32 %v538, %v892
  %v894 = vpop.f32.mrf.mxu0
  %v895 = vpop.f32.mrf.mxu0
  %v896 = vadd.f32 %v541, %v895
  %v897 = vpop.f32.mrf.mxu0
  %898 = vmatprep.mubr.bf16.mxu0 0
  %899 = vmatmul.mubr.bf16.gmra.mxu0 %v283
  %v900 = vpop.f32.mrf.mxu0
  %v901 = vadd.f32 %v546, %v900
  %v902 = vpop.f32.mrf.mxu0
  %v903 = vpop.f32.mrf.mxu0
  %v904 = vadd.f32 %v549, %v903
  %v905 = vpop.f32.mrf.mxu0
  %906 = vmatprep.mubr.bf16.mxu0 0
  %907 = vmatmul.mubr.bf16.gmra.mxu0 %v284
  %v908 = vpop.f32.mrf.mxu0
  %v909 = vadd.f32 %v554, %v908
  %v910 = vpop.f32.mrf.mxu0
  %v911 = vpop.f32.mrf.mxu0
  %v912 = vadd.f32 %v557, %v911
  %v913 = vpop.f32.mrf.mxu0
  %914 = vmatprep.mubr.bf16.mxu0 0
  %915 = vmatmul.mubr.bf16.gmra.mxu0 %v285
  %v916 = vpop.f32.mrf.mxu0
  %v917 = vadd.f32 %v562, %v916
  %v918 = vpop.f32.mrf.mxu0
  %v919 = vpop.f32.mrf.mxu0
  %v920 = vadd.f32 %v565, %v919
  %v921 = vpop.f32.mrf.mxu0
  %922 = vmatprep.mubr.bf16.mxu0 0
  %923 = vmatmul.mubr.bf16.gmra.mxu0 %v286
  %v924 = vpop.f32.mrf.mxu0
  %v925 = vadd.f32 %v570, %v924
  %v926 = vpop.f32.mrf.mxu0
  %v927 = vpop.f32.mrf.mxu0
  %v928 = vadd.f32 %v573, %v927
  %v929 = vpop.f32.mrf.mxu0
  %930 = vmatprep.mubr.bf16.mxu0 0
  %931 = vmatmul.mubr.bf16.gmra.mxu0 %v287
  %v932 = vpop.f32.mrf.mxu0
  %v933 = vadd.f32 %v578, %v932
  %v934 = vpop.f32.mrf.mxu0
  %v935 = vpop.f32.mrf.mxu0
  %v936 = vadd.f32 %v581, %v935
  %v937 = vpop.f32.mrf.mxu0
  %938 = vmatprep.mubr.bf16.mxu0 0
  %939 = vmatmul.mubr.bf16.gmra.mxu0 %v288
  %v940 = vpop.f32.mrf.mxu0
  %v941 = vadd.f32 %v586, %v940
  %v942 = vpop.f32.mrf.mxu0
  %v943 = vpop.f32.mrf.mxu0
  %v944 = vadd.f32 %v589, %v943
  %v945 = vpop.f32.mrf.mxu0
  %946 = vmatprep.mubr.bf16.mxu0 0
  %947 = vmatmul.mubr.bf16.gmra.mxu0 %v289
  %v948 = vpop.f32.mrf.mxu0
  %v949 = vadd.f32 %v594, %v948
  %v950 = vpop.f32.mrf.mxu0
  %v951 = vpop.f32.mrf.mxu0
  %v952 = vadd.f32 %v597, %v951
  %v953 = vpop.f32.mrf.mxu0
  %954 = vmatprep.mubr.bf16.mxu0 0
  %955 = vmatmul.mubr.bf16.gmra.mxu0 %v290
  %v956 = vpop.f32.mrf.mxu0
  %v957 = vadd.f32 %v602, %v956
  %v958 = vpop.f32.mrf.mxu0
  %v959 = vpop.f32.mrf.mxu0
  %v960 = vadd.f32 %v605, %v959
  %v961 = vpop.f32.mrf.mxu0
  %962 = vmatprep.mubr.bf16.mxu0 0
  %963 = vmatmul.mubr.bf16.gmra.mxu0 %v291
  %v964 = vpop.f32.mrf.mxu0
  %v965 = vadd.f32 %v610, %v964
  %v966 = vpop.f32.mrf.mxu0
  %v967 = vpop.f32.mrf.mxu0
  %v968 = vadd.f32 %v613, %v967
  %v969 = vpop.f32.mrf.mxu0
  %970 = vmatprep.mubr.bf16.mxu0 0
  %971 = vmatmul.mubr.bf16.gmra.mxu0 %v292
  %v972 = vpop.f32.mrf.mxu0
  %v973 = vadd.f32 %v618, %v972
  %v974 = vpop.f32.mrf.mxu0
  %v975 = vpop.f32.mrf.mxu0
  %v976 = vadd.f32 %v621, %v975
  %v977 = vpop.f32.mrf.mxu0
  %978 = vmatprep.mubr.bf16.mxu0 0
  %979 = vmatmul.mubr.bf16.gmra.mxu0 %v293
  %v980 = vpop.f32.mrf.mxu0
  %v981 = vadd.f32 %v626, %v980
  %v982 = vpop.f32.mrf.mxu0
  %v983 = vpop.f32.mrf.mxu0
  %v984 = vadd.f32 %v629, %v983
  %v985 = vpop.f32.mrf.mxu0
  %986 = vmatprep.mubr.bf16.mxu0 0
  %987 = vmatmul.mubr.bf16.gmra.mxu0 %v294
  %v988 = vpop.f32.mrf.mxu0
  %v989 = vadd.f32 %v634, %v988
  %v990 = vpop.f32.mrf.mxu0
  %v991 = vpop.f32.mrf.mxu0
  %v992 = vadd.f32 %v637, %v991
  %v993 = vpop.f32.mrf.mxu0
  %994 = vmatprep.mubr.bf16.mxu0 0
  %995 = vmatmul.mubr.bf16.gmra.mxu0 %v295
  %v996 = vpop.f32.mrf.mxu0
  %v997 = vadd.f32 %v642, %v996
  %v998 = vpop.f32.mrf.mxu0
  %v999 = vpop.f32.mrf.mxu0
  %v1000 = vadd.f32 %v645, %v999
  %v1001 = vpop.f32.mrf.mxu0
  %1002 = vmatprep.mubr.bf16.mxu0 0
  %1003 = vmatmul.mubr.bf16.gmra.mxu0 %v296
  %v1004 = vpop.f32.mrf.mxu0
  %v1005 = vadd.f32 %v650, %v1004
  %v1006 = vpop.f32.mrf.mxu0
  %v1007 = vpop.f32.mrf.mxu0
  %v1008 = vadd.f32 %v653, %v1007
  %v1009 = vpop.f32.mrf.mxu0
  %1010 = vmatprep.mubr.bf16.mxu0 0
  %1011 = vmatmul.mubr.bf16.gmra.mxu0 %v297
  %v1012 = vpop.f32.mrf.mxu0
  %v1013 = vadd.f32 %v658, %v1012
  %v1014 = vpop.f32.mrf.mxu0
  %v1015 = vpop.f32.mrf.mxu0
  %v1016 = vadd.f32 %v661, %v1015
  %v1017 = vpop.f32.mrf.mxu0
  %1018 = vmatprep.mubr.bf16.mxu0 0
  %1019 = vmatmul.mubr.bf16.gmra.mxu0 %v298
  %v1020 = vpop.f32.mrf.mxu0
  %v1021 = vadd.f32 %v666, %v1020
  %v1022 = vpop.f32.mrf.mxu0
  %v1023 = vpop.f32.mrf.mxu0
  %v1024 = vadd.f32 %v669, %v1023
  %v1025 = vpop.f32.mrf.mxu0
  %1026 = vmatprep.mubr.bf16.mxu0 0
  %1027 = vmatmul.mubr.bf16.gmra.mxu0 %v299
  %v1028 = vpop.f32.mrf.mxu0
  %v1029 = vpop.f32.mrf.mxu0
  %v1030 = vpop.f32.mrf.mxu0
  %v1031 = vpop.f32.mrf.mxu0
  %1032 = vdwg.mxu0
  %s1033 = scalar_lea.vmem %s2, 384
  %v1034 = vld [vmem:[%s1033] sm:$0xf]
  %v1035 = vld [vmem:[%s1033 + $0x4] sm:$0xf]
  %v1036 = vld [vmem:[%s1033 + $0x8] sm:$0xf]
  %v1037 = vld [vmem:[%s1033 + $0xc] sm:$0xf]
  %v1038 = vld [vmem:[%s1033 + $0x10] sm:$0xf]
  %v1039 = vld [vmem:[%s1033 + $0x14] sm:$0xf]
  %v1040 = vld [vmem:[%s1033 + $0x18] sm:$0xf]
  %v1041 = vld [vmem:[%s1033 + $0x1c] sm:$0xf]
  %v1042 = vld [vmem:[%s1033 + $0x20] sm:$0xf]
  %v1043 = vld [vmem:[%s1033 + $0x24] sm:$0xf]
  %v1044 = vld [vmem:[%s1033 + $0x28] sm:$0xf]
  %v1045 = vld [vmem:[%s1033 + $0x2c] sm:$0xf]
  %v1046 = vld [vmem:[%s1033 + $0x30] sm:$0xf]
  %v1047 = vld [vmem:[%s1033 + $0x34] sm:$0xf]
  %v1048 = vld [vmem:[%s1033 + $0x38] sm:$0xf]
  %v1049 = vld [vmem:[%s1033 + $0x3c] sm:$0xf]
  %v1054 = vunpack.c.l.b16 %v100
  %v1055 = vunpack.c.l.b16 %v101
  %v1056 = vunpack.c.l.b16 %v102
  %v1057 = vunpack.c.l.b16 %v103
  %v1058 = vpack.c.b16 %v1055, %v1054
  %v1059 = vpack.c.b16 %v1057, %v1056
  %v1078 = vunpack.c.l.b16 %v1034
  %v1079 = vunpack.c.l.b16 %v1035
  %v1080 = vunpack.c.l.b16 %v1036
  %v1081 = vunpack.c.l.b16 %v1037
  %v1082 = vunpack.c.l.b16 %v1038
  %v1083 = vunpack.c.l.b16 %v1039
  %v1084 = vunpack.c.l.b16 %v1040
  %v1085 = vunpack.c.l.b16 %v1041
  %v1086 = vunpack.c.l.b16 %v1042
  %v1087 = vunpack.c.l.b16 %v1043
  %v1088 = vunpack.c.l.b16 %v1044
  %v1089 = vunpack.c.l.b16 %v1045
  %v1090 = vunpack.c.l.b16 %v1046
  %v1091 = vunpack.c.l.b16 %v1047
  %v1092 = vunpack.c.l.b16 %v1048
  %v1093 = vunpack.c.l.b16 %v1049
  %v1094 = vpack.c.b16 %v1079, %v1078
  %v1095 = vpack.c.b16 %v1081, %v1080
  %v1096 = vpack.c.b16 %v1083, %v1082
  %v1097 = vpack.c.b16 %v1085, %v1084
  %v1098 = vpack.c.b16 %v1087, %v1086
  %v1099 = vpack.c.b16 %v1089, %v1088
  %v1100 = vpack.c.b16 %v1091, %v1090
  %v1101 = vpack.c.b16 %v1093, %v1092
  %1110 = vmatprep.subr.bf16.mxu0 0
  %1111 = vmatpush1.bf16.msra.mxu0 %v1101
  %1112 = vmatprep.subr.bf16.mxu0 0
  %1113 = vmatpush1.bf16.msra.mxu0 %v1100
  %1114 = vmatprep.subr.bf16.mxu0 0
  %1115 = vmatpush1.bf16.msra.mxu0 %v1099
  %1116 = vmatprep.subr.bf16.mxu0 0
  %1117 = vmatpush1.bf16.msra.mxu0 %v1098
  %1118 = vmatprep.subr.bf16.mxu0 0
  %1119 = vmatpush1.bf16.msra.mxu0 %v1097
  %1120 = vmatprep.subr.bf16.mxu0 0
  %1121 = vmatpush1.bf16.msra.mxu0 %v1096
  %1122 = vmatprep.subr.bf16.mxu0 0
  %1123 = vmatpush1.bf16.msra.mxu0 %v1095
  %1124 = vmatprep.subr.bf16.mxu0 0
  %1125 = vmatpush1.bf16.msra.mxu0 %v1094
  %1126 = vmatprep.subr.bf16.mxu0 0
  %1127 = vmatpush2.bf16.msra.mxu0 0
  %1128 = vmatprep.subr.bf16.mxu0 0
  %1129 = vmatpush2.bf16.msra.mxu0 0
  %1130 = vmatprep.subr.bf16.mxu0 0
  %1131 = vmatpush2.bf16.msra.mxu0 0
  %1132 = vmatprep.subr.bf16.mxu0 0
  %1133 = vmatpush2.bf16.msra.mxu0 0
  %1134 = vmatprep.subr.bf16.mxu0 0
  %1135 = vmatpush2.bf16.msra.mxu0 0
  %1136 = vmatprep.subr.bf16.mxu0 0
  %1137 = vmatpush2.bf16.msra.mxu0 0
  %1138 = vmatprep.subr.bf16.mxu0 0
  %1139 = vmatpush2.bf16.msra.mxu0 0
  %1140 = vmatprep.subr.bf16.mxu0 0
  %1141 = vmatpush2.bf16.msra.mxu0 0
  %1142 = vmatprep.mubr.bf16.mxu0 0
  %1143 = vmatmul.mubr.bf16.gmra.mxu0 %v271
  %v1144 = vpop.f32.mrf.mxu0
  %v1145 = vadd.f32 0.0, %v1144
  %v1146 = vpop.f32.mrf.mxu0
  %v1147 = vpop.f32.mrf.mxu0
  %v1148 = vadd.f32 0.0, %v1147
  %v1149 = vpop.f32.mrf.mxu0
  %1150 = vmatprep.mubr.bf16.mxu0 0
  %1151 = vmatmul.mubr.bf16.gmra.mxu0 %v272
  %v1152 = vpop.f32.mrf.mxu0
  %v1153 = vadd.f32 0.0, %v1152
  %v1154 = vpop.f32.mrf.mxu0
  %v1155 = vpop.f32.mrf.mxu0
  %v1156 = vadd.f32 0.0, %v1155
  %v1157 = vpop.f32.mrf.mxu0
  %1158 = vmatprep.mubr.bf16.mxu0 0
  %1159 = vmatmul.mubr.bf16.gmra.mxu0 %v273
  %v1160 = vpop.f32.mrf.mxu0
  %v1161 = vadd.f32 0.0, %v1160
  %v1162 = vpop.f32.mrf.mxu0
  %v1163 = vpop.f32.mrf.mxu0
  %v1164 = vadd.f32 0.0, %v1163
  %v1165 = vpop.f32.mrf.mxu0
  %1166 = vmatprep.mubr.bf16.mxu0 0
  %1167 = vmatmul.mubr.bf16.gmra.mxu0 %v274
  %v1168 = vpop.f32.mrf.mxu0
  %v1169 = vadd.f32 0.0, %v1168
  %v1170 = vpop.f32.mrf.mxu0
  %v1171 = vpop.f32.mrf.mxu0
  %v1172 = vadd.f32 0.0, %v1171
  %v1173 = vpop.f32.mrf.mxu0
  %1174 = vmatprep.mubr.bf16.mxu0 0
  %1175 = vmatmul.mubr.bf16.gmra.mxu0 %v275
  %v1176 = vpop.f32.mrf.mxu0
  %v1177 = vadd.f32 0.0, %v1176
  %v1178 = vpop.f32.mrf.mxu0
  %v1179 = vpop.f32.mrf.mxu0
  %v1180 = vadd.f32 0.0, %v1179
  %v1181 = vpop.f32.mrf.mxu0
  %1182 = vmatprep.mubr.bf16.mxu0 0
  %1183 = vmatmul.mubr.bf16.gmra.mxu0 %v276
  %v1184 = vpop.f32.mrf.mxu0
  %v1185 = vadd.f32 0.0, %v1184
  %v1186 = vpop.f32.mrf.mxu0
  %v1187 = vpop.f32.mrf.mxu0
  %v1188 = vadd.f32 0.0, %v1187
  %v1189 = vpop.f32.mrf.mxu0
  %1190 = vmatprep.mubr.bf16.mxu0 0
  %1191 = vmatmul.mubr.bf16.gmra.mxu0 %v277
  %v1192 = vpop.f32.mrf.mxu0
  %v1193 = vadd.f32 0.0, %v1192
  %v1194 = vpop.f32.mrf.mxu0
  %v1195 = vpop.f32.mrf.mxu0
  %v1196 = vadd.f32 0.0, %v1195
  %v1197 = vpop.f32.mrf.mxu0
  %1198 = vmatprep.mubr.bf16.mxu0 0
  %1199 = vmatmul.mubr.bf16.gmra.mxu0 %v278
  %v1200 = vpop.f32.mrf.mxu0
  %v1201 = vadd.f32 0.0, %v1200
  %v1202 = vpop.f32.mrf.mxu0
  %v1203 = vpop.f32.mrf.mxu0
  %v1204 = vadd.f32 0.0, %v1203
  %v1205 = vpop.f32.mrf.mxu0
  %1206 = vmatprep.mubr.bf16.mxu0 0
  %1207 = vmatmul.mubr.bf16.gmra.mxu0 %v279
  %v1208 = vpop.f32.mrf.mxu0
  %v1209 = vadd.f32 0.0, %v1208
  %v1210 = vpop.f32.mrf.mxu0
  %v1211 = vpop.f32.mrf.mxu0
  %v1212 = vadd.f32 0.0, %v1211
  %v1213 = vpop.f32.mrf.mxu0
  %1214 = vmatprep.mubr.bf16.mxu0 0
  %1215 = vmatmul.mubr.bf16.gmra.mxu0 %v280
  %v1216 = vpop.f32.mrf.mxu0
  %v1217 = vadd.f32 0.0, %v1216
  %v1218 = vpop.f32.mrf.mxu0
  %v1219 = vpop.f32.mrf.mxu0
  %v1220 = vadd.f32 0.0, %v1219
  %v1221 = vpop.f32.mrf.mxu0
  %1222 = vmatprep.mubr.bf16.mxu0 0
  %1223 = vmatmul.mubr.bf16.gmra.mxu0 %v281
  %v1224 = vpop.f32.mrf.mxu0
  %v1225 = vadd.f32 0.0, %v1224
  %v1226 = vpop.f32.mrf.mxu0
  %v1227 = vpop.f32.mrf.mxu0
  %v1228 = vadd.f32 0.0, %v1227
  %v1229 = vpop.f32.mrf.mxu0
  %1230 = vmatprep.mubr.bf16.mxu0 0
  %1231 = vmatmul.mubr.bf16.gmra.mxu0 %v282
  %v1232 = vpop.f32.mrf.mxu0
  %v1233 = vadd.f32 0.0, %v1232
  %v1234 = vpop.f32.mrf.mxu0
  %v1235 = vpop.f32.mrf.mxu0
  %v1236 = vadd.f32 0.0, %v1235
  %v1237 = vpop.f32.mrf.mxu0
  %1238 = vmatprep.mubr.bf16.mxu0 0
  %1239 = vmatmul.mubr.bf16.gmra.mxu0 %v283
  %v1240 = vpop.f32.mrf.mxu0
  %v1241 = vadd.f32 0.0, %v1240
  %v1242 = vpop.f32.mrf.mxu0
  %v1243 = vpop.f32.mrf.mxu0
  %v1244 = vadd.f32 0.0, %v1243
  %v1245 = vpop.f32.mrf.mxu0
  %1246 = vmatprep.mubr.bf16.mxu0 0
  %1247 = vmatmul.mubr.bf16.gmra.mxu0 %v284
  %v1248 = vpop.f32.mrf.mxu0
  %v1249 = vadd.f32 0.0, %v1248
  %v1250 = vpop.f32.mrf.mxu0
  %v1251 = vpop.f32.mrf.mxu0
  %v1252 = vadd.f32 0.0, %v1251
  %v1253 = vpop.f32.mrf.mxu0
  %1254 = vmatprep.mubr.bf16.mxu0 0
  %1255 = vmatmul.mubr.bf16.gmra.mxu0 %v285
  %v1256 = vpop.f32.mrf.mxu0
  %v1257 = vadd.f32 0.0, %v1256
  %v1258 = vpop.f32.mrf.mxu0
  %v1259 = vpop.f32.mrf.mxu0
  %v1260 = vadd.f32 0.0, %v1259
  %v1261 = vpop.f32.mrf.mxu0
  %1262 = vmatprep.mubr.bf16.mxu0 0
  %1263 = vmatmul.mubr.bf16.gmra.mxu0 %v286
  %v1264 = vpop.f32.mrf.mxu0
  %v1265 = vadd.f32 0.0, %v1264
  %v1266 = vpop.f32.mrf.mxu0
  %v1267 = vpop.f32.mrf.mxu0
  %v1268 = vadd.f32 0.0, %v1267
  %v1269 = vpop.f32.mrf.mxu0
  %1270 = vmatprep.mubr.bf16.mxu0 0
  %1271 = vmatmul.mubr.bf16.gmra.mxu0 %v287
  %v1272 = vpop.f32.mrf.mxu0
  %v1273 = vadd.f32 0.0, %v1272
  %v1274 = vpop.f32.mrf.mxu0
  %v1275 = vpop.f32.mrf.mxu0
  %v1276 = vadd.f32 0.0, %v1275
  %v1277 = vpop.f32.mrf.mxu0
  %1278 = vmatprep.mubr.bf16.mxu0 0
  %1279 = vmatmul.mubr.bf16.gmra.mxu0 %v288
  %v1280 = vpop.f32.mrf.mxu0
  %v1281 = vadd.f32 0.0, %v1280
  %v1282 = vpop.f32.mrf.mxu0
  %v1283 = vpop.f32.mrf.mxu0
  %v1284 = vadd.f32 0.0, %v1283
  %v1285 = vpop.f32.mrf.mxu0
  %1286 = vmatprep.mubr.bf16.mxu0 0
  %1287 = vmatmul.mubr.bf16.gmra.mxu0 %v289
  %v1288 = vpop.f32.mrf.mxu0
  %v1289 = vadd.f32 0.0, %v1288
  %v1290 = vpop.f32.mrf.mxu0
  %v1291 = vpop.f32.mrf.mxu0
  %v1292 = vadd.f32 0.0, %v1291
  %v1293 = vpop.f32.mrf.mxu0
  %1294 = vmatprep.mubr.bf16.mxu0 0
  %1295 = vmatmul.mubr.bf16.gmra.mxu0 %v290
  %v1296 = vpop.f32.mrf.mxu0
  %v1297 = vadd.f32 0.0, %v1296
  %v1298 = vpop.f32.mrf.mxu0
  %v1299 = vpop.f32.mrf.mxu0
  %v1300 = vadd.f32 0.0, %v1299
  %v1301 = vpop.f32.mrf.mxu0
  %1302 = vmatprep.mubr.bf16.mxu0 0
  %1303 = vmatmul.mubr.bf16.gmra.mxu0 %v291
  %v1304 = vpop.f32.mrf.mxu0
  %v1305 = vadd.f32 0.0, %v1304
  %v1306 = vpop.f32.mrf.mxu0
  %v1307 = vpop.f32.mrf.mxu0
  %v1308 = vadd.f32 0.0, %v1307
  %v1309 = vpop.f32.mrf.mxu0
  %1310 = vmatprep.mubr.bf16.mxu0 0
  %1311 = vmatmul.mubr.bf16.gmra.mxu0 %v292
  %v1312 = vpop.f32.mrf.mxu0
  %v1313 = vadd.f32 0.0, %v1312
  %v1314 = vpop.f32.mrf.mxu0
  %v1315 = vpop.f32.mrf.mxu0
  %v1316 = vadd.f32 0.0, %v1315
  %v1317 = vpop.f32.mrf.mxu0
  %1318 = vmatprep.mubr.bf16.mxu0 0
  %1319 = vmatmul.mubr.bf16.gmra.mxu0 %v293
  %v1320 = vpop.f32.mrf.mxu0
  %v1321 = vadd.f32 0.0, %v1320
  %v1322 = vpop.f32.mrf.mxu0
  %v1323 = vpop.f32.mrf.mxu0
  %v1324 = vadd.f32 0.0, %v1323
  %v1325 = vpop.f32.mrf.mxu0
  %1326 = vmatprep.mubr.bf16.mxu0 0
  %1327 = vmatmul.mubr.bf16.gmra.mxu0 %v294
  %v1328 = vpop.f32.mrf.mxu0
  %v1329 = vadd.f32 0.0, %v1328
  %v1330 = vpop.f32.mrf.mxu0
  %v1331 = vpop.f32.mrf.mxu0
  %v1332 = vadd.f32 0.0, %v1331
  %v1333 = vpop.f32.mrf.mxu0
  %1334 = vmatprep.mubr.bf16.mxu0 0
  %1335 = vmatmul.mubr.bf16.gmra.mxu0 %v295
  %v1336 = vpop.f32.mrf.mxu0
  %v1337 = vadd.f32 0.0, %v1336
  %v1338 = vpop.f32.mrf.mxu0
  %v1339 = vpop.f32.mrf.mxu0
  %v1340 = vadd.f32 0.0, %v1339
  %v1341 = vpop.f32.mrf.mxu0
  %1342 = vmatprep.mubr.bf16.mxu0 0
  %1343 = vmatmul.mubr.bf16.gmra.mxu0 %v296
  %v1344 = vpop.f32.mrf.mxu0
  %v1345 = vadd.f32 0.0, %v1344
  %v1346 = vpop.f32.mrf.mxu0
  %v1347 = vpop.f32.mrf.mxu0
  %v1348 = vadd.f32 0.0, %v1347
  %v1349 = vpop.f32.mrf.mxu0
  %1350 = vmatprep.mubr.bf16.mxu0 0
  %1351 = vmatmul.mubr.bf16.gmra.mxu0 %v297
  %v1352 = vpop.f32.mrf.mxu0
  %v1353 = vadd.f32 0.0, %v1352
  %v1354 = vpop.f32.mrf.mxu0
  %v1355 = vpop.f32.mrf.mxu0
  %v1356 = vadd.f32 0.0, %v1355
  %v1357 = vpop.f32.mrf.mxu0
  %1358 = vmatprep.mubr.bf16.mxu0 0
  %1359 = vmatmul.mubr.bf16.gmra.mxu0 %v298
  %v1360 = vpop.f32.mrf.mxu0
  %v1361 = vadd.f32 0.0, %v1360
  %v1362 = vpop.f32.mrf.mxu0
  %v1363 = vpop.f32.mrf.mxu0
  %v1364 = vadd.f32 0.0, %v1363
  %v1365 = vpop.f32.mrf.mxu0
  %1366 = vmatprep.mubr.bf16.mxu0 0
  %1367 = vmatmul.mubr.bf16.gmra.mxu0 %v299
  %v1368 = vpop.f32.mrf.mxu0
  %v1369 = vadd.f32 0.0, %v1368
  %v1370 = vpop.f32.mrf.mxu0
  %v1371 = vpop.f32.mrf.mxu0
  %v1372 = vadd.f32 0.0, %v1371
  %v1373 = vpop.f32.mrf.mxu0
  %1374 = vmatprep.mubr.bf16.mxu0 0
  %1375 = vmatmul.mubr.bf16.gmra.mxu0 %v300
  %v1376 = vpop.f32.mrf.mxu0
  %v1377 = vadd.f32 0.0, %v1376
  %v1378 = vpop.f32.mrf.mxu0
  %v1379 = vpop.f32.mrf.mxu0
  %v1380 = vadd.f32 0.0, %v1379
  %v1381 = vpop.f32.mrf.mxu0
  %1382 = vmatprep.mubr.bf16.mxu0 0
  %1383 = vmatmul.mubr.bf16.gmra.mxu0 %v301
  %v1384 = vpop.f32.mrf.mxu0
  %v1385 = vadd.f32 0.0, %v1384
  %v1386 = vpop.f32.mrf.mxu0
  %v1387 = vpop.f32.mrf.mxu0
  %v1388 = vadd.f32 0.0, %v1387
  %v1389 = vpop.f32.mrf.mxu0
  %1390 = vmatprep.mubr.bf16.mxu0 0
  %1391 = vmatmul.mubr.bf16.gmra.mxu0 %v1058
  %v1392 = vpop.f32.mrf.mxu0
  %v1393 = vadd.f32 0.0, %v1392
  %v1394 = vpop.f32.mrf.mxu0
  %v1395 = vpop.f32.mrf.mxu0
  %v1396 = vadd.f32 0.0, %v1395
  %v1397 = vpop.f32.mrf.mxu0
  %1398 = vmatprep.mubr.bf16.mxu0 0
  %1399 = vmatmul.mubr.bf16.gmra.mxu0 %v1059
  %v1400 = vpop.f32.mrf.mxu0
  %v1401 = vpop.f32.mrf.mxu0
  %v1402 = vpop.f32.mrf.mxu0
  %v1403 = vpop.f32.mrf.mxu0
  %1404 = vdwg.mxu0
  %v1405 = vadd.f32 %v773, %v1145
  %v1406 = vadd.f32 %v776, %v1148
  %v1407 = vadd.f32 %v781, %v1153
  %v1408 = vadd.f32 %v784, %v1156
  %v1409 = vadd.f32 %v789, %v1161
  %v1410 = vadd.f32 %v792, %v1164
  %v1411 = vadd.f32 %v797, %v1169
  %v1412 = vadd.f32 %v800, %v1172
  %v1413 = vadd.f32 %v805, %v1177
  %v1414 = vadd.f32 %v808, %v1180
  %v1415 = vadd.f32 %v813, %v1185
  %v1416 = vadd.f32 %v816, %v1188
  %v1417 = vadd.f32 %v821, %v1193
  %v1418 = vadd.f32 %v824, %v1196
  %v1419 = vadd.f32 %v829, %v1201
  %v1420 = vadd.f32 %v832, %v1204
  %v1421 = vadd.f32 %v837, %v1209
  %v1422 = vadd.f32 %v840, %v1212
  %v1423 = vadd.f32 %v845, %v1217
  %v1424 = vadd.f32 %v848, %v1220
  %v1425 = vadd.f32 %v853, %v1225
  %v1426 = vadd.f32 %v856, %v1228
  %v1427 = vadd.f32 %v861, %v1233
  %v1428 = vadd.f32 %v864, %v1236
  %v1429 = vadd.f32 %v869, %v1241
  %v1430 = vadd.f32 %v872, %v1244
  %v1431 = vadd.f32 %v877, %v1249
  %v1432 = vadd.f32 %v880, %v1252
  %v1433 = vadd.f32 %v885, %v1257
  %v1434 = vadd.f32 %v888, %v1260
  %v1435 = vadd.f32 %v893, %v1265
  %v1436 = vadd.f32 %v896, %v1268
  %v1437 = vadd.f32 %v901, %v1273
  %v1438 = vadd.f32 %v904, %v1276
  %v1439 = vadd.f32 %v909, %v1281
  %v1440 = vadd.f32 %v912, %v1284
  %v1441 = vadd.f32 %v917, %v1289
  %v1442 = vadd.f32 %v920, %v1292
  %v1443 = vadd.f32 %v925, %v1297
  %v1444 = vadd.f32 %v928, %v1300
  %v1445 = vadd.f32 %v933, %v1305
  %v1446 = vadd.f32 %v936, %v1308
  %v1447 = vadd.f32 %v941, %v1313
  %v1448 = vadd.f32 %v944, %v1316
  %v1449 = vadd.f32 %v949, %v1321
  %v1450 = vadd.f32 %v952, %v1324
  %v1451 = vadd.f32 %v957, %v1329
  %v1452 = vadd.f32 %v960, %v1332
  %v1453 = vadd.f32 %v965, %v1337
  %v1454 = vadd.f32 %v968, %v1340
  %v1455 = vadd.f32 %v973, %v1345
  %v1456 = vadd.f32 %v976, %v1348
  %v1457 = vadd.f32 %v981, %v1353
  %v1458 = vadd.f32 %v984, %v1356
  %v1459 = vadd.f32 %v989, %v1361
  %v1460 = vadd.f32 %v992, %v1364
  %v1461 = vadd.f32 %v997, %v1369
  %v1462 = vadd.f32 %v1000, %v1372
  %v1463 = vadd.f32 %v1005, %v1377
  %v1464 = vadd.f32 %v1008, %v1380
  %v1465 = vadd.f32 %v1013, %v1385
  %v1466 = vadd.f32 %v1016, %v1388
  %v1467 = vadd.f32 %v1021, %v1393
  %v1468 = vadd.f32 %v1024, %v1396
  %s1469 = scalar_lea.vmem %s2, 64
  %v1470 = vld [vmem:[%s1469] sm:$0xf]
  %v1471 = vld [vmem:[%s1469 + $0x4] sm:$0xf]
  %v1472 = vld [vmem:[%s1469 + $0x8] sm:$0xf]
  %v1473 = vld [vmem:[%s1469 + $0xc] sm:$0xf]
  %v1474 = vld [vmem:[%s1469 + $0x10] sm:$0xf]
  %v1475 = vld [vmem:[%s1469 + $0x14] sm:$0xf]
  %v1476 = vld [vmem:[%s1469 + $0x18] sm:$0xf]
  %v1477 = vld [vmem:[%s1469 + $0x1c] sm:$0xf]
  %v1478 = vld [vmem:[%s1469 + $0x20] sm:$0xf]
  %v1479 = vld [vmem:[%s1469 + $0x24] sm:$0xf]
  %v1480 = vld [vmem:[%s1469 + $0x28] sm:$0xf]
  %v1481 = vld [vmem:[%s1469 + $0x2c] sm:$0xf]
  %v1482 = vld [vmem:[%s1469 + $0x30] sm:$0xf]
  %v1483 = vld [vmem:[%s1469 + $0x34] sm:$0xf]
  %v1484 = vld [vmem:[%s1469 + $0x38] sm:$0xf]
  %v1485 = vld [vmem:[%s1469 + $0x3c] sm:$0xf]
  %s1486 = scalar_lea.vmem %s2, 256
  %v1487 = vld [vmem:[%s1486] sm:$0xf]
  %v1488 = vld [vmem:[%s1486 + $0x4] sm:$0xf]
  %v1489 = vld [vmem:[%s1486 + $0x8] sm:$0xf]
  %v1490 = vld [vmem:[%s1486 + $0xc] sm:$0xf]
  %v1491 = vld [vmem:[%s1486 + $0x10] sm:$0xf]
  %v1492 = vld [vmem:[%s1486 + $0x14] sm:$0xf]
  %v1493 = vld [vmem:[%s1486 + $0x18] sm:$0xf]
  %v1494 = vld [vmem:[%s1486 + $0x1c] sm:$0xf]
  %v1495 = vld [vmem:[%s1486 + $0x20] sm:$0xf]
  %v1496 = vld [vmem:[%s1486 + $0x24] sm:$0xf]
  %v1497 = vld [vmem:[%s1486 + $0x28] sm:$0xf]
  %v1498 = vld [vmem:[%s1486 + $0x2c] sm:$0xf]
  %v1499 = vld [vmem:[%s1486 + $0x30] sm:$0xf]
  %v1500 = vld [vmem:[%s1486 + $0x34] sm:$0xf]
  %v1501 = vld [vmem:[%s1486 + $0x38] sm:$0xf]
  %v1502 = vld [vmem:[%s1486 + $0x3c] sm:$0xf]
  %v1519 = vunpack.c.l.b16 %v1487
  %v1520 = vunpack.c.l.b16 %v1488
  %v1521 = vunpack.c.l.b16 %v1489
  %v1522 = vunpack.c.l.b16 %v1490
  %v1523 = vunpack.c.l.b16 %v1491
  %v1524 = vunpack.c.l.b16 %v1492
  %v1525 = vunpack.c.l.b16 %v1493
  %v1526 = vunpack.c.l.b16 %v1494
  %v1527 = vunpack.c.l.b16 %v1495
  %v1528 = vunpack.c.l.b16 %v1496
  %v1529 = vunpack.c.l.b16 %v1497
  %v1530 = vunpack.c.l.b16 %v1498
  %v1531 = vunpack.c.l.b16 %v1499
  %v1532 = vunpack.c.l.b16 %v1500
  %v1533 = vunpack.c.l.b16 %v1501
  %v1534 = vunpack.c.l.b16 %v1502
  %v1535 = vpack.c.b16 %v1520, %v1519
  %v1536 = vpack.c.b16 %v1522, %v1521
  %v1537 = vpack.c.b16 %v1524, %v1523
  %v1538 = vpack.c.b16 %v1526, %v1525
  %v1539 = vpack.c.b16 %v1528, %v1527
  %v1540 = vpack.c.b16 %v1530, %v1529
  %v1541 = vpack.c.b16 %v1532, %v1531
  %v1542 = vpack.c.b16 %v1534, %v1533
  %1551 = vmatprep.subr.bf16.mxu0 0
  %1552 = vmatpush1.bf16.msra.mxu0 %v1542
  %1553 = vmatprep.subr.bf16.mxu0 0
  %1554 = vmatpush1.bf16.msra.mxu0 %v1541
  %1555 = vmatprep.subr.bf16.mxu0 0
  %1556 = vmatpush1.bf16.msra.mxu0 %v1540
  %1557 = vmatprep.subr.bf16.mxu0 0
  %1558 = vmatpush1.bf16.msra.mxu0 %v1539
  %1559 = vmatprep.subr.bf16.mxu0 0
  %1560 = vmatpush1.bf16.msra.mxu0 %v1538
  %1561 = vmatprep.subr.bf16.mxu0 0
  %1562 = vmatpush1.bf16.msra.mxu0 %v1537
  %1563 = vmatprep.subr.bf16.mxu0 0
  %1564 = vmatpush1.bf16.msra.mxu0 %v1536
  %1565 = vmatprep.subr.bf16.mxu0 0
  %1566 = vmatpush1.bf16.msra.mxu0 %v1535
  %1567 = vmatprep.subr.bf16.mxu0 0
  %1568 = vmatpush2.bf16.msra.mxu0 0
  %1569 = vmatprep.subr.bf16.mxu0 0
  %1570 = vmatpush2.bf16.msra.mxu0 0
  %1571 = vmatprep.subr.bf16.mxu0 0
  %1572 = vmatpush2.bf16.msra.mxu0 0
  %1573 = vmatprep.subr.bf16.mxu0 0
  %1574 = vmatpush2.bf16.msra.mxu0 0
  %1575 = vmatprep.subr.bf16.mxu0 0
  %1576 = vmatpush2.bf16.msra.mxu0 0
  %1577 = vmatprep.subr.bf16.mxu0 0
  %1578 = vmatpush2.bf16.msra.mxu0 0
  %1579 = vmatprep.subr.bf16.mxu0 0
  %1580 = vmatpush2.bf16.msra.mxu0 0
  %1581 = vmatprep.subr.bf16.mxu0 0
  %1582 = vmatpush2.bf16.msra.mxu0 0
  %1583 = vmatprep.mubr.bf16.mxu0 0
  %1584 = vmatmul.mubr.bf16.gmra.mxu0 %v269
  %v1585 = vpop.f32.mrf.mxu0
  %v1586 = vadd.f32 0.0, %v1585
  %v1587 = vpop.f32.mrf.mxu0
  %v1588 = vpop.f32.mrf.mxu0
  %v1589 = vadd.f32 0.0, %v1588
  %v1590 = vpop.f32.mrf.mxu0
  %1591 = vmatprep.mubr.bf16.mxu0 0
  %1592 = vmatmul.mubr.bf16.gmra.mxu0 %v270
  %v1593 = vpop.f32.mrf.mxu0
  %v1594 = vadd.f32 0.0, %v1593
  %v1595 = vpop.f32.mrf.mxu0
  %v1596 = vpop.f32.mrf.mxu0
  %v1597 = vadd.f32 0.0, %v1596
  %v1598 = vpop.f32.mrf.mxu0
  %1599 = vmatprep.mubr.bf16.mxu0 0
  %1600 = vmatmul.mubr.bf16.gmra.mxu0 %v271
  %v1601 = vpop.f32.mrf.mxu0
  %v1602 = vadd.f32 0.0, %v1601
  %v1603 = vpop.f32.mrf.mxu0
  %v1604 = vpop.f32.mrf.mxu0
  %v1605 = vadd.f32 0.0, %v1604
  %v1606 = vpop.f32.mrf.mxu0
  %1607 = vmatprep.mubr.bf16.mxu0 0
  %1608 = vmatmul.mubr.bf16.gmra.mxu0 %v272
  %v1609 = vpop.f32.mrf.mxu0
  %v1610 = vadd.f32 0.0, %v1609
  %v1611 = vpop.f32.mrf.mxu0
  %v1612 = vpop.f32.mrf.mxu0
  %v1613 = vadd.f32 0.0, %v1612
  %v1614 = vpop.f32.mrf.mxu0
  %1615 = vmatprep.mubr.bf16.mxu0 0
  %1616 = vmatmul.mubr.bf16.gmra.mxu0 %v273
  %v1617 = vpop.f32.mrf.mxu0
  %v1618 = vadd.f32 0.0, %v1617
  %v1619 = vpop.f32.mrf.mxu0
  %v1620 = vpop.f32.mrf.mxu0
  %v1621 = vadd.f32 0.0, %v1620
  %v1622 = vpop.f32.mrf.mxu0
  %1623 = vmatprep.mubr.bf16.mxu0 0
  %1624 = vmatmul.mubr.bf16.gmra.mxu0 %v274
  %v1625 = vpop.f32.mrf.mxu0
  %v1626 = vadd.f32 0.0, %v1625
  %v1627 = vpop.f32.mrf.mxu0
  %v1628 = vpop.f32.mrf.mxu0
  %v1629 = vadd.f32 0.0, %v1628
  %v1630 = vpop.f32.mrf.mxu0
  %1631 = vmatprep.mubr.bf16.mxu0 0
  %1632 = vmatmul.mubr.bf16.gmra.mxu0 %v275
  %v1633 = vpop.f32.mrf.mxu0
  %v1634 = vadd.f32 0.0, %v1633
  %v1635 = vpop.f32.mrf.mxu0
  %v1636 = vpop.f32.mrf.mxu0
  %v1637 = vadd.f32 0.0, %v1636
  %v1638 = vpop.f32.mrf.mxu0
  %1639 = vmatprep.mubr.bf16.mxu0 0
  %1640 = vmatmul.mubr.bf16.gmra.mxu0 %v276
  %v1641 = vpop.f32.mrf.mxu0
  %v1642 = vadd.f32 0.0, %v1641
  %v1643 = vpop.f32.mrf.mxu0
  %v1644 = vpop.f32.mrf.mxu0
  %v1645 = vadd.f32 0.0, %v1644
  %v1646 = vpop.f32.mrf.mxu0
  %1647 = vmatprep.mubr.bf16.mxu0 0
  %1648 = vmatmul.mubr.bf16.gmra.mxu0 %v277
  %v1649 = vpop.f32.mrf.mxu0
  %v1650 = vadd.f32 0.0, %v1649
  %v1651 = vpop.f32.mrf.mxu0
  %v1652 = vpop.f32.mrf.mxu0
  %v1653 = vadd.f32 0.0, %v1652
  %v1654 = vpop.f32.mrf.mxu0
  %1655 = vmatprep.mubr.bf16.mxu0 0
  %1656 = vmatmul.mubr.bf16.gmra.mxu0 %v278
  %v1657 = vpop.f32.mrf.mxu0
  %v1658 = vadd.f32 0.0, %v1657
  %v1659 = vpop.f32.mrf.mxu0
  %v1660 = vpop.f32.mrf.mxu0
  %v1661 = vadd.f32 0.0, %v1660
  %v1662 = vpop.f32.mrf.mxu0
  %1663 = vmatprep.mubr.bf16.mxu0 0
  %1664 = vmatmul.mubr.bf16.gmra.mxu0 %v279
  %v1665 = vpop.f32.mrf.mxu0
  %v1666 = vadd.f32 0.0, %v1665
  %v1667 = vpop.f32.mrf.mxu0
  %v1668 = vpop.f32.mrf.mxu0
  %v1669 = vadd.f32 0.0, %v1668
  %v1670 = vpop.f32.mrf.mxu0
  %1671 = vmatprep.mubr.bf16.mxu0 0
  %1672 = vmatmul.mubr.bf16.gmra.mxu0 %v280
  %v1673 = vpop.f32.mrf.mxu0
  %v1674 = vadd.f32 0.0, %v1673
  %v1675 = vpop.f32.mrf.mxu0
  %v1676 = vpop.f32.mrf.mxu0
  %v1677 = vadd.f32 0.0, %v1676
  %v1678 = vpop.f32.mrf.mxu0
  %1679 = vmatprep.mubr.bf16.mxu0 0
  %1680 = vmatmul.mubr.bf16.gmra.mxu0 %v281
  %v1681 = vpop.f32.mrf.mxu0
  %v1682 = vadd.f32 0.0, %v1681
  %v1683 = vpop.f32.mrf.mxu0
  %v1684 = vpop.f32.mrf.mxu0
  %v1685 = vadd.f32 0.0, %v1684
  %v1686 = vpop.f32.mrf.mxu0
  %1687 = vmatprep.mubr.bf16.mxu0 0
  %1688 = vmatmul.mubr.bf16.gmra.mxu0 %v282
  %v1689 = vpop.f32.mrf.mxu0
  %v1690 = vadd.f32 0.0, %v1689
  %v1691 = vpop.f32.mrf.mxu0
  %v1692 = vpop.f32.mrf.mxu0
  %v1693 = vadd.f32 0.0, %v1692
  %v1694 = vpop.f32.mrf.mxu0
  %1695 = vmatprep.mubr.bf16.mxu0 0
  %1696 = vmatmul.mubr.bf16.gmra.mxu0 %v283
  %v1697 = vpop.f32.mrf.mxu0
  %v1698 = vadd.f32 0.0, %v1697
  %v1699 = vpop.f32.mrf.mxu0
  %v1700 = vpop.f32.mrf.mxu0
  %v1701 = vadd.f32 0.0, %v1700
  %v1702 = vpop.f32.mrf.mxu0
  %1703 = vmatprep.mubr.bf16.mxu0 0
  %1704 = vmatmul.mubr.bf16.gmra.mxu0 %v284
  %v1705 = vpop.f32.mrf.mxu0
  %v1706 = vadd.f32 0.0, %v1705
  %v1707 = vpop.f32.mrf.mxu0
  %v1708 = vpop.f32.mrf.mxu0
  %v1709 = vadd.f32 0.0, %v1708
  %v1710 = vpop.f32.mrf.mxu0
  %1711 = vmatprep.mubr.bf16.mxu0 0
  %1712 = vmatmul.mubr.bf16.gmra.mxu0 %v285
  %v1713 = vpop.f32.mrf.mxu0
  %v1714 = vadd.f32 0.0, %v1713
  %v1715 = vpop.f32.mrf.mxu0
  %v1716 = vpop.f32.mrf.mxu0
  %v1717 = vadd.f32 0.0, %v1716
  %v1718 = vpop.f32.mrf.mxu0
  %1719 = vmatprep.mubr.bf16.mxu0 0
  %1720 = vmatmul.mubr.bf16.gmra.mxu0 %v286
  %v1721 = vpop.f32.mrf.mxu0
  %v1722 = vadd.f32 0.0, %v1721
  %v1723 = vpop.f32.mrf.mxu0
  %v1724 = vpop.f32.mrf.mxu0
  %v1725 = vadd.f32 0.0, %v1724
  %v1726 = vpop.f32.mrf.mxu0
  %1727 = vmatprep.mubr.bf16.mxu0 0
  %1728 = vmatmul.mubr.bf16.gmra.mxu0 %v287
  %v1729 = vpop.f32.mrf.mxu0
  %v1730 = vadd.f32 0.0, %v1729
  %v1731 = vpop.f32.mrf.mxu0
  %v1732 = vpop.f32.mrf.mxu0
  %v1733 = vadd.f32 0.0, %v1732
  %v1734 = vpop.f32.mrf.mxu0
  %1735 = vmatprep.mubr.bf16.mxu0 0
  %1736 = vmatmul.mubr.bf16.gmra.mxu0 %v288
  %v1737 = vpop.f32.mrf.mxu0
  %v1738 = vadd.f32 0.0, %v1737
  %v1739 = vpop.f32.mrf.mxu0
  %v1740 = vpop.f32.mrf.mxu0
  %v1741 = vadd.f32 0.0, %v1740
  %v1742 = vpop.f32.mrf.mxu0
  %1743 = vmatprep.mubr.bf16.mxu0 0
  %1744 = vmatmul.mubr.bf16.gmra.mxu0 %v289
  %v1745 = vpop.f32.mrf.mxu0
  %v1746 = vadd.f32 0.0, %v1745
  %v1747 = vpop.f32.mrf.mxu0
  %v1748 = vpop.f32.mrf.mxu0
  %v1749 = vadd.f32 0.0, %v1748
  %v1750 = vpop.f32.mrf.mxu0
  %1751 = vmatprep.mubr.bf16.mxu0 0
  %1752 = vmatmul.mubr.bf16.gmra.mxu0 %v290
  %v1753 = vpop.f32.mrf.mxu0
  %v1754 = vadd.f32 0.0, %v1753
  %v1755 = vpop.f32.mrf.mxu0
  %v1756 = vpop.f32.mrf.mxu0
  %v1757 = vadd.f32 0.0, %v1756
  %v1758 = vpop.f32.mrf.mxu0
  %1759 = vmatprep.mubr.bf16.mxu0 0
  %1760 = vmatmul.mubr.bf16.gmra.mxu0 %v291
  %v1761 = vpop.f32.mrf.mxu0
  %v1762 = vadd.f32 0.0, %v1761
  %v1763 = vpop.f32.mrf.mxu0
  %v1764 = vpop.f32.mrf.mxu0
  %v1765 = vadd.f32 0.0, %v1764
  %v1766 = vpop.f32.mrf.mxu0
  %1767 = vmatprep.mubr.bf16.mxu0 0
  %1768 = vmatmul.mubr.bf16.gmra.mxu0 %v292
  %v1769 = vpop.f32.mrf.mxu0
  %v1770 = vadd.f32 0.0, %v1769
  %v1771 = vpop.f32.mrf.mxu0
  %v1772 = vpop.f32.mrf.mxu0
  %v1773 = vadd.f32 0.0, %v1772
  %v1774 = vpop.f32.mrf.mxu0
  %1775 = vmatprep.mubr.bf16.mxu0 0
  %1776 = vmatmul.mubr.bf16.gmra.mxu0 %v293
  %v1777 = vpop.f32.mrf.mxu0
  %v1778 = vadd.f32 0.0, %v1777
  %v1779 = vpop.f32.mrf.mxu0
  %v1780 = vpop.f32.mrf.mxu0
  %v1781 = vadd.f32 0.0, %v1780
  %v1782 = vpop.f32.mrf.mxu0
  %1783 = vmatprep.mubr.bf16.mxu0 0
  %1784 = vmatmul.mubr.bf16.gmra.mxu0 %v294
  %v1785 = vpop.f32.mrf.mxu0
  %v1786 = vadd.f32 0.0, %v1785
  %v1787 = vpop.f32.mrf.mxu0
  %v1788 = vpop.f32.mrf.mxu0
  %v1789 = vadd.f32 0.0, %v1788
  %v1790 = vpop.f32.mrf.mxu0
  %1791 = vmatprep.mubr.bf16.mxu0 0
  %1792 = vmatmul.mubr.bf16.gmra.mxu0 %v295
  %v1793 = vpop.f32.mrf.mxu0
  %v1794 = vadd.f32 0.0, %v1793
  %v1795 = vpop.f32.mrf.mxu0
  %v1796 = vpop.f32.mrf.mxu0
  %v1797 = vadd.f32 0.0, %v1796
  %v1798 = vpop.f32.mrf.mxu0
  %1799 = vmatprep.mubr.bf16.mxu0 0
  %1800 = vmatmul.mubr.bf16.gmra.mxu0 %v296
  %v1801 = vpop.f32.mrf.mxu0
  %v1802 = vadd.f32 0.0, %v1801
  %v1803 = vpop.f32.mrf.mxu0
  %v1804 = vpop.f32.mrf.mxu0
  %v1805 = vadd.f32 0.0, %v1804
  %v1806 = vpop.f32.mrf.mxu0
  %1807 = vmatprep.mubr.bf16.mxu0 0
  %1808 = vmatmul.mubr.bf16.gmra.mxu0 %v297
  %v1809 = vpop.f32.mrf.mxu0
  %v1810 = vadd.f32 0.0, %v1809
  %v1811 = vpop.f32.mrf.mxu0
  %v1812 = vpop.f32.mrf.mxu0
  %v1813 = vadd.f32 0.0, %v1812
  %v1814 = vpop.f32.mrf.mxu0
  %1815 = vmatprep.mubr.bf16.mxu0 0
  %1816 = vmatmul.mubr.bf16.gmra.mxu0 %v298
  %v1817 = vpop.f32.mrf.mxu0
  %v1818 = vadd.f32 0.0, %v1817
  %v1819 = vpop.f32.mrf.mxu0
  %v1820 = vpop.f32.mrf.mxu0
  %v1821 = vadd.f32 0.0, %v1820
  %v1822 = vpop.f32.mrf.mxu0
  %1823 = vmatprep.mubr.bf16.mxu0 0
  %1824 = vmatmul.mubr.bf16.gmra.mxu0 %v299
  %v1825 = vpop.f32.mrf.mxu0
  %v1826 = vadd.f32 0.0, %v1825
  %v1827 = vpop.f32.mrf.mxu0
  %v1828 = vpop.f32.mrf.mxu0
  %v1829 = vadd.f32 0.0, %v1828
  %v1830 = vpop.f32.mrf.mxu0
  %1831 = vmatprep.mubr.bf16.mxu0 0
  %1832 = vmatmul.mubr.bf16.gmra.mxu0 %v300
  %v1833 = vpop.f32.mrf.mxu0
  %v1834 = vadd.f32 0.0, %v1833
  %v1835 = vpop.f32.mrf.mxu0
  %v1836 = vpop.f32.mrf.mxu0
  %v1837 = vadd.f32 0.0, %v1836
  %v1838 = vpop.f32.mrf.mxu0
  %1839 = vmatprep.mubr.bf16.mxu0 0
  %1840 = vmatmul.mubr.bf16.gmra.mxu0 %v301
  %v1841 = vpop.f32.mrf.mxu0
  %v1842 = vadd.f32 0.0, %v1841
  %v1843 = vpop.f32.mrf.mxu0
  %v1844 = vpop.f32.mrf.mxu0
  %v1845 = vpop.f32.mrf.mxu0
  %1846 = vdwg.mxu0
  %v1863 = vunpack.c.l.b16 %v1470
  %v1864 = vunpack.c.l.b16 %v1471
  %v1865 = vunpack.c.l.b16 %v1472
  %v1866 = vunpack.c.l.b16 %v1473
  %v1867 = vunpack.c.l.b16 %v1474
  %v1868 = vunpack.c.l.b16 %v1475
  %v1869 = vunpack.c.l.b16 %v1476
  %v1870 = vunpack.c.l.b16 %v1477
  %v1871 = vunpack.c.l.b16 %v1478
  %v1872 = vunpack.c.l.b16 %v1479
  %v1873 = vunpack.c.l.b16 %v1480
  %v1874 = vunpack.c.l.b16 %v1481
  %v1875 = vunpack.c.l.b16 %v1482
  %v1876 = vunpack.c.l.b16 %v1483
  %v1877 = vunpack.c.l.b16 %v1484
  %v1878 = vunpack.c.l.b16 %v1485
  %v1879 = vpack.c.b16 %v1864, %v1863
  %v1880 = vpack.c.b16 %v1866, %v1865
  %v1881 = vpack.c.b16 %v1868, %v1867
  %v1882 = vpack.c.b16 %v1870, %v1869
  %v1883 = vpack.c.b16 %v1872, %v1871
  %v1884 = vpack.c.b16 %v1874, %v1873
  %v1885 = vpack.c.b16 %v1876, %v1875
  %v1886 = vpack.c.b16 %v1878, %v1877
  %1895 = vmatprep.subr.bf16.mxu0 0
  %1896 = vmatpush1.bf16.msra.mxu0 %v1886
  %1897 = vmatprep.subr.bf16.mxu0 0
  %1898 = vmatpush1.bf16.msra.mxu0 %v1885
  %1899 = vmatprep.subr.bf16.mxu0 0
  %1900 = vmatpush1.bf16.msra.mxu0 %v1884
  %1901 = vmatprep.subr.bf16.mxu0 0
  %1902 = vmatpush1.bf16.msra.mxu0 %v1883
  %1903 = vmatprep.subr.bf16.mxu0 0
  %1904 = vmatpush1.bf16.msra.mxu0 %v1882
  %1905 = vmatprep.subr.bf16.mxu0 0
  %1906 = vmatpush1.bf16.msra.mxu0 %v1881
  %1907 = vmatprep.subr.bf16.mxu0 0
  %1908 = vmatpush1.bf16.msra.mxu0 %v1880
  %1909 = vmatprep.subr.bf16.mxu0 0
  %1910 = vmatpush1.bf16.msra.mxu0 %v1879
  %1911 = vmatprep.subr.bf16.mxu0 0
  %1912 = vmatpush2.bf16.msra.mxu0 0
  %1913 = vmatprep.subr.bf16.mxu0 0
  %1914 = vmatpush2.bf16.msra.mxu0 0
  %1915 = vmatprep.subr.bf16.mxu0 0
  %1916 = vmatpush2.bf16.msra.mxu0 0
  %1917 = vmatprep.subr.bf16.mxu0 0
  %1918 = vmatpush2.bf16.msra.mxu0 0
  %1919 = vmatprep.subr.bf16.mxu0 0
  %1920 = vmatpush2.bf16.msra.mxu0 0
  %1921 = vmatprep.subr.bf16.mxu0 0
  %1922 = vmatpush2.bf16.msra.mxu0 0
  %1923 = vmatprep.subr.bf16.mxu0 0
  %1924 = vmatpush2.bf16.msra.mxu0 0
  %1925 = vmatprep.subr.bf16.mxu0 0
  %1926 = vmatpush2.bf16.msra.mxu0 0
  %1927 = vmatprep.mubr.bf16.mxu0 0
  %1928 = vmatmul.mubr.bf16.gmra.mxu0 %v686
  %v1929 = vpop.f32.mrf.mxu0
  %v1930 = vadd.f32 %v1586, %v1929
  %v1931 = vpop.f32.mrf.mxu0
  %v1932 = vpop.f32.mrf.mxu0
  %v1933 = vadd.f32 %v1589, %v1932
  %v1934 = vpop.f32.mrf.mxu0
  %1935 = vmatprep.mubr.bf16.mxu0 0
  %1936 = vmatmul.mubr.bf16.gmra.mxu0 %v687
  %v1937 = vpop.f32.mrf.mxu0
  %v1938 = vadd.f32 %v1594, %v1937
  %v1939 = vpop.f32.mrf.mxu0
  %v1940 = vpop.f32.mrf.mxu0
  %v1941 = vadd.f32 %v1597, %v1940
  %v1942 = vpop.f32.mrf.mxu0
  %1943 = vmatprep.mubr.bf16.mxu0 0
  %1944 = vmatmul.mubr.bf16.gmra.mxu0 %v269
  %v1945 = vpop.f32.mrf.mxu0
  %v1946 = vadd.f32 %v1602, %v1945
  %v1947 = vpop.f32.mrf.mxu0
  %v1948 = vpop.f32.mrf.mxu0
  %v1949 = vadd.f32 %v1605, %v1948
  %v1950 = vpop.f32.mrf.mxu0
  %1951 = vmatprep.mubr.bf16.mxu0 0
  %1952 = vmatmul.mubr.bf16.gmra.mxu0 %v270
  %v1953 = vpop.f32.mrf.mxu0
  %v1954 = vadd.f32 %v1610, %v1953
  %v1955 = vpop.f32.mrf.mxu0
  %v1956 = vpop.f32.mrf.mxu0
  %v1957 = vadd.f32 %v1613, %v1956
  %v1958 = vpop.f32.mrf.mxu0
  %1959 = vmatprep.mubr.bf16.mxu0 0
  %1960 = vmatmul.mubr.bf16.gmra.mxu0 %v271
  %v1961 = vpop.f32.mrf.mxu0
  %v1962 = vadd.f32 %v1618, %v1961
  %v1963 = vpop.f32.mrf.mxu0
  %v1964 = vpop.f32.mrf.mxu0
  %v1965 = vadd.f32 %v1621, %v1964
  %v1966 = vpop.f32.mrf.mxu0
  %1967 = vmatprep.mubr.bf16.mxu0 0
  %1968 = vmatmul.mubr.bf16.gmra.mxu0 %v272
  %v1969 = vpop.f32.mrf.mxu0
  %v1970 = vadd.f32 %v1626, %v1969
  %v1971 = vpop.f32.mrf.mxu0
  %v1972 = vpop.f32.mrf.mxu0
  %v1973 = vadd.f32 %v1629, %v1972
  %v1974 = vpop.f32.mrf.mxu0
  %1975 = vmatprep.mubr.bf16.mxu0 0
  %1976 = vmatmul.mubr.bf16.gmra.mxu0 %v273
  %v1977 = vpop.f32.mrf.mxu0
  %v1978 = vadd.f32 %v1634, %v1977
  %v1979 = vpop.f32.mrf.mxu0
  %v1980 = vpop.f32.mrf.mxu0
  %v1981 = vadd.f32 %v1637, %v1980
  %v1982 = vpop.f32.mrf.mxu0
  %1983 = vmatprep.mubr.bf16.mxu0 0
  %1984 = vmatmul.mubr.bf16.gmra.mxu0 %v274
  %v1985 = vpop.f32.mrf.mxu0
  %v1986 = vadd.f32 %v1642, %v1985
  %v1987 = vpop.f32.mrf.mxu0
  %v1988 = vpop.f32.mrf.mxu0
  %v1989 = vadd.f32 %v1645, %v1988
  %v1990 = vpop.f32.mrf.mxu0
  %1991 = vmatprep.mubr.bf16.mxu0 0
  %1992 = vmatmul.mubr.bf16.gmra.mxu0 %v275
  %v1993 = vpop.f32.mrf.mxu0
  %v1994 = vadd.f32 %v1650, %v1993
  %v1995 = vpop.f32.mrf.mxu0
  %v1996 = vpop.f32.mrf.mxu0
  %v1997 = vadd.f32 %v1653, %v1996
  %v1998 = vpop.f32.mrf.mxu0
  %1999 = vmatprep.mubr.bf16.mxu0 0
  %2000 = vmatmul.mubr.bf16.gmra.mxu0 %v276
  %v2001 = vpop.f32.mrf.mxu0
  %v2002 = vadd.f32 %v1658, %v2001
  %v2003 = vpop.f32.mrf.mxu0
  %v2004 = vpop.f32.mrf.mxu0
  %v2005 = vadd.f32 %v1661, %v2004
  %v2006 = vpop.f32.mrf.mxu0
  %2007 = vmatprep.mubr.bf16.mxu0 0
  %2008 = vmatmul.mubr.bf16.gmra.mxu0 %v277
  %v2009 = vpop.f32.mrf.mxu0
  %v2010 = vadd.f32 %v1666, %v2009
  %v2011 = vpop.f32.mrf.mxu0
  %v2012 = vpop.f32.mrf.mxu0
  %v2013 = vadd.f32 %v1669, %v2012
  %v2014 = vpop.f32.mrf.mxu0
  %2015 = vmatprep.mubr.bf16.mxu0 0
  %2016 = vmatmul.mubr.bf16.gmra.mxu0 %v278
  %v2017 = vpop.f32.mrf.mxu0
  %v2018 = vadd.f32 %v1674, %v2017
  %v2019 = vpop.f32.mrf.mxu0
  %v2020 = vpop.f32.mrf.mxu0
  %v2021 = vadd.f32 %v1677, %v2020
  %v2022 = vpop.f32.mrf.mxu0
  %2023 = vmatprep.mubr.bf16.mxu0 0
  %2024 = vmatmul.mubr.bf16.gmra.mxu0 %v279
  %v2025 = vpop.f32.mrf.mxu0
  %v2026 = vadd.f32 %v1682, %v2025
  %v2027 = vpop.f32.mrf.mxu0
  %v2028 = vpop.f32.mrf.mxu0
  %v2029 = vadd.f32 %v1685, %v2028
  %v2030 = vpop.f32.mrf.mxu0
  %2031 = vmatprep.mubr.bf16.mxu0 0
  %2032 = vmatmul.mubr.bf16.gmra.mxu0 %v280
  %v2033 = vpop.f32.mrf.mxu0
  %v2034 = vadd.f32 %v1690, %v2033
  %v2035 = vpop.f32.mrf.mxu0
  %v2036 = vpop.f32.mrf.mxu0
  %v2037 = vadd.f32 %v1693, %v2036
  %v2038 = vpop.f32.mrf.mxu0
  %2039 = vmatprep.mubr.bf16.mxu0 0
  %2040 = vmatmul.mubr.bf16.gmra.mxu0 %v281
  %v2041 = vpop.f32.mrf.mxu0
  %v2042 = vadd.f32 %v1698, %v2041
  %v2043 = vpop.f32.mrf.mxu0
  %v2044 = vpop.f32.mrf.mxu0
  %v2045 = vadd.f32 %v1701, %v2044
  %v2046 = vpop.f32.mrf.mxu0
  %2047 = vmatprep.mubr.bf16.mxu0 0
  %2048 = vmatmul.mubr.bf16.gmra.mxu0 %v282
  %v2049 = vpop.f32.mrf.mxu0
  %v2050 = vadd.f32 %v1706, %v2049
  %v2051 = vpop.f32.mrf.mxu0
  %v2052 = vpop.f32.mrf.mxu0
  %v2053 = vadd.f32 %v1709, %v2052
  %v2054 = vpop.f32.mrf.mxu0
  %2055 = vmatprep.mubr.bf16.mxu0 0
  %2056 = vmatmul.mubr.bf16.gmra.mxu0 %v283
  %v2057 = vpop.f32.mrf.mxu0
  %v2058 = vadd.f32 %v1714, %v2057
  %v2059 = vpop.f32.mrf.mxu0
  %v2060 = vpop.f32.mrf.mxu0
  %v2061 = vadd.f32 %v1717, %v2060
  %v2062 = vpop.f32.mrf.mxu0
  %2063 = vmatprep.mubr.bf16.mxu0 0
  %2064 = vmatmul.mubr.bf16.gmra.mxu0 %v284
  %v2065 = vpop.f32.mrf.mxu0
  %v2066 = vadd.f32 %v1722, %v2065
  %v2067 = vpop.f32.mrf.mxu0
  %v2068 = vpop.f32.mrf.mxu0
  %v2069 = vadd.f32 %v1725, %v2068
  %v2070 = vpop.f32.mrf.mxu0
  %2071 = vmatprep.mubr.bf16.mxu0 0
  %2072 = vmatmul.mubr.bf16.gmra.mxu0 %v285
  %v2073 = vpop.f32.mrf.mxu0
  %v2074 = vadd.f32 %v1730, %v2073
  %v2075 = vpop.f32.mrf.mxu0
  %v2076 = vpop.f32.mrf.mxu0
  %v2077 = vadd.f32 %v1733, %v2076
  %v2078 = vpop.f32.mrf.mxu0
  %2079 = vmatprep.mubr.bf16.mxu0 0
  %2080 = vmatmul.mubr.bf16.gmra.mxu0 %v286
  %v2081 = vpop.f32.mrf.mxu0
  %v2082 = vadd.f32 %v1738, %v2081
  %v2083 = vpop.f32.mrf.mxu0
  %v2084 = vpop.f32.mrf.mxu0
  %v2085 = vadd.f32 %v1741, %v2084
  %v2086 = vpop.f32.mrf.mxu0
  %2087 = vmatprep.mubr.bf16.mxu0 0
  %2088 = vmatmul.mubr.bf16.gmra.mxu0 %v287
  %v2089 = vpop.f32.mrf.mxu0
  %v2090 = vadd.f32 %v1746, %v2089
  %v2091 = vpop.f32.mrf.mxu0
  %v2092 = vpop.f32.mrf.mxu0
  %v2093 = vadd.f32 %v1749, %v2092
  %v2094 = vpop.f32.mrf.mxu0
  %2095 = vmatprep.mubr.bf16.mxu0 0
  %2096 = vmatmul.mubr.bf16.gmra.mxu0 %v288
  %v2097 = vpop.f32.mrf.mxu0
  %v2098 = vadd.f32 %v1754, %v2097
  %v2099 = vpop.f32.mrf.mxu0
  %v2100 = vpop.f32.mrf.mxu0
  %v2101 = vadd.f32 %v1757, %v2100
  %v2102 = vpop.f32.mrf.mxu0
  %2103 = vmatprep.mubr.bf16.mxu0 0
  %2104 = vmatmul.mubr.bf16.gmra.mxu0 %v289
  %v2105 = vpop.f32.mrf.mxu0
  %v2106 = vadd.f32 %v1762, %v2105
  %v2107 = vpop.f32.mrf.mxu0
  %v2108 = vpop.f32.mrf.mxu0
  %v2109 = vadd.f32 %v1765, %v2108
  %v2110 = vpop.f32.mrf.mxu0
  %2111 = vmatprep.mubr.bf16.mxu0 0
  %2112 = vmatmul.mubr.bf16.gmra.mxu0 %v290
  %v2113 = vpop.f32.mrf.mxu0
  %v2114 = vadd.f32 %v1770, %v2113
  %v2115 = vpop.f32.mrf.mxu0
  %v2116 = vpop.f32.mrf.mxu0
  %v2117 = vadd.f32 %v1773, %v2116
  %v2118 = vpop.f32.mrf.mxu0
  %2119 = vmatprep.mubr.bf16.mxu0 0
  %2120 = vmatmul.mubr.bf16.gmra.mxu0 %v291
  %v2121 = vpop.f32.mrf.mxu0
  %v2122 = vadd.f32 %v1778, %v2121
  %v2123 = vpop.f32.mrf.mxu0
  %v2124 = vpop.f32.mrf.mxu0
  %v2125 = vadd.f32 %v1781, %v2124
  %v2126 = vpop.f32.mrf.mxu0
  %2127 = vmatprep.mubr.bf16.mxu0 0
  %2128 = vmatmul.mubr.bf16.gmra.mxu0 %v292
  %v2129 = vpop.f32.mrf.mxu0
  %v2130 = vadd.f32 %v1786, %v2129
  %v2131 = vpop.f32.mrf.mxu0
  %v2132 = vpop.f32.mrf.mxu0
  %v2133 = vadd.f32 %v1789, %v2132
  %v2134 = vpop.f32.mrf.mxu0
  %2135 = vmatprep.mubr.bf16.mxu0 0
  %2136 = vmatmul.mubr.bf16.gmra.mxu0 %v293
  %v2137 = vpop.f32.mrf.mxu0
  %v2138 = vadd.f32 %v1794, %v2137
  %v2139 = vpop.f32.mrf.mxu0
  %v2140 = vpop.f32.mrf.mxu0
  %v2141 = vadd.f32 %v1797, %v2140
  %v2142 = vpop.f32.mrf.mxu0
  %2143 = vmatprep.mubr.bf16.mxu0 0
  %2144 = vmatmul.mubr.bf16.gmra.mxu0 %v294
  %v2145 = vpop.f32.mrf.mxu0
  %v2146 = vadd.f32 %v1802, %v2145
  %v2147 = vpop.f32.mrf.mxu0
  %v2148 = vpop.f32.mrf.mxu0
  %v2149 = vadd.f32 %v1805, %v2148
  %v2150 = vpop.f32.mrf.mxu0
  %2151 = vmatprep.mubr.bf16.mxu0 0
  %2152 = vmatmul.mubr.bf16.gmra.mxu0 %v295
  %v2153 = vpop.f32.mrf.mxu0
  %v2154 = vadd.f32 %v1810, %v2153
  %v2155 = vpop.f32.mrf.mxu0
  %v2156 = vpop.f32.mrf.mxu0
  %v2157 = vadd.f32 %v1813, %v2156
  %v2158 = vpop.f32.mrf.mxu0
  %2159 = vmatprep.mubr.bf16.mxu0 0
  %2160 = vmatmul.mubr.bf16.gmra.mxu0 %v296
  %v2161 = vpop.f32.mrf.mxu0
  %v2162 = vadd.f32 %v1818, %v2161
  %v2163 = vpop.f32.mrf.mxu0
  %v2164 = vpop.f32.mrf.mxu0
  %v2165 = vadd.f32 %v1821, %v2164
  %v2166 = vpop.f32.mrf.mxu0
  %2167 = vmatprep.mubr.bf16.mxu0 0
  %2168 = vmatmul.mubr.bf16.gmra.mxu0 %v297
  %v2169 = vpop.f32.mrf.mxu0
  %v2170 = vadd.f32 %v1826, %v2169
  %v2171 = vpop.f32.mrf.mxu0
  %v2172 = vpop.f32.mrf.mxu0
  %v2173 = vadd.f32 %v1829, %v2172
  %v2174 = vpop.f32.mrf.mxu0
  %2175 = vmatprep.mubr.bf16.mxu0 0
  %2176 = vmatmul.mubr.bf16.gmra.mxu0 %v298
  %v2177 = vpop.f32.mrf.mxu0
  %v2178 = vadd.f32 %v1834, %v2177
  %v2179 = vpop.f32.mrf.mxu0
  %v2180 = vpop.f32.mrf.mxu0
  %v2181 = vadd.f32 %v1837, %v2180
  %v2182 = vpop.f32.mrf.mxu0
  %2183 = vmatprep.mubr.bf16.mxu0 0
  %2184 = vmatmul.mubr.bf16.gmra.mxu0 %v299
  %v2185 = vpop.f32.mrf.mxu0
  %v2186 = vadd.f32 %v1842, %v2185
  %v2187 = vpop.f32.mrf.mxu0
  %v2188 = vpop.f32.mrf.mxu0
  %v2189 = vpop.f32.mrf.mxu0
  %2190 = vdwg.mxu0
  %s2191 = scalar_lea.vmem %s2, 448
  %v2192 = vld [vmem:[%s2191] sm:$0xf]
  %v2193 = vld [vmem:[%s2191 + $0x4] sm:$0xf]
  %v2194 = vld [vmem:[%s2191 + $0x8] sm:$0xf]
  %v2195 = vld [vmem:[%s2191 + $0xc] sm:$0xf]
  %v2196 = vld [vmem:[%s2191 + $0x10] sm:$0xf]
  %v2197 = vld [vmem:[%s2191 + $0x14] sm:$0xf]
  %v2198 = vld [vmem:[%s2191 + $0x18] sm:$0xf]
  %v2199 = vld [vmem:[%s2191 + $0x1c] sm:$0xf]
  %v2200 = vld [vmem:[%s2191 + $0x20] sm:$0xf]
  %v2201 = vld [vmem:[%s2191 + $0x24] sm:$0xf]
  %v2202 = vld [vmem:[%s2191 + $0x28] sm:$0xf]
  %v2203 = vld [vmem:[%s2191 + $0x2c] sm:$0xf]
  %v2204 = vld [vmem:[%s2191 + $0x30] sm:$0xf]
  %v2205 = vld [vmem:[%s2191 + $0x34] sm:$0xf]
  %v2206 = vld [vmem:[%s2191 + $0x38] sm:$0xf]
  %v2207 = vld [vmem:[%s2191 + $0x3c] sm:$0xf]
  %v2224 = vunpack.c.l.b16 %v2192
  %v2225 = vunpack.c.l.b16 %v2193
  %v2226 = vunpack.c.l.b16 %v2194
  %v2227 = vunpack.c.l.b16 %v2195
  %v2228 = vunpack.c.l.b16 %v2196
  %v2229 = vunpack.c.l.b16 %v2197
  %v2230 = vunpack.c.l.b16 %v2198
  %v2231 = vunpack.c.l.b16 %v2199
  %v2232 = vunpack.c.l.b16 %v2200
  %v2233 = vunpack.c.l.b16 %v2201
  %v2234 = vunpack.c.l.b16 %v2202
  %v2235 = vunpack.c.l.b16 %v2203
  %v2236 = vunpack.c.l.b16 %v2204
  %v2237 = vunpack.c.l.b16 %v2205
  %v2238 = vunpack.c.l.b16 %v2206
  %v2239 = vunpack.c.l.b16 %v2207
  %v2240 = vpack.c.b16 %v2225, %v2224
  %v2241 = vpack.c.b16 %v2227, %v2226
  %v2242 = vpack.c.b16 %v2229, %v2228
  %v2243 = vpack.c.b16 %v2231, %v2230
  %v2244 = vpack.c.b16 %v2233, %v2232
  %v2245 = vpack.c.b16 %v2235, %v2234
  %v2246 = vpack.c.b16 %v2237, %v2236
  %v2247 = vpack.c.b16 %v2239, %v2238
  %2256 = vmatprep.subr.bf16.mxu0 0
  %2257 = vmatpush1.bf16.msra.mxu0 %v2247
  %2258 = vmatprep.subr.bf16.mxu0 0
  %2259 = vmatpush1.bf16.msra.mxu0 %v2246
  %2260 = vmatprep.subr.bf16.mxu0 0
  %2261 = vmatpush1.bf16.msra.mxu0 %v2245
  %2262 = vmatprep.subr.bf16.mxu0 0
  %2263 = vmatpush1.bf16.msra.mxu0 %v2244
  %2264 = vmatprep.subr.bf16.mxu0 0
  %2265 = vmatpush1.bf16.msra.mxu0 %v2243
  %2266 = vmatprep.subr.bf16.mxu0 0
  %2267 = vmatpush1.bf16.msra.mxu0 %v2242
  %2268 = vmatprep.subr.bf16.mxu0 0
  %2269 = vmatpush1.bf16.msra.mxu0 %v2241
  %2270 = vmatprep.subr.bf16.mxu0 0
  %2271 = vmatpush1.bf16.msra.mxu0 %v2240
  %2272 = vmatprep.subr.bf16.mxu0 0
  %2273 = vmatpush2.bf16.msra.mxu0 0
  %2274 = vmatprep.subr.bf16.mxu0 0
  %2275 = vmatpush2.bf16.msra.mxu0 0
  %2276 = vmatprep.subr.bf16.mxu0 0
  %2277 = vmatpush2.bf16.msra.mxu0 0
  %2278 = vmatprep.subr.bf16.mxu0 0
  %2279 = vmatpush2.bf16.msra.mxu0 0
  %2280 = vmatprep.subr.bf16.mxu0 0
  %2281 = vmatpush2.bf16.msra.mxu0 0
  %2282 = vmatprep.subr.bf16.mxu0 0
  %2283 = vmatpush2.bf16.msra.mxu0 0
  %2284 = vmatprep.subr.bf16.mxu0 0
  %2285 = vmatpush2.bf16.msra.mxu0 0
  %2286 = vmatprep.subr.bf16.mxu0 0
  %2287 = vmatpush2.bf16.msra.mxu0 0
  %2288 = vmatprep.mubr.bf16.mxu0 0
  %2289 = vmatmul.mubr.bf16.gmra.mxu0 %v271
  %v2290 = vpop.f32.mrf.mxu0
  %v2291 = vadd.f32 0.0, %v2290
  %v2292 = vpop.f32.mrf.mxu0
  %v2293 = vpop.f32.mrf.mxu0
  %v2294 = vadd.f32 0.0, %v2293
  %v2295 = vpop.f32.mrf.mxu0
  %2296 = vmatprep.mubr.bf16.mxu0 0
  %2297 = vmatmul.mubr.bf16.gmra.mxu0 %v272
  %v2298 = vpop.f32.mrf.mxu0
  %v2299 = vadd.f32 0.0, %v2298
  %v2300 = vpop.f32.mrf.mxu0
  %v2301 = vpop.f32.mrf.mxu0
  %v2302 = vadd.f32 0.0, %v2301
  %v2303 = vpop.f32.mrf.mxu0
  %2304 = vmatprep.mubr.bf16.mxu0 0
  %2305 = vmatmul.mubr.bf16.gmra.mxu0 %v273
  %v2306 = vpop.f32.mrf.mxu0
  %v2307 = vadd.f32 0.0, %v2306
  %v2308 = vpop.f32.mrf.mxu0
  %v2309 = vpop.f32.mrf.mxu0
  %v2310 = vadd.f32 0.0, %v2309
  %v2311 = vpop.f32.mrf.mxu0
  %2312 = vmatprep.mubr.bf16.mxu0 0
  %2313 = vmatmul.mubr.bf16.gmra.mxu0 %v274
  %v2314 = vpop.f32.mrf.mxu0
  %v2315 = vadd.f32 0.0, %v2314
  %v2316 = vpop.f32.mrf.mxu0
  %v2317 = vpop.f32.mrf.mxu0
  %v2318 = vadd.f32 0.0, %v2317
  %v2319 = vpop.f32.mrf.mxu0
  %2320 = vmatprep.mubr.bf16.mxu0 0
  %2321 = vmatmul.mubr.bf16.gmra.mxu0 %v275
  %v2322 = vpop.f32.mrf.mxu0
  %v2323 = vadd.f32 0.0, %v2322
  %v2324 = vpop.f32.mrf.mxu0
  %v2325 = vpop.f32.mrf.mxu0
  %v2326 = vadd.f32 0.0, %v2325
  %v2327 = vpop.f32.mrf.mxu0
  %2328 = vmatprep.mubr.bf16.mxu0 0
  %2329 = vmatmul.mubr.bf16.gmra.mxu0 %v276
  %v2330 = vpop.f32.mrf.mxu0
  %v2331 = vadd.f32 0.0, %v2330
  %v2332 = vpop.f32.mrf.mxu0
  %v2333 = vpop.f32.mrf.mxu0
  %v2334 = vadd.f32 0.0, %v2333
  %v2335 = vpop.f32.mrf.mxu0
  %2336 = vmatprep.mubr.bf16.mxu0 0
  %2337 = vmatmul.mubr.bf16.gmra.mxu0 %v277
  %v2338 = vpop.f32.mrf.mxu0
  %v2339 = vadd.f32 0.0, %v2338
  %v2340 = vpop.f32.mrf.mxu0
  %v2341 = vpop.f32.mrf.mxu0
  %v2342 = vadd.f32 0.0, %v2341
  %v2343 = vpop.f32.mrf.mxu0
  %2344 = vmatprep.mubr.bf16.mxu0 0
  %2345 = vmatmul.mubr.bf16.gmra.mxu0 %v278
  %v2346 = vpop.f32.mrf.mxu0
  %v2347 = vadd.f32 0.0, %v2346
  %v2348 = vpop.f32.mrf.mxu0
  %v2349 = vpop.f32.mrf.mxu0
  %v2350 = vadd.f32 0.0, %v2349
  %v2351 = vpop.f32.mrf.mxu0
  %2352 = vmatprep.mubr.bf16.mxu0 0
  %2353 = vmatmul.mubr.bf16.gmra.mxu0 %v279
  %v2354 = vpop.f32.mrf.mxu0
  %v2355 = vadd.f32 0.0, %v2354
  %v2356 = vpop.f32.mrf.mxu0
  %v2357 = vpop.f32.mrf.mxu0
  %v2358 = vadd.f32 0.0, %v2357
  %v2359 = vpop.f32.mrf.mxu0
  %2360 = vmatprep.mubr.bf16.mxu0 0
  %2361 = vmatmul.mubr.bf16.gmra.mxu0 %v280
  %v2362 = vpop.f32.mrf.mxu0
  %v2363 = vadd.f32 0.0, %v2362
  %v2364 = vpop.f32.mrf.mxu0
  %v2365 = vpop.f32.mrf.mxu0
  %v2366 = vadd.f32 0.0, %v2365
  %v2367 = vpop.f32.mrf.mxu0
  %2368 = vmatprep.mubr.bf16.mxu0 0
  %2369 = vmatmul.mubr.bf16.gmra.mxu0 %v281
  %v2370 = vpop.f32.mrf.mxu0
  %v2371 = vadd.f32 0.0, %v2370
  %v2372 = vpop.f32.mrf.mxu0
  %v2373 = vpop.f32.mrf.mxu0
  %v2374 = vadd.f32 0.0, %v2373
  %v2375 = vpop.f32.mrf.mxu0
  %2376 = vmatprep.mubr.bf16.mxu0 0
  %2377 = vmatmul.mubr.bf16.gmra.mxu0 %v282
  %v2378 = vpop.f32.mrf.mxu0
  %v2379 = vadd.f32 0.0, %v2378
  %v2380 = vpop.f32.mrf.mxu0
  %v2381 = vpop.f32.mrf.mxu0
  %v2382 = vadd.f32 0.0, %v2381
  %v2383 = vpop.f32.mrf.mxu0
  %2384 = vmatprep.mubr.bf16.mxu0 0
  %2385 = vmatmul.mubr.bf16.gmra.mxu0 %v283
  %v2386 = vpop.f32.mrf.mxu0
  %v2387 = vadd.f32 0.0, %v2386
  %v2388 = vpop.f32.mrf.mxu0
  %v2389 = vpop.f32.mrf.mxu0
  %v2390 = vadd.f32 0.0, %v2389
  %v2391 = vpop.f32.mrf.mxu0
  %2392 = vmatprep.mubr.bf16.mxu0 0
  %2393 = vmatmul.mubr.bf16.gmra.mxu0 %v284
  %v2394 = vpop.f32.mrf.mxu0
  %v2395 = vadd.f32 0.0, %v2394
  %v2396 = vpop.f32.mrf.mxu0
  %v2397 = vpop.f32.mrf.mxu0
  %v2398 = vadd.f32 0.0, %v2397
  %v2399 = vpop.f32.mrf.mxu0
  %2400 = vmatprep.mubr.bf16.mxu0 0
  %2401 = vmatmul.mubr.bf16.gmra.mxu0 %v285
  %v2402 = vpop.f32.mrf.mxu0
  %v2403 = vadd.f32 0.0, %v2402
  %v2404 = vpop.f32.mrf.mxu0
  %v2405 = vpop.f32.mrf.mxu0
  %v2406 = vadd.f32 0.0, %v2405
  %v2407 = vpop.f32.mrf.mxu0
  %2408 = vmatprep.mubr.bf16.mxu0 0
  %2409 = vmatmul.mubr.bf16.gmra.mxu0 %v286
  %v2410 = vpop.f32.mrf.mxu0
  %v2411 = vadd.f32 0.0, %v2410
  %v2412 = vpop.f32.mrf.mxu0
  %v2413 = vpop.f32.mrf.mxu0
  %v2414 = vadd.f32 0.0, %v2413
  %v2415 = vpop.f32.mrf.mxu0
  %2416 = vmatprep.mubr.bf16.mxu0 0
  %2417 = vmatmul.mubr.bf16.gmra.mxu0 %v287
  %v2418 = vpop.f32.mrf.mxu0
  %v2419 = vadd.f32 0.0, %v2418
  %v2420 = vpop.f32.mrf.mxu0
  %v2421 = vpop.f32.mrf.mxu0
  %v2422 = vadd.f32 0.0, %v2421
  %v2423 = vpop.f32.mrf.mxu0
  %2424 = vmatprep.mubr.bf16.mxu0 0
  %2425 = vmatmul.mubr.bf16.gmra.mxu0 %v288
  %v2426 = vpop.f32.mrf.mxu0
  %v2427 = vadd.f32 0.0, %v2426
  %v2428 = vpop.f32.mrf.mxu0
  %v2429 = vpop.f32.mrf.mxu0
  %v2430 = vadd.f32 0.0, %v2429
  %v2431 = vpop.f32.mrf.mxu0
  %2432 = vmatprep.mubr.bf16.mxu0 0
  %2433 = vmatmul.mubr.bf16.gmra.mxu0 %v289
  %v2434 = vpop.f32.mrf.mxu0
  %v2435 = vadd.f32 0.0, %v2434
  %v2436 = vpop.f32.mrf.mxu0
  %v2437 = vpop.f32.mrf.mxu0
  %v2438 = vadd.f32 0.0, %v2437
  %v2439 = vpop.f32.mrf.mxu0
  %2440 = vmatprep.mubr.bf16.mxu0 0
  %2441 = vmatmul.mubr.bf16.gmra.mxu0 %v290
  %v2442 = vpop.f32.mrf.mxu0
  %v2443 = vadd.f32 0.0, %v2442
  %v2444 = vpop.f32.mrf.mxu0
  %v2445 = vpop.f32.mrf.mxu0
  %v2446 = vadd.f32 0.0, %v2445
  %v2447 = vpop.f32.mrf.mxu0
  %2448 = vmatprep.mubr.bf16.mxu0 0
  %2449 = vmatmul.mubr.bf16.gmra.mxu0 %v291
  %v2450 = vpop.f32.mrf.mxu0
  %v2451 = vadd.f32 0.0, %v2450
  %v2452 = vpop.f32.mrf.mxu0
  %v2453 = vpop.f32.mrf.mxu0
  %v2454 = vadd.f32 0.0, %v2453
  %v2455 = vpop.f32.mrf.mxu0
  %2456 = vmatprep.mubr.bf16.mxu0 0
  %2457 = vmatmul.mubr.bf16.gmra.mxu0 %v292
  %v2458 = vpop.f32.mrf.mxu0
  %v2459 = vadd.f32 0.0, %v2458
  %v2460 = vpop.f32.mrf.mxu0
  %v2461 = vpop.f32.mrf.mxu0
  %v2462 = vadd.f32 0.0, %v2461
  %v2463 = vpop.f32.mrf.mxu0
  %2464 = vmatprep.mubr.bf16.mxu0 0
  %2465 = vmatmul.mubr.bf16.gmra.mxu0 %v293
  %v2466 = vpop.f32.mrf.mxu0
  %v2467 = vadd.f32 0.0, %v2466
  %v2468 = vpop.f32.mrf.mxu0
  %v2469 = vpop.f32.mrf.mxu0
  %v2470 = vadd.f32 0.0, %v2469
  %v2471 = vpop.f32.mrf.mxu0
  %2472 = vmatprep.mubr.bf16.mxu0 0
  %2473 = vmatmul.mubr.bf16.gmra.mxu0 %v294
  %v2474 = vpop.f32.mrf.mxu0
  %v2475 = vadd.f32 0.0, %v2474
  %v2476 = vpop.f32.mrf.mxu0
  %v2477 = vpop.f32.mrf.mxu0
  %v2478 = vadd.f32 0.0, %v2477
  %v2479 = vpop.f32.mrf.mxu0
  %2480 = vmatprep.mubr.bf16.mxu0 0
  %2481 = vmatmul.mubr.bf16.gmra.mxu0 %v295
  %v2482 = vpop.f32.mrf.mxu0
  %v2483 = vadd.f32 0.0, %v2482
  %v2484 = vpop.f32.mrf.mxu0
  %v2485 = vpop.f32.mrf.mxu0
  %v2486 = vadd.f32 0.0, %v2485
  %v2487 = vpop.f32.mrf.mxu0
  %2488 = vmatprep.mubr.bf16.mxu0 0
  %2489 = vmatmul.mubr.bf16.gmra.mxu0 %v296
  %v2490 = vpop.f32.mrf.mxu0
  %v2491 = vadd.f32 0.0, %v2490
  %v2492 = vpop.f32.mrf.mxu0
  %v2493 = vpop.f32.mrf.mxu0
  %v2494 = vadd.f32 0.0, %v2493
  %v2495 = vpop.f32.mrf.mxu0
  %2496 = vmatprep.mubr.bf16.mxu0 0
  %2497 = vmatmul.mubr.bf16.gmra.mxu0 %v297
  %v2498 = vpop.f32.mrf.mxu0
  %v2499 = vadd.f32 0.0, %v2498
  %v2500 = vpop.f32.mrf.mxu0
  %v2501 = vpop.f32.mrf.mxu0
  %v2502 = vadd.f32 0.0, %v2501
  %v2503 = vpop.f32.mrf.mxu0
  %2504 = vmatprep.mubr.bf16.mxu0 0
  %2505 = vmatmul.mubr.bf16.gmra.mxu0 %v298
  %v2506 = vpop.f32.mrf.mxu0
  %v2507 = vadd.f32 0.0, %v2506
  %v2508 = vpop.f32.mrf.mxu0
  %v2509 = vpop.f32.mrf.mxu0
  %v2510 = vadd.f32 0.0, %v2509
  %v2511 = vpop.f32.mrf.mxu0
  %2512 = vmatprep.mubr.bf16.mxu0 0
  %2513 = vmatmul.mubr.bf16.gmra.mxu0 %v299
  %v2514 = vpop.f32.mrf.mxu0
  %v2515 = vadd.f32 0.0, %v2514
  %v2516 = vpop.f32.mrf.mxu0
  %v2517 = vpop.f32.mrf.mxu0
  %v2518 = vadd.f32 0.0, %v2517
  %v2519 = vpop.f32.mrf.mxu0
  %2520 = vmatprep.mubr.bf16.mxu0 0
  %2521 = vmatmul.mubr.bf16.gmra.mxu0 %v300
  %v2522 = vpop.f32.mrf.mxu0
  %v2523 = vadd.f32 0.0, %v2522
  %v2524 = vpop.f32.mrf.mxu0
  %v2525 = vpop.f32.mrf.mxu0
  %v2526 = vadd.f32 0.0, %v2525
  %v2527 = vpop.f32.mrf.mxu0
  %2528 = vmatprep.mubr.bf16.mxu0 0
  %2529 = vmatmul.mubr.bf16.gmra.mxu0 %v301
  %v2530 = vpop.f32.mrf.mxu0
  %v2531 = vadd.f32 0.0, %v2530
  %v2532 = vpop.f32.mrf.mxu0
  %v2533 = vpop.f32.mrf.mxu0
  %v2534 = vadd.f32 0.0, %v2533
  %v2535 = vpop.f32.mrf.mxu0
  %2536 = vmatprep.mubr.bf16.mxu0 0
  %2537 = vmatmul.mubr.bf16.gmra.mxu0 %v1058
  %v2538 = vpop.f32.mrf.mxu0
  %v2539 = vadd.f32 0.0, %v2538
  %v2540 = vpop.f32.mrf.mxu0
  %v2541 = vpop.f32.mrf.mxu0
  %v2542 = vadd.f32 0.0, %v2541
  %v2543 = vpop.f32.mrf.mxu0
  %2544 = vmatprep.mubr.bf16.mxu0 0
  %2545 = vmatmul.mubr.bf16.gmra.mxu0 %v1059
  %v2546 = vpop.f32.mrf.mxu0
  %v2547 = vadd.f32 0.0, %v2546
  %v2548 = vpop.f32.mrf.mxu0
  %v2549 = vpop.f32.mrf.mxu0
  %v2550 = vpop.f32.mrf.mxu0
  %2551 = vdwg.mxu0
  %v2552 = vadd.f32 %v1930, %v2291
  %v2553 = vadd.f32 %v1933, %v2294
  %v2554 = vadd.f32 %v1938, %v2299
  %v2555 = vadd.f32 %v1941, %v2302
  %v2556 = vadd.f32 %v1946, %v2307
  %v2557 = vadd.f32 %v1949, %v2310
  %v2558 = vadd.f32 %v1954, %v2315
  %v2559 = vadd.f32 %v1957, %v2318
  %v2560 = vadd.f32 %v1962, %v2323
  %v2561 = vadd.f32 %v1965, %v2326
  %v2562 = vadd.f32 %v1970, %v2331
  %v2563 = vadd.f32 %v1973, %v2334
  %v2564 = vadd.f32 %v1978, %v2339
  %v2565 = vadd.f32 %v1981, %v2342
  %v2566 = vadd.f32 %v1986, %v2347
  %v2567 = vadd.f32 %v1989, %v2350
  %v2568 = vadd.f32 %v1994, %v2355
  %v2569 = vadd.f32 %v1997, %v2358
  %v2570 = vadd.f32 %v2002, %v2363
  %v2571 = vadd.f32 %v2005, %v2366
  %v2572 = vadd.f32 %v2010, %v2371
  %v2573 = vadd.f32 %v2013, %v2374
  %v2574 = vadd.f32 %v2018, %v2379
  %v2575 = vadd.f32 %v2021, %v2382
  %v2576 = vadd.f32 %v2026, %v2387
  %v2577 = vadd.f32 %v2029, %v2390
  %v2578 = vadd.f32 %v2034, %v2395
  %v2579 = vadd.f32 %v2037, %v2398
  %v2580 = vadd.f32 %v2042, %v2403
  %v2581 = vadd.f32 %v2045, %v2406
  %v2582 = vadd.f32 %v2050, %v2411
  %v2583 = vadd.f32 %v2053, %v2414
  %v2584 = vadd.f32 %v2058, %v2419
  %v2585 = vadd.f32 %v2061, %v2422
  %v2586 = vadd.f32 %v2066, %v2427
  %v2587 = vadd.f32 %v2069, %v2430
  %v2588 = vadd.f32 %v2074, %v2435
  %v2589 = vadd.f32 %v2077, %v2438
  %v2590 = vadd.f32 %v2082, %v2443
  %v2591 = vadd.f32 %v2085, %v2446
  %v2592 = vadd.f32 %v2090, %v2451
  %v2593 = vadd.f32 %v2093, %v2454
  %v2594 = vadd.f32 %v2098, %v2459
  %v2595 = vadd.f32 %v2101, %v2462
  %v2596 = vadd.f32 %v2106, %v2467
  %v2597 = vadd.f32 %v2109, %v2470
  %v2598 = vadd.f32 %v2114, %v2475
  %v2599 = vadd.f32 %v2117, %v2478
  %v2600 = vadd.f32 %v2122, %v2483
  %v2601 = vadd.f32 %v2125, %v2486
  %v2602 = vadd.f32 %v2130, %v2491
  %v2603 = vadd.f32 %v2133, %v2494
  %v2604 = vadd.f32 %v2138, %v2499
  %v2605 = vadd.f32 %v2141, %v2502
  %v2606 = vadd.f32 %v2146, %v2507
  %v2607 = vadd.f32 %v2149, %v2510
  %v2608 = vadd.f32 %v2154, %v2515
  %v2609 = vadd.f32 %v2157, %v2518
  %v2610 = vadd.f32 %v2162, %v2523
  %v2611 = vadd.f32 %v2165, %v2526
  %v2612 = vadd.f32 %v2170, %v2531
  %v2613 = vadd.f32 %v2173, %v2534
  %v2614 = vadd.f32 %v2178, %v2539
  %v2615 = vadd.f32 %v2181, %v2542
  %v2616 = vadd.f32 %v2186, %v2547
  %v2617 = vrot.slane %v2552, 1
  %v2618 = vrot.slane %v2553, 1
  %v2619 = vrot.slane %v2554, 1
  %v2620 = vrot.slane %v2555, 1
  %v2621 = vrot.slane %v2556, 1
  %v2622 = vrot.slane %v2557, 1
  %v2623 = vrot.slane %v2558, 1
  %v2624 = vrot.slane %v2559, 1
  %v2625 = vrot.slane %v2560, 1
  %v2626 = vrot.slane %v2561, 1
  %v2627 = vrot.slane %v2562, 1
  %v2628 = vrot.slane %v2563, 1
  %v2629 = vrot.slane %v2564, 1
  %v2630 = vrot.slane %v2565, 1
  %v2631 = vrot.slane %v2566, 1
  %v2632 = vrot.slane %v2567, 1
  %v2633 = vrot.slane %v2568, 1
  %v2634 = vrot.slane %v2569, 1
  %v2635 = vrot.slane %v2570, 1
  %v2636 = vrot.slane %v2571, 1
  %v2637 = vrot.slane %v2572, 1
  %v2638 = vrot.slane %v2573, 1
  %v2639 = vrot.slane %v2574, 1
  %v2640 = vrot.slane %v2575, 1
  %v2641 = vrot.slane %v2576, 1
  %v2642 = vrot.slane %v2577, 1
  %v2643 = vrot.slane %v2578, 1
  %v2644 = vrot.slane %v2579, 1
  %v2645 = vrot.slane %v2580, 1
  %v2646 = vrot.slane %v2581, 1
  %v2647 = vrot.slane %v2582, 1
  %v2648 = vrot.slane %v2583, 1
  %v2649 = vrot.slane %v2584, 1
  %v2650 = vrot.slane %v2585, 1
  %v2651 = vrot.slane %v2586, 1
  %v2652 = vrot.slane %v2587, 1
  %v2653 = vrot.slane %v2588, 1
  %v2654 = vrot.slane %v2589, 1
  %v2655 = vrot.slane %v2590, 1
  %v2656 = vrot.slane %v2591, 1
  %v2657 = vrot.slane %v2592, 1
  %v2658 = vrot.slane %v2593, 1
  %v2659 = vrot.slane %v2594, 1
  %v2660 = vrot.slane %v2595, 1
  %v2661 = vrot.slane %v2596, 1
  %v2662 = vrot.slane %v2597, 1
  %v2663 = vrot.slane %v2598, 1
  %v2664 = vrot.slane %v2599, 1
  %v2665 = vrot.slane %v2600, 1
  %v2666 = vrot.slane %v2601, 1
  %v2667 = vrot.slane %v2602, 1
  %v2668 = vrot.slane %v2603, 1
  %v2669 = vrot.slane %v2604, 1
  %v2670 = vrot.slane %v2605, 1
  %v2671 = vrot.slane %v2606, 1
  %v2672 = vrot.slane %v2607, 1
  %v2673 = vrot.slane %v2608, 1
  %v2674 = vrot.slane %v2609, 1
  %v2675 = vrot.slane %v2610, 1
  %v2676 = vrot.slane %v2611, 1
  %v2677 = vrot.slane %v2612, 1
  %v2678 = vrot.slane %v2613, 1
  %v2679 = vrot.slane %v2614, 1
  %v2680 = vrot.slane %v2615, 1
  %v2681 = vrot.slane %v2616, 1
  %v2682 = vlaneseq
  %v2683 = vshrl.u32 %v2682, 7
  %vm2684 = vcmp.lt.s32.totalorder %v2683, 7
  %v2685 = vsel %vm2684, %v2680, %v2681
  %v2686 = vsel %vm2684, %v2679, %v2680
  %v2687 = vsel %vm2684, %v2678, %v2679
  %v2688 = vsel %vm2684, %v2677, %v2678
  %v2689 = vsel %vm2684, %v2676, %v2677
  %v2690 = vsel %vm2684, %v2675, %v2676
  %v2691 = vsel %vm2684, %v2674, %v2675
  %v2692 = vsel %vm2684, %v2673, %v2674
  %v2693 = vsel %vm2684, %v2672, %v2673
  %v2694 = vsel %vm2684, %v2671, %v2672
  %v2695 = vsel %vm2684, %v2670, %v2671
  %v2696 = vsel %vm2684, %v2669, %v2670
  %v2697 = vsel %vm2684, %v2668, %v2669
  %v2698 = vsel %vm2684, %v2667, %v2668
  %v2699 = vsel %vm2684, %v2666, %v2667
  %v2700 = vsel %vm2684, %v2665, %v2666
  %v2701 = vsel %vm2684, %v2664, %v2665
  %v2702 = vsel %vm2684, %v2663, %v2664
  %v2703 = vsel %vm2684, %v2662, %v2663
  %v2704 = vsel %vm2684, %v2661, %v2662
  %v2705 = vsel %vm2684, %v2660, %v2661
  %v2706 = vsel %vm2684, %v2659, %v2660
  %v2707 = vsel %vm2684, %v2658, %v2659
  %v2708 = vsel %vm2684, %v2657, %v2658
  %v2709 = vsel %vm2684, %v2656, %v2657
  %v2710 = vsel %vm2684, %v2655, %v2656
  %v2711 = vsel %vm2684, %v2654, %v2655
  %v2712 = vsel %vm2684, %v2653, %v2654
  %v2713 = vsel %vm2684, %v2652, %v2653
  %v2714 = vsel %vm2684, %v2651, %v2652
  %v2715 = vsel %vm2684, %v2650, %v2651
  %v2716 = vsel %vm2684, %v2649, %v2650
  %v2717 = vsel %vm2684, %v2648, %v2649
  %v2718 = vsel %vm2684, %v2647, %v2648
  %v2719 = vsel %vm2684, %v2646, %v2647
  %v2720 = vsel %vm2684, %v2645, %v2646
  %v2721 = vsel %vm2684, %v2644, %v2645
  %v2722 = vsel %vm2684, %v2643, %v2644
  %v2723 = vsel %vm2684, %v2642, %v2643
  %v2724 = vsel %vm2684, %v2641, %v2642
  %v2725 = vsel %vm2684, %v2640, %v2641
  %v2726 = vsel %vm2684, %v2639, %v2640
  %v2727 = vsel %vm2684, %v2638, %v2639
  %v2728 = vsel %vm2684, %v2637, %v2638
  %v2729 = vsel %vm2684, %v2636, %v2637
  %v2730 = vsel %vm2684, %v2635, %v2636
  %v2731 = vsel %vm2684, %v2634, %v2635
  %v2732 = vsel %vm2684, %v2633, %v2634
  %v2733 = vsel %vm2684, %v2632, %v2633
  %v2734 = vsel %vm2684, %v2631, %v2632
  %v2735 = vsel %vm2684, %v2630, %v2631
  %v2736 = vsel %vm2684, %v2629, %v2630
  %v2737 = vsel %vm2684, %v2628, %v2629
  %v2738 = vsel %vm2684, %v2627, %v2628
  %v2739 = vsel %vm2684, %v2626, %v2627
  %v2740 = vsel %vm2684, %v2625, %v2626
  %v2741 = vsel %vm2684, %v2624, %v2625
  %v2742 = vsel %vm2684, %v2623, %v2624
  %v2743 = vsel %vm2684, %v2622, %v2623
  %v2744 = vsel %vm2684, %v2621, %v2622
  %v2745 = vsel %vm2684, %v2620, %v2621
  %v2746 = vsel %vm2684, %v2619, %v2620
  %v2747 = vsel %vm2684, %v2618, %v2619
  %v2748 = vsel %vm2684, %v2617, %v2618
  %v2749 = vadd.f32 %v1405, %v2748
  %v2750 = vadd.f32 %v1406, %v2747
  %v2751 = vadd.f32 %v1407, %v2746
  %v2752 = vadd.f32 %v1408, %v2745
  %v2753 = vadd.f32 %v1409, %v2744
  %v2754 = vadd.f32 %v1410, %v2743
  %v2755 = vadd.f32 %v1411, %v2742
  %v2756 = vadd.f32 %v1412, %v2741
  %v2757 = vadd.f32 %v1413, %v2740
  %v2758 = vadd.f32 %v1414, %v2739
  %v2759 = vadd.f32 %v1415, %v2738
  %v2760 = vadd.f32 %v1416, %v2737
  %v2761 = vadd.f32 %v1417, %v2736
  %v2762 = vadd.f32 %v1418, %v2735
  %v2763 = vadd.f32 %v1419, %v2734
  %v2764 = vadd.f32 %v1420, %v2733
  %v2765 = vadd.f32 %v1421, %v2732
  %v2766 = vadd.f32 %v1422, %v2731
  %v2767 = vadd.f32 %v1423, %v2730
  %v2768 = vadd.f32 %v1424, %v2729
  %v2769 = vadd.f32 %v1425, %v2728
  %v2770 = vadd.f32 %v1426, %v2727
  %v2771 = vadd.f32 %v1427, %v2726
  %v2772 = vadd.f32 %v1428, %v2725
  %v2773 = vadd.f32 %v1429, %v2724
  %v2774 = vadd.f32 %v1430, %v2723
  %v2775 = vadd.f32 %v1431, %v2722
  %v2776 = vadd.f32 %v1432, %v2721
  %v2777 = vadd.f32 %v1433, %v2720
  %v2778 = vadd.f32 %v1434, %v2719
  %v2779 = vadd.f32 %v1435, %v2718
  %v2780 = vadd.f32 %v1436, %v2717
  %v2781 = vadd.f32 %v1437, %v2716
  %v2782 = vadd.f32 %v1438, %v2715
  %v2783 = vadd.f32 %v1439, %v2714
  %v2784 = vadd.f32 %v1440, %v2713
  %v2785 = vadd.f32 %v1441, %v2712
  %v2786 = vadd.f32 %v1442, %v2711
  %v2787 = vadd.f32 %v1443, %v2710
  %v2788 = vadd.f32 %v1444, %v2709
  %v2789 = vadd.f32 %v1445, %v2708
  %v2790 = vadd.f32 %v1446, %v2707
  %v2791 = vadd.f32 %v1447, %v2706
  %v2792 = vadd.f32 %v1448, %v2705
  %v2793 = vadd.f32 %v1449, %v2704
  %v2794 = vadd.f32 %v1450, %v2703
  %v2795 = vadd.f32 %v1451, %v2702
  %v2796 = vadd.f32 %v1452, %v2701
  %v2797 = vadd.f32 %v1453, %v2700
  %v2798 = vadd.f32 %v1454, %v2699
  %v2799 = vadd.f32 %v1455, %v2698
  %v2800 = vadd.f32 %v1456, %v2697
  %v2801 = vadd.f32 %v1457, %v2696
  %v2802 = vadd.f32 %v1458, %v2695
  %v2803 = vadd.f32 %v1459, %v2694
  %v2804 = vadd.f32 %v1460, %v2693
  %v2805 = vadd.f32 %v1461, %v2692
  %v2806 = vadd.f32 %v1462, %v2691
  %v2807 = vadd.f32 %v1463, %v2690
  %v2808 = vadd.f32 %v1464, %v2689
  %v2809 = vadd.f32 %v1465, %v2688
  %v2810 = vadd.f32 %v1466, %v2687
  %v2811 = vadd.f32 %v1467, %v2686
  %v2812 = vadd.f32 %v1468, %v2685
  %s2813 = scalar_lea.vmem %s2, 128
  %v2814 = vld [vmem:[%s2813] sm:$0xf]
  %v2815 = vld [vmem:[%s2813 + $0x4] sm:$0xf]
  %v2816 = vld [vmem:[%s2813 + $0x8] sm:$0xf]
  %v2817 = vld [vmem:[%s2813 + $0xc] sm:$0xf]
  %v2818 = vld [vmem:[%s2813 + $0x10] sm:$0xf]
  %v2819 = vld [vmem:[%s2813 + $0x14] sm:$0xf]
  %v2820 = vld [vmem:[%s2813 + $0x18] sm:$0xf]
  %v2821 = vld [vmem:[%s2813 + $0x1c] sm:$0xf]
  %v2822 = vld [vmem:[%s2813 + $0x20] sm:$0xf]
  %v2823 = vld [vmem:[%s2813 + $0x24] sm:$0xf]
  %v2824 = vld [vmem:[%s2813 + $0x28] sm:$0xf]
  %v2825 = vld [vmem:[%s2813 + $0x2c] sm:$0xf]
  %v2826 = vld [vmem:[%s2813 + $0x30] sm:$0xf]
  %v2827 = vld [vmem:[%s2813 + $0x34] sm:$0xf]
  %v2828 = vld [vmem:[%s2813 + $0x38] sm:$0xf]
  %v2829 = vld [vmem:[%s2813 + $0x3c] sm:$0xf]
  %s2830 = scalar_lea.vmem %s2, 320
  %v2831 = vld [vmem:[%s2830] sm:$0xf]
  %v2832 = vld [vmem:[%s2830 + $0x4] sm:$0xf]
  %v2833 = vld [vmem:[%s2830 + $0x8] sm:$0xf]
  %v2834 = vld [vmem:[%s2830 + $0xc] sm:$0xf]
  %v2835 = vld [vmem:[%s2830 + $0x10] sm:$0xf]
  %v2836 = vld [vmem:[%s2830 + $0x14] sm:$0xf]
  %v2837 = vld [vmem:[%s2830 + $0x18] sm:$0xf]
  %v2838 = vld [vmem:[%s2830 + $0x1c] sm:$0xf]
  %v2839 = vld [vmem:[%s2830 + $0x20] sm:$0xf]
  %v2840 = vld [vmem:[%s2830 + $0x24] sm:$0xf]
  %v2841 = vld [vmem:[%s2830 + $0x28] sm:$0xf]
  %v2842 = vld [vmem:[%s2830 + $0x2c] sm:$0xf]
  %v2843 = vld [vmem:[%s2830 + $0x30] sm:$0xf]
  %v2844 = vld [vmem:[%s2830 + $0x34] sm:$0xf]
  %v2845 = vld [vmem:[%s2830 + $0x38] sm:$0xf]
  %v2846 = vld [vmem:[%s2830 + $0x3c] sm:$0xf]
  %v2863 = vunpack.c.l.b16 %v2831
  %v2864 = vunpack.c.l.b16 %v2832
  %v2865 = vunpack.c.l.b16 %v2833
  %v2866 = vunpack.c.l.b16 %v2834
  %v2867 = vunpack.c.l.b16 %v2835
  %v2868 = vunpack.c.l.b16 %v2836
  %v2869 = vunpack.c.l.b16 %v2837
  %v2870 = vunpack.c.l.b16 %v2838
  %v2871 = vunpack.c.l.b16 %v2839
  %v2872 = vunpack.c.l.b16 %v2840
  %v2873 = vunpack.c.l.b16 %v2841
  %v2874 = vunpack.c.l.b16 %v2842
  %v2875 = vunpack.c.l.b16 %v2843
  %v2876 = vunpack.c.l.b16 %v2844
  %v2877 = vunpack.c.l.b16 %v2845
  %v2878 = vunpack.c.l.b16 %v2846
  %v2879 = vpack.c.b16 %v2864, %v2863
  %v2880 = vpack.c.b16 %v2866, %v2865
  %v2881 = vpack.c.b16 %v2868, %v2867
  %v2882 = vpack.c.b16 %v2870, %v2869
  %v2883 = vpack.c.b16 %v2872, %v2871
  %v2884 = vpack.c.b16 %v2874, %v2873
  %v2885 = vpack.c.b16 %v2876, %v2875
  %v2886 = vpack.c.b16 %v2878, %v2877
  %2895 = vmatprep.subr.bf16.mxu0 0
  %2896 = vmatpush1.bf16.msra.mxu0 %v2886
  %2897 = vmatprep.subr.bf16.mxu0 0
  %2898 = vmatpush1.bf16.msra.mxu0 %v2885
  %2899 = vmatprep.subr.bf16.mxu0 0
  %2900 = vmatpush1.bf16.msra.mxu0 %v2884
  %2901 = vmatprep.subr.bf16.mxu0 0
  %2902 = vmatpush1.bf16.msra.mxu0 %v2883
  %2903 = vmatprep.subr.bf16.mxu0 0
  %2904 = vmatpush1.bf16.msra.mxu0 %v2882
  %2905 = vmatprep.subr.bf16.mxu0 0
  %2906 = vmatpush1.bf16.msra.mxu0 %v2881
  %2907 = vmatprep.subr.bf16.mxu0 0
  %2908 = vmatpush1.bf16.msra.mxu0 %v2880
  %2909 = vmatprep.subr.bf16.mxu0 0
  %2910 = vmatpush1.bf16.msra.mxu0 %v2879
  %2911 = vmatprep.subr.bf16.mxu0 0
  %2912 = vmatpush2.bf16.msra.mxu0 0
  %2913 = vmatprep.subr.bf16.mxu0 0
  %2914 = vmatpush2.bf16.msra.mxu0 0
  %2915 = vmatprep.subr.bf16.mxu0 0
  %2916 = vmatpush2.bf16.msra.mxu0 0
  %2917 = vmatprep.subr.bf16.mxu0 0
  %2918 = vmatpush2.bf16.msra.mxu0 0
  %2919 = vmatprep.subr.bf16.mxu0 0
  %2920 = vmatpush2.bf16.msra.mxu0 0
  %2921 = vmatprep.subr.bf16.mxu0 0
  %2922 = vmatpush2.bf16.msra.mxu0 0
  %2923 = vmatprep.subr.bf16.mxu0 0
  %2924 = vmatpush2.bf16.msra.mxu0 0
  %2925 = vmatprep.subr.bf16.mxu0 0
  %2926 = vmatpush2.bf16.msra.mxu0 0
  %2927 = vmatprep.mubr.bf16.mxu0 0
  %2928 = vmatmul.mubr.bf16.gmra.mxu0 %v269
  %v2929 = vpop.f32.mrf.mxu0
  %v2930 = vadd.f32 0.0, %v2929
  %v2931 = vpop.f32.mrf.mxu0
  %v2932 = vpop.f32.mrf.mxu0
  %v2933 = vadd.f32 0.0, %v2932
  %v2934 = vpop.f32.mrf.mxu0
  %2935 = vmatprep.mubr.bf16.mxu0 0
  %2936 = vmatmul.mubr.bf16.gmra.mxu0 %v270
  %v2937 = vpop.f32.mrf.mxu0
  %v2938 = vadd.f32 0.0, %v2937
  %v2939 = vpop.f32.mrf.mxu0
  %v2940 = vpop.f32.mrf.mxu0
  %v2941 = vadd.f32 0.0, %v2940
  %v2942 = vpop.f32.mrf.mxu0
  %2943 = vmatprep.mubr.bf16.mxu0 0
  %2944 = vmatmul.mubr.bf16.gmra.mxu0 %v271
  %v2945 = vpop.f32.mrf.mxu0
  %v2946 = vadd.f32 0.0, %v2945
  %v2947 = vpop.f32.mrf.mxu0
  %v2948 = vpop.f32.mrf.mxu0
  %v2949 = vadd.f32 0.0, %v2948
  %v2950 = vpop.f32.mrf.mxu0
  %2951 = vmatprep.mubr.bf16.mxu0 0
  %2952 = vmatmul.mubr.bf16.gmra.mxu0 %v272
  %v2953 = vpop.f32.mrf.mxu0
  %v2954 = vadd.f32 0.0, %v2953
  %v2955 = vpop.f32.mrf.mxu0
  %v2956 = vpop.f32.mrf.mxu0
  %v2957 = vadd.f32 0.0, %v2956
  %v2958 = vpop.f32.mrf.mxu0
  %2959 = vmatprep.mubr.bf16.mxu0 0
  %2960 = vmatmul.mubr.bf16.gmra.mxu0 %v273
  %v2961 = vpop.f32.mrf.mxu0
  %v2962 = vadd.f32 0.0, %v2961
  %v2963 = vpop.f32.mrf.mxu0
  %v2964 = vpop.f32.mrf.mxu0
  %v2965 = vadd.f32 0.0, %v2964
  %v2966 = vpop.f32.mrf.mxu0
  %2967 = vmatprep.mubr.bf16.mxu0 0
  %2968 = vmatmul.mubr.bf16.gmra.mxu0 %v274
  %v2969 = vpop.f32.mrf.mxu0
  %v2970 = vadd.f32 0.0, %v2969
  %v2971 = vpop.f32.mrf.mxu0
  %v2972 = vpop.f32.mrf.mxu0
  %v2973 = vadd.f32 0.0, %v2972
  %v2974 = vpop.f32.mrf.mxu0
  %2975 = vmatprep.mubr.bf16.mxu0 0
  %2976 = vmatmul.mubr.bf16.gmra.mxu0 %v275
  %v2977 = vpop.f32.mrf.mxu0
  %v2978 = vadd.f32 0.0, %v2977
  %v2979 = vpop.f32.mrf.mxu0
  %v2980 = vpop.f32.mrf.mxu0
  %v2981 = vadd.f32 0.0, %v2980
  %v2982 = vpop.f32.mrf.mxu0
  %2983 = vmatprep.mubr.bf16.mxu0 0
  %2984 = vmatmul.mubr.bf16.gmra.mxu0 %v276
  %v2985 = vpop.f32.mrf.mxu0
  %v2986 = vadd.f32 0.0, %v2985
  %v2987 = vpop.f32.mrf.mxu0
  %v2988 = vpop.f32.mrf.mxu0
  %v2989 = vadd.f32 0.0, %v2988
  %v2990 = vpop.f32.mrf.mxu0
  %2991 = vmatprep.mubr.bf16.mxu0 0
  %2992 = vmatmul.mubr.bf16.gmra.mxu0 %v277
  %v2993 = vpop.f32.mrf.mxu0
  %v2994 = vadd.f32 0.0, %v2993
  %v2995 = vpop.f32.mrf.mxu0
  %v2996 = vpop.f32.mrf.mxu0
  %v2997 = vadd.f32 0.0, %v2996
  %v2998 = vpop.f32.mrf.mxu0
  %2999 = vmatprep.mubr.bf16.mxu0 0
  %3000 = vmatmul.mubr.bf16.gmra.mxu0 %v278
  %v3001 = vpop.f32.mrf.mxu0
  %v3002 = vadd.f32 0.0, %v3001
  %v3003 = vpop.f32.mrf.mxu0
  %v3004 = vpop.f32.mrf.mxu0
  %v3005 = vadd.f32 0.0, %v3004
  %v3006 = vpop.f32.mrf.mxu0
  %3007 = vmatprep.mubr.bf16.mxu0 0
  %3008 = vmatmul.mubr.bf16.gmra.mxu0 %v279
  %v3009 = vpop.f32.mrf.mxu0
  %v3010 = vadd.f32 0.0, %v3009
  %v3011 = vpop.f32.mrf.mxu0
  %v3012 = vpop.f32.mrf.mxu0
  %v3013 = vadd.f32 0.0, %v3012
  %v3014 = vpop.f32.mrf.mxu0
  %3015 = vmatprep.mubr.bf16.mxu0 0
  %3016 = vmatmul.mubr.bf16.gmra.mxu0 %v280
  %v3017 = vpop.f32.mrf.mxu0
  %v3018 = vadd.f32 0.0, %v3017
  %v3019 = vpop.f32.mrf.mxu0
  %v3020 = vpop.f32.mrf.mxu0
  %v3021 = vadd.f32 0.0, %v3020
  %v3022 = vpop.f32.mrf.mxu0
  %3023 = vmatprep.mubr.bf16.mxu0 0
  %3024 = vmatmul.mubr.bf16.gmra.mxu0 %v281
  %v3025 = vpop.f32.mrf.mxu0
  %v3026 = vadd.f32 0.0, %v3025
  %v3027 = vpop.f32.mrf.mxu0
  %v3028 = vpop.f32.mrf.mxu0
  %v3029 = vadd.f32 0.0, %v3028
  %v3030 = vpop.f32.mrf.mxu0
  %3031 = vmatprep.mubr.bf16.mxu0 0
  %3032 = vmatmul.mubr.bf16.gmra.mxu0 %v282
  %v3033 = vpop.f32.mrf.mxu0
  %v3034 = vadd.f32 0.0, %v3033
  %v3035 = vpop.f32.mrf.mxu0
  %v3036 = vpop.f32.mrf.mxu0
  %v3037 = vadd.f32 0.0, %v3036
  %v3038 = vpop.f32.mrf.mxu0
  %3039 = vmatprep.mubr.bf16.mxu0 0
  %3040 = vmatmul.mubr.bf16.gmra.mxu0 %v283
  %v3041 = vpop.f32.mrf.mxu0
  %v3042 = vadd.f32 0.0, %v3041
  %v3043 = vpop.f32.mrf.mxu0
  %v3044 = vpop.f32.mrf.mxu0
  %v3045 = vadd.f32 0.0, %v3044
  %v3046 = vpop.f32.mrf.mxu0
  %3047 = vmatprep.mubr.bf16.mxu0 0
  %3048 = vmatmul.mubr.bf16.gmra.mxu0 %v284
  %v3049 = vpop.f32.mrf.mxu0
  %v3050 = vadd.f32 0.0, %v3049
  %v3051 = vpop.f32.mrf.mxu0
  %v3052 = vpop.f32.mrf.mxu0
  %v3053 = vadd.f32 0.0, %v3052
  %v3054 = vpop.f32.mrf.mxu0
  %3055 = vmatprep.mubr.bf16.mxu0 0
  %3056 = vmatmul.mubr.bf16.gmra.mxu0 %v285
  %v3057 = vpop.f32.mrf.mxu0
  %v3058 = vadd.f32 0.0, %v3057
  %v3059 = vpop.f32.mrf.mxu0
  %v3060 = vpop.f32.mrf.mxu0
  %v3061 = vadd.f32 0.0, %v3060
  %v3062 = vpop.f32.mrf.mxu0
  %3063 = vmatprep.mubr.bf16.mxu0 0
  %3064 = vmatmul.mubr.bf16.gmra.mxu0 %v286
  %v3065 = vpop.f32.mrf.mxu0
  %v3066 = vadd.f32 0.0, %v3065
  %v3067 = vpop.f32.mrf.mxu0
  %v3068 = vpop.f32.mrf.mxu0
  %v3069 = vadd.f32 0.0, %v3068
  %v3070 = vpop.f32.mrf.mxu0
  %3071 = vmatprep.mubr.bf16.mxu0 0
  %3072 = vmatmul.mubr.bf16.gmra.mxu0 %v287
  %v3073 = vpop.f32.mrf.mxu0
  %v3074 = vadd.f32 0.0, %v3073
  %v3075 = vpop.f32.mrf.mxu0
  %v3076 = vpop.f32.mrf.mxu0
  %v3077 = vadd.f32 0.0, %v3076
  %v3078 = vpop.f32.mrf.mxu0
  %3079 = vmatprep.mubr.bf16.mxu0 0
  %3080 = vmatmul.mubr.bf16.gmra.mxu0 %v288
  %v3081 = vpop.f32.mrf.mxu0
  %v3082 = vadd.f32 0.0, %v3081
  %v3083 = vpop.f32.mrf.mxu0
  %v3084 = vpop.f32.mrf.mxu0
  %v3085 = vadd.f32 0.0, %v3084
  %v3086 = vpop.f32.mrf.mxu0
  %3087 = vmatprep.mubr.bf16.mxu0 0
  %3088 = vmatmul.mubr.bf16.gmra.mxu0 %v289
  %v3089 = vpop.f32.mrf.mxu0
  %v3090 = vadd.f32 0.0, %v3089
  %v3091 = vpop.f32.mrf.mxu0
  %v3092 = vpop.f32.mrf.mxu0
  %v3093 = vadd.f32 0.0, %v3092
  %v3094 = vpop.f32.mrf.mxu0
  %3095 = vmatprep.mubr.bf16.mxu0 0
  %3096 = vmatmul.mubr.bf16.gmra.mxu0 %v290
  %v3097 = vpop.f32.mrf.mxu0
  %v3098 = vadd.f32 0.0, %v3097
  %v3099 = vpop.f32.mrf.mxu0
  %v3100 = vpop.f32.mrf.mxu0
  %v3101 = vadd.f32 0.0, %v3100
  %v3102 = vpop.f32.mrf.mxu0
  %3103 = vmatprep.mubr.bf16.mxu0 0
  %3104 = vmatmul.mubr.bf16.gmra.mxu0 %v291
  %v3105 = vpop.f32.mrf.mxu0
  %v3106 = vadd.f32 0.0, %v3105
  %v3107 = vpop.f32.mrf.mxu0
  %v3108 = vpop.f32.mrf.mxu0
  %v3109 = vadd.f32 0.0, %v3108
  %v3110 = vpop.f32.mrf.mxu0
  %3111 = vmatprep.mubr.bf16.mxu0 0
  %3112 = vmatmul.mubr.bf16.gmra.mxu0 %v292
  %v3113 = vpop.f32.mrf.mxu0
  %v3114 = vadd.f32 0.0, %v3113
  %v3115 = vpop.f32.mrf.mxu0
  %v3116 = vpop.f32.mrf.mxu0
  %v3117 = vadd.f32 0.0, %v3116
  %v3118 = vpop.f32.mrf.mxu0
  %3119 = vmatprep.mubr.bf16.mxu0 0
  %3120 = vmatmul.mubr.bf16.gmra.mxu0 %v293
  %v3121 = vpop.f32.mrf.mxu0
  %v3122 = vadd.f32 0.0, %v3121
  %v3123 = vpop.f32.mrf.mxu0
  %v3124 = vpop.f32.mrf.mxu0
  %v3125 = vadd.f32 0.0, %v3124
  %v3126 = vpop.f32.mrf.mxu0
  %3127 = vmatprep.mubr.bf16.mxu0 0
  %3128 = vmatmul.mubr.bf16.gmra.mxu0 %v294
  %v3129 = vpop.f32.mrf.mxu0
  %v3130 = vadd.f32 0.0, %v3129
  %v3131 = vpop.f32.mrf.mxu0
  %v3132 = vpop.f32.mrf.mxu0
  %v3133 = vadd.f32 0.0, %v3132
  %v3134 = vpop.f32.mrf.mxu0
  %3135 = vmatprep.mubr.bf16.mxu0 0
  %3136 = vmatmul.mubr.bf16.gmra.mxu0 %v295
  %v3137 = vpop.f32.mrf.mxu0
  %v3138 = vadd.f32 0.0, %v3137
  %v3139 = vpop.f32.mrf.mxu0
  %v3140 = vpop.f32.mrf.mxu0
  %v3141 = vadd.f32 0.0, %v3140
  %v3142 = vpop.f32.mrf.mxu0
  %3143 = vmatprep.mubr.bf16.mxu0 0
  %3144 = vmatmul.mubr.bf16.gmra.mxu0 %v296
  %v3145 = vpop.f32.mrf.mxu0
  %v3146 = vadd.f32 0.0, %v3145
  %v3147 = vpop.f32.mrf.mxu0
  %v3148 = vpop.f32.mrf.mxu0
  %v3149 = vadd.f32 0.0, %v3148
  %v3150 = vpop.f32.mrf.mxu0
  %3151 = vmatprep.mubr.bf16.mxu0 0
  %3152 = vmatmul.mubr.bf16.gmra.mxu0 %v297
  %v3153 = vpop.f32.mrf.mxu0
  %v3154 = vadd.f32 0.0, %v3153
  %v3155 = vpop.f32.mrf.mxu0
  %v3156 = vpop.f32.mrf.mxu0
  %v3157 = vadd.f32 0.0, %v3156
  %v3158 = vpop.f32.mrf.mxu0
  %3159 = vmatprep.mubr.bf16.mxu0 0
  %3160 = vmatmul.mubr.bf16.gmra.mxu0 %v298
  %v3161 = vpop.f32.mrf.mxu0
  %v3162 = vadd.f32 0.0, %v3161
  %v3163 = vpop.f32.mrf.mxu0
  %v3164 = vpop.f32.mrf.mxu0
  %v3165 = vadd.f32 0.0, %v3164
  %v3166 = vpop.f32.mrf.mxu0
  %3167 = vmatprep.mubr.bf16.mxu0 0
  %3168 = vmatmul.mubr.bf16.gmra.mxu0 %v299
  %v3169 = vpop.f32.mrf.mxu0
  %v3170 = vadd.f32 0.0, %v3169
  %v3171 = vpop.f32.mrf.mxu0
  %v3172 = vpop.f32.mrf.mxu0
  %v3173 = vadd.f32 0.0, %v3172
  %v3174 = vpop.f32.mrf.mxu0
  %3175 = vmatprep.mubr.bf16.mxu0 0
  %3176 = vmatmul.mubr.bf16.gmra.mxu0 %v300
  %v3177 = vpop.f32.mrf.mxu0
  %v3178 = vadd.f32 0.0, %v3177
  %v3179 = vpop.f32.mrf.mxu0
  %v3180 = vpop.f32.mrf.mxu0
  %v3181 = vadd.f32 0.0, %v3180
  %v3182 = vpop.f32.mrf.mxu0
  %3183 = vmatprep.mubr.bf16.mxu0 0
  %3184 = vmatmul.mubr.bf16.gmra.mxu0 %v301
  %v3185 = vpop.f32.mrf.mxu0
  %v3186 = vadd.f32 0.0, %v3185
  %v3187 = vpop.f32.mrf.mxu0
  %v3188 = vpop.f32.mrf.mxu0
  %v3189 = vpop.f32.mrf.mxu0
  %3190 = vdwg.mxu0
  %v3207 = vunpack.c.l.b16 %v2814
  %v3208 = vunpack.c.l.b16 %v2815
  %v3209 = vunpack.c.l.b16 %v2816
  %v3210 = vunpack.c.l.b16 %v2817
  %v3211 = vunpack.c.l.b16 %v2818
  %v3212 = vunpack.c.l.b16 %v2819
  %v3213 = vunpack.c.l.b16 %v2820
  %v3214 = vunpack.c.l.b16 %v2821
  %v3215 = vunpack.c.l.b16 %v2822
  %v3216 = vunpack.c.l.b16 %v2823
  %v3217 = vunpack.c.l.b16 %v2824
  %v3218 = vunpack.c.l.b16 %v2825
  %v3219 = vunpack.c.l.b16 %v2826
  %v3220 = vunpack.c.l.b16 %v2827
  %v3221 = vunpack.c.l.b16 %v2828
  %v3222 = vunpack.c.l.b16 %v2829
  %v3223 = vpack.c.b16 %v3208, %v3207
  %v3224 = vpack.c.b16 %v3210, %v3209
  %v3225 = vpack.c.b16 %v3212, %v3211
  %v3226 = vpack.c.b16 %v3214, %v3213
  %v3227 = vpack.c.b16 %v3216, %v3215
  %v3228 = vpack.c.b16 %v3218, %v3217
  %v3229 = vpack.c.b16 %v3220, %v3219
  %v3230 = vpack.c.b16 %v3222, %v3221
  %3239 = vmatprep.subr.bf16.mxu0 0
  %3240 = vmatpush1.bf16.msra.mxu0 %v3230
  %3241 = vmatprep.subr.bf16.mxu0 0
  %3242 = vmatpush1.bf16.msra.mxu0 %v3229
  %3243 = vmatprep.subr.bf16.mxu0 0
  %3244 = vmatpush1.bf16.msra.mxu0 %v3228
  %3245 = vmatprep.subr.bf16.mxu0 0
  %3246 = vmatpush1.bf16.msra.mxu0 %v3227
  %3247 = vmatprep.subr.bf16.mxu0 0
  %3248 = vmatpush1.bf16.msra.mxu0 %v3226
  %3249 = vmatprep.subr.bf16.mxu0 0
  %3250 = vmatpush1.bf16.msra.mxu0 %v3225
  %3251 = vmatprep.subr.bf16.mxu0 0
  %3252 = vmatpush1.bf16.msra.mxu0 %v3224
  %3253 = vmatprep.subr.bf16.mxu0 0
  %3254 = vmatpush1.bf16.msra.mxu0 %v3223
  %3255 = vmatprep.subr.bf16.mxu0 0
  %3256 = vmatpush2.bf16.msra.mxu0 0
  %3257 = vmatprep.subr.bf16.mxu0 0
  %3258 = vmatpush2.bf16.msra.mxu0 0
  %3259 = vmatprep.subr.bf16.mxu0 0
  %3260 = vmatpush2.bf16.msra.mxu0 0
  %3261 = vmatprep.subr.bf16.mxu0 0
  %3262 = vmatpush2.bf16.msra.mxu0 0
  %3263 = vmatprep.subr.bf16.mxu0 0
  %3264 = vmatpush2.bf16.msra.mxu0 0
  %3265 = vmatprep.subr.bf16.mxu0 0
  %3266 = vmatpush2.bf16.msra.mxu0 0
  %3267 = vmatprep.subr.bf16.mxu0 0
  %3268 = vmatpush2.bf16.msra.mxu0 0
  %3269 = vmatprep.subr.bf16.mxu0 0
  %3270 = vmatpush2.bf16.msra.mxu0 0
  %3271 = vmatprep.mubr.bf16.mxu0 0
  %3272 = vmatmul.mubr.bf16.gmra.mxu0 %v686
  %v3273 = vpop.f32.mrf.mxu0
  %v3274 = vadd.f32 %v2930, %v3273
  %v3275 = vpop.f32.mrf.mxu0
  %v3276 = vpop.f32.mrf.mxu0
  %v3277 = vadd.f32 %v2933, %v3276
  %v3278 = vpop.f32.mrf.mxu0
  %3279 = vmatprep.mubr.bf16.mxu0 0
  %3280 = vmatmul.mubr.bf16.gmra.mxu0 %v687
  %v3281 = vpop.f32.mrf.mxu0
  %v3282 = vadd.f32 %v2938, %v3281
  %v3283 = vpop.f32.mrf.mxu0
  %v3284 = vpop.f32.mrf.mxu0
  %v3285 = vadd.f32 %v2941, %v3284
  %v3286 = vpop.f32.mrf.mxu0
  %3287 = vmatprep.mubr.bf16.mxu0 0
  %3288 = vmatmul.mubr.bf16.gmra.mxu0 %v269
  %v3289 = vpop.f32.mrf.mxu0
  %v3290 = vadd.f32 %v2946, %v3289
  %v3291 = vpop.f32.mrf.mxu0
  %v3292 = vpop.f32.mrf.mxu0
  %v3293 = vadd.f32 %v2949, %v3292
  %v3294 = vpop.f32.mrf.mxu0
  %3295 = vmatprep.mubr.bf16.mxu0 0
  %3296 = vmatmul.mubr.bf16.gmra.mxu0 %v270
  %v3297 = vpop.f32.mrf.mxu0
  %v3298 = vadd.f32 %v2954, %v3297
  %v3299 = vpop.f32.mrf.mxu0
  %v3300 = vpop.f32.mrf.mxu0
  %v3301 = vadd.f32 %v2957, %v3300
  %v3302 = vpop.f32.mrf.mxu0
  %3303 = vmatprep.mubr.bf16.mxu0 0
  %3304 = vmatmul.mubr.bf16.gmra.mxu0 %v271
  %v3305 = vpop.f32.mrf.mxu0
  %v3306 = vadd.f32 %v2962, %v3305
  %v3307 = vpop.f32.mrf.mxu0
  %v3308 = vpop.f32.mrf.mxu0
  %v3309 = vadd.f32 %v2965, %v3308
  %v3310 = vpop.f32.mrf.mxu0
  %3311 = vmatprep.mubr.bf16.mxu0 0
  %3312 = vmatmul.mubr.bf16.gmra.mxu0 %v272
  %v3313 = vpop.f32.mrf.mxu0
  %v3314 = vadd.f32 %v2970, %v3313
  %v3315 = vpop.f32.mrf.mxu0
  %v3316 = vpop.f32.mrf.mxu0
  %v3317 = vadd.f32 %v2973, %v3316
  %v3318 = vpop.f32.mrf.mxu0
  %3319 = vmatprep.mubr.bf16.mxu0 0
  %3320 = vmatmul.mubr.bf16.gmra.mxu0 %v273
  %v3321 = vpop.f32.mrf.mxu0
  %v3322 = vadd.f32 %v2978, %v3321
  %v3323 = vpop.f32.mrf.mxu0
  %v3324 = vpop.f32.mrf.mxu0
  %v3325 = vadd.f32 %v2981, %v3324
  %v3326 = vpop.f32.mrf.mxu0
  %3327 = vmatprep.mubr.bf16.mxu0 0
  %3328 = vmatmul.mubr.bf16.gmra.mxu0 %v274
  %v3329 = vpop.f32.mrf.mxu0
  %v3330 = vadd.f32 %v2986, %v3329
  %v3331 = vpop.f32.mrf.mxu0
  %v3332 = vpop.f32.mrf.mxu0
  %v3333 = vadd.f32 %v2989, %v3332
  %v3334 = vpop.f32.mrf.mxu0
  %3335 = vmatprep.mubr.bf16.mxu0 0
  %3336 = vmatmul.mubr.bf16.gmra.mxu0 %v275
  %v3337 = vpop.f32.mrf.mxu0
  %v3338 = vadd.f32 %v2994, %v3337
  %v3339 = vpop.f32.mrf.mxu0
  %v3340 = vpop.f32.mrf.mxu0
  %v3341 = vadd.f32 %v2997, %v3340
  %v3342 = vpop.f32.mrf.mxu0
  %3343 = vmatprep.mubr.bf16.mxu0 0
  %3344 = vmatmul.mubr.bf16.gmra.mxu0 %v276
  %v3345 = vpop.f32.mrf.mxu0
  %v3346 = vadd.f32 %v3002, %v3345
  %v3347 = vpop.f32.mrf.mxu0
  %v3348 = vpop.f32.mrf.mxu0
  %v3349 = vadd.f32 %v3005, %v3348
  %v3350 = vpop.f32.mrf.mxu0
  %3351 = vmatprep.mubr.bf16.mxu0 0
  %3352 = vmatmul.mubr.bf16.gmra.mxu0 %v277
  %v3353 = vpop.f32.mrf.mxu0
  %v3354 = vadd.f32 %v3010, %v3353
  %v3355 = vpop.f32.mrf.mxu0
  %v3356 = vpop.f32.mrf.mxu0
  %v3357 = vadd.f32 %v3013, %v3356
  %v3358 = vpop.f32.mrf.mxu0
  %3359 = vmatprep.mubr.bf16.mxu0 0
  %3360 = vmatmul.mubr.bf16.gmra.mxu0 %v278
  %v3361 = vpop.f32.mrf.mxu0
  %v3362 = vadd.f32 %v3018, %v3361
  %v3363 = vpop.f32.mrf.mxu0
  %v3364 = vpop.f32.mrf.mxu0
  %v3365 = vadd.f32 %v3021, %v3364
  %v3366 = vpop.f32.mrf.mxu0
  %3367 = vmatprep.mubr.bf16.mxu0 0
  %3368 = vmatmul.mubr.bf16.gmra.mxu0 %v279
  %v3369 = vpop.f32.mrf.mxu0
  %v3370 = vadd.f32 %v3026, %v3369
  %v3371 = vpop.f32.mrf.mxu0
  %v3372 = vpop.f32.mrf.mxu0
  %v3373 = vadd.f32 %v3029, %v3372
  %v3374 = vpop.f32.mrf.mxu0
  %3375 = vmatprep.mubr.bf16.mxu0 0
  %3376 = vmatmul.mubr.bf16.gmra.mxu0 %v280
  %v3377 = vpop.f32.mrf.mxu0
  %v3378 = vadd.f32 %v3034, %v3377
  %v3379 = vpop.f32.mrf.mxu0
  %v3380 = vpop.f32.mrf.mxu0
  %v3381 = vadd.f32 %v3037, %v3380
  %v3382 = vpop.f32.mrf.mxu0
  %3383 = vmatprep.mubr.bf16.mxu0 0
  %3384 = vmatmul.mubr.bf16.gmra.mxu0 %v281
  %v3385 = vpop.f32.mrf.mxu0
  %v3386 = vadd.f32 %v3042, %v3385
  %v3387 = vpop.f32.mrf.mxu0
  %v3388 = vpop.f32.mrf.mxu0
  %v3389 = vadd.f32 %v3045, %v3388
  %v3390 = vpop.f32.mrf.mxu0
  %3391 = vmatprep.mubr.bf16.mxu0 0
  %3392 = vmatmul.mubr.bf16.gmra.mxu0 %v282
  %v3393 = vpop.f32.mrf.mxu0
  %v3394 = vadd.f32 %v3050, %v3393
  %v3395 = vpop.f32.mrf.mxu0
  %v3396 = vpop.f32.mrf.mxu0
  %v3397 = vadd.f32 %v3053, %v3396
  %v3398 = vpop.f32.mrf.mxu0
  %3399 = vmatprep.mubr.bf16.mxu0 0
  %3400 = vmatmul.mubr.bf16.gmra.mxu0 %v283
  %v3401 = vpop.f32.mrf.mxu0
  %v3402 = vadd.f32 %v3058, %v3401
  %v3403 = vpop.f32.mrf.mxu0
  %v3404 = vpop.f32.mrf.mxu0
  %v3405 = vadd.f32 %v3061, %v3404
  %v3406 = vpop.f32.mrf.mxu0
  %3407 = vmatprep.mubr.bf16.mxu0 0
  %3408 = vmatmul.mubr.bf16.gmra.mxu0 %v284
  %v3409 = vpop.f32.mrf.mxu0
  %v3410 = vadd.f32 %v3066, %v3409
  %v3411 = vpop.f32.mrf.mxu0
  %v3412 = vpop.f32.mrf.mxu0
  %v3413 = vadd.f32 %v3069, %v3412
  %v3414 = vpop.f32.mrf.mxu0
  %3415 = vmatprep.mubr.bf16.mxu0 0
  %3416 = vmatmul.mubr.bf16.gmra.mxu0 %v285
  %v3417 = vpop.f32.mrf.mxu0
  %v3418 = vadd.f32 %v3074, %v3417
  %v3419 = vpop.f32.mrf.mxu0
  %v3420 = vpop.f32.mrf.mxu0
  %v3421 = vadd.f32 %v3077, %v3420
  %v3422 = vpop.f32.mrf.mxu0
  %3423 = vmatprep.mubr.bf16.mxu0 0
  %3424 = vmatmul.mubr.bf16.gmra.mxu0 %v286
  %v3425 = vpop.f32.mrf.mxu0
  %v3426 = vadd.f32 %v3082, %v3425
  %v3427 = vpop.f32.mrf.mxu0
  %v3428 = vpop.f32.mrf.mxu0
  %v3429 = vadd.f32 %v3085, %v3428
  %v3430 = vpop.f32.mrf.mxu0
  %3431 = vmatprep.mubr.bf16.mxu0 0
  %3432 = vmatmul.mubr.bf16.gmra.mxu0 %v287
  %v3433 = vpop.f32.mrf.mxu0
  %v3434 = vadd.f32 %v3090, %v3433
  %v3435 = vpop.f32.mrf.mxu0
  %v3436 = vpop.f32.mrf.mxu0
  %v3437 = vadd.f32 %v3093, %v3436
  %v3438 = vpop.f32.mrf.mxu0
  %3439 = vmatprep.mubr.bf16.mxu0 0
  %3440 = vmatmul.mubr.bf16.gmra.mxu0 %v288
  %v3441 = vpop.f32.mrf.mxu0
  %v3442 = vadd.f32 %v3098, %v3441
  %v3443 = vpop.f32.mrf.mxu0
  %v3444 = vpop.f32.mrf.mxu0
  %v3445 = vadd.f32 %v3101, %v3444
  %v3446 = vpop.f32.mrf.mxu0
  %3447 = vmatprep.mubr.bf16.mxu0 0
  %3448 = vmatmul.mubr.bf16.gmra.mxu0 %v289
  %v3449 = vpop.f32.mrf.mxu0
  %v3450 = vadd.f32 %v3106, %v3449
  %v3451 = vpop.f32.mrf.mxu0
  %v3452 = vpop.f32.mrf.mxu0
  %v3453 = vadd.f32 %v3109, %v3452
  %v3454 = vpop.f32.mrf.mxu0
  %3455 = vmatprep.mubr.bf16.mxu0 0
  %3456 = vmatmul.mubr.bf16.gmra.mxu0 %v290
  %v3457 = vpop.f32.mrf.mxu0
  %v3458 = vadd.f32 %v3114, %v3457
  %v3459 = vpop.f32.mrf.mxu0
  %v3460 = vpop.f32.mrf.mxu0
  %v3461 = vadd.f32 %v3117, %v3460
  %v3462 = vpop.f32.mrf.mxu0
  %3463 = vmatprep.mubr.bf16.mxu0 0
  %3464 = vmatmul.mubr.bf16.gmra.mxu0 %v291
  %v3465 = vpop.f32.mrf.mxu0
  %v3466 = vadd.f32 %v3122, %v3465
  %v3467 = vpop.f32.mrf.mxu0
  %v3468 = vpop.f32.mrf.mxu0
  %v3469 = vadd.f32 %v3125, %v3468
  %v3470 = vpop.f32.mrf.mxu0
  %3471 = vmatprep.mubr.bf16.mxu0 0
  %3472 = vmatmul.mubr.bf16.gmra.mxu0 %v292
  %v3473 = vpop.f32.mrf.mxu0
  %v3474 = vadd.f32 %v3130, %v3473
  %v3475 = vpop.f32.mrf.mxu0
  %v3476 = vpop.f32.mrf.mxu0
  %v3477 = vadd.f32 %v3133, %v3476
  %v3478 = vpop.f32.mrf.mxu0
  %3479 = vmatprep.mubr.bf16.mxu0 0
  %3480 = vmatmul.mubr.bf16.gmra.mxu0 %v293
  %v3481 = vpop.f32.mrf.mxu0
  %v3482 = vadd.f32 %v3138, %v3481
  %v3483 = vpop.f32.mrf.mxu0
  %v3484 = vpop.f32.mrf.mxu0
  %v3485 = vadd.f32 %v3141, %v3484
  %v3486 = vpop.f32.mrf.mxu0
  %3487 = vmatprep.mubr.bf16.mxu0 0
  %3488 = vmatmul.mubr.bf16.gmra.mxu0 %v294
  %v3489 = vpop.f32.mrf.mxu0
  %v3490 = vadd.f32 %v3146, %v3489
  %v3491 = vpop.f32.mrf.mxu0
  %v3492 = vpop.f32.mrf.mxu0
  %v3493 = vadd.f32 %v3149, %v3492
  %v3494 = vpop.f32.mrf.mxu0
  %3495 = vmatprep.mubr.bf16.mxu0 0
  %3496 = vmatmul.mubr.bf16.gmra.mxu0 %v295
  %v3497 = vpop.f32.mrf.mxu0
  %v3498 = vadd.f32 %v3154, %v3497
  %v3499 = vpop.f32.mrf.mxu0
  %v3500 = vpop.f32.mrf.mxu0
  %v3501 = vadd.f32 %v3157, %v3500
  %v3502 = vpop.f32.mrf.mxu0
  %3503 = vmatprep.mubr.bf16.mxu0 0
  %3504 = vmatmul.mubr.bf16.gmra.mxu0 %v296
  %v3505 = vpop.f32.mrf.mxu0
  %v3506 = vadd.f32 %v3162, %v3505
  %v3507 = vpop.f32.mrf.mxu0
  %v3508 = vpop.f32.mrf.mxu0
  %v3509 = vadd.f32 %v3165, %v3508
  %v3510 = vpop.f32.mrf.mxu0
  %3511 = vmatprep.mubr.bf16.mxu0 0
  %3512 = vmatmul.mubr.bf16.gmra.mxu0 %v297
  %v3513 = vpop.f32.mrf.mxu0
  %v3514 = vadd.f32 %v3170, %v3513
  %v3515 = vpop.f32.mrf.mxu0
  %v3516 = vpop.f32.mrf.mxu0
  %v3517 = vadd.f32 %v3173, %v3516
  %v3518 = vpop.f32.mrf.mxu0
  %3519 = vmatprep.mubr.bf16.mxu0 0
  %3520 = vmatmul.mubr.bf16.gmra.mxu0 %v298
  %v3521 = vpop.f32.mrf.mxu0
  %v3522 = vadd.f32 %v3178, %v3521
  %v3523 = vpop.f32.mrf.mxu0
  %v3524 = vpop.f32.mrf.mxu0
  %v3525 = vadd.f32 %v3181, %v3524
  %v3526 = vpop.f32.mrf.mxu0
  %3527 = vmatprep.mubr.bf16.mxu0 0
  %3528 = vmatmul.mubr.bf16.gmra.mxu0 %v299
  %v3529 = vpop.f32.mrf.mxu0
  %v3530 = vadd.f32 %v3186, %v3529
  %v3531 = vpop.f32.mrf.mxu0
  %v3532 = vpop.f32.mrf.mxu0
  %v3533 = vpop.f32.mrf.mxu0
  %3534 = vdwg.mxu0
  %s3535 = scalar_lea.vmem %s2, 512
  %v3536 = vld [vmem:[%s3535] sm:$0xf]
  %v3537 = vld [vmem:[%s3535 + $0x4] sm:$0xf]
  %v3538 = vld [vmem:[%s3535 + $0x8] sm:$0xf]
  %v3539 = vld [vmem:[%s3535 + $0xc] sm:$0xf]
  %v3540 = vld [vmem:[%s3535 + $0x10] sm:$0xf]
  %v3541 = vld [vmem:[%s3535 + $0x14] sm:$0xf]
  %v3542 = vld [vmem:[%s3535 + $0x18] sm:$0xf]
  %v3543 = vld [vmem:[%s3535 + $0x1c] sm:$0xf]
  %v3544 = vld [vmem:[%s3535 + $0x20] sm:$0xf]
  %v3545 = vld [vmem:[%s3535 + $0x24] sm:$0xf]
  %v3546 = vld [vmem:[%s3535 + $0x28] sm:$0xf]
  %v3547 = vld [vmem:[%s3535 + $0x2c] sm:$0xf]
  %v3548 = vld [vmem:[%s3535 + $0x30] sm:$0xf]
  %v3549 = vld [vmem:[%s3535 + $0x34] sm:$0xf]
  %v3550 = vld [vmem:[%s3535 + $0x38] sm:$0xf]
  %v3551 = vld [vmem:[%s3535 + $0x3c] sm:$0xf]
  %v3568 = vunpack.c.l.b16 %v3536
  %v3569 = vunpack.c.l.b16 %v3537
  %v3570 = vunpack.c.l.b16 %v3538
  %v3571 = vunpack.c.l.b16 %v3539
  %v3572 = vunpack.c.l.b16 %v3540
  %v3573 = vunpack.c.l.b16 %v3541
  %v3574 = vunpack.c.l.b16 %v3542
  %v3575 = vunpack.c.l.b16 %v3543
  %v3576 = vunpack.c.l.b16 %v3544
  %v3577 = vunpack.c.l.b16 %v3545
  %v3578 = vunpack.c.l.b16 %v3546
  %v3579 = vunpack.c.l.b16 %v3547
  %v3580 = vunpack.c.l.b16 %v3548
  %v3581 = vunpack.c.l.b16 %v3549
  %v3582 = vunpack.c.l.b16 %v3550
  %v3583 = vunpack.c.l.b16 %v3551
  %v3584 = vpack.c.b16 %v3569, %v3568
  %v3585 = vpack.c.b16 %v3571, %v3570
  %v3586 = vpack.c.b16 %v3573, %v3572
  %v3587 = vpack.c.b16 %v3575, %v3574
  %v3588 = vpack.c.b16 %v3577, %v3576
  %v3589 = vpack.c.b16 %v3579, %v3578
  %v3590 = vpack.c.b16 %v3581, %v3580
  %v3591 = vpack.c.b16 %v3583, %v3582
  %3600 = vmatprep.subr.bf16.mxu0 0
  %3601 = vmatpush1.bf16.msra.mxu0 %v3591
  %3602 = vmatprep.subr.bf16.mxu0 0
  %3603 = vmatpush1.bf16.msra.mxu0 %v3590
  %3604 = vmatprep.subr.bf16.mxu0 0
  %3605 = vmatpush1.bf16.msra.mxu0 %v3589
  %3606 = vmatprep.subr.bf16.mxu0 0
  %3607 = vmatpush1.bf16.msra.mxu0 %v3588
  %3608 = vmatprep.subr.bf16.mxu0 0
  %3609 = vmatpush1.bf16.msra.mxu0 %v3587
  %3610 = vmatprep.subr.bf16.mxu0 0
  %3611 = vmatpush1.bf16.msra.mxu0 %v3586
  %3612 = vmatprep.subr.bf16.mxu0 0
  %3613 = vmatpush1.bf16.msra.mxu0 %v3585
  %3614 = vmatprep.subr.bf16.mxu0 0
  %3615 = vmatpush1.bf16.msra.mxu0 %v3584
  %3616 = vmatprep.subr.bf16.mxu0 0
  %3617 = vmatpush2.bf16.msra.mxu0 0
  %3618 = vmatprep.subr.bf16.mxu0 0
  %3619 = vmatpush2.bf16.msra.mxu0 0
  %3620 = vmatprep.subr.bf16.mxu0 0
  %3621 = vmatpush2.bf16.msra.mxu0 0
  %3622 = vmatprep.subr.bf16.mxu0 0
  %3623 = vmatpush2.bf16.msra.mxu0 0
  %3624 = vmatprep.subr.bf16.mxu0 0
  %3625 = vmatpush2.bf16.msra.mxu0 0
  %3626 = vmatprep.subr.bf16.mxu0 0
  %3627 = vmatpush2.bf16.msra.mxu0 0
  %3628 = vmatprep.subr.bf16.mxu0 0
  %3629 = vmatpush2.bf16.msra.mxu0 0
  %3630 = vmatprep.subr.bf16.mxu0 0
  %3631 = vmatpush2.bf16.msra.mxu0 0
  %3632 = vmatprep.mubr.bf16.mxu0 0
  %3633 = vmatmul.mubr.bf16.gmra.mxu0 %v271
  %v3634 = vpop.f32.mrf.mxu0
  %v3635 = vadd.f32 0.0, %v3634
  %v3636 = vpop.f32.mrf.mxu0
  %v3637 = vpop.f32.mrf.mxu0
  %v3638 = vadd.f32 0.0, %v3637
  %v3639 = vpop.f32.mrf.mxu0
  %3640 = vmatprep.mubr.bf16.mxu0 0
  %3641 = vmatmul.mubr.bf16.gmra.mxu0 %v272
  %v3642 = vpop.f32.mrf.mxu0
  %v3643 = vadd.f32 0.0, %v3642
  %v3644 = vpop.f32.mrf.mxu0
  %v3645 = vpop.f32.mrf.mxu0
  %v3646 = vadd.f32 0.0, %v3645
  %v3647 = vpop.f32.mrf.mxu0
  %3648 = vmatprep.mubr.bf16.mxu0 0
  %3649 = vmatmul.mubr.bf16.gmra.mxu0 %v273
  %v3650 = vpop.f32.mrf.mxu0
  %v3651 = vadd.f32 0.0, %v3650
  %v3652 = vpop.f32.mrf.mxu0
  %v3653 = vpop.f32.mrf.mxu0
  %v3654 = vadd.f32 0.0, %v3653
  %v3655 = vpop.f32.mrf.mxu0
  %3656 = vmatprep.mubr.bf16.mxu0 0
  %3657 = vmatmul.mubr.bf16.gmra.mxu0 %v274
  %v3658 = vpop.f32.mrf.mxu0
  %v3659 = vadd.f32 0.0, %v3658
  %v3660 = vpop.f32.mrf.mxu0
  %v3661 = vpop.f32.mrf.mxu0
  %v3662 = vadd.f32 0.0, %v3661
  %v3663 = vpop.f32.mrf.mxu0
  %3664 = vmatprep.mubr.bf16.mxu0 0
  %3665 = vmatmul.mubr.bf16.gmra.mxu0 %v275
  %v3666 = vpop.f32.mrf.mxu0
  %v3667 = vadd.f32 0.0, %v3666
  %v3668 = vpop.f32.mrf.mxu0
  %v3669 = vpop.f32.mrf.mxu0
  %v3670 = vadd.f32 0.0, %v3669
  %v3671 = vpop.f32.mrf.mxu0
  %3672 = vmatprep.mubr.bf16.mxu0 0
  %3673 = vmatmul.mubr.bf16.gmra.mxu0 %v276
  %v3674 = vpop.f32.mrf.mxu0
  %v3675 = vadd.f32 0.0, %v3674
  %v3676 = vpop.f32.mrf.mxu0
  %v3677 = vpop.f32.mrf.mxu0
  %v3678 = vadd.f32 0.0, %v3677
  %v3679 = vpop.f32.mrf.mxu0
  %3680 = vmatprep.mubr.bf16.mxu0 0
  %3681 = vmatmul.mubr.bf16.gmra.mxu0 %v277
  %v3682 = vpop.f32.mrf.mxu0
  %v3683 = vadd.f32 0.0, %v3682
  %v3684 = vpop.f32.mrf.mxu0
  %v3685 = vpop.f32.mrf.mxu0
  %v3686 = vadd.f32 0.0, %v3685
  %v3687 = vpop.f32.mrf.mxu0
  %3688 = vmatprep.mubr.bf16.mxu0 0
  %3689 = vmatmul.mubr.bf16.gmra.mxu0 %v278
  %v3690 = vpop.f32.mrf.mxu0
  %v3691 = vadd.f32 0.0, %v3690
  %v3692 = vpop.f32.mrf.mxu0
  %v3693 = vpop.f32.mrf.mxu0
  %v3694 = vadd.f32 0.0, %v3693
  %v3695 = vpop.f32.mrf.mxu0
  %3696 = vmatprep.mubr.bf16.mxu0 0
  %3697 = vmatmul.mubr.bf16.gmra.mxu0 %v279
  %v3698 = vpop.f32.mrf.mxu0
  %v3699 = vadd.f32 0.0, %v3698
  %v3700 = vpop.f32.mrf.mxu0
  %v3701 = vpop.f32.mrf.mxu0
  %v3702 = vadd.f32 0.0, %v3701
  %v3703 = vpop.f32.mrf.mxu0
  %3704 = vmatprep.mubr.bf16.mxu0 0
  %3705 = vmatmul.mubr.bf16.gmra.mxu0 %v280
  %v3706 = vpop.f32.mrf.mxu0
  %v3707 = vadd.f32 0.0, %v3706
  %v3708 = vpop.f32.mrf.mxu0
  %v3709 = vpop.f32.mrf.mxu0
  %v3710 = vadd.f32 0.0, %v3709
  %v3711 = vpop.f32.mrf.mxu0
  %3712 = vmatprep.mubr.bf16.mxu0 0
  %3713 = vmatmul.mubr.bf16.gmra.mxu0 %v281
  %v3714 = vpop.f32.mrf.mxu0
  %v3715 = vadd.f32 0.0, %v3714
  %v3716 = vpop.f32.mrf.mxu0
  %v3717 = vpop.f32.mrf.mxu0
  %v3718 = vadd.f32 0.0, %v3717
  %v3719 = vpop.f32.mrf.mxu0
  %3720 = vmatprep.mubr.bf16.mxu0 0
  %3721 = vmatmul.mubr.bf16.gmra.mxu0 %v282
  %v3722 = vpop.f32.mrf.mxu0
  %v3723 = vadd.f32 0.0, %v3722
  %v3724 = vpop.f32.mrf.mxu0
  %v3725 = vpop.f32.mrf.mxu0
  %v3726 = vadd.f32 0.0, %v3725
  %v3727 = vpop.f32.mrf.mxu0
  %3728 = vmatprep.mubr.bf16.mxu0 0
  %3729 = vmatmul.mubr.bf16.gmra.mxu0 %v283
  %v3730 = vpop.f32.mrf.mxu0
  %v3731 = vadd.f32 0.0, %v3730
  %v3732 = vpop.f32.mrf.mxu0
  %v3733 = vpop.f32.mrf.mxu0
  %v3734 = vadd.f32 0.0, %v3733
  %v3735 = vpop.f32.mrf.mxu0
  %3736 = vmatprep.mubr.bf16.mxu0 0
  %3737 = vmatmul.mubr.bf16.gmra.mxu0 %v284
  %v3738 = vpop.f32.mrf.mxu0
  %v3739 = vadd.f32 0.0, %v3738
  %v3740 = vpop.f32.mrf.mxu0
  %v3741 = vpop.f32.mrf.mxu0
  %v3742 = vadd.f32 0.0, %v3741
  %v3743 = vpop.f32.mrf.mxu0
  %3744 = vmatprep.mubr.bf16.mxu0 0
  %3745 = vmatmul.mubr.bf16.gmra.mxu0 %v285
  %v3746 = vpop.f32.mrf.mxu0
  %v3747 = vadd.f32 0.0, %v3746
  %v3748 = vpop.f32.mrf.mxu0
  %v3749 = vpop.f32.mrf.mxu0
  %v3750 = vadd.f32 0.0, %v3749
  %v3751 = vpop.f32.mrf.mxu0
  %3752 = vmatprep.mubr.bf16.mxu0 0
  %3753 = vmatmul.mubr.bf16.gmra.mxu0 %v286
  %v3754 = vpop.f32.mrf.mxu0
  %v3755 = vadd.f32 0.0, %v3754
  %v3756 = vpop.f32.mrf.mxu0
  %v3757 = vpop.f32.mrf.mxu0
  %v3758 = vadd.f32 0.0, %v3757
  %v3759 = vpop.f32.mrf.mxu0
  %3760 = vmatprep.mubr.bf16.mxu0 0
  %3761 = vmatmul.mubr.bf16.gmra.mxu0 %v287
  %v3762 = vpop.f32.mrf.mxu0
  %v3763 = vadd.f32 0.0, %v3762
  %v3764 = vpop.f32.mrf.mxu0
  %v3765 = vpop.f32.mrf.mxu0
  %v3766 = vadd.f32 0.0, %v3765
  %v3767 = vpop.f32.mrf.mxu0
  %3768 = vmatprep.mubr.bf16.mxu0 0
  %3769 = vmatmul.mubr.bf16.gmra.mxu0 %v288
  %v3770 = vpop.f32.mrf.mxu0
  %v3771 = vadd.f32 0.0, %v3770
  %v3772 = vpop.f32.mrf.mxu0
  %v3773 = vpop.f32.mrf.mxu0
  %v3774 = vadd.f32 0.0, %v3773
  %v3775 = vpop.f32.mrf.mxu0
  %3776 = vmatprep.mubr.bf16.mxu0 0
  %3777 = vmatmul.mubr.bf16.gmra.mxu0 %v289
  %v3778 = vpop.f32.mrf.mxu0
  %v3779 = vadd.f32 0.0, %v3778
  %v3780 = vpop.f32.mrf.mxu0
  %v3781 = vpop.f32.mrf.mxu0
  %v3782 = vadd.f32 0.0, %v3781
  %v3783 = vpop.f32.mrf.mxu0
  %3784 = vmatprep.mubr.bf16.mxu0 0
  %3785 = vmatmul.mubr.bf16.gmra.mxu0 %v290
  %v3786 = vpop.f32.mrf.mxu0
  %v3787 = vadd.f32 0.0, %v3786
  %v3788 = vpop.f32.mrf.mxu0
  %v3789 = vpop.f32.mrf.mxu0
  %v3790 = vadd.f32 0.0, %v3789
  %v3791 = vpop.f32.mrf.mxu0
  %3792 = vmatprep.mubr.bf16.mxu0 0
  %3793 = vmatmul.mubr.bf16.gmra.mxu0 %v291
  %v3794 = vpop.f32.mrf.mxu0
  %v3795 = vadd.f32 0.0, %v3794
  %v3796 = vpop.f32.mrf.mxu0
  %v3797 = vpop.f32.mrf.mxu0
  %v3798 = vadd.f32 0.0, %v3797
  %v3799 = vpop.f32.mrf.mxu0
  %3800 = vmatprep.mubr.bf16.mxu0 0
  %3801 = vmatmul.mubr.bf16.gmra.mxu0 %v292
  %v3802 = vpop.f32.mrf.mxu0
  %v3803 = vadd.f32 0.0, %v3802
  %v3804 = vpop.f32.mrf.mxu0
  %v3805 = vpop.f32.mrf.mxu0
  %v3806 = vadd.f32 0.0, %v3805
  %v3807 = vpop.f32.mrf.mxu0
  %3808 = vmatprep.mubr.bf16.mxu0 0
  %3809 = vmatmul.mubr.bf16.gmra.mxu0 %v293
  %v3810 = vpop.f32.mrf.mxu0
  %v3811 = vadd.f32 0.0, %v3810
  %v3812 = vpop.f32.mrf.mxu0
  %v3813 = vpop.f32.mrf.mxu0
  %v3814 = vadd.f32 0.0, %v3813
  %v3815 = vpop.f32.mrf.mxu0
  %3816 = vmatprep.mubr.bf16.mxu0 0
  %3817 = vmatmul.mubr.bf16.gmra.mxu0 %v294
  %v3818 = vpop.f32.mrf.mxu0
  %v3819 = vadd.f32 0.0, %v3818
  %v3820 = vpop.f32.mrf.mxu0
  %v3821 = vpop.f32.mrf.mxu0
  %v3822 = vadd.f32 0.0, %v3821
  %v3823 = vpop.f32.mrf.mxu0
  %3824 = vmatprep.mubr.bf16.mxu0 0
  %3825 = vmatmul.mubr.bf16.gmra.mxu0 %v295
  %v3826 = vpop.f32.mrf.mxu0
  %v3827 = vadd.f32 0.0, %v3826
  %v3828 = vpop.f32.mrf.mxu0
  %v3829 = vpop.f32.mrf.mxu0
  %v3830 = vadd.f32 0.0, %v3829
  %v3831 = vpop.f32.mrf.mxu0
  %3832 = vmatprep.mubr.bf16.mxu0 0
  %3833 = vmatmul.mubr.bf16.gmra.mxu0 %v296
  %v3834 = vpop.f32.mrf.mxu0
  %v3835 = vadd.f32 0.0, %v3834
  %v3836 = vpop.f32.mrf.mxu0
  %v3837 = vpop.f32.mrf.mxu0
  %v3838 = vadd.f32 0.0, %v3837
  %v3839 = vpop.f32.mrf.mxu0
  %3840 = vmatprep.mubr.bf16.mxu0 0
  %3841 = vmatmul.mubr.bf16.gmra.mxu0 %v297
  %v3842 = vpop.f32.mrf.mxu0
  %v3843 = vadd.f32 0.0, %v3842
  %v3844 = vpop.f32.mrf.mxu0
  %v3845 = vpop.f32.mrf.mxu0
  %v3846 = vadd.f32 0.0, %v3845
  %v3847 = vpop.f32.mrf.mxu0
  %3848 = vmatprep.mubr.bf16.mxu0 0
  %3849 = vmatmul.mubr.bf16.gmra.mxu0 %v298
  %v3850 = vpop.f32.mrf.mxu0
  %v3851 = vadd.f32 0.0, %v3850
  %v3852 = vpop.f32.mrf.mxu0
  %v3853 = vpop.f32.mrf.mxu0
  %v3854 = vadd.f32 0.0, %v3853
  %v3855 = vpop.f32.mrf.mxu0
  %3856 = vmatprep.mubr.bf16.mxu0 0
  %3857 = vmatmul.mubr.bf16.gmra.mxu0 %v299
  %v3858 = vpop.f32.mrf.mxu0
  %v3859 = vadd.f32 0.0, %v3858
  %v3860 = vpop.f32.mrf.mxu0
  %v3861 = vpop.f32.mrf.mxu0
  %v3862 = vadd.f32 0.0, %v3861
  %v3863 = vpop.f32.mrf.mxu0
  %3864 = vmatprep.mubr.bf16.mxu0 0
  %3865 = vmatmul.mubr.bf16.gmra.mxu0 %v300
  %v3866 = vpop.f32.mrf.mxu0
  %v3867 = vadd.f32 0.0, %v3866
  %v3868 = vpop.f32.mrf.mxu0
  %v3869 = vpop.f32.mrf.mxu0
  %v3870 = vadd.f32 0.0, %v3869
  %v3871 = vpop.f32.mrf.mxu0
  %3872 = vmatprep.mubr.bf16.mxu0 0
  %3873 = vmatmul.mubr.bf16.gmra.mxu0 %v301
  %v3874 = vpop.f32.mrf.mxu0
  %v3875 = vadd.f32 0.0, %v3874
  %v3876 = vpop.f32.mrf.mxu0
  %v3877 = vpop.f32.mrf.mxu0
  %v3878 = vadd.f32 0.0, %v3877
  %v3879 = vpop.f32.mrf.mxu0
  %3880 = vmatprep.mubr.bf16.mxu0 0
  %3881 = vmatmul.mubr.bf16.gmra.mxu0 %v1058
  %v3882 = vpop.f32.mrf.mxu0
  %v3883 = vadd.f32 0.0, %v3882
  %v3884 = vpop.f32.mrf.mxu0
  %v3885 = vpop.f32.mrf.mxu0
  %v3886 = vadd.f32 0.0, %v3885
  %v3887 = vpop.f32.mrf.mxu0
  %3888 = vmatprep.mubr.bf16.mxu0 0
  %3889 = vmatmul.mubr.bf16.gmra.mxu0 %v1059
  %v3890 = vpop.f32.mrf.mxu0
  %v3891 = vadd.f32 0.0, %v3890
  %v3892 = vpop.f32.mrf.mxu0
  %v3893 = vpop.f32.mrf.mxu0
  %v3894 = vpop.f32.mrf.mxu0
  %3895 = vdwg.mxu0
  %v3896 = vadd.f32 %v3274, %v3635
  %v3897 = vadd.f32 %v3277, %v3638
  %v3898 = vadd.f32 %v3282, %v3643
  %v3899 = vadd.f32 %v3285, %v3646
  %v3900 = vadd.f32 %v3290, %v3651
  %v3901 = vadd.f32 %v3293, %v3654
  %v3902 = vadd.f32 %v3298, %v3659
  %v3903 = vadd.f32 %v3301, %v3662
  %v3904 = vadd.f32 %v3306, %v3667
  %v3905 = vadd.f32 %v3309, %v3670
  %v3906 = vadd.f32 %v3314, %v3675
  %v3907 = vadd.f32 %v3317, %v3678
  %v3908 = vadd.f32 %v3322, %v3683
  %v3909 = vadd.f32 %v3325, %v3686
  %v3910 = vadd.f32 %v3330, %v3691
  %v3911 = vadd.f32 %v3333, %v3694
  %v3912 = vadd.f32 %v3338, %v3699
  %v3913 = vadd.f32 %v3341, %v3702
  %v3914 = vadd.f32 %v3346, %v3707
  %v3915 = vadd.f32 %v3349, %v3710
  %v3916 = vadd.f32 %v3354, %v3715
  %v3917 = vadd.f32 %v3357, %v3718
  %v3918 = vadd.f32 %v3362, %v3723
  %v3919 = vadd.f32 %v3365, %v3726
  %v3920 = vadd.f32 %v3370, %v3731
  %v3921 = vadd.f32 %v3373, %v3734
  %v3922 = vadd.f32 %v3378, %v3739
  %v3923 = vadd.f32 %v3381, %v3742
  %v3924 = vadd.f32 %v3386, %v3747
  %v3925 = vadd.f32 %v3389, %v3750
  %v3926 = vadd.f32 %v3394, %v3755
  %v3927 = vadd.f32 %v3397, %v3758
  %v3928 = vadd.f32 %v3402, %v3763
  %v3929 = vadd.f32 %v3405, %v3766
  %v3930 = vadd.f32 %v3410, %v3771
  %v3931 = vadd.f32 %v3413, %v3774
  %v3932 = vadd.f32 %v3418, %v3779
  %v3933 = vadd.f32 %v3421, %v3782
  %v3934 = vadd.f32 %v3426, %v3787
  %v3935 = vadd.f32 %v3429, %v3790
  %v3936 = vadd.f32 %v3434, %v3795
  %v3937 = vadd.f32 %v3437, %v3798
  %v3938 = vadd.f32 %v3442, %v3803
  %v3939 = vadd.f32 %v3445, %v3806
  %v3940 = vadd.f32 %v3450, %v3811
  %v3941 = vadd.f32 %v3453, %v3814
  %v3942 = vadd.f32 %v3458, %v3819
  %v3943 = vadd.f32 %v3461, %v3822
  %v3944 = vadd.f32 %v3466, %v3827
  %v3945 = vadd.f32 %v3469, %v3830
  %v3946 = vadd.f32 %v3474, %v3835
  %v3947 = vadd.f32 %v3477, %v3838
  %v3948 = vadd.f32 %v3482, %v3843
  %v3949 = vadd.f32 %v3485, %v3846
  %v3950 = vadd.f32 %v3490, %v3851
  %v3951 = vadd.f32 %v3493, %v3854
  %v3952 = vadd.f32 %v3498, %v3859
  %v3953 = vadd.f32 %v3501, %v3862
  %v3954 = vadd.f32 %v3506, %v3867
  %v3955 = vadd.f32 %v3509, %v3870
  %v3956 = vadd.f32 %v3514, %v3875
  %v3957 = vadd.f32 %v3517, %v3878
  %v3958 = vadd.f32 %v3522, %v3883
  %v3959 = vadd.f32 %v3525, %v3886
  %v3960 = vadd.f32 %v3530, %v3891
  %v3961 = vrot.slane %v3896, 2
  %v3962 = vrot.slane %v3897, 2
  %v3963 = vrot.slane %v3898, 2
  %v3964 = vrot.slane %v3899, 2
  %v3965 = vrot.slane %v3900, 2
  %v3966 = vrot.slane %v3901, 2
  %v3967 = vrot.slane %v3902, 2
  %v3968 = vrot.slane %v3903, 2
  %v3969 = vrot.slane %v3904, 2
  %v3970 = vrot.slane %v3905, 2
  %v3971 = vrot.slane %v3906, 2
  %v3972 = vrot.slane %v3907, 2
  %v3973 = vrot.slane %v3908, 2
  %v3974 = vrot.slane %v3909, 2
  %v3975 = vrot.slane %v3910, 2
  %v3976 = vrot.slane %v3911, 2
  %v3977 = vrot.slane %v3912, 2
  %v3978 = vrot.slane %v3913, 2
  %v3979 = vrot.slane %v3914, 2
  %v3980 = vrot.slane %v3915, 2
  %v3981 = vrot.slane %v3916, 2
  %v3982 = vrot.slane %v3917, 2
  %v3983 = vrot.slane %v3918, 2
  %v3984 = vrot.slane %v3919, 2
  %v3985 = vrot.slane %v3920, 2
  %v3986 = vrot.slane %v3921, 2
  %v3987 = vrot.slane %v3922, 2
  %v3988 = vrot.slane %v3923, 2
  %v3989 = vrot.slane %v3924, 2
  %v3990 = vrot.slane %v3925, 2
  %v3991 = vrot.slane %v3926, 2
  %v3992 = vrot.slane %v3927, 2
  %v3993 = vrot.slane %v3928, 2
  %v3994 = vrot.slane %v3929, 2
  %v3995 = vrot.slane %v3930, 2
  %v3996 = vrot.slane %v3931, 2
  %v3997 = vrot.slane %v3932, 2
  %v3998 = vrot.slane %v3933, 2
  %v3999 = vrot.slane %v3934, 2
  %v4000 = vrot.slane %v3935, 2
  %v4001 = vrot.slane %v3936, 2
  %v4002 = vrot.slane %v3937, 2
  %v4003 = vrot.slane %v3938, 2
  %v4004 = vrot.slane %v3939, 2
  %v4005 = vrot.slane %v3940, 2
  %v4006 = vrot.slane %v3941, 2
  %v4007 = vrot.slane %v3942, 2
  %v4008 = vrot.slane %v3943, 2
  %v4009 = vrot.slane %v3944, 2
  %v4010 = vrot.slane %v3945, 2
  %v4011 = vrot.slane %v3946, 2
  %v4012 = vrot.slane %v3947, 2
  %v4013 = vrot.slane %v3948, 2
  %v4014 = vrot.slane %v3949, 2
  %v4015 = vrot.slane %v3950, 2
  %v4016 = vrot.slane %v3951, 2
  %v4017 = vrot.slane %v3952, 2
  %v4018 = vrot.slane %v3953, 2
  %v4019 = vrot.slane %v3954, 2
  %v4020 = vrot.slane %v3955, 2
  %v4021 = vrot.slane %v3956, 2
  %v4022 = vrot.slane %v3957, 2
  %v4023 = vrot.slane %v3958, 2
  %v4024 = vrot.slane %v3959, 2
  %v4025 = vrot.slane %v3960, 2
  %vm4026 = vcmp.lt.s32.totalorder %v2683, 6
  %v4027 = vsel %vm4026, %v4024, %v4025
  %v4028 = vsel %vm4026, %v4023, %v4024
  %v4029 = vsel %vm4026, %v4022, %v4023
  %v4030 = vsel %vm4026, %v4021, %v4022
  %v4031 = vsel %vm4026, %v4020, %v4021
  %v4032 = vsel %vm4026, %v4019, %v4020
  %v4033 = vsel %vm4026, %v4018, %v4019
  %v4034 = vsel %vm4026, %v4017, %v4018
  %v4035 = vsel %vm4026, %v4016, %v4017
  %v4036 = vsel %vm4026, %v4015, %v4016
  %v4037 = vsel %vm4026, %v4014, %v4015
  %v4038 = vsel %vm4026, %v4013, %v4014
  %v4039 = vsel %vm4026, %v4012, %v4013
  %v4040 = vsel %vm4026, %v4011, %v4012
  %v4041 = vsel %vm4026, %v4010, %v4011
  %v4042 = vsel %vm4026, %v4009, %v4010
  %v4043 = vsel %vm4026, %v4008, %v4009
  %v4044 = vsel %vm4026, %v4007, %v4008
  %v4045 = vsel %vm4026, %v4006, %v4007
  %v4046 = vsel %vm4026, %v4005, %v4006
  %v4047 = vsel %vm4026, %v4004, %v4005
  %v4048 = vsel %vm4026, %v4003, %v4004
  %v4049 = vsel %vm4026, %v4002, %v4003
  %v4050 = vsel %vm4026, %v4001, %v4002
  %v4051 = vsel %vm4026, %v4000, %v4001
  %v4052 = vsel %vm4026, %v3999, %v4000
  %v4053 = vsel %vm4026, %v3998, %v3999
  %v4054 = vsel %vm4026, %v3997, %v3998
  %v4055 = vsel %vm4026, %v3996, %v3997
  %v4056 = vsel %vm4026, %v3995, %v3996
  %v4057 = vsel %vm4026, %v3994, %v3995
  %v4058 = vsel %vm4026, %v3993, %v3994
  %v4059 = vsel %vm4026, %v3992, %v3993
  %v4060 = vsel %vm4026, %v3991, %v3992
  %v4061 = vsel %vm4026, %v3990, %v3991
  %v4062 = vsel %vm4026, %v3989, %v3990
  %v4063 = vsel %vm4026, %v3988, %v3989
  %v4064 = vsel %vm4026, %v3987, %v3988
  %v4065 = vsel %vm4026, %v3986, %v3987
  %v4066 = vsel %vm4026, %v3985, %v3986
  %v4067 = vsel %vm4026, %v3984, %v3985
  %v4068 = vsel %vm4026, %v3983, %v3984
  %v4069 = vsel %vm4026, %v3982, %v3983
  %v4070 = vsel %vm4026, %v3981, %v3982
  %v4071 = vsel %vm4026, %v3980, %v3981
  %v4072 = vsel %vm4026, %v3979, %v3980
  %v4073 = vsel %vm4026, %v3978, %v3979
  %v4074 = vsel %vm4026, %v3977, %v3978
  %v4075 = vsel %vm4026, %v3976, %v3977
  %v4076 = vsel %vm4026, %v3975, %v3976
  %v4077 = vsel %vm4026, %v3974, %v3975
  %v4078 = vsel %vm4026, %v3973, %v3974
  %v4079 = vsel %vm4026, %v3972, %v3973
  %v4080 = vsel %vm4026, %v3971, %v3972
  %v4081 = vsel %vm4026, %v3970, %v3971
  %v4082 = vsel %vm4026, %v3969, %v3970
  %v4083 = vsel %vm4026, %v3968, %v3969
  %v4084 = vsel %vm4026, %v3967, %v3968
  %v4085 = vsel %vm4026, %v3966, %v3967
  %v4086 = vsel %vm4026, %v3965, %v3966
  %v4087 = vsel %vm4026, %v3964, %v3965
  %v4088 = vsel %vm4026, %v3963, %v3964
  %v4089 = vsel %vm4026, %v3962, %v3963
  %v4090 = vsel %vm4026, %v3961, %v3962
  %v4091 = vadd.f32 %v2749, %v4090
  %v4092 = vadd.f32 %v2750, %v4089
  %v4093 = vadd.f32 %v2751, %v4088
  %v4094 = vadd.f32 %v2752, %v4087
  %v4095 = vadd.f32 %v2753, %v4086
  %v4096 = vadd.f32 %v2754, %v4085
  %v4097 = vadd.f32 %v2755, %v4084
  %v4098 = vadd.f32 %v2756, %v4083
  %v4099 = vadd.f32 %v2757, %v4082
  %v4100 = vadd.f32 %v2758, %v4081
  %v4101 = vadd.f32 %v2759, %v4080
  %v4102 = vadd.f32 %v2760, %v4079
  %v4103 = vadd.f32 %v2761, %v4078
  %v4104 = vadd.f32 %v2762, %v4077
  %v4105 = vadd.f32 %v2763, %v4076
  %v4106 = vadd.f32 %v2764, %v4075
  %v4107 = vadd.f32 %v2765, %v4074
  %v4108 = vadd.f32 %v2766, %v4073
  %v4109 = vadd.f32 %v2767, %v4072
  %v4110 = vadd.f32 %v2768, %v4071
  %v4111 = vadd.f32 %v2769, %v4070
  %v4112 = vadd.f32 %v2770, %v4069
  %v4113 = vadd.f32 %v2771, %v4068
  %v4114 = vadd.f32 %v2772, %v4067
  %v4115 = vadd.f32 %v2773, %v4066
  %v4116 = vadd.f32 %v2774, %v4065
  %v4117 = vadd.f32 %v2775, %v4064
  %v4118 = vadd.f32 %v2776, %v4063
  %v4119 = vadd.f32 %v2777, %v4062
  %v4120 = vadd.f32 %v2778, %v4061
  %v4121 = vadd.f32 %v2779, %v4060
  %v4122 = vadd.f32 %v2780, %v4059
  %v4123 = vadd.f32 %v2781, %v4058
  %v4124 = vadd.f32 %v2782, %v4057
  %v4125 = vadd.f32 %v2783, %v4056
  %v4126 = vadd.f32 %v2784, %v4055
  %v4127 = vadd.f32 %v2785, %v4054
  %v4128 = vadd.f32 %v2786, %v4053
  %v4129 = vadd.f32 %v2787, %v4052
  %v4130 = vadd.f32 %v2788, %v4051
  %v4131 = vadd.f32 %v2789, %v4050
  %v4132 = vadd.f32 %v2790, %v4049
  %v4133 = vadd.f32 %v2791, %v4048
  %v4134 = vadd.f32 %v2792, %v4047
  %v4135 = vadd.f32 %v2793, %v4046
  %v4136 = vadd.f32 %v2794, %v4045
  %v4137 = vadd.f32 %v2795, %v4044
  %v4138 = vadd.f32 %v2796, %v4043
  %v4139 = vadd.f32 %v2797, %v4042
  %v4140 = vadd.f32 %v2798, %v4041
  %v4141 = vadd.f32 %v2799, %v4040
  %v4142 = vadd.f32 %v2800, %v4039
  %v4143 = vadd.f32 %v2801, %v4038
  %v4144 = vadd.f32 %v2802, %v4037
  %v4145 = vadd.f32 %v2803, %v4036
  %v4146 = vadd.f32 %v2804, %v4035
  %v4147 = vadd.f32 %v2805, %v4034
  %v4148 = vadd.f32 %v2806, %v4033
  %v4149 = vadd.f32 %v2807, %v4032
  %v4150 = vadd.f32 %v2808, %v4031
  %v4151 = vadd.f32 %v2809, %v4030
  %v4152 = vadd.f32 %v2810, %v4029
  %v4153 = vadd.f32 %v2811, %v4028
  %v4154 = vadd.f32 %v2812, %v4027
  %v4155 = vld [vmem:[%s3] sm:$0x1]
  %v4157 = vlaneseq
  %v4158 = vshrl.u32 %v4157, 7
  %v4159 = vsub.s32 0, %v4158
  %v4160 = vrot.slane %v4155, %v4159
  %v4162 = vadd.f32 %v4091, %v4160
  %v4163 = vadd.f32 %v4092, %v4160
  %v4164 = vadd.f32 %v4093, %v4160
  %v4165 = vadd.f32 %v4094, %v4160
  %v4166 = vadd.f32 %v4095, %v4160
  %v4167 = vadd.f32 %v4096, %v4160
  %v4168 = vadd.f32 %v4097, %v4160
  %v4169 = vadd.f32 %v4098, %v4160
  %v4170 = vadd.f32 %v4099, %v4160
  %v4171 = vadd.f32 %v4100, %v4160
  %v4172 = vadd.f32 %v4101, %v4160
  %v4173 = vadd.f32 %v4102, %v4160
  %v4174 = vadd.f32 %v4103, %v4160
  %v4175 = vadd.f32 %v4104, %v4160
  %v4176 = vadd.f32 %v4105, %v4160
  %v4177 = vadd.f32 %v4106, %v4160
  %v4178 = vadd.f32 %v4107, %v4160
  %v4179 = vadd.f32 %v4108, %v4160
  %v4180 = vadd.f32 %v4109, %v4160
  %v4181 = vadd.f32 %v4110, %v4160
  %v4182 = vadd.f32 %v4111, %v4160
  %v4183 = vadd.f32 %v4112, %v4160
  %v4184 = vadd.f32 %v4113, %v4160
  %v4185 = vadd.f32 %v4114, %v4160
  %v4186 = vadd.f32 %v4115, %v4160
  %v4187 = vadd.f32 %v4116, %v4160
  %v4188 = vadd.f32 %v4117, %v4160
  %v4189 = vadd.f32 %v4118, %v4160
  %v4190 = vadd.f32 %v4119, %v4160
  %v4191 = vadd.f32 %v4120, %v4160
  %v4192 = vadd.f32 %v4121, %v4160
  %v4193 = vadd.f32 %v4122, %v4160
  %v4194 = vadd.f32 %v4123, %v4160
  %v4195 = vadd.f32 %v4124, %v4160
  %v4196 = vadd.f32 %v4125, %v4160
  %v4197 = vadd.f32 %v4126, %v4160
  %v4198 = vadd.f32 %v4127, %v4160
  %v4199 = vadd.f32 %v4128, %v4160
  %v4200 = vadd.f32 %v4129, %v4160
  %v4201 = vadd.f32 %v4130, %v4160
  %v4202 = vadd.f32 %v4131, %v4160
  %v4203 = vadd.f32 %v4132, %v4160
  %v4204 = vadd.f32 %v4133, %v4160
  %v4205 = vadd.f32 %v4134, %v4160
  %v4206 = vadd.f32 %v4135, %v4160
  %v4207 = vadd.f32 %v4136, %v4160
  %v4208 = vadd.f32 %v4137, %v4160
  %v4209 = vadd.f32 %v4138, %v4160
  %v4210 = vadd.f32 %v4139, %v4160
  %v4211 = vadd.f32 %v4140, %v4160
  %v4212 = vadd.f32 %v4141, %v4160
  %v4213 = vadd.f32 %v4142, %v4160
  %v4214 = vadd.f32 %v4143, %v4160
  %v4215 = vadd.f32 %v4144, %v4160
  %v4216 = vadd.f32 %v4145, %v4160
  %v4217 = vadd.f32 %v4146, %v4160
  %v4218 = vadd.f32 %v4147, %v4160
  %v4219 = vadd.f32 %v4148, %v4160
  %v4220 = vadd.f32 %v4149, %v4160
  %v4221 = vadd.f32 %v4150, %v4160
  %v4222 = vadd.f32 %v4151, %v4160
  %v4223 = vadd.f32 %v4152, %v4160
  %v4224 = vadd.f32 %v4153, %v4160
  %v4225 = vadd.f32 %v4154, %v4160
  %v4226 = vld [vmem:[%s1] sm:$0xf]
  %v4227 = vld [vmem:[%s1 + $0x4] sm:$0xf]
  %v4228 = vld [vmem:[%s1 + $0x8] sm:$0xf]
  %v4229 = vld [vmem:[%s1 + $0xc] sm:$0xf]
  %v4230 = vld [vmem:[%s1 + $0x10] sm:$0xf]
  %v4231 = vld [vmem:[%s1 + $0x14] sm:$0xf]
  %v4232 = vld [vmem:[%s1 + $0x18] sm:$0xf]
  %v4233 = vld [vmem:[%s1 + $0x1c] sm:$0xf]
  %v4234 = vld [vmem:[%s1 + $0x20] sm:$0xf]
  %v4235 = vld [vmem:[%s1 + $0x24] sm:$0xf]
  %v4236 = vld [vmem:[%s1 + $0x28] sm:$0xf]
  %v4237 = vld [vmem:[%s1 + $0x2c] sm:$0xf]
  %v4238 = vld [vmem:[%s1 + $0x30] sm:$0xf]
  %v4239 = vld [vmem:[%s1 + $0x34] sm:$0xf]
  %v4240 = vld [vmem:[%s1 + $0x38] sm:$0xf]
  %v4241 = vld [vmem:[%s1 + $0x3c] sm:$0xf]
  %v4242 = vld [vmem:[%s1 + $0x40] sm:$0xf]
  %v4243 = vld [vmem:[%s1 + $0x44] sm:$0xf]
  %v4244 = vld [vmem:[%s1 + $0x48] sm:$0xf]
  %v4245 = vld [vmem:[%s1 + $0x4c] sm:$0xf]
  %v4246 = vld [vmem:[%s1 + $0x50] sm:$0xf]
  %v4247 = vld [vmem:[%s1 + $0x54] sm:$0xf]
  %v4248 = vld [vmem:[%s1 + $0x58] sm:$0xf]
  %v4249 = vld [vmem:[%s1 + $0x5c] sm:$0xf]
  %v4250 = vld [vmem:[%s1 + $0x60] sm:$0xf]
  %v4251 = vld [vmem:[%s1 + $0x64] sm:$0xf]
  %v4252 = vld [vmem:[%s1 + $0x68] sm:$0xf]
  %v4253 = vld [vmem:[%s1 + $0x6c] sm:$0xf]
  %v4254 = vld [vmem:[%s1 + $0x70] sm:$0xf]
  %v4255 = vld [vmem:[%s1 + $0x74] sm:$0xf]
  %v4256 = vld [vmem:[%s1 + $0x78] sm:$0xf]
  %v4257 = vld [vmem:[%s1 + $0x7c] sm:$0xf]
  %v4258 = vld [vmem:[%s1 + $0x80] sm:$0xf]
  %v4259 = vld [vmem:[%s1 + $0x84] sm:$0xf]
  %v4260 = vld [vmem:[%s1 + $0x88] sm:$0xf]
  %v4261 = vld [vmem:[%s1 + $0x8c] sm:$0xf]
  %v4262 = vld [vmem:[%s1 + $0x90] sm:$0xf]
  %v4263 = vld [vmem:[%s1 + $0x94] sm:$0xf]
  %v4264 = vld [vmem:[%s1 + $0x98] sm:$0xf]
  %v4265 = vld [vmem:[%s1 + $0x9c] sm:$0xf]
  %v4266 = vld [vmem:[%s1 + $0xa0] sm:$0xf]
  %v4267 = vld [vmem:[%s1 + $0xa4] sm:$0xf]
  %v4268 = vld [vmem:[%s1 + $0xa8] sm:$0xf]
  %v4269 = vld [vmem:[%s1 + $0xac] sm:$0xf]
  %v4270 = vld [vmem:[%s1 + $0xb0] sm:$0xf]
  %v4271 = vld [vmem:[%s1 + $0xb4] sm:$0xf]
  %v4272 = vld [vmem:[%s1 + $0xb8] sm:$0xf]
  %v4273 = vld [vmem:[%s1 + $0xbc] sm:$0xf]
  %v4274 = vld [vmem:[%s1 + $0xc0] sm:$0xf]
  %v4275 = vld [vmem:[%s1 + $0xc4] sm:$0xf]
  %v4276 = vld [vmem:[%s1 + $0xc8] sm:$0xf]
  %v4277 = vld [vmem:[%s1 + $0xcc] sm:$0xf]
  %v4278 = vld [vmem:[%s1 + $0xd0] sm:$0xf]
  %v4279 = vld [vmem:[%s1 + $0xd4] sm:$0xf]
  %v4280 = vld [vmem:[%s1 + $0xd8] sm:$0xf]
  %v4281 = vld [vmem:[%s1 + $0xdc] sm:$0xf]
  %v4282 = vld [vmem:[%s1 + $0xe0] sm:$0xf]
  %v4283 = vld [vmem:[%s1 + $0xe4] sm:$0xf]
  %v4284 = vld [vmem:[%s1 + $0xe8] sm:$0xf]
  %v4285 = vld [vmem:[%s1 + $0xec] sm:$0xf]
  %v4286 = vld [vmem:[%s1 + $0xf0] sm:$0xf]
  %v4287 = vld [vmem:[%s1 + $0xf4] sm:$0xf]
  %v4288 = vld [vmem:[%s1 + $0xf8] sm:$0xf]
  %v4289 = vld [vmem:[%s1 + $0xfc] sm:$0xf]
  %v4290 = vld [vmem:[%s1 + $0x100] sm:$0xf]
  %v4291 = vld [vmem:[%s1 + $0x104] sm:$0xf]
  %v4292 = vld [vmem:[%s1 + $0x108] sm:$0xf]
  %v4293 = vld [vmem:[%s1 + $0x10c] sm:$0xf]
  %v4294 = vld [vmem:[%s1 + $0x110] sm:$0xf]
  %v4295 = vld [vmem:[%s1 + $0x114] sm:$0xf]
  %v4296 = vld [vmem:[%s1 + $0x118] sm:$0xf]
  %v4297 = vld [vmem:[%s1 + $0x11c] sm:$0xf]
  %v4298 = vld [vmem:[%s1 + $0x120] sm:$0xf]
  %v4299 = vld [vmem:[%s1 + $0x124] sm:$0xf]
  %v4300 = vld [vmem:[%s4] sm:$0xf]
  %v4301 = vld [vmem:[%s4 + $0x4] sm:$0xf]
  %v4302 = vld [vmem:[%s4 + $0x8] sm:$0xf]
  %v4303 = vld [vmem:[%s4 + $0xc] sm:$0xf]
  %v4304 = vld [vmem:[%s4 + $0x10] sm:$0xf]
  %v4305 = vld [vmem:[%s4 + $0x14] sm:$0xf]
  %v4306 = vld [vmem:[%s4 + $0x18] sm:$0xf]
  %v4307 = vld [vmem:[%s4 + $0x1c] sm:$0xf]
  %v4308 = vld [vmem:[%s4 + $0x20] sm:$0xf]
  %v4309 = vld [vmem:[%s4 + $0x24] sm:$0xf]
  %v4310 = vld [vmem:[%s4 + $0x28] sm:$0xf]
  %v4311 = vld [vmem:[%s4 + $0x2c] sm:$0xf]
  %v4312 = vld [vmem:[%s4 + $0x30] sm:$0xf]
  %v4313 = vld [vmem:[%s4 + $0x34] sm:$0xf]
  %v4314 = vld [vmem:[%s4 + $0x38] sm:$0xf]
  %v4315 = vld [vmem:[%s4 + $0x3c] sm:$0xf]
  %s4316 = scalar_lea.vmem %s4, 192
  %v4317 = vld [vmem:[%s4316] sm:$0xf]
  %v4318 = vld [vmem:[%s4316 + $0x4] sm:$0xf]
  %v4319 = vld [vmem:[%s4316 + $0x8] sm:$0xf]
  %v4320 = vld [vmem:[%s4316 + $0xc] sm:$0xf]
  %v4321 = vld [vmem:[%s4316 + $0x10] sm:$0xf]
  %v4322 = vld [vmem:[%s4316 + $0x14] sm:$0xf]
  %v4323 = vld [vmem:[%s4316 + $0x18] sm:$0xf]
  %v4324 = vld [vmem:[%s4316 + $0x1c] sm:$0xf]
  %v4325 = vld [vmem:[%s4316 + $0x20] sm:$0xf]
  %v4326 = vld [vmem:[%s4316 + $0x24] sm:$0xf]
  %v4327 = vld [vmem:[%s4316 + $0x28] sm:$0xf]
  %v4328 = vld [vmem:[%s4316 + $0x2c] sm:$0xf]
  %v4329 = vld [vmem:[%s4316 + $0x30] sm:$0xf]
  %v4330 = vld [vmem:[%s4316 + $0x34] sm:$0xf]
  %v4331 = vld [vmem:[%s4316 + $0x38] sm:$0xf]
  %v4332 = vld [vmem:[%s4316 + $0x3c] sm:$0xf]
  %v4399 = vunpack.c.l.b16 %v4230
  %v4400 = vunpack.c.l.b16 %v4231
  %v4401 = vunpack.c.l.b16 %v4232
  %v4402 = vunpack.c.l.b16 %v4233
  %v4403 = vunpack.c.l.b16 %v4234
  %v4404 = vunpack.c.l.b16 %v4235
  %v4405 = vunpack.c.l.b16 %v4236
  %v4406 = vunpack.c.l.b16 %v4237
  %v4407 = vunpack.c.l.b16 %v4238
  %v4408 = vunpack.c.l.b16 %v4239
  %v4409 = vunpack.c.l.b16 %v4240
  %v4410 = vunpack.c.l.b16 %v4241
  %v4411 = vunpack.c.l.b16 %v4242
  %v4412 = vunpack.c.l.b16 %v4243
  %v4413 = vunpack.c.l.b16 %v4244
  %v4414 = vunpack.c.l.b16 %v4245
  %v4415 = vunpack.c.l.b16 %v4246
  %v4416 = vunpack.c.l.b16 %v4247
  %v4417 = vunpack.c.l.b16 %v4248
  %v4418 = vunpack.c.l.b16 %v4249
  %v4419 = vunpack.c.l.b16 %v4250
  %v4420 = vunpack.c.l.b16 %v4251
  %v4421 = vunpack.c.l.b16 %v4252
  %v4422 = vunpack.c.l.b16 %v4253
  %v4423 = vunpack.c.l.b16 %v4254
  %v4424 = vunpack.c.l.b16 %v4255
  %v4425 = vunpack.c.l.b16 %v4256
  %v4426 = vunpack.c.l.b16 %v4257
  %v4427 = vunpack.c.l.b16 %v4258
  %v4428 = vunpack.c.l.b16 %v4259
  %v4429 = vunpack.c.l.b16 %v4260
  %v4430 = vunpack.c.l.b16 %v4261
  %v4431 = vunpack.c.l.b16 %v4262
  %v4432 = vunpack.c.l.b16 %v4263
  %v4433 = vunpack.c.l.b16 %v4264
  %v4434 = vunpack.c.l.b16 %v4265
  %v4435 = vunpack.c.l.b16 %v4266
  %v4436 = vunpack.c.l.b16 %v4267
  %v4437 = vunpack.c.l.b16 %v4268
  %v4438 = vunpack.c.l.b16 %v4269
  %v4439 = vunpack.c.l.b16 %v4270
  %v4440 = vunpack.c.l.b16 %v4271
  %v4441 = vunpack.c.l.b16 %v4272
  %v4442 = vunpack.c.l.b16 %v4273
  %v4443 = vunpack.c.l.b16 %v4274
  %v4444 = vunpack.c.l.b16 %v4275
  %v4445 = vunpack.c.l.b16 %v4276
  %v4446 = vunpack.c.l.b16 %v4277
  %v4447 = vunpack.c.l.b16 %v4278
  %v4448 = vunpack.c.l.b16 %v4279
  %v4449 = vunpack.c.l.b16 %v4280
  %v4450 = vunpack.c.l.b16 %v4281
  %v4451 = vunpack.c.l.b16 %v4282
  %v4452 = vunpack.c.l.b16 %v4283
  %v4453 = vunpack.c.l.b16 %v4284
  %v4454 = vunpack.c.l.b16 %v4285
  %v4455 = vunpack.c.l.b16 %v4286
  %v4456 = vunpack.c.l.b16 %v4287
  %v4457 = vunpack.c.l.b16 %v4288
  %v4458 = vunpack.c.l.b16 %v4289
  %v4459 = vunpack.c.l.b16 %v4290
  %v4460 = vunpack.c.l.b16 %v4291
  %v4461 = vunpack.c.l.b16 %v4292
  %v4462 = vunpack.c.l.b16 %v4293
  %v4463 = vunpack.c.l.b16 %v4294
  %v4464 = vunpack.c.l.b16 %v4295
  %v4465 = vpack.c.b16 %v4400, %v4399
  %v4466 = vpack.c.b16 %v4402, %v4401
  %v4467 = vpack.c.b16 %v4404, %v4403
  %v4468 = vpack.c.b16 %v4406, %v4405
  %v4469 = vpack.c.b16 %v4408, %v4407
  %v4470 = vpack.c.b16 %v4410, %v4409
  %v4471 = vpack.c.b16 %v4412, %v4411
  %v4472 = vpack.c.b16 %v4414, %v4413
  %v4473 = vpack.c.b16 %v4416, %v4415
  %v4474 = vpack.c.b16 %v4418, %v4417
  %v4475 = vpack.c.b16 %v4420, %v4419
  %v4476 = vpack.c.b16 %v4422, %v4421
  %v4477 = vpack.c.b16 %v4424, %v4423
  %v4478 = vpack.c.b16 %v4426, %v4425
  %v4479 = vpack.c.b16 %v4428, %v4427
  %v4480 = vpack.c.b16 %v4430, %v4429
  %v4481 = vpack.c.b16 %v4432, %v4431
  %v4482 = vpack.c.b16 %v4434, %v4433
  %v4483 = vpack.c.b16 %v4436, %v4435
  %v4484 = vpack.c.b16 %v4438, %v4437
  %v4485 = vpack.c.b16 %v4440, %v4439
  %v4486 = vpack.c.b16 %v4442, %v4441
  %v4487 = vpack.c.b16 %v4444, %v4443
  %v4488 = vpack.c.b16 %v4446, %v4445
  %v4489 = vpack.c.b16 %v4448, %v4447
  %v4490 = vpack.c.b16 %v4450, %v4449
  %v4491 = vpack.c.b16 %v4452, %v4451
  %v4492 = vpack.c.b16 %v4454, %v4453
  %v4493 = vpack.c.b16 %v4456, %v4455
  %v4494 = vpack.c.b16 %v4458, %v4457
  %v4495 = vpack.c.b16 %v4460, %v4459
  %v4496 = vpack.c.b16 %v4462, %v4461
  %v4497 = vpack.c.b16 %v4464, %v4463
  %v4547 = vunpack.c.l.b16 %v4317
  %v4548 = vunpack.c.l.b16 %v4318
  %v4549 = vunpack.c.l.b16 %v4319
  %v4550 = vunpack.c.l.b16 %v4320
  %v4551 = vunpack.c.l.b16 %v4321
  %v4552 = vunpack.c.l.b16 %v4322
  %v4553 = vunpack.c.l.b16 %v4323
  %v4554 = vunpack.c.l.b16 %v4324
  %v4555 = vunpack.c.l.b16 %v4325
  %v4556 = vunpack.c.l.b16 %v4326
  %v4557 = vunpack.c.l.b16 %v4327
  %v4558 = vunpack.c.l.b16 %v4328
  %v4559 = vunpack.c.l.b16 %v4329
  %v4560 = vunpack.c.l.b16 %v4330
  %v4561 = vunpack.c.l.b16 %v4331
  %v4562 = vunpack.c.l.b16 %v4332
  %v4563 = vpack.c.b16 %v4548, %v4547
  %v4564 = vpack.c.b16 %v4550, %v4549
  %v4565 = vpack.c.b16 %v4552, %v4551
  %v4566 = vpack.c.b16 %v4554, %v4553
  %v4567 = vpack.c.b16 %v4556, %v4555
  %v4568 = vpack.c.b16 %v4558, %v4557
  %v4569 = vpack.c.b16 %v4560, %v4559
  %v4570 = vpack.c.b16 %v4562, %v4561
  %4579 = vmatprep.subr.bf16.mxu0 0
  %4580 = vmatpush1.bf16.msra.mxu0 %v4570
  %4581 = vmatprep.subr.bf16.mxu0 0
  %4582 = vmatpush1.bf16.msra.mxu0 %v4569
  %4583 = vmatprep.subr.bf16.mxu0 0
  %4584 = vmatpush1.bf16.msra.mxu0 %v4568
  %4585 = vmatprep.subr.bf16.mxu0 0
  %4586 = vmatpush1.bf16.msra.mxu0 %v4567
  %4587 = vmatprep.subr.bf16.mxu0 0
  %4588 = vmatpush1.bf16.msra.mxu0 %v4566
  %4589 = vmatprep.subr.bf16.mxu0 0
  %4590 = vmatpush1.bf16.msra.mxu0 %v4565
  %4591 = vmatprep.subr.bf16.mxu0 0
  %4592 = vmatpush1.bf16.msra.mxu0 %v4564
  %4593 = vmatprep.subr.bf16.mxu0 0
  %4594 = vmatpush1.bf16.msra.mxu0 %v4563
  %4595 = vmatprep.subr.bf16.mxu0 0
  %4596 = vmatpush2.bf16.msra.mxu0 0
  %4597 = vmatprep.subr.bf16.mxu0 0
  %4598 = vmatpush2.bf16.msra.mxu0 0
  %4599 = vmatprep.subr.bf16.mxu0 0
  %4600 = vmatpush2.bf16.msra.mxu0 0
  %4601 = vmatprep.subr.bf16.mxu0 0
  %4602 = vmatpush2.bf16.msra.mxu0 0
  %4603 = vmatprep.subr.bf16.mxu0 0
  %4604 = vmatpush2.bf16.msra.mxu0 0
  %4605 = vmatprep.subr.bf16.mxu0 0
  %4606 = vmatpush2.bf16.msra.mxu0 0
  %4607 = vmatprep.subr.bf16.mxu0 0
  %4608 = vmatpush2.bf16.msra.mxu0 0
  %4609 = vmatprep.subr.bf16.mxu0 0
  %4610 = vmatpush2.bf16.msra.mxu0 0
  %4611 = vmatprep.mubr.bf16.mxu0 0
  %4612 = vmatmul.mubr.bf16.gmra.mxu0 %v4465
  %v4613 = vpop.f32.mrf.mxu0
  %v4614 = vadd.f32 0.0, %v4613
  %v4615 = vpop.f32.mrf.mxu0
  %v4616 = vpop.f32.mrf.mxu0
  %v4617 = vadd.f32 0.0, %v4616
  %v4618 = vpop.f32.mrf.mxu0
  %4619 = vmatprep.mubr.bf16.mxu0 0
  %4620 = vmatmul.mubr.bf16.gmra.mxu0 %v4466
  %v4621 = vpop.f32.mrf.mxu0
  %v4622 = vadd.f32 0.0, %v4621
  %v4623 = vpop.f32.mrf.mxu0
  %v4624 = vpop.f32.mrf.mxu0
  %v4625 = vadd.f32 0.0, %v4624
  %v4626 = vpop.f32.mrf.mxu0
  %4627 = vmatprep.mubr.bf16.mxu0 0
  %4628 = vmatmul.mubr.bf16.gmra.mxu0 %v4467
  %v4629 = vpop.f32.mrf.mxu0
  %v4630 = vadd.f32 0.0, %v4629
  %v4631 = vpop.f32.mrf.mxu0
  %v4632 = vpop.f32.mrf.mxu0
  %v4633 = vadd.f32 0.0, %v4632
  %v4634 = vpop.f32.mrf.mxu0
  %4635 = vmatprep.mubr.bf16.mxu0 0
  %4636 = vmatmul.mubr.bf16.gmra.mxu0 %v4468
  %v4637 = vpop.f32.mrf.mxu0
  %v4638 = vadd.f32 0.0, %v4637
  %v4639 = vpop.f32.mrf.mxu0
  %v4640 = vpop.f32.mrf.mxu0
  %v4641 = vadd.f32 0.0, %v4640
  %v4642 = vpop.f32.mrf.mxu0
  %4643 = vmatprep.mubr.bf16.mxu0 0
  %4644 = vmatmul.mubr.bf16.gmra.mxu0 %v4469
  %v4645 = vpop.f32.mrf.mxu0
  %v4646 = vadd.f32 0.0, %v4645
  %v4647 = vpop.f32.mrf.mxu0
  %v4648 = vpop.f32.mrf.mxu0
  %v4649 = vadd.f32 0.0, %v4648
  %v4650 = vpop.f32.mrf.mxu0
  %4651 = vmatprep.mubr.bf16.mxu0 0
  %4652 = vmatmul.mubr.bf16.gmra.mxu0 %v4470
  %v4653 = vpop.f32.mrf.mxu0
  %v4654 = vadd.f32 0.0, %v4653
  %v4655 = vpop.f32.mrf.mxu0
  %v4656 = vpop.f32.mrf.mxu0
  %v4657 = vadd.f32 0.0, %v4656
  %v4658 = vpop.f32.mrf.mxu0
  %4659 = vmatprep.mubr.bf16.mxu0 0
  %4660 = vmatmul.mubr.bf16.gmra.mxu0 %v4471
  %v4661 = vpop.f32.mrf.mxu0
  %v4662 = vadd.f32 0.0, %v4661
  %v4663 = vpop.f32.mrf.mxu0
  %v4664 = vpop.f32.mrf.mxu0
  %v4665 = vadd.f32 0.0, %v4664
  %v4666 = vpop.f32.mrf.mxu0
  %4667 = vmatprep.mubr.bf16.mxu0 0
  %4668 = vmatmul.mubr.bf16.gmra.mxu0 %v4472
  %v4669 = vpop.f32.mrf.mxu0
  %v4670 = vadd.f32 0.0, %v4669
  %v4671 = vpop.f32.mrf.mxu0
  %v4672 = vpop.f32.mrf.mxu0
  %v4673 = vadd.f32 0.0, %v4672
  %v4674 = vpop.f32.mrf.mxu0
  %4675 = vmatprep.mubr.bf16.mxu0 0
  %4676 = vmatmul.mubr.bf16.gmra.mxu0 %v4473
  %v4677 = vpop.f32.mrf.mxu0
  %v4678 = vadd.f32 0.0, %v4677
  %v4679 = vpop.f32.mrf.mxu0
  %v4680 = vpop.f32.mrf.mxu0
  %v4681 = vadd.f32 0.0, %v4680
  %v4682 = vpop.f32.mrf.mxu0
  %4683 = vmatprep.mubr.bf16.mxu0 0
  %4684 = vmatmul.mubr.bf16.gmra.mxu0 %v4474
  %v4685 = vpop.f32.mrf.mxu0
  %v4686 = vadd.f32 0.0, %v4685
  %v4687 = vpop.f32.mrf.mxu0
  %v4688 = vpop.f32.mrf.mxu0
  %v4689 = vadd.f32 0.0, %v4688
  %v4690 = vpop.f32.mrf.mxu0
  %4691 = vmatprep.mubr.bf16.mxu0 0
  %4692 = vmatmul.mubr.bf16.gmra.mxu0 %v4475
  %v4693 = vpop.f32.mrf.mxu0
  %v4694 = vadd.f32 0.0, %v4693
  %v4695 = vpop.f32.mrf.mxu0
  %v4696 = vpop.f32.mrf.mxu0
  %v4697 = vadd.f32 0.0, %v4696
  %v4698 = vpop.f32.mrf.mxu0
  %4699 = vmatprep.mubr.bf16.mxu0 0
  %4700 = vmatmul.mubr.bf16.gmra.mxu0 %v4476
  %v4701 = vpop.f32.mrf.mxu0
  %v4702 = vadd.f32 0.0, %v4701
  %v4703 = vpop.f32.mrf.mxu0
  %v4704 = vpop.f32.mrf.mxu0
  %v4705 = vadd.f32 0.0, %v4704
  %v4706 = vpop.f32.mrf.mxu0
  %4707 = vmatprep.mubr.bf16.mxu0 0
  %4708 = vmatmul.mubr.bf16.gmra.mxu0 %v4477
  %v4709 = vpop.f32.mrf.mxu0
  %v4710 = vadd.f32 0.0, %v4709
  %v4711 = vpop.f32.mrf.mxu0
  %v4712 = vpop.f32.mrf.mxu0
  %v4713 = vadd.f32 0.0, %v4712
  %v4714 = vpop.f32.mrf.mxu0
  %4715 = vmatprep.mubr.bf16.mxu0 0
  %4716 = vmatmul.mubr.bf16.gmra.mxu0 %v4478
  %v4717 = vpop.f32.mrf.mxu0
  %v4718 = vadd.f32 0.0, %v4717
  %v4719 = vpop.f32.mrf.mxu0
  %v4720 = vpop.f32.mrf.mxu0
  %v4721 = vadd.f32 0.0, %v4720
  %v4722 = vpop.f32.mrf.mxu0
  %4723 = vmatprep.mubr.bf16.mxu0 0
  %4724 = vmatmul.mubr.bf16.gmra.mxu0 %v4479
  %v4725 = vpop.f32.mrf.mxu0
  %v4726 = vadd.f32 0.0, %v4725
  %v4727 = vpop.f32.mrf.mxu0
  %v4728 = vpop.f32.mrf.mxu0
  %v4729 = vadd.f32 0.0, %v4728
  %v4730 = vpop.f32.mrf.mxu0
  %4731 = vmatprep.mubr.bf16.mxu0 0
  %4732 = vmatmul.mubr.bf16.gmra.mxu0 %v4480
  %v4733 = vpop.f32.mrf.mxu0
  %v4734 = vadd.f32 0.0, %v4733
  %v4735 = vpop.f32.mrf.mxu0
  %v4736 = vpop.f32.mrf.mxu0
  %v4737 = vadd.f32 0.0, %v4736
  %v4738 = vpop.f32.mrf.mxu0
  %4739 = vmatprep.mubr.bf16.mxu0 0
  %4740 = vmatmul.mubr.bf16.gmra.mxu0 %v4481
  %v4741 = vpop.f32.mrf.mxu0
  %v4742 = vadd.f32 0.0, %v4741
  %v4743 = vpop.f32.mrf.mxu0
  %v4744 = vpop.f32.mrf.mxu0
  %v4745 = vadd.f32 0.0, %v4744
  %v4746 = vpop.f32.mrf.mxu0
  %4747 = vmatprep.mubr.bf16.mxu0 0
  %4748 = vmatmul.mubr.bf16.gmra.mxu0 %v4482
  %v4749 = vpop.f32.mrf.mxu0
  %v4750 = vadd.f32 0.0, %v4749
  %v4751 = vpop.f32.mrf.mxu0
  %v4752 = vpop.f32.mrf.mxu0
  %v4753 = vadd.f32 0.0, %v4752
  %v4754 = vpop.f32.mrf.mxu0
  %4755 = vmatprep.mubr.bf16.mxu0 0
  %4756 = vmatmul.mubr.bf16.gmra.mxu0 %v4483
  %v4757 = vpop.f32.mrf.mxu0
  %v4758 = vadd.f32 0.0, %v4757
  %v4759 = vpop.f32.mrf.mxu0
  %v4760 = vpop.f32.mrf.mxu0
  %v4761 = vadd.f32 0.0, %v4760
  %v4762 = vpop.f32.mrf.mxu0
  %4763 = vmatprep.mubr.bf16.mxu0 0
  %4764 = vmatmul.mubr.bf16.gmra.mxu0 %v4484
  %v4765 = vpop.f32.mrf.mxu0
  %v4766 = vadd.f32 0.0, %v4765
  %v4767 = vpop.f32.mrf.mxu0
  %v4768 = vpop.f32.mrf.mxu0
  %v4769 = vadd.f32 0.0, %v4768
  %v4770 = vpop.f32.mrf.mxu0
  %4771 = vmatprep.mubr.bf16.mxu0 0
  %4772 = vmatmul.mubr.bf16.gmra.mxu0 %v4485
  %v4773 = vpop.f32.mrf.mxu0
  %v4774 = vadd.f32 0.0, %v4773
  %v4775 = vpop.f32.mrf.mxu0
  %v4776 = vpop.f32.mrf.mxu0
  %v4777 = vadd.f32 0.0, %v4776
  %v4778 = vpop.f32.mrf.mxu0
  %4779 = vmatprep.mubr.bf16.mxu0 0
  %4780 = vmatmul.mubr.bf16.gmra.mxu0 %v4486
  %v4781 = vpop.f32.mrf.mxu0
  %v4782 = vadd.f32 0.0, %v4781
  %v4783 = vpop.f32.mrf.mxu0
  %v4784 = vpop.f32.mrf.mxu0
  %v4785 = vadd.f32 0.0, %v4784
  %v4786 = vpop.f32.mrf.mxu0
  %4787 = vmatprep.mubr.bf16.mxu0 0
  %4788 = vmatmul.mubr.bf16.gmra.mxu0 %v4487
  %v4789 = vpop.f32.mrf.mxu0
  %v4790 = vadd.f32 0.0, %v4789
  %v4791 = vpop.f32.mrf.mxu0
  %v4792 = vpop.f32.mrf.mxu0
  %v4793 = vadd.f32 0.0, %v4792
  %v4794 = vpop.f32.mrf.mxu0
  %4795 = vmatprep.mubr.bf16.mxu0 0
  %4796 = vmatmul.mubr.bf16.gmra.mxu0 %v4488
  %v4797 = vpop.f32.mrf.mxu0
  %v4798 = vadd.f32 0.0, %v4797
  %v4799 = vpop.f32.mrf.mxu0
  %v4800 = vpop.f32.mrf.mxu0
  %v4801 = vadd.f32 0.0, %v4800
  %v4802 = vpop.f32.mrf.mxu0
  %4803 = vmatprep.mubr.bf16.mxu0 0
  %4804 = vmatmul.mubr.bf16.gmra.mxu0 %v4489
  %v4805 = vpop.f32.mrf.mxu0
  %v4806 = vadd.f32 0.0, %v4805
  %v4807 = vpop.f32.mrf.mxu0
  %v4808 = vpop.f32.mrf.mxu0
  %v4809 = vadd.f32 0.0, %v4808
  %v4810 = vpop.f32.mrf.mxu0
  %4811 = vmatprep.mubr.bf16.mxu0 0
  %4812 = vmatmul.mubr.bf16.gmra.mxu0 %v4490
  %v4813 = vpop.f32.mrf.mxu0
  %v4814 = vadd.f32 0.0, %v4813
  %v4815 = vpop.f32.mrf.mxu0
  %v4816 = vpop.f32.mrf.mxu0
  %v4817 = vadd.f32 0.0, %v4816
  %v4818 = vpop.f32.mrf.mxu0
  %4819 = vmatprep.mubr.bf16.mxu0 0
  %4820 = vmatmul.mubr.bf16.gmra.mxu0 %v4491
  %v4821 = vpop.f32.mrf.mxu0
  %v4822 = vadd.f32 0.0, %v4821
  %v4823 = vpop.f32.mrf.mxu0
  %v4824 = vpop.f32.mrf.mxu0
  %v4825 = vadd.f32 0.0, %v4824
  %v4826 = vpop.f32.mrf.mxu0
  %4827 = vmatprep.mubr.bf16.mxu0 0
  %4828 = vmatmul.mubr.bf16.gmra.mxu0 %v4492
  %v4829 = vpop.f32.mrf.mxu0
  %v4830 = vadd.f32 0.0, %v4829
  %v4831 = vpop.f32.mrf.mxu0
  %v4832 = vpop.f32.mrf.mxu0
  %v4833 = vadd.f32 0.0, %v4832
  %v4834 = vpop.f32.mrf.mxu0
  %4835 = vmatprep.mubr.bf16.mxu0 0
  %4836 = vmatmul.mubr.bf16.gmra.mxu0 %v4493
  %v4837 = vpop.f32.mrf.mxu0
  %v4838 = vadd.f32 0.0, %v4837
  %v4839 = vpop.f32.mrf.mxu0
  %v4840 = vpop.f32.mrf.mxu0
  %v4841 = vadd.f32 0.0, %v4840
  %v4842 = vpop.f32.mrf.mxu0
  %4843 = vmatprep.mubr.bf16.mxu0 0
  %4844 = vmatmul.mubr.bf16.gmra.mxu0 %v4494
  %v4845 = vpop.f32.mrf.mxu0
  %v4846 = vadd.f32 0.0, %v4845
  %v4847 = vpop.f32.mrf.mxu0
  %v4848 = vpop.f32.mrf.mxu0
  %v4849 = vadd.f32 0.0, %v4848
  %v4850 = vpop.f32.mrf.mxu0
  %4851 = vmatprep.mubr.bf16.mxu0 0
  %4852 = vmatmul.mubr.bf16.gmra.mxu0 %v4495
  %v4853 = vpop.f32.mrf.mxu0
  %v4854 = vadd.f32 0.0, %v4853
  %v4855 = vpop.f32.mrf.mxu0
  %v4856 = vpop.f32.mrf.mxu0
  %v4857 = vadd.f32 0.0, %v4856
  %v4858 = vpop.f32.mrf.mxu0
  %4859 = vmatprep.mubr.bf16.mxu0 0
  %4860 = vmatmul.mubr.bf16.gmra.mxu0 %v4496
  %v4861 = vpop.f32.mrf.mxu0
  %v4862 = vadd.f32 0.0, %v4861
  %v4863 = vpop.f32.mrf.mxu0
  %v4864 = vpop.f32.mrf.mxu0
  %v4865 = vadd.f32 0.0, %v4864
  %v4866 = vpop.f32.mrf.mxu0
  %4867 = vmatprep.mubr.bf16.mxu0 0
  %4868 = vmatmul.mubr.bf16.gmra.mxu0 %v4497
  %v4869 = vpop.f32.mrf.mxu0
  %v4870 = vpop.f32.mrf.mxu0
  %v4871 = vpop.f32.mrf.mxu0
  %v4872 = vpop.f32.mrf.mxu0
  %4873 = vdwg.mxu0
  %v4878 = vunpack.c.l.b16 %v4226
  %v4879 = vunpack.c.l.b16 %v4227
  %v4880 = vunpack.c.l.b16 %v4228
  %v4881 = vunpack.c.l.b16 %v4229
  %v4882 = vpack.c.b16 %v4879, %v4878
  %v4883 = vpack.c.b16 %v4881, %v4880
  %v4902 = vunpack.c.l.b16 %v4300
  %v4903 = vunpack.c.l.b16 %v4301
  %v4904 = vunpack.c.l.b16 %v4302
  %v4905 = vunpack.c.l.b16 %v4303
  %v4906 = vunpack.c.l.b16 %v4304
  %v4907 = vunpack.c.l.b16 %v4305
  %v4908 = vunpack.c.l.b16 %v4306
  %v4909 = vunpack.c.l.b16 %v4307
  %v4910 = vunpack.c.l.b16 %v4308
  %v4911 = vunpack.c.l.b16 %v4309
  %v4912 = vunpack.c.l.b16 %v4310
  %v4913 = vunpack.c.l.b16 %v4311
  %v4914 = vunpack.c.l.b16 %v4312
  %v4915 = vunpack.c.l.b16 %v4313
  %v4916 = vunpack.c.l.b16 %v4314
  %v4917 = vunpack.c.l.b16 %v4315
  %v4918 = vpack.c.b16 %v4903, %v4902
  %v4919 = vpack.c.b16 %v4905, %v4904
  %v4920 = vpack.c.b16 %v4907, %v4906
  %v4921 = vpack.c.b16 %v4909, %v4908
  %v4922 = vpack.c.b16 %v4911, %v4910
  %v4923 = vpack.c.b16 %v4913, %v4912
  %v4924 = vpack.c.b16 %v4915, %v4914
  %v4925 = vpack.c.b16 %v4917, %v4916
  %4934 = vmatprep.subr.bf16.mxu0 0
  %4935 = vmatpush1.bf16.msra.mxu0 %v4925
  %4936 = vmatprep.subr.bf16.mxu0 0
  %4937 = vmatpush1.bf16.msra.mxu0 %v4924
  %4938 = vmatprep.subr.bf16.mxu0 0
  %4939 = vmatpush1.bf16.msra.mxu0 %v4923
  %4940 = vmatprep.subr.bf16.mxu0 0
  %4941 = vmatpush1.bf16.msra.mxu0 %v4922
  %4942 = vmatprep.subr.bf16.mxu0 0
  %4943 = vmatpush1.bf16.msra.mxu0 %v4921
  %4944 = vmatprep.subr.bf16.mxu0 0
  %4945 = vmatpush1.bf16.msra.mxu0 %v4920
  %4946 = vmatprep.subr.bf16.mxu0 0
  %4947 = vmatpush1.bf16.msra.mxu0 %v4919
  %4948 = vmatprep.subr.bf16.mxu0 0
  %4949 = vmatpush1.bf16.msra.mxu0 %v4918
  %4950 = vmatprep.subr.bf16.mxu0 0
  %4951 = vmatpush2.bf16.msra.mxu0 0
  %4952 = vmatprep.subr.bf16.mxu0 0
  %4953 = vmatpush2.bf16.msra.mxu0 0
  %4954 = vmatprep.subr.bf16.mxu0 0
  %4955 = vmatpush2.bf16.msra.mxu0 0
  %4956 = vmatprep.subr.bf16.mxu0 0
  %4957 = vmatpush2.bf16.msra.mxu0 0
  %4958 = vmatprep.subr.bf16.mxu0 0
  %4959 = vmatpush2.bf16.msra.mxu0 0
  %4960 = vmatprep.subr.bf16.mxu0 0
  %4961 = vmatpush2.bf16.msra.mxu0 0
  %4962 = vmatprep.subr.bf16.mxu0 0
  %4963 = vmatpush2.bf16.msra.mxu0 0
  %4964 = vmatprep.subr.bf16.mxu0 0
  %4965 = vmatpush2.bf16.msra.mxu0 0
  %4966 = vmatprep.mubr.bf16.mxu0 0
  %4967 = vmatmul.mubr.bf16.gmra.mxu0 %v4882
  %v4968 = vpop.f32.mrf.mxu0
  %v4969 = vadd.f32 %v4614, %v4968
  %v4970 = vpop.f32.mrf.mxu0
  %v4971 = vpop.f32.mrf.mxu0
  %v4972 = vadd.f32 %v4617, %v4971
  %v4973 = vpop.f32.mrf.mxu0
  %4974 = vmatprep.mubr.bf16.mxu0 0
  %4975 = vmatmul.mubr.bf16.gmra.mxu0 %v4883
  %v4976 = vpop.f32.mrf.mxu0
  %v4977 = vadd.f32 %v4622, %v4976
  %v4978 = vpop.f32.mrf.mxu0
  %v4979 = vpop.f32.mrf.mxu0
  %v4980 = vadd.f32 %v4625, %v4979
  %v4981 = vpop.f32.mrf.mxu0
  %4982 = vmatprep.mubr.bf16.mxu0 0
  %4983 = vmatmul.mubr.bf16.gmra.mxu0 %v4465
  %v4984 = vpop.f32.mrf.mxu0
  %v4985 = vadd.f32 %v4630, %v4984
  %v4986 = vpop.f32.mrf.mxu0
  %v4987 = vpop.f32.mrf.mxu0
  %v4988 = vadd.f32 %v4633, %v4987
  %v4989 = vpop.f32.mrf.mxu0
  %4990 = vmatprep.mubr.bf16.mxu0 0
  %4991 = vmatmul.mubr.bf16.gmra.mxu0 %v4466
  %v4992 = vpop.f32.mrf.mxu0
  %v4993 = vadd.f32 %v4638, %v4992
  %v4994 = vpop.f32.mrf.mxu0
  %v4995 = vpop.f32.mrf.mxu0
  %v4996 = vadd.f32 %v4641, %v4995
  %v4997 = vpop.f32.mrf.mxu0
  %4998 = vmatprep.mubr.bf16.mxu0 0
  %4999 = vmatmul.mubr.bf16.gmra.mxu0 %v4467
  %v5000 = vpop.f32.mrf.mxu0
  %v5001 = vadd.f32 %v4646, %v5000
  %v5002 = vpop.f32.mrf.mxu0
  %v5003 = vpop.f32.mrf.mxu0
  %v5004 = vadd.f32 %v4649, %v5003
  %v5005 = vpop.f32.mrf.mxu0
  %5006 = vmatprep.mubr.bf16.mxu0 0
  %5007 = vmatmul.mubr.bf16.gmra.mxu0 %v4468
  %v5008 = vpop.f32.mrf.mxu0
  %v5009 = vadd.f32 %v4654, %v5008
  %v5010 = vpop.f32.mrf.mxu0
  %v5011 = vpop.f32.mrf.mxu0
  %v5012 = vadd.f32 %v4657, %v5011
  %v5013 = vpop.f32.mrf.mxu0
  %5014 = vmatprep.mubr.bf16.mxu0 0
  %5015 = vmatmul.mubr.bf16.gmra.mxu0 %v4469
  %v5016 = vpop.f32.mrf.mxu0
  %v5017 = vadd.f32 %v4662, %v5016
  %v5018 = vpop.f32.mrf.mxu0
  %v5019 = vpop.f32.mrf.mxu0
  %v5020 = vadd.f32 %v4665, %v5019
  %v5021 = vpop.f32.mrf.mxu0
  %5022 = vmatprep.mubr.bf16.mxu0 0
  %5023 = vmatmul.mubr.bf16.gmra.mxu0 %v4470
  %v5024 = vpop.f32.mrf.mxu0
  %v5025 = vadd.f32 %v4670, %v5024
  %v5026 = vpop.f32.mrf.mxu0
  %v5027 = vpop.f32.mrf.mxu0
  %v5028 = vadd.f32 %v4673, %v5027
  %v5029 = vpop.f32.mrf.mxu0
  %5030 = vmatprep.mubr.bf16.mxu0 0
  %5031 = vmatmul.mubr.bf16.gmra.mxu0 %v4471
  %v5032 = vpop.f32.mrf.mxu0
  %v5033 = vadd.f32 %v4678, %v5032
  %v5034 = vpop.f32.mrf.mxu0
  %v5035 = vpop.f32.mrf.mxu0
  %v5036 = vadd.f32 %v4681, %v5035
  %v5037 = vpop.f32.mrf.mxu0
  %5038 = vmatprep.mubr.bf16.mxu0 0
  %5039 = vmatmul.mubr.bf16.gmra.mxu0 %v4472
  %v5040 = vpop.f32.mrf.mxu0
  %v5041 = vadd.f32 %v4686, %v5040
  %v5042 = vpop.f32.mrf.mxu0
  %v5043 = vpop.f32.mrf.mxu0
  %v5044 = vadd.f32 %v4689, %v5043
  %v5045 = vpop.f32.mrf.mxu0
  %5046 = vmatprep.mubr.bf16.mxu0 0
  %5047 = vmatmul.mubr.bf16.gmra.mxu0 %v4473
  %v5048 = vpop.f32.mrf.mxu0
  %v5049 = vadd.f32 %v4694, %v5048
  %v5050 = vpop.f32.mrf.mxu0
  %v5051 = vpop.f32.mrf.mxu0
  %v5052 = vadd.f32 %v4697, %v5051
  %v5053 = vpop.f32.mrf.mxu0
  %5054 = vmatprep.mubr.bf16.mxu0 0
  %5055 = vmatmul.mubr.bf16.gmra.mxu0 %v4474
  %v5056 = vpop.f32.mrf.mxu0
  %v5057 = vadd.f32 %v4702, %v5056
  %v5058 = vpop.f32.mrf.mxu0
  %v5059 = vpop.f32.mrf.mxu0
  %v5060 = vadd.f32 %v4705, %v5059
  %v5061 = vpop.f32.mrf.mxu0
  %5062 = vmatprep.mubr.bf16.mxu0 0
  %5063 = vmatmul.mubr.bf16.gmra.mxu0 %v4475
  %v5064 = vpop.f32.mrf.mxu0
  %v5065 = vadd.f32 %v4710, %v5064
  %v5066 = vpop.f32.mrf.mxu0
  %v5067 = vpop.f32.mrf.mxu0
  %v5068 = vadd.f32 %v4713, %v5067
  %v5069 = vpop.f32.mrf.mxu0
  %5070 = vmatprep.mubr.bf16.mxu0 0
  %5071 = vmatmul.mubr.bf16.gmra.mxu0 %v4476
  %v5072 = vpop.f32.mrf.mxu0
  %v5073 = vadd.f32 %v4718, %v5072
  %v5074 = vpop.f32.mrf.mxu0
  %v5075 = vpop.f32.mrf.mxu0
  %v5076 = vadd.f32 %v4721, %v5075
  %v5077 = vpop.f32.mrf.mxu0
  %5078 = vmatprep.mubr.bf16.mxu0 0
  %5079 = vmatmul.mubr.bf16.gmra.mxu0 %v4477
  %v5080 = vpop.f32.mrf.mxu0
  %v5081 = vadd.f32 %v4726, %v5080
  %v5082 = vpop.f32.mrf.mxu0
  %v5083 = vpop.f32.mrf.mxu0
  %v5084 = vadd.f32 %v4729, %v5083
  %v5085 = vpop.f32.mrf.mxu0
  %5086 = vmatprep.mubr.bf16.mxu0 0
  %5087 = vmatmul.mubr.bf16.gmra.mxu0 %v4478
  %v5088 = vpop.f32.mrf.mxu0
  %v5089 = vadd.f32 %v4734, %v5088
  %v5090 = vpop.f32.mrf.mxu0
  %v5091 = vpop.f32.mrf.mxu0
  %v5092 = vadd.f32 %v4737, %v5091
  %v5093 = vpop.f32.mrf.mxu0
  %5094 = vmatprep.mubr.bf16.mxu0 0
  %5095 = vmatmul.mubr.bf16.gmra.mxu0 %v4479
  %v5096 = vpop.f32.mrf.mxu0
  %v5097 = vadd.f32 %v4742, %v5096
  %v5098 = vpop.f32.mrf.mxu0
  %v5099 = vpop.f32.mrf.mxu0
  %v5100 = vadd.f32 %v4745, %v5099
  %v5101 = vpop.f32.mrf.mxu0
  %5102 = vmatprep.mubr.bf16.mxu0 0
  %5103 = vmatmul.mubr.bf16.gmra.mxu0 %v4480
  %v5104 = vpop.f32.mrf.mxu0
  %v5105 = vadd.f32 %v4750, %v5104
  %v5106 = vpop.f32.mrf.mxu0
  %v5107 = vpop.f32.mrf.mxu0
  %v5108 = vadd.f32 %v4753, %v5107
  %v5109 = vpop.f32.mrf.mxu0
  %5110 = vmatprep.mubr.bf16.mxu0 0
  %5111 = vmatmul.mubr.bf16.gmra.mxu0 %v4481
  %v5112 = vpop.f32.mrf.mxu0
  %v5113 = vadd.f32 %v4758, %v5112
  %v5114 = vpop.f32.mrf.mxu0
  %v5115 = vpop.f32.mrf.mxu0
  %v5116 = vadd.f32 %v4761, %v5115
  %v5117 = vpop.f32.mrf.mxu0
  %5118 = vmatprep.mubr.bf16.mxu0 0
  %5119 = vmatmul.mubr.bf16.gmra.mxu0 %v4482
  %v5120 = vpop.f32.mrf.mxu0
  %v5121 = vadd.f32 %v4766, %v5120
  %v5122 = vpop.f32.mrf.mxu0
  %v5123 = vpop.f32.mrf.mxu0
  %v5124 = vadd.f32 %v4769, %v5123
  %v5125 = vpop.f32.mrf.mxu0
  %5126 = vmatprep.mubr.bf16.mxu0 0
  %5127 = vmatmul.mubr.bf16.gmra.mxu0 %v4483
  %v5128 = vpop.f32.mrf.mxu0
  %v5129 = vadd.f32 %v4774, %v5128
  %v5130 = vpop.f32.mrf.mxu0
  %v5131 = vpop.f32.mrf.mxu0
  %v5132 = vadd.f32 %v4777, %v5131
  %v5133 = vpop.f32.mrf.mxu0
  %5134 = vmatprep.mubr.bf16.mxu0 0
  %5135 = vmatmul.mubr.bf16.gmra.mxu0 %v4484
  %v5136 = vpop.f32.mrf.mxu0
  %v5137 = vadd.f32 %v4782, %v5136
  %v5138 = vpop.f32.mrf.mxu0
  %v5139 = vpop.f32.mrf.mxu0
  %v5140 = vadd.f32 %v4785, %v5139
  %v5141 = vpop.f32.mrf.mxu0
  %5142 = vmatprep.mubr.bf16.mxu0 0
  %5143 = vmatmul.mubr.bf16.gmra.mxu0 %v4485
  %v5144 = vpop.f32.mrf.mxu0
  %v5145 = vadd.f32 %v4790, %v5144
  %v5146 = vpop.f32.mrf.mxu0
  %v5147 = vpop.f32.mrf.mxu0
  %v5148 = vadd.f32 %v4793, %v5147
  %v5149 = vpop.f32.mrf.mxu0
  %5150 = vmatprep.mubr.bf16.mxu0 0
  %5151 = vmatmul.mubr.bf16.gmra.mxu0 %v4486
  %v5152 = vpop.f32.mrf.mxu0
  %v5153 = vadd.f32 %v4798, %v5152
  %v5154 = vpop.f32.mrf.mxu0
  %v5155 = vpop.f32.mrf.mxu0
  %v5156 = vadd.f32 %v4801, %v5155
  %v5157 = vpop.f32.mrf.mxu0
  %5158 = vmatprep.mubr.bf16.mxu0 0
  %5159 = vmatmul.mubr.bf16.gmra.mxu0 %v4487
  %v5160 = vpop.f32.mrf.mxu0
  %v5161 = vadd.f32 %v4806, %v5160
  %v5162 = vpop.f32.mrf.mxu0
  %v5163 = vpop.f32.mrf.mxu0
  %v5164 = vadd.f32 %v4809, %v5163
  %v5165 = vpop.f32.mrf.mxu0
  %5166 = vmatprep.mubr.bf16.mxu0 0
  %5167 = vmatmul.mubr.bf16.gmra.mxu0 %v4488
  %v5168 = vpop.f32.mrf.mxu0
  %v5169 = vadd.f32 %v4814, %v5168
  %v5170 = vpop.f32.mrf.mxu0
  %v5171 = vpop.f32.mrf.mxu0
  %v5172 = vadd.f32 %v4817, %v5171
  %v5173 = vpop.f32.mrf.mxu0
  %5174 = vmatprep.mubr.bf16.mxu0 0
  %5175 = vmatmul.mubr.bf16.gmra.mxu0 %v4489
  %v5176 = vpop.f32.mrf.mxu0
  %v5177 = vadd.f32 %v4822, %v5176
  %v5178 = vpop.f32.mrf.mxu0
  %v5179 = vpop.f32.mrf.mxu0
  %v5180 = vadd.f32 %v4825, %v5179
  %v5181 = vpop.f32.mrf.mxu0
  %5182 = vmatprep.mubr.bf16.mxu0 0
  %5183 = vmatmul.mubr.bf16.gmra.mxu0 %v4490
  %v5184 = vpop.f32.mrf.mxu0
  %v5185 = vadd.f32 %v4830, %v5184
  %v5186 = vpop.f32.mrf.mxu0
  %v5187 = vpop.f32.mrf.mxu0
  %v5188 = vadd.f32 %v4833, %v5187
  %v5189 = vpop.f32.mrf.mxu0
  %5190 = vmatprep.mubr.bf16.mxu0 0
  %5191 = vmatmul.mubr.bf16.gmra.mxu0 %v4491
  %v5192 = vpop.f32.mrf.mxu0
  %v5193 = vadd.f32 %v4838, %v5192
  %v5194 = vpop.f32.mrf.mxu0
  %v5195 = vpop.f32.mrf.mxu0
  %v5196 = vadd.f32 %v4841, %v5195
  %v5197 = vpop.f32.mrf.mxu0
  %5198 = vmatprep.mubr.bf16.mxu0 0
  %5199 = vmatmul.mubr.bf16.gmra.mxu0 %v4492
  %v5200 = vpop.f32.mrf.mxu0
  %v5201 = vadd.f32 %v4846, %v5200
  %v5202 = vpop.f32.mrf.mxu0
  %v5203 = vpop.f32.mrf.mxu0
  %v5204 = vadd.f32 %v4849, %v5203
  %v5205 = vpop.f32.mrf.mxu0
  %5206 = vmatprep.mubr.bf16.mxu0 0
  %5207 = vmatmul.mubr.bf16.gmra.mxu0 %v4493
  %v5208 = vpop.f32.mrf.mxu0
  %v5209 = vadd.f32 %v4854, %v5208
  %v5210 = vpop.f32.mrf.mxu0
  %v5211 = vpop.f32.mrf.mxu0
  %v5212 = vadd.f32 %v4857, %v5211
  %v5213 = vpop.f32.mrf.mxu0
  %5214 = vmatprep.mubr.bf16.mxu0 0
  %5215 = vmatmul.mubr.bf16.gmra.mxu0 %v4494
  %v5216 = vpop.f32.mrf.mxu0
  %v5217 = vadd.f32 %v4862, %v5216
  %v5218 = vpop.f32.mrf.mxu0
  %v5219 = vpop.f32.mrf.mxu0
  %v5220 = vadd.f32 %v4865, %v5219
  %v5221 = vpop.f32.mrf.mxu0
  %5222 = vmatprep.mubr.bf16.mxu0 0
  %5223 = vmatmul.mubr.bf16.gmra.mxu0 %v4495
  %v5224 = vpop.f32.mrf.mxu0
  %v5225 = vpop.f32.mrf.mxu0
  %v5226 = vpop.f32.mrf.mxu0
  %v5227 = vpop.f32.mrf.mxu0
  %5228 = vdwg.mxu0
  %s5229 = scalar_lea.vmem %s4, 384
  %v5230 = vld [vmem:[%s5229] sm:$0xf]
  %v5231 = vld [vmem:[%s5229 + $0x4] sm:$0xf]
  %v5232 = vld [vmem:[%s5229 + $0x8] sm:$0xf]
  %v5233 = vld [vmem:[%s5229 + $0xc] sm:$0xf]
  %v5234 = vld [vmem:[%s5229 + $0x10] sm:$0xf]
  %v5235 = vld [vmem:[%s5229 + $0x14] sm:$0xf]
  %v5236 = vld [vmem:[%s5229 + $0x18] sm:$0xf]
  %v5237 = vld [vmem:[%s5229 + $0x1c] sm:$0xf]
  %v5238 = vld [vmem:[%s5229 + $0x20] sm:$0xf]
  %v5239 = vld [vmem:[%s5229 + $0x24] sm:$0xf]
  %v5240 = vld [vmem:[%s5229 + $0x28] sm:$0xf]
  %v5241 = vld [vmem:[%s5229 + $0x2c] sm:$0xf]
  %v5242 = vld [vmem:[%s5229 + $0x30] sm:$0xf]
  %v5243 = vld [vmem:[%s5229 + $0x34] sm:$0xf]
  %v5244 = vld [vmem:[%s5229 + $0x38] sm:$0xf]
  %v5245 = vld [vmem:[%s5229 + $0x3c] sm:$0xf]
  %v5250 = vunpack.c.l.b16 %v4296
  %v5251 = vunpack.c.l.b16 %v4297
  %v5252 = vunpack.c.l.b16 %v4298
  %v5253 = vunpack.c.l.b16 %v4299
  %v5254 = vpack.c.b16 %v5251, %v5250
  %v5255 = vpack.c.b16 %v5253, %v5252
  %v5274 = vunpack.c.l.b16 %v5230
  %v5275 = vunpack.c.l.b16 %v5231
  %v5276 = vunpack.c.l.b16 %v5232
  %v5277 = vunpack.c.l.b16 %v5233
  %v5278 = vunpack.c.l.b16 %v5234
  %v5279 = vunpack.c.l.b16 %v5235
  %v5280 = vunpack.c.l.b16 %v5236
  %v5281 = vunpack.c.l.b16 %v5237
  %v5282 = vunpack.c.l.b16 %v5238
  %v5283 = vunpack.c.l.b16 %v5239
  %v5284 = vunpack.c.l.b16 %v5240
  %v5285 = vunpack.c.l.b16 %v5241
  %v5286 = vunpack.c.l.b16 %v5242
  %v5287 = vunpack.c.l.b16 %v5243
  %v5288 = vunpack.c.l.b16 %v5244
  %v5289 = vunpack.c.l.b16 %v5245
  %v5290 = vpack.c.b16 %v5275, %v5274
  %v5291 = vpack.c.b16 %v5277, %v5276
  %v5292 = vpack.c.b16 %v5279, %v5278
  %v5293 = vpack.c.b16 %v5281, %v5280
  %v5294 = vpack.c.b16 %v5283, %v5282
  %v5295 = vpack.c.b16 %v5285, %v5284
  %v5296 = vpack.c.b16 %v5287, %v5286
  %v5297 = vpack.c.b16 %v5289, %v5288
  %5306 = vmatprep.subr.bf16.mxu0 0
  %5307 = vmatpush1.bf16.msra.mxu0 %v5297
  %5308 = vmatprep.subr.bf16.mxu0 0
  %5309 = vmatpush1.bf16.msra.mxu0 %v5296
  %5310 = vmatprep.subr.bf16.mxu0 0
  %5311 = vmatpush1.bf16.msra.mxu0 %v5295
  %5312 = vmatprep.subr.bf16.mxu0 0
  %5313 = vmatpush1.bf16.msra.mxu0 %v5294
  %5314 = vmatprep.subr.bf16.mxu0 0
  %5315 = vmatpush1.bf16.msra.mxu0 %v5293
  %5316 = vmatprep.subr.bf16.mxu0 0
  %5317 = vmatpush1.bf16.msra.mxu0 %v5292
  %5318 = vmatprep.subr.bf16.mxu0 0
  %5319 = vmatpush1.bf16.msra.mxu0 %v5291
  %5320 = vmatprep.subr.bf16.mxu0 0
  %5321 = vmatpush1.bf16.msra.mxu0 %v5290
  %5322 = vmatprep.subr.bf16.mxu0 0
  %5323 = vmatpush2.bf16.msra.mxu0 0
  %5324 = vmatprep.subr.bf16.mxu0 0
  %5325 = vmatpush2.bf16.msra.mxu0 0
  %5326 = vmatprep.subr.bf16.mxu0 0
  %5327 = vmatpush2.bf16.msra.mxu0 0
  %5328 = vmatprep.subr.bf16.mxu0 0
  %5329 = vmatpush2.bf16.msra.mxu0 0
  %5330 = vmatprep.subr.bf16.mxu0 0
  %5331 = vmatpush2.bf16.msra.mxu0 0
  %5332 = vmatprep.subr.bf16.mxu0 0
  %5333 = vmatpush2.bf16.msra.mxu0 0
  %5334 = vmatprep.subr.bf16.mxu0 0
  %5335 = vmatpush2.bf16.msra.mxu0 0
  %5336 = vmatprep.subr.bf16.mxu0 0
  %5337 = vmatpush2.bf16.msra.mxu0 0
  %5338 = vmatprep.mubr.bf16.mxu0 0
  %5339 = vmatmul.mubr.bf16.gmra.mxu0 %v4467
  %v5340 = vpop.f32.mrf.mxu0
  %v5341 = vadd.f32 0.0, %v5340
  %v5342 = vpop.f32.mrf.mxu0
  %v5343 = vpop.f32.mrf.mxu0
  %v5344 = vadd.f32 0.0, %v5343
  %v5345 = vpop.f32.mrf.mxu0
  %5346 = vmatprep.mubr.bf16.mxu0 0
  %5347 = vmatmul.mubr.bf16.gmra.mxu0 %v4468
  %v5348 = vpop.f32.mrf.mxu0
  %v5349 = vadd.f32 0.0, %v5348
  %v5350 = vpop.f32.mrf.mxu0
  %v5351 = vpop.f32.mrf.mxu0
  %v5352 = vadd.f32 0.0, %v5351
  %v5353 = vpop.f32.mrf.mxu0
  %5354 = vmatprep.mubr.bf16.mxu0 0
  %5355 = vmatmul.mubr.bf16.gmra.mxu0 %v4469
  %v5356 = vpop.f32.mrf.mxu0
  %v5357 = vadd.f32 0.0, %v5356
  %v5358 = vpop.f32.mrf.mxu0
  %v5359 = vpop.f32.mrf.mxu0
  %v5360 = vadd.f32 0.0, %v5359
  %v5361 = vpop.f32.mrf.mxu0
  %5362 = vmatprep.mubr.bf16.mxu0 0
  %5363 = vmatmul.mubr.bf16.gmra.mxu0 %v4470
  %v5364 = vpop.f32.mrf.mxu0
  %v5365 = vadd.f32 0.0, %v5364
  %v5366 = vpop.f32.mrf.mxu0
  %v5367 = vpop.f32.mrf.mxu0
  %v5368 = vadd.f32 0.0, %v5367
  %v5369 = vpop.f32.mrf.mxu0
  %5370 = vmatprep.mubr.bf16.mxu0 0
  %5371 = vmatmul.mubr.bf16.gmra.mxu0 %v4471
  %v5372 = vpop.f32.mrf.mxu0
  %v5373 = vadd.f32 0.0, %v5372
  %v5374 = vpop.f32.mrf.mxu0
  %v5375 = vpop.f32.mrf.mxu0
  %v5376 = vadd.f32 0.0, %v5375
  %v5377 = vpop.f32.mrf.mxu0
  %5378 = vmatprep.mubr.bf16.mxu0 0
  %5379 = vmatmul.mubr.bf16.gmra.mxu0 %v4472
  %v5380 = vpop.f32.mrf.mxu0
  %v5381 = vadd.f32 0.0, %v5380
  %v5382 = vpop.f32.mrf.mxu0
  %v5383 = vpop.f32.mrf.mxu0
  %v5384 = vadd.f32 0.0, %v5383
  %v5385 = vpop.f32.mrf.mxu0
  %5386 = vmatprep.mubr.bf16.mxu0 0
  %5387 = vmatmul.mubr.bf16.gmra.mxu0 %v4473
  %v5388 = vpop.f32.mrf.mxu0
  %v5389 = vadd.f32 0.0, %v5388
  %v5390 = vpop.f32.mrf.mxu0
  %v5391 = vpop.f32.mrf.mxu0
  %v5392 = vadd.f32 0.0, %v5391
  %v5393 = vpop.f32.mrf.mxu0
  %5394 = vmatprep.mubr.bf16.mxu0 0
  %5395 = vmatmul.mubr.bf16.gmra.mxu0 %v4474
  %v5396 = vpop.f32.mrf.mxu0
  %v5397 = vadd.f32 0.0, %v5396
  %v5398 = vpop.f32.mrf.mxu0
  %v5399 = vpop.f32.mrf.mxu0
  %v5400 = vadd.f32 0.0, %v5399
  %v5401 = vpop.f32.mrf.mxu0
  %5402 = vmatprep.mubr.bf16.mxu0 0
  %5403 = vmatmul.mubr.bf16.gmra.mxu0 %v4475
  %v5404 = vpop.f32.mrf.mxu0
  %v5405 = vadd.f32 0.0, %v5404
  %v5406 = vpop.f32.mrf.mxu0
  %v5407 = vpop.f32.mrf.mxu0
  %v5408 = vadd.f32 0.0, %v5407
  %v5409 = vpop.f32.mrf.mxu0
  %5410 = vmatprep.mubr.bf16.mxu0 0
  %5411 = vmatmul.mubr.bf16.gmra.mxu0 %v4476
  %v5412 = vpop.f32.mrf.mxu0
  %v5413 = vadd.f32 0.0, %v5412
  %v5414 = vpop.f32.mrf.mxu0
  %v5415 = vpop.f32.mrf.mxu0
  %v5416 = vadd.f32 0.0, %v5415
  %v5417 = vpop.f32.mrf.mxu0
  %5418 = vmatprep.mubr.bf16.mxu0 0
  %5419 = vmatmul.mubr.bf16.gmra.mxu0 %v4477
  %v5420 = vpop.f32.mrf.mxu0
  %v5421 = vadd.f32 0.0, %v5420
  %v5422 = vpop.f32.mrf.mxu0
  %v5423 = vpop.f32.mrf.mxu0
  %v5424 = vadd.f32 0.0, %v5423
  %v5425 = vpop.f32.mrf.mxu0
  %5426 = vmatprep.mubr.bf16.mxu0 0
  %5427 = vmatmul.mubr.bf16.gmra.mxu0 %v4478
  %v5428 = vpop.f32.mrf.mxu0
  %v5429 = vadd.f32 0.0, %v5428
  %v5430 = vpop.f32.mrf.mxu0
  %v5431 = vpop.f32.mrf.mxu0
  %v5432 = vadd.f32 0.0, %v5431
  %v5433 = vpop.f32.mrf.mxu0
  %5434 = vmatprep.mubr.bf16.mxu0 0
  %5435 = vmatmul.mubr.bf16.gmra.mxu0 %v4479
  %v5436 = vpop.f32.mrf.mxu0
  %v5437 = vadd.f32 0.0, %v5436
  %v5438 = vpop.f32.mrf.mxu0
  %v5439 = vpop.f32.mrf.mxu0
  %v5440 = vadd.f32 0.0, %v5439
  %v5441 = vpop.f32.mrf.mxu0
  %5442 = vmatprep.mubr.bf16.mxu0 0
  %5443 = vmatmul.mubr.bf16.gmra.mxu0 %v4480
  %v5444 = vpop.f32.mrf.mxu0
  %v5445 = vadd.f32 0.0, %v5444
  %v5446 = vpop.f32.mrf.mxu0
  %v5447 = vpop.f32.mrf.mxu0
  %v5448 = vadd.f32 0.0, %v5447
  %v5449 = vpop.f32.mrf.mxu0
  %5450 = vmatprep.mubr.bf16.mxu0 0
  %5451 = vmatmul.mubr.bf16.gmra.mxu0 %v4481
  %v5452 = vpop.f32.mrf.mxu0
  %v5453 = vadd.f32 0.0, %v5452
  %v5454 = vpop.f32.mrf.mxu0
  %v5455 = vpop.f32.mrf.mxu0
  %v5456 = vadd.f32 0.0, %v5455
  %v5457 = vpop.f32.mrf.mxu0
  %5458 = vmatprep.mubr.bf16.mxu0 0
  %5459 = vmatmul.mubr.bf16.gmra.mxu0 %v4482
  %v5460 = vpop.f32.mrf.mxu0
  %v5461 = vadd.f32 0.0, %v5460
  %v5462 = vpop.f32.mrf.mxu0
  %v5463 = vpop.f32.mrf.mxu0
  %v5464 = vadd.f32 0.0, %v5463
  %v5465 = vpop.f32.mrf.mxu0
  %5466 = vmatprep.mubr.bf16.mxu0 0
  %5467 = vmatmul.mubr.bf16.gmra.mxu0 %v4483
  %v5468 = vpop.f32.mrf.mxu0
  %v5469 = vadd.f32 0.0, %v5468
  %v5470 = vpop.f32.mrf.mxu0
  %v5471 = vpop.f32.mrf.mxu0
  %v5472 = vadd.f32 0.0, %v5471
  %v5473 = vpop.f32.mrf.mxu0
  %5474 = vmatprep.mubr.bf16.mxu0 0
  %5475 = vmatmul.mubr.bf16.gmra.mxu0 %v4484
  %v5476 = vpop.f32.mrf.mxu0
  %v5477 = vadd.f32 0.0, %v5476
  %v5478 = vpop.f32.mrf.mxu0
  %v5479 = vpop.f32.mrf.mxu0
  %v5480 = vadd.f32 0.0, %v5479
  %v5481 = vpop.f32.mrf.mxu0
  %5482 = vmatprep.mubr.bf16.mxu0 0
  %5483 = vmatmul.mubr.bf16.gmra.mxu0 %v4485
  %v5484 = vpop.f32.mrf.mxu0
  %v5485 = vadd.f32 0.0, %v5484
  %v5486 = vpop.f32.mrf.mxu0
  %v5487 = vpop.f32.mrf.mxu0
  %v5488 = vadd.f32 0.0, %v5487
  %v5489 = vpop.f32.mrf.mxu0
  %5490 = vmatprep.mubr.bf16.mxu0 0
  %5491 = vmatmul.mubr.bf16.gmra.mxu0 %v4486
  %v5492 = vpop.f32.mrf.mxu0
  %v5493 = vadd.f32 0.0, %v5492
  %v5494 = vpop.f32.mrf.mxu0
  %v5495 = vpop.f32.mrf.mxu0
  %v5496 = vadd.f32 0.0, %v5495
  %v5497 = vpop.f32.mrf.mxu0
  %5498 = vmatprep.mubr.bf16.mxu0 0
  %5499 = vmatmul.mubr.bf16.gmra.mxu0 %v4487
  %v5500 = vpop.f32.mrf.mxu0
  %v5501 = vadd.f32 0.0, %v5500
  %v5502 = vpop.f32.mrf.mxu0
  %v5503 = vpop.f32.mrf.mxu0
  %v5504 = vadd.f32 0.0, %v5503
  %v5505 = vpop.f32.mrf.mxu0
  %5506 = vmatprep.mubr.bf16.mxu0 0
  %5507 = vmatmul.mubr.bf16.gmra.mxu0 %v4488
  %v5508 = vpop.f32.mrf.mxu0
  %v5509 = vadd.f32 0.0, %v5508
  %v5510 = vpop.f32.mrf.mxu0
  %v5511 = vpop.f32.mrf.mxu0
  %v5512 = vadd.f32 0.0, %v5511
  %v5513 = vpop.f32.mrf.mxu0
  %5514 = vmatprep.mubr.bf16.mxu0 0
  %5515 = vmatmul.mubr.bf16.gmra.mxu0 %v4489
  %v5516 = vpop.f32.mrf.mxu0
  %v5517 = vadd.f32 0.0, %v5516
  %v5518 = vpop.f32.mrf.mxu0
  %v5519 = vpop.f32.mrf.mxu0
  %v5520 = vadd.f32 0.0, %v5519
  %v5521 = vpop.f32.mrf.mxu0
  %5522 = vmatprep.mubr.bf16.mxu0 0
  %5523 = vmatmul.mubr.bf16.gmra.mxu0 %v4490
  %v5524 = vpop.f32.mrf.mxu0
  %v5525 = vadd.f32 0.0, %v5524
  %v5526 = vpop.f32.mrf.mxu0
  %v5527 = vpop.f32.mrf.mxu0
  %v5528 = vadd.f32 0.0, %v5527
  %v5529 = vpop.f32.mrf.mxu0
  %5530 = vmatprep.mubr.bf16.mxu0 0
  %5531 = vmatmul.mubr.bf16.gmra.mxu0 %v4491
  %v5532 = vpop.f32.mrf.mxu0
  %v5533 = vadd.f32 0.0, %v5532
  %v5534 = vpop.f32.mrf.mxu0
  %v5535 = vpop.f32.mrf.mxu0
  %v5536 = vadd.f32 0.0, %v5535
  %v5537 = vpop.f32.mrf.mxu0
  %5538 = vmatprep.mubr.bf16.mxu0 0
  %5539 = vmatmul.mubr.bf16.gmra.mxu0 %v4492
  %v5540 = vpop.f32.mrf.mxu0
  %v5541 = vadd.f32 0.0, %v5540
  %v5542 = vpop.f32.mrf.mxu0
  %v5543 = vpop.f32.mrf.mxu0
  %v5544 = vadd.f32 0.0, %v5543
  %v5545 = vpop.f32.mrf.mxu0
  %5546 = vmatprep.mubr.bf16.mxu0 0
  %5547 = vmatmul.mubr.bf16.gmra.mxu0 %v4493
  %v5548 = vpop.f32.mrf.mxu0
  %v5549 = vadd.f32 0.0, %v5548
  %v5550 = vpop.f32.mrf.mxu0
  %v5551 = vpop.f32.mrf.mxu0
  %v5552 = vadd.f32 0.0, %v5551
  %v5553 = vpop.f32.mrf.mxu0
  %5554 = vmatprep.mubr.bf16.mxu0 0
  %5555 = vmatmul.mubr.bf16.gmra.mxu0 %v4494
  %v5556 = vpop.f32.mrf.mxu0
  %v5557 = vadd.f32 0.0, %v5556
  %v5558 = vpop.f32.mrf.mxu0
  %v5559 = vpop.f32.mrf.mxu0
  %v5560 = vadd.f32 0.0, %v5559
  %v5561 = vpop.f32.mrf.mxu0
  %5562 = vmatprep.mubr.bf16.mxu0 0
  %5563 = vmatmul.mubr.bf16.gmra.mxu0 %v4495
  %v5564 = vpop.f32.mrf.mxu0
  %v5565 = vadd.f32 0.0, %v5564
  %v5566 = vpop.f32.mrf.mxu0
  %v5567 = vpop.f32.mrf.mxu0
  %v5568 = vadd.f32 0.0, %v5567
  %v5569 = vpop.f32.mrf.mxu0
  %5570 = vmatprep.mubr.bf16.mxu0 0
  %5571 = vmatmul.mubr.bf16.gmra.mxu0 %v4496
  %v5572 = vpop.f32.mrf.mxu0
  %v5573 = vadd.f32 0.0, %v5572
  %v5574 = vpop.f32.mrf.mxu0
  %v5575 = vpop.f32.mrf.mxu0
  %v5576 = vadd.f32 0.0, %v5575
  %v5577 = vpop.f32.mrf.mxu0
  %5578 = vmatprep.mubr.bf16.mxu0 0
  %5579 = vmatmul.mubr.bf16.gmra.mxu0 %v4497
  %v5580 = vpop.f32.mrf.mxu0
  %v5581 = vadd.f32 0.0, %v5580
  %v5582 = vpop.f32.mrf.mxu0
  %v5583 = vpop.f32.mrf.mxu0
  %v5584 = vadd.f32 0.0, %v5583
  %v5585 = vpop.f32.mrf.mxu0
  %5586 = vmatprep.mubr.bf16.mxu0 0
  %5587 = vmatmul.mubr.bf16.gmra.mxu0 %v5254
  %v5588 = vpop.f32.mrf.mxu0
  %v5589 = vadd.f32 0.0, %v5588
  %v5590 = vpop.f32.mrf.mxu0
  %v5591 = vpop.f32.mrf.mxu0
  %v5592 = vadd.f32 0.0, %v5591
  %v5593 = vpop.f32.mrf.mxu0
  %5594 = vmatprep.mubr.bf16.mxu0 0
  %5595 = vmatmul.mubr.bf16.gmra.mxu0 %v5255
  %v5596 = vpop.f32.mrf.mxu0
  %v5597 = vpop.f32.mrf.mxu0
  %v5598 = vpop.f32.mrf.mxu0
  %v5599 = vpop.f32.mrf.mxu0
  %5600 = vdwg.mxu0
  %v5601 = vadd.f32 %v4969, %v5341
  %v5602 = vadd.f32 %v4972, %v5344
  %v5603 = vadd.f32 %v4977, %v5349
  %v5604 = vadd.f32 %v4980, %v5352
  %v5605 = vadd.f32 %v4985, %v5357
  %v5606 = vadd.f32 %v4988, %v5360
  %v5607 = vadd.f32 %v4993, %v5365
  %v5608 = vadd.f32 %v4996, %v5368
  %v5609 = vadd.f32 %v5001, %v5373
  %v5610 = vadd.f32 %v5004, %v5376
  %v5611 = vadd.f32 %v5009, %v5381
  %v5612 = vadd.f32 %v5012, %v5384
  %v5613 = vadd.f32 %v5017, %v5389
  %v5614 = vadd.f32 %v5020, %v5392
  %v5615 = vadd.f32 %v5025, %v5397
  %v5616 = vadd.f32 %v5028, %v5400
  %v5617 = vadd.f32 %v5033, %v5405
  %v5618 = vadd.f32 %v5036, %v5408
  %v5619 = vadd.f32 %v5041, %v5413
  %v5620 = vadd.f32 %v5044, %v5416
  %v5621 = vadd.f32 %v5049, %v5421
  %v5622 = vadd.f32 %v5052, %v5424
  %v5623 = vadd.f32 %v5057, %v5429
  %v5624 = vadd.f32 %v5060, %v5432
  %v5625 = vadd.f32 %v5065, %v5437
  %v5626 = vadd.f32 %v5068, %v5440
  %v5627 = vadd.f32 %v5073, %v5445
  %v5628 = vadd.f32 %v5076, %v5448
  %v5629 = vadd.f32 %v5081, %v5453
  %v5630 = vadd.f32 %v5084, %v5456
  %v5631 = vadd.f32 %v5089, %v5461
  %v5632 = vadd.f32 %v5092, %v5464
  %v5633 = vadd.f32 %v5097, %v5469
  %v5634 = vadd.f32 %v5100, %v5472
  %v5635 = vadd.f32 %v5105, %v5477
  %v5636 = vadd.f32 %v5108, %v5480
  %v5637 = vadd.f32 %v5113, %v5485
  %v5638 = vadd.f32 %v5116, %v5488
  %v5639 = vadd.f32 %v5121, %v5493
  %v5640 = vadd.f32 %v5124, %v5496
  %v5641 = vadd.f32 %v5129, %v5501
  %v5642 = vadd.f32 %v5132, %v5504
  %v5643 = vadd.f32 %v5137, %v5509
  %v5644 = vadd.f32 %v5140, %v5512
  %v5645 = vadd.f32 %v5145, %v5517
  %v5646 = vadd.f32 %v5148, %v5520
  %v5647 = vadd.f32 %v5153, %v5525
  %v5648 = vadd.f32 %v5156, %v5528
  %v5649 = vadd.f32 %v5161, %v5533
  %v5650 = vadd.f32 %v5164, %v5536
  %v5651 = vadd.f32 %v5169, %v5541
  %v5652 = vadd.f32 %v5172, %v5544
  %v5653 = vadd.f32 %v5177, %v5549
  %v5654 = vadd.f32 %v5180, %v5552
  %v5655 = vadd.f32 %v5185, %v5557
  %v5656 = vadd.f32 %v5188, %v5560
  %v5657 = vadd.f32 %v5193, %v5565
  %v5658 = vadd.f32 %v5196, %v5568
  %v5659 = vadd.f32 %v5201, %v5573
  %v5660 = vadd.f32 %v5204, %v5576
  %v5661 = vadd.f32 %v5209, %v5581
  %v5662 = vadd.f32 %v5212, %v5584
  %v5663 = vadd.f32 %v5217, %v5589
  %v5664 = vadd.f32 %v5220, %v5592
  %s5665 = scalar_lea.vmem %s4, 64
  %v5666 = vld [vmem:[%s5665] sm:$0xf]
  %v5667 = vld [vmem:[%s5665 + $0x4] sm:$0xf]
  %v5668 = vld [vmem:[%s5665 + $0x8] sm:$0xf]
  %v5669 = vld [vmem:[%s5665 + $0xc] sm:$0xf]
  %v5670 = vld [vmem:[%s5665 + $0x10] sm:$0xf]
  %v5671 = vld [vmem:[%s5665 + $0x14] sm:$0xf]
  %v5672 = vld [vmem:[%s5665 + $0x18] sm:$0xf]
  %v5673 = vld [vmem:[%s5665 + $0x1c] sm:$0xf]
  %v5674 = vld [vmem:[%s5665 + $0x20] sm:$0xf]
  %v5675 = vld [vmem:[%s5665 + $0x24] sm:$0xf]
  %v5676 = vld [vmem:[%s5665 + $0x28] sm:$0xf]
  %v5677 = vld [vmem:[%s5665 + $0x2c] sm:$0xf]
  %v5678 = vld [vmem:[%s5665 + $0x30] sm:$0xf]
  %v5679 = vld [vmem:[%s5665 + $0x34] sm:$0xf]
  %v5680 = vld [vmem:[%s5665 + $0x38] sm:$0xf]
  %v5681 = vld [vmem:[%s5665 + $0x3c] sm:$0xf]
  %s5682 = scalar_lea.vmem %s4, 256
  %v5683 = vld [vmem:[%s5682] sm:$0xf]
  %v5684 = vld [vmem:[%s5682 + $0x4] sm:$0xf]
  %v5685 = vld [vmem:[%s5682 + $0x8] sm:$0xf]
  %v5686 = vld [vmem:[%s5682 + $0xc] sm:$0xf]
  %v5687 = vld [vmem:[%s5682 + $0x10] sm:$0xf]
  %v5688 = vld [vmem:[%s5682 + $0x14] sm:$0xf]
  %v5689 = vld [vmem:[%s5682 + $0x18] sm:$0xf]
  %v5690 = vld [vmem:[%s5682 + $0x1c] sm:$0xf]
  %v5691 = vld [vmem:[%s5682 + $0x20] sm:$0xf]
  %v5692 = vld [vmem:[%s5682 + $0x24] sm:$0xf]
  %v5693 = vld [vmem:[%s5682 + $0x28] sm:$0xf]
  %v5694 = vld [vmem:[%s5682 + $0x2c] sm:$0xf]
  %v5695 = vld [vmem:[%s5682 + $0x30] sm:$0xf]
  %v5696 = vld [vmem:[%s5682 + $0x34] sm:$0xf]
  %v5697 = vld [vmem:[%s5682 + $0x38] sm:$0xf]
  %v5698 = vld [vmem:[%s5682 + $0x3c] sm:$0xf]
  %v5715 = vunpack.c.l.b16 %v5683
  %v5716 = vunpack.c.l.b16 %v5684
  %v5717 = vunpack.c.l.b16 %v5685
  %v5718 = vunpack.c.l.b16 %v5686
  %v5719 = vunpack.c.l.b16 %v5687
  %v5720 = vunpack.c.l.b16 %v5688
  %v5721 = vunpack.c.l.b16 %v5689
  %v5722 = vunpack.c.l.b16 %v5690
  %v5723 = vunpack.c.l.b16 %v5691
  %v5724 = vunpack.c.l.b16 %v5692
  %v5725 = vunpack.c.l.b16 %v5693
  %v5726 = vunpack.c.l.b16 %v5694
  %v5727 = vunpack.c.l.b16 %v5695
  %v5728 = vunpack.c.l.b16 %v5696
  %v5729 = vunpack.c.l.b16 %v5697
  %v5730 = vunpack.c.l.b16 %v5698
  %v5731 = vpack.c.b16 %v5716, %v5715
  %v5732 = vpack.c.b16 %v5718, %v5717
  %v5733 = vpack.c.b16 %v5720, %v5719
  %v5734 = vpack.c.b16 %v5722, %v5721
  %v5735 = vpack.c.b16 %v5724, %v5723
  %v5736 = vpack.c.b16 %v5726, %v5725
  %v5737 = vpack.c.b16 %v5728, %v5727
  %v5738 = vpack.c.b16 %v5730, %v5729
  %5747 = vmatprep.subr.bf16.mxu0 0
  %5748 = vmatpush1.bf16.msra.mxu0 %v5738
  %5749 = vmatprep.subr.bf16.mxu0 0
  %5750 = vmatpush1.bf16.msra.mxu0 %v5737
  %5751 = vmatprep.subr.bf16.mxu0 0
  %5752 = vmatpush1.bf16.msra.mxu0 %v5736
  %5753 = vmatprep.subr.bf16.mxu0 0
  %5754 = vmatpush1.bf16.msra.mxu0 %v5735
  %5755 = vmatprep.subr.bf16.mxu0 0
  %5756 = vmatpush1.bf16.msra.mxu0 %v5734
  %5757 = vmatprep.subr.bf16.mxu0 0
  %5758 = vmatpush1.bf16.msra.mxu0 %v5733
  %5759 = vmatprep.subr.bf16.mxu0 0
  %5760 = vmatpush1.bf16.msra.mxu0 %v5732
  %5761 = vmatprep.subr.bf16.mxu0 0
  %5762 = vmatpush1.bf16.msra.mxu0 %v5731
  %5763 = vmatprep.subr.bf16.mxu0 0
  %5764 = vmatpush2.bf16.msra.mxu0 0
  %5765 = vmatprep.subr.bf16.mxu0 0
  %5766 = vmatpush2.bf16.msra.mxu0 0
  %5767 = vmatprep.subr.bf16.mxu0 0
  %5768 = vmatpush2.bf16.msra.mxu0 0
  %5769 = vmatprep.subr.bf16.mxu0 0
  %5770 = vmatpush2.bf16.msra.mxu0 0
  %5771 = vmatprep.subr.bf16.mxu0 0
  %5772 = vmatpush2.bf16.msra.mxu0 0
  %5773 = vmatprep.subr.bf16.mxu0 0
  %5774 = vmatpush2.bf16.msra.mxu0 0
  %5775 = vmatprep.subr.bf16.mxu0 0
  %5776 = vmatpush2.bf16.msra.mxu0 0
  %5777 = vmatprep.subr.bf16.mxu0 0
  %5778 = vmatpush2.bf16.msra.mxu0 0
  %5779 = vmatprep.mubr.bf16.mxu0 0
  %5780 = vmatmul.mubr.bf16.gmra.mxu0 %v4465
  %v5781 = vpop.f32.mrf.mxu0
  %v5782 = vadd.f32 0.0, %v5781
  %v5783 = vpop.f32.mrf.mxu0
  %v5784 = vpop.f32.mrf.mxu0
  %v5785 = vadd.f32 0.0, %v5784
  %v5786 = vpop.f32.mrf.mxu0
  %5787 = vmatprep.mubr.bf16.mxu0 0
  %5788 = vmatmul.mubr.bf16.gmra.mxu0 %v4466
  %v5789 = vpop.f32.mrf.mxu0
  %v5790 = vadd.f32 0.0, %v5789
  %v5791 = vpop.f32.mrf.mxu0
  %v5792 = vpop.f32.mrf.mxu0
  %v5793 = vadd.f32 0.0, %v5792
  %v5794 = vpop.f32.mrf.mxu0
  %5795 = vmatprep.mubr.bf16.mxu0 0
  %5796 = vmatmul.mubr.bf16.gmra.mxu0 %v4467
  %v5797 = vpop.f32.mrf.mxu0
  %v5798 = vadd.f32 0.0, %v5797
  %v5799 = vpop.f32.mrf.mxu0
  %v5800 = vpop.f32.mrf.mxu0
  %v5801 = vadd.f32 0.0, %v5800
  %v5802 = vpop.f32.mrf.mxu0
  %5803 = vmatprep.mubr.bf16.mxu0 0
  %5804 = vmatmul.mubr.bf16.gmra.mxu0 %v4468
  %v5805 = vpop.f32.mrf.mxu0
  %v5806 = vadd.f32 0.0, %v5805
  %v5807 = vpop.f32.mrf.mxu0
  %v5808 = vpop.f32.mrf.mxu0
  %v5809 = vadd.f32 0.0, %v5808
  %v5810 = vpop.f32.mrf.mxu0
  %5811 = vmatprep.mubr.bf16.mxu0 0
  %5812 = vmatmul.mubr.bf16.gmra.mxu0 %v4469
  %v5813 = vpop.f32.mrf.mxu0
  %v5814 = vadd.f32 0.0, %v5813
  %v5815 = vpop.f32.mrf.mxu0
  %v5816 = vpop.f32.mrf.mxu0
  %v5817 = vadd.f32 0.0, %v5816
  %v5818 = vpop.f32.mrf.mxu0
  %5819 = vmatprep.mubr.bf16.mxu0 0
  %5820 = vmatmul.mubr.bf16.gmra.mxu0 %v4470
  %v5821 = vpop.f32.mrf.mxu0
  %v5822 = vadd.f32 0.0, %v5821
  %v5823 = vpop.f32.mrf.mxu0
  %v5824 = vpop.f32.mrf.mxu0
  %v5825 = vadd.f32 0.0, %v5824
  %v5826 = vpop.f32.mrf.mxu0
  %5827 = vmatprep.mubr.bf16.mxu0 0
  %5828 = vmatmul.mubr.bf16.gmra.mxu0 %v4471
  %v5829 = vpop.f32.mrf.mxu0
  %v5830 = vadd.f32 0.0, %v5829
  %v5831 = vpop.f32.mrf.mxu0
  %v5832 = vpop.f32.mrf.mxu0
  %v5833 = vadd.f32 0.0, %v5832
  %v5834 = vpop.f32.mrf.mxu0
  %5835 = vmatprep.mubr.bf16.mxu0 0
  %5836 = vmatmul.mubr.bf16.gmra.mxu0 %v4472
  %v5837 = vpop.f32.mrf.mxu0
  %v5838 = vadd.f32 0.0, %v5837
  %v5839 = vpop.f32.mrf.mxu0
  %v5840 = vpop.f32.mrf.mxu0
  %v5841 = vadd.f32 0.0, %v5840
  %v5842 = vpop.f32.mrf.mxu0
  %5843 = vmatprep.mubr.bf16.mxu0 0
  %5844 = vmatmul.mubr.bf16.gmra.mxu0 %v4473
  %v5845 = vpop.f32.mrf.mxu0
  %v5846 = vadd.f32 0.0, %v5845
  %v5847 = vpop.f32.mrf.mxu0
  %v5848 = vpop.f32.mrf.mxu0
  %v5849 = vadd.f32 0.0, %v5848
  %v5850 = vpop.f32.mrf.mxu0
  %5851 = vmatprep.mubr.bf16.mxu0 0
  %5852 = vmatmul.mubr.bf16.gmra.mxu0 %v4474
  %v5853 = vpop.f32.mrf.mxu0
  %v5854 = vadd.f32 0.0, %v5853
  %v5855 = vpop.f32.mrf.mxu0
  %v5856 = vpop.f32.mrf.mxu0
  %v5857 = vadd.f32 0.0, %v5856
  %v5858 = vpop.f32.mrf.mxu0
  %5859 = vmatprep.mubr.bf16.mxu0 0
  %5860 = vmatmul.mubr.bf16.gmra.mxu0 %v4475
  %v5861 = vpop.f32.mrf.mxu0
  %v5862 = vadd.f32 0.0, %v5861
  %v5863 = vpop.f32.mrf.mxu0
  %v5864 = vpop.f32.mrf.mxu0
  %v5865 = vadd.f32 0.0, %v5864
  %v5866 = vpop.f32.mrf.mxu0
  %5867 = vmatprep.mubr.bf16.mxu0 0
  %5868 = vmatmul.mubr.bf16.gmra.mxu0 %v4476
  %v5869 = vpop.f32.mrf.mxu0
  %v5870 = vadd.f32 0.0, %v5869
  %v5871 = vpop.f32.mrf.mxu0
  %v5872 = vpop.f32.mrf.mxu0
  %v5873 = vadd.f32 0.0, %v5872
  %v5874 = vpop.f32.mrf.mxu0
  %5875 = vmatprep.mubr.bf16.mxu0 0
  %5876 = vmatmul.mubr.bf16.gmra.mxu0 %v4477
  %v5877 = vpop.f32.mrf.mxu0
  %v5878 = vadd.f32 0.0, %v5877
  %v5879 = vpop.f32.mrf.mxu0
  %v5880 = vpop.f32.mrf.mxu0
  %v5881 = vadd.f32 0.0, %v5880
  %v5882 = vpop.f32.mrf.mxu0
  %5883 = vmatprep.mubr.bf16.mxu0 0
  %5884 = vmatmul.mubr.bf16.gmra.mxu0 %v4478
  %v5885 = vpop.f32.mrf.mxu0
  %v5886 = vadd.f32 0.0, %v5885
  %v5887 = vpop.f32.mrf.mxu0
  %v5888 = vpop.f32.mrf.mxu0
  %v5889 = vadd.f32 0.0, %v5888
  %v5890 = vpop.f32.mrf.mxu0
  %5891 = vmatprep.mubr.bf16.mxu0 0
  %5892 = vmatmul.mubr.bf16.gmra.mxu0 %v4479
  %v5893 = vpop.f32.mrf.mxu0
  %v5894 = vadd.f32 0.0, %v5893
  %v5895 = vpop.f32.mrf.mxu0
  %v5896 = vpop.f32.mrf.mxu0
  %v5897 = vadd.f32 0.0, %v5896
  %v5898 = vpop.f32.mrf.mxu0
  %5899 = vmatprep.mubr.bf16.mxu0 0
  %5900 = vmatmul.mubr.bf16.gmra.mxu0 %v4480
  %v5901 = vpop.f32.mrf.mxu0
  %v5902 = vadd.f32 0.0, %v5901
  %v5903 = vpop.f32.mrf.mxu0
  %v5904 = vpop.f32.mrf.mxu0
  %v5905 = vadd.f32 0.0, %v5904
  %v5906 = vpop.f32.mrf.mxu0
  %5907 = vmatprep.mubr.bf16.mxu0 0
  %5908 = vmatmul.mubr.bf16.gmra.mxu0 %v4481
  %v5909 = vpop.f32.mrf.mxu0
  %v5910 = vadd.f32 0.0, %v5909
  %v5911 = vpop.f32.mrf.mxu0
  %v5912 = vpop.f32.mrf.mxu0
  %v5913 = vadd.f32 0.0, %v5912
  %v5914 = vpop.f32.mrf.mxu0
  %5915 = vmatprep.mubr.bf16.mxu0 0
  %5916 = vmatmul.mubr.bf16.gmra.mxu0 %v4482
  %v5917 = vpop.f32.mrf.mxu0
  %v5918 = vadd.f32 0.0, %v5917
  %v5919 = vpop.f32.mrf.mxu0
  %v5920 = vpop.f32.mrf.mxu0
  %v5921 = vadd.f32 0.0, %v5920
  %v5922 = vpop.f32.mrf.mxu0
  %5923 = vmatprep.mubr.bf16.mxu0 0
  %5924 = vmatmul.mubr.bf16.gmra.mxu0 %v4483
  %v5925 = vpop.f32.mrf.mxu0
  %v5926 = vadd.f32 0.0, %v5925
  %v5927 = vpop.f32.mrf.mxu0
  %v5928 = vpop.f32.mrf.mxu0
  %v5929 = vadd.f32 0.0, %v5928
  %v5930 = vpop.f32.mrf.mxu0
  %5931 = vmatprep.mubr.bf16.mxu0 0
  %5932 = vmatmul.mubr.bf16.gmra.mxu0 %v4484
  %v5933 = vpop.f32.mrf.mxu0
  %v5934 = vadd.f32 0.0, %v5933
  %v5935 = vpop.f32.mrf.mxu0
  %v5936 = vpop.f32.mrf.mxu0
  %v5937 = vadd.f32 0.0, %v5936
  %v5938 = vpop.f32.mrf.mxu0
  %5939 = vmatprep.mubr.bf16.mxu0 0
  %5940 = vmatmul.mubr.bf16.gmra.mxu0 %v4485
  %v5941 = vpop.f32.mrf.mxu0
  %v5942 = vadd.f32 0.0, %v5941
  %v5943 = vpop.f32.mrf.mxu0
  %v5944 = vpop.f32.mrf.mxu0
  %v5945 = vadd.f32 0.0, %v5944
  %v5946 = vpop.f32.mrf.mxu0
  %5947 = vmatprep.mubr.bf16.mxu0 0
  %5948 = vmatmul.mubr.bf16.gmra.mxu0 %v4486
  %v5949 = vpop.f32.mrf.mxu0
  %v5950 = vadd.f32 0.0, %v5949
  %v5951 = vpop.f32.mrf.mxu0
  %v5952 = vpop.f32.mrf.mxu0
  %v5953 = vadd.f32 0.0, %v5952
  %v5954 = vpop.f32.mrf.mxu0
  %5955 = vmatprep.mubr.bf16.mxu0 0
  %5956 = vmatmul.mubr.bf16.gmra.mxu0 %v4487
  %v5957 = vpop.f32.mrf.mxu0
  %v5958 = vadd.f32 0.0, %v5957
  %v5959 = vpop.f32.mrf.mxu0
  %v5960 = vpop.f32.mrf.mxu0
  %v5961 = vadd.f32 0.0, %v5960
  %v5962 = vpop.f32.mrf.mxu0
  %5963 = vmatprep.mubr.bf16.mxu0 0
  %5964 = vmatmul.mubr.bf16.gmra.mxu0 %v4488
  %v5965 = vpop.f32.mrf.mxu0
  %v5966 = vadd.f32 0.0, %v5965
  %v5967 = vpop.f32.mrf.mxu0
  %v5968 = vpop.f32.mrf.mxu0
  %v5969 = vadd.f32 0.0, %v5968
  %v5970 = vpop.f32.mrf.mxu0
  %5971 = vmatprep.mubr.bf16.mxu0 0
  %5972 = vmatmul.mubr.bf16.gmra.mxu0 %v4489
  %v5973 = vpop.f32.mrf.mxu0
  %v5974 = vadd.f32 0.0, %v5973
  %v5975 = vpop.f32.mrf.mxu0
  %v5976 = vpop.f32.mrf.mxu0
  %v5977 = vadd.f32 0.0, %v5976
  %v5978 = vpop.f32.mrf.mxu0
  %5979 = vmatprep.mubr.bf16.mxu0 0
  %5980 = vmatmul.mubr.bf16.gmra.mxu0 %v4490
  %v5981 = vpop.f32.mrf.mxu0
  %v5982 = vadd.f32 0.0, %v5981
  %v5983 = vpop.f32.mrf.mxu0
  %v5984 = vpop.f32.mrf.mxu0
  %v5985 = vadd.f32 0.0, %v5984
  %v5986 = vpop.f32.mrf.mxu0
  %5987 = vmatprep.mubr.bf16.mxu0 0
  %5988 = vmatmul.mubr.bf16.gmra.mxu0 %v4491
  %v5989 = vpop.f32.mrf.mxu0
  %v5990 = vadd.f32 0.0, %v5989
  %v5991 = vpop.f32.mrf.mxu0
  %v5992 = vpop.f32.mrf.mxu0
  %v5993 = vadd.f32 0.0, %v5992
  %v5994 = vpop.f32.mrf.mxu0
  %5995 = vmatprep.mubr.bf16.mxu0 0
  %5996 = vmatmul.mubr.bf16.gmra.mxu0 %v4492
  %v5997 = vpop.f32.mrf.mxu0
  %v5998 = vadd.f32 0.0, %v5997
  %v5999 = vpop.f32.mrf.mxu0
  %v6000 = vpop.f32.mrf.mxu0
  %v6001 = vadd.f32 0.0, %v6000
  %v6002 = vpop.f32.mrf.mxu0
  %6003 = vmatprep.mubr.bf16.mxu0 0
  %6004 = vmatmul.mubr.bf16.gmra.mxu0 %v4493
  %v6005 = vpop.f32.mrf.mxu0
  %v6006 = vadd.f32 0.0, %v6005
  %v6007 = vpop.f32.mrf.mxu0
  %v6008 = vpop.f32.mrf.mxu0
  %v6009 = vadd.f32 0.0, %v6008
  %v6010 = vpop.f32.mrf.mxu0
  %6011 = vmatprep.mubr.bf16.mxu0 0
  %6012 = vmatmul.mubr.bf16.gmra.mxu0 %v4494
  %v6013 = vpop.f32.mrf.mxu0
  %v6014 = vadd.f32 0.0, %v6013
  %v6015 = vpop.f32.mrf.mxu0
  %v6016 = vpop.f32.mrf.mxu0
  %v6017 = vadd.f32 0.0, %v6016
  %v6018 = vpop.f32.mrf.mxu0
  %6019 = vmatprep.mubr.bf16.mxu0 0
  %6020 = vmatmul.mubr.bf16.gmra.mxu0 %v4495
  %v6021 = vpop.f32.mrf.mxu0
  %v6022 = vadd.f32 0.0, %v6021
  %v6023 = vpop.f32.mrf.mxu0
  %v6024 = vpop.f32.mrf.mxu0
  %v6025 = vadd.f32 0.0, %v6024
  %v6026 = vpop.f32.mrf.mxu0
  %6027 = vmatprep.mubr.bf16.mxu0 0
  %6028 = vmatmul.mubr.bf16.gmra.mxu0 %v4496
  %v6029 = vpop.f32.mrf.mxu0
  %v6030 = vadd.f32 0.0, %v6029
  %v6031 = vpop.f32.mrf.mxu0
  %v6032 = vpop.f32.mrf.mxu0
  %v6033 = vadd.f32 0.0, %v6032
  %v6034 = vpop.f32.mrf.mxu0
  %6035 = vmatprep.mubr.bf16.mxu0 0
  %6036 = vmatmul.mubr.bf16.gmra.mxu0 %v4497
  %v6037 = vpop.f32.mrf.mxu0
  %v6038 = vadd.f32 0.0, %v6037
  %v6039 = vpop.f32.mrf.mxu0
  %v6040 = vpop.f32.mrf.mxu0
  %v6041 = vpop.f32.mrf.mxu0
  %6042 = vdwg.mxu0
  %v6059 = vunpack.c.l.b16 %v5666
  %v6060 = vunpack.c.l.b16 %v5667
  %v6061 = vunpack.c.l.b16 %v5668
  %v6062 = vunpack.c.l.b16 %v5669
  %v6063 = vunpack.c.l.b16 %v5670
  %v6064 = vunpack.c.l.b16 %v5671
  %v6065 = vunpack.c.l.b16 %v5672
  %v6066 = vunpack.c.l.b16 %v5673
  %v6067 = vunpack.c.l.b16 %v5674
  %v6068 = vunpack.c.l.b16 %v5675
  %v6069 = vunpack.c.l.b16 %v5676
  %v6070 = vunpack.c.l.b16 %v5677
  %v6071 = vunpack.c.l.b16 %v5678
  %v6072 = vunpack.c.l.b16 %v5679
  %v6073 = vunpack.c.l.b16 %v5680
  %v6074 = vunpack.c.l.b16 %v5681
  %v6075 = vpack.c.b16 %v6060, %v6059
  %v6076 = vpack.c.b16 %v6062, %v6061
  %v6077 = vpack.c.b16 %v6064, %v6063
  %v6078 = vpack.c.b16 %v6066, %v6065
  %v6079 = vpack.c.b16 %v6068, %v6067
  %v6080 = vpack.c.b16 %v6070, %v6069
  %v6081 = vpack.c.b16 %v6072, %v6071
  %v6082 = vpack.c.b16 %v6074, %v6073
  %6091 = vmatprep.subr.bf16.mxu0 0
  %6092 = vmatpush1.bf16.msra.mxu0 %v6082
  %6093 = vmatprep.subr.bf16.mxu0 0
  %6094 = vmatpush1.bf16.msra.mxu0 %v6081
  %6095 = vmatprep.subr.bf16.mxu0 0
  %6096 = vmatpush1.bf16.msra.mxu0 %v6080
  %6097 = vmatprep.subr.bf16.mxu0 0
  %6098 = vmatpush1.bf16.msra.mxu0 %v6079
  %6099 = vmatprep.subr.bf16.mxu0 0
  %6100 = vmatpush1.bf16.msra.mxu0 %v6078
  %6101 = vmatprep.subr.bf16.mxu0 0
  %6102 = vmatpush1.bf16.msra.mxu0 %v6077
  %6103 = vmatprep.subr.bf16.mxu0 0
  %6104 = vmatpush1.bf16.msra.mxu0 %v6076
  %6105 = vmatprep.subr.bf16.mxu0 0
  %6106 = vmatpush1.bf16.msra.mxu0 %v6075
  %6107 = vmatprep.subr.bf16.mxu0 0
  %6108 = vmatpush2.bf16.msra.mxu0 0
  %6109 = vmatprep.subr.bf16.mxu0 0
  %6110 = vmatpush2.bf16.msra.mxu0 0
  %6111 = vmatprep.subr.bf16.mxu0 0
  %6112 = vmatpush2.bf16.msra.mxu0 0
  %6113 = vmatprep.subr.bf16.mxu0 0
  %6114 = vmatpush2.bf16.msra.mxu0 0
  %6115 = vmatprep.subr.bf16.mxu0 0
  %6116 = vmatpush2.bf16.msra.mxu0 0
  %6117 = vmatprep.subr.bf16.mxu0 0
  %6118 = vmatpush2.bf16.msra.mxu0 0
  %6119 = vmatprep.subr.bf16.mxu0 0
  %6120 = vmatpush2.bf16.msra.mxu0 0
  %6121 = vmatprep.subr.bf16.mxu0 0
  %6122 = vmatpush2.bf16.msra.mxu0 0
  %6123 = vmatprep.mubr.bf16.mxu0 0
  %6124 = vmatmul.mubr.bf16.gmra.mxu0 %v4882
  %v6125 = vpop.f32.mrf.mxu0
  %v6126 = vadd.f32 %v5782, %v6125
  %v6127 = vpop.f32.mrf.mxu0
  %v6128 = vpop.f32.mrf.mxu0
  %v6129 = vadd.f32 %v5785, %v6128
  %v6130 = vpop.f32.mrf.mxu0
  %6131 = vmatprep.mubr.bf16.mxu0 0
  %6132 = vmatmul.mubr.bf16.gmra.mxu0 %v4883
  %v6133 = vpop.f32.mrf.mxu0
  %v6134 = vadd.f32 %v5790, %v6133
  %v6135 = vpop.f32.mrf.mxu0
  %v6136 = vpop.f32.mrf.mxu0
  %v6137 = vadd.f32 %v5793, %v6136
  %v6138 = vpop.f32.mrf.mxu0
  %6139 = vmatprep.mubr.bf16.mxu0 0
  %6140 = vmatmul.mubr.bf16.gmra.mxu0 %v4465
  %v6141 = vpop.f32.mrf.mxu0
  %v6142 = vadd.f32 %v5798, %v6141
  %v6143 = vpop.f32.mrf.mxu0
  %v6144 = vpop.f32.mrf.mxu0
  %v6145 = vadd.f32 %v5801, %v6144
  %v6146 = vpop.f32.mrf.mxu0
  %6147 = vmatprep.mubr.bf16.mxu0 0
  %6148 = vmatmul.mubr.bf16.gmra.mxu0 %v4466
  %v6149 = vpop.f32.mrf.mxu0
  %v6150 = vadd.f32 %v5806, %v6149
  %v6151 = vpop.f32.mrf.mxu0
  %v6152 = vpop.f32.mrf.mxu0
  %v6153 = vadd.f32 %v5809, %v6152
  %v6154 = vpop.f32.mrf.mxu0
  %6155 = vmatprep.mubr.bf16.mxu0 0
  %6156 = vmatmul.mubr.bf16.gmra.mxu0 %v4467
  %v6157 = vpop.f32.mrf.mxu0
  %v6158 = vadd.f32 %v5814, %v6157
  %v6159 = vpop.f32.mrf.mxu0
  %v6160 = vpop.f32.mrf.mxu0
  %v6161 = vadd.f32 %v5817, %v6160
  %v6162 = vpop.f32.mrf.mxu0
  %6163 = vmatprep.mubr.bf16.mxu0 0
  %6164 = vmatmul.mubr.bf16.gmra.mxu0 %v4468
  %v6165 = vpop.f32.mrf.mxu0
  %v6166 = vadd.f32 %v5822, %v6165
  %v6167 = vpop.f32.mrf.mxu0
  %v6168 = vpop.f32.mrf.mxu0
  %v6169 = vadd.f32 %v5825, %v6168
  %v6170 = vpop.f32.mrf.mxu0
  %6171 = vmatprep.mubr.bf16.mxu0 0
  %6172 = vmatmul.mubr.bf16.gmra.mxu0 %v4469
  %v6173 = vpop.f32.mrf.mxu0
  %v6174 = vadd.f32 %v5830, %v6173
  %v6175 = vpop.f32.mrf.mxu0
  %v6176 = vpop.f32.mrf.mxu0
  %v6177 = vadd.f32 %v5833, %v6176
  %v6178 = vpop.f32.mrf.mxu0
  %6179 = vmatprep.mubr.bf16.mxu0 0
  %6180 = vmatmul.mubr.bf16.gmra.mxu0 %v4470
  %v6181 = vpop.f32.mrf.mxu0
  %v6182 = vadd.f32 %v5838, %v6181
  %v6183 = vpop.f32.mrf.mxu0
  %v6184 = vpop.f32.mrf.mxu0
  %v6185 = vadd.f32 %v5841, %v6184
  %v6186 = vpop.f32.mrf.mxu0
  %6187 = vmatprep.mubr.bf16.mxu0 0
  %6188 = vmatmul.mubr.bf16.gmra.mxu0 %v4471
  %v6189 = vpop.f32.mrf.mxu0
  %v6190 = vadd.f32 %v5846, %v6189
  %v6191 = vpop.f32.mrf.mxu0
  %v6192 = vpop.f32.mrf.mxu0
  %v6193 = vadd.f32 %v5849, %v6192
  %v6194 = vpop.f32.mrf.mxu0
  %6195 = vmatprep.mubr.bf16.mxu0 0
  %6196 = vmatmul.mubr.bf16.gmra.mxu0 %v4472
  %v6197 = vpop.f32.mrf.mxu0
  %v6198 = vadd.f32 %v5854, %v6197
  %v6199 = vpop.f32.mrf.mxu0
  %v6200 = vpop.f32.mrf.mxu0
  %v6201 = vadd.f32 %v5857, %v6200
  %v6202 = vpop.f32.mrf.mxu0
  %6203 = vmatprep.mubr.bf16.mxu0 0
  %6204 = vmatmul.mubr.bf16.gmra.mxu0 %v4473
  %v6205 = vpop.f32.mrf.mxu0
  %v6206 = vadd.f32 %v5862, %v6205
  %v6207 = vpop.f32.mrf.mxu0
  %v6208 = vpop.f32.mrf.mxu0
  %v6209 = vadd.f32 %v5865, %v6208
  %v6210 = vpop.f32.mrf.mxu0
  %6211 = vmatprep.mubr.bf16.mxu0 0
  %6212 = vmatmul.mubr.bf16.gmra.mxu0 %v4474
  %v6213 = vpop.f32.mrf.mxu0
  %v6214 = vadd.f32 %v5870, %v6213
  %v6215 = vpop.f32.mrf.mxu0
  %v6216 = vpop.f32.mrf.mxu0
  %v6217 = vadd.f32 %v5873, %v6216
  %v6218 = vpop.f32.mrf.mxu0
  %6219 = vmatprep.mubr.bf16.mxu0 0
  %6220 = vmatmul.mubr.bf16.gmra.mxu0 %v4475
  %v6221 = vpop.f32.mrf.mxu0
  %v6222 = vadd.f32 %v5878, %v6221
  %v6223 = vpop.f32.mrf.mxu0
  %v6224 = vpop.f32.mrf.mxu0
  %v6225 = vadd.f32 %v5881, %v6224
  %v6226 = vpop.f32.mrf.mxu0
  %6227 = vmatprep.mubr.bf16.mxu0 0
  %6228 = vmatmul.mubr.bf16.gmra.mxu0 %v4476
  %v6229 = vpop.f32.mrf.mxu0
  %v6230 = vadd.f32 %v5886, %v6229
  %v6231 = vpop.f32.mrf.mxu0
  %v6232 = vpop.f32.mrf.mxu0
  %v6233 = vadd.f32 %v5889, %v6232
  %v6234 = vpop.f32.mrf.mxu0
  %6235 = vmatprep.mubr.bf16.mxu0 0
  %6236 = vmatmul.mubr.bf16.gmra.mxu0 %v4477
  %v6237 = vpop.f32.mrf.mxu0
  %v6238 = vadd.f32 %v5894, %v6237
  %v6239 = vpop.f32.mrf.mxu0
  %v6240 = vpop.f32.mrf.mxu0
  %v6241 = vadd.f32 %v5897, %v6240
  %v6242 = vpop.f32.mrf.mxu0
  %6243 = vmatprep.mubr.bf16.mxu0 0
  %6244 = vmatmul.mubr.bf16.gmra.mxu0 %v4478
  %v6245 = vpop.f32.mrf.mxu0
  %v6246 = vadd.f32 %v5902, %v6245
  %v6247 = vpop.f32.mrf.mxu0
  %v6248 = vpop.f32.mrf.mxu0
  %v6249 = vadd.f32 %v5905, %v6248
  %v6250 = vpop.f32.mrf.mxu0
  %6251 = vmatprep.mubr.bf16.mxu0 0
  %6252 = vmatmul.mubr.bf16.gmra.mxu0 %v4479
  %v6253 = vpop.f32.mrf.mxu0
  %v6254 = vadd.f32 %v5910, %v6253
  %v6255 = vpop.f32.mrf.mxu0
  %v6256 = vpop.f32.mrf.mxu0
  %v6257 = vadd.f32 %v5913, %v6256
  %v6258 = vpop.f32.mrf.mxu0
  %6259 = vmatprep.mubr.bf16.mxu0 0
  %6260 = vmatmul.mubr.bf16.gmra.mxu0 %v4480
  %v6261 = vpop.f32.mrf.mxu0
  %v6262 = vadd.f32 %v5918, %v6261
  %v6263 = vpop.f32.mrf.mxu0
  %v6264 = vpop.f32.mrf.mxu0
  %v6265 = vadd.f32 %v5921, %v6264
  %v6266 = vpop.f32.mrf.mxu0
  %6267 = vmatprep.mubr.bf16.mxu0 0
  %6268 = vmatmul.mubr.bf16.gmra.mxu0 %v4481
  %v6269 = vpop.f32.mrf.mxu0
  %v6270 = vadd.f32 %v5926, %v6269
  %v6271 = vpop.f32.mrf.mxu0
  %v6272 = vpop.f32.mrf.mxu0
  %v6273 = vadd.f32 %v5929, %v6272
  %v6274 = vpop.f32.mrf.mxu0
  %6275 = vmatprep.mubr.bf16.mxu0 0
  %6276 = vmatmul.mubr.bf16.gmra.mxu0 %v4482
  %v6277 = vpop.f32.mrf.mxu0
  %v6278 = vadd.f32 %v5934, %v6277
  %v6279 = vpop.f32.mrf.mxu0
  %v6280 = vpop.f32.mrf.mxu0
  %v6281 = vadd.f32 %v5937, %v6280
  %v6282 = vpop.f32.mrf.mxu0
  %6283 = vmatprep.mubr.bf16.mxu0 0
  %6284 = vmatmul.mubr.bf16.gmra.mxu0 %v4483
  %v6285 = vpop.f32.mrf.mxu0
  %v6286 = vadd.f32 %v5942, %v6285
  %v6287 = vpop.f32.mrf.mxu0
  %v6288 = vpop.f32.mrf.mxu0
  %v6289 = vadd.f32 %v5945, %v6288
  %v6290 = vpop.f32.mrf.mxu0
  %6291 = vmatprep.mubr.bf16.mxu0 0
  %6292 = vmatmul.mubr.bf16.gmra.mxu0 %v4484
  %v6293 = vpop.f32.mrf.mxu0
  %v6294 = vadd.f32 %v5950, %v6293
  %v6295 = vpop.f32.mrf.mxu0
  %v6296 = vpop.f32.mrf.mxu0
  %v6297 = vadd.f32 %v5953, %v6296
  %v6298 = vpop.f32.mrf.mxu0
  %6299 = vmatprep.mubr.bf16.mxu0 0
  %6300 = vmatmul.mubr.bf16.gmra.mxu0 %v4485
  %v6301 = vpop.f32.mrf.mxu0
  %v6302 = vadd.f32 %v5958, %v6301
  %v6303 = vpop.f32.mrf.mxu0
  %v6304 = vpop.f32.mrf.mxu0
  %v6305 = vadd.f32 %v5961, %v6304
  %v6306 = vpop.f32.mrf.mxu0
  %6307 = vmatprep.mubr.bf16.mxu0 0
  %6308 = vmatmul.mubr.bf16.gmra.mxu0 %v4486
  %v6309 = vpop.f32.mrf.mxu0
  %v6310 = vadd.f32 %v5966, %v6309
  %v6311 = vpop.f32.mrf.mxu0
  %v6312 = vpop.f32.mrf.mxu0
  %v6313 = vadd.f32 %v5969, %v6312
  %v6314 = vpop.f32.mrf.mxu0
  %6315 = vmatprep.mubr.bf16.mxu0 0
  %6316 = vmatmul.mubr.bf16.gmra.mxu0 %v4487
  %v6317 = vpop.f32.mrf.mxu0
  %v6318 = vadd.f32 %v5974, %v6317
  %v6319 = vpop.f32.mrf.mxu0
  %v6320 = vpop.f32.mrf.mxu0
  %v6321 = vadd.f32 %v5977, %v6320
  %v6322 = vpop.f32.mrf.mxu0
  %6323 = vmatprep.mubr.bf16.mxu0 0
  %6324 = vmatmul.mubr.bf16.gmra.mxu0 %v4488
  %v6325 = vpop.f32.mrf.mxu0
  %v6326 = vadd.f32 %v5982, %v6325
  %v6327 = vpop.f32.mrf.mxu0
  %v6328 = vpop.f32.mrf.mxu0
  %v6329 = vadd.f32 %v5985, %v6328
  %v6330 = vpop.f32.mrf.mxu0
  %6331 = vmatprep.mubr.bf16.mxu0 0
  %6332 = vmatmul.mubr.bf16.gmra.mxu0 %v4489
  %v6333 = vpop.f32.mrf.mxu0
  %v6334 = vadd.f32 %v5990, %v6333
  %v6335 = vpop.f32.mrf.mxu0
  %v6336 = vpop.f32.mrf.mxu0
  %v6337 = vadd.f32 %v5993, %v6336
  %v6338 = vpop.f32.mrf.mxu0
  %6339 = vmatprep.mubr.bf16.mxu0 0
  %6340 = vmatmul.mubr.bf16.gmra.mxu0 %v4490
  %v6341 = vpop.f32.mrf.mxu0
  %v6342 = vadd.f32 %v5998, %v6341
  %v6343 = vpop.f32.mrf.mxu0
  %v6344 = vpop.f32.mrf.mxu0
  %v6345 = vadd.f32 %v6001, %v6344
  %v6346 = vpop.f32.mrf.mxu0
  %6347 = vmatprep.mubr.bf16.mxu0 0
  %6348 = vmatmul.mubr.bf16.gmra.mxu0 %v4491
  %v6349 = vpop.f32.mrf.mxu0
  %v6350 = vadd.f32 %v6006, %v6349
  %v6351 = vpop.f32.mrf.mxu0
  %v6352 = vpop.f32.mrf.mxu0
  %v6353 = vadd.f32 %v6009, %v6352
  %v6354 = vpop.f32.mrf.mxu0
  %6355 = vmatprep.mubr.bf16.mxu0 0
  %6356 = vmatmul.mubr.bf16.gmra.mxu0 %v4492
  %v6357 = vpop.f32.mrf.mxu0
  %v6358 = vadd.f32 %v6014, %v6357
  %v6359 = vpop.f32.mrf.mxu0
  %v6360 = vpop.f32.mrf.mxu0
  %v6361 = vadd.f32 %v6017, %v6360
  %v6362 = vpop.f32.mrf.mxu0
  %6363 = vmatprep.mubr.bf16.mxu0 0
  %6364 = vmatmul.mubr.bf16.gmra.mxu0 %v4493
  %v6365 = vpop.f32.mrf.mxu0
  %v6366 = vadd.f32 %v6022, %v6365
  %v6367 = vpop.f32.mrf.mxu0
  %v6368 = vpop.f32.mrf.mxu0
  %v6369 = vadd.f32 %v6025, %v6368
  %v6370 = vpop.f32.mrf.mxu0
  %6371 = vmatprep.mubr.bf16.mxu0 0
  %6372 = vmatmul.mubr.bf16.gmra.mxu0 %v4494
  %v6373 = vpop.f32.mrf.mxu0
  %v6374 = vadd.f32 %v6030, %v6373
  %v6375 = vpop.f32.mrf.mxu0
  %v6376 = vpop.f32.mrf.mxu0
  %v6377 = vadd.f32 %v6033, %v6376
  %v6378 = vpop.f32.mrf.mxu0
  %6379 = vmatprep.mubr.bf16.mxu0 0
  %6380 = vmatmul.mubr.bf16.gmra.mxu0 %v4495
  %v6381 = vpop.f32.mrf.mxu0
  %v6382 = vadd.f32 %v6038, %v6381
  %v6383 = vpop.f32.mrf.mxu0
  %v6384 = vpop.f32.mrf.mxu0
  %v6385 = vpop.f32.mrf.mxu0
  %6386 = vdwg.mxu0
  %s6387 = scalar_lea.vmem %s4, 448
  %v6388 = vld [vmem:[%s6387] sm:$0xf]
  %v6389 = vld [vmem:[%s6387 + $0x4] sm:$0xf]
  %v6390 = vld [vmem:[%s6387 + $0x8] sm:$0xf]
  %v6391 = vld [vmem:[%s6387 + $0xc] sm:$0xf]
  %v6392 = vld [vmem:[%s6387 + $0x10] sm:$0xf]
  %v6393 = vld [vmem:[%s6387 + $0x14] sm:$0xf]
  %v6394 = vld [vmem:[%s6387 + $0x18] sm:$0xf]
  %v6395 = vld [vmem:[%s6387 + $0x1c] sm:$0xf]
  %v6396 = vld [vmem:[%s6387 + $0x20] sm:$0xf]
  %v6397 = vld [vmem:[%s6387 + $0x24] sm:$0xf]
  %v6398 = vld [vmem:[%s6387 + $0x28] sm:$0xf]
  %v6399 = vld [vmem:[%s6387 + $0x2c] sm:$0xf]
  %v6400 = vld [vmem:[%s6387 + $0x30] sm:$0xf]
  %v6401 = vld [vmem:[%s6387 + $0x34] sm:$0xf]
  %v6402 = vld [vmem:[%s6387 + $0x38] sm:$0xf]
  %v6403 = vld [vmem:[%s6387 + $0x3c] sm:$0xf]
  %v6420 = vunpack.c.l.b16 %v6388
  %v6421 = vunpack.c.l.b16 %v6389
  %v6422 = vunpack.c.l.b16 %v6390
  %v6423 = vunpack.c.l.b16 %v6391
  %v6424 = vunpack.c.l.b16 %v6392
  %v6425 = vunpack.c.l.b16 %v6393
  %v6426 = vunpack.c.l.b16 %v6394
  %v6427 = vunpack.c.l.b16 %v6395
  %v6428 = vunpack.c.l.b16 %v6396
  %v6429 = vunpack.c.l.b16 %v6397
  %v6430 = vunpack.c.l.b16 %v6398
  %v6431 = vunpack.c.l.b16 %v6399
  %v6432 = vunpack.c.l.b16 %v6400
  %v6433 = vunpack.c.l.b16 %v6401
  %v6434 = vunpack.c.l.b16 %v6402
  %v6435 = vunpack.c.l.b16 %v6403
  %v6436 = vpack.c.b16 %v6421, %v6420
  %v6437 = vpack.c.b16 %v6423, %v6422
  %v6438 = vpack.c.b16 %v6425, %v6424
  %v6439 = vpack.c.b16 %v6427, %v6426
  %v6440 = vpack.c.b16 %v6429, %v6428
  %v6441 = vpack.c.b16 %v6431, %v6430
  %v6442 = vpack.c.b16 %v6433, %v6432
  %v6443 = vpack.c.b16 %v6435, %v6434
  %6452 = vmatprep.subr.bf16.mxu0 0
  %6453 = vmatpush1.bf16.msra.mxu0 %v6443
  %6454 = vmatprep.subr.bf16.mxu0 0
  %6455 = vmatpush1.bf16.msra.mxu0 %v6442
  %6456 = vmatprep.subr.bf16.mxu0 0
  %6457 = vmatpush1.bf16.msra.mxu0 %v6441
  %6458 = vmatprep.subr.bf16.mxu0 0
  %6459 = vmatpush1.bf16.msra.mxu0 %v6440
  %6460 = vmatprep.subr.bf16.mxu0 0
  %6461 = vmatpush1.bf16.msra.mxu0 %v6439
  %6462 = vmatprep.subr.bf16.mxu0 0
  %6463 = vmatpush1.bf16.msra.mxu0 %v6438
  %6464 = vmatprep.subr.bf16.mxu0 0
  %6465 = vmatpush1.bf16.msra.mxu0 %v6437
  %6466 = vmatprep.subr.bf16.mxu0 0
  %6467 = vmatpush1.bf16.msra.mxu0 %v6436
  %6468 = vmatprep.subr.bf16.mxu0 0
  %6469 = vmatpush2.bf16.msra.mxu0 0
  %6470 = vmatprep.subr.bf16.mxu0 0
  %6471 = vmatpush2.bf16.msra.mxu0 0
  %6472 = vmatprep.subr.bf16.mxu0 0
  %6473 = vmatpush2.bf16.msra.mxu0 0
  %6474 = vmatprep.subr.bf16.mxu0 0
  %6475 = vmatpush2.bf16.msra.mxu0 0
  %6476 = vmatprep.subr.bf16.mxu0 0
  %6477 = vmatpush2.bf16.msra.mxu0 0
  %6478 = vmatprep.subr.bf16.mxu0 0
  %6479 = vmatpush2.bf16.msra.mxu0 0
  %6480 = vmatprep.subr.bf16.mxu0 0
  %6481 = vmatpush2.bf16.msra.mxu0 0
  %6482 = vmatprep.subr.bf16.mxu0 0
  %6483 = vmatpush2.bf16.msra.mxu0 0
  %6484 = vmatprep.mubr.bf16.mxu0 0
  %6485 = vmatmul.mubr.bf16.gmra.mxu0 %v4467
  %v6486 = vpop.f32.mrf.mxu0
  %v6487 = vadd.f32 0.0, %v6486
  %v6488 = vpop.f32.mrf.mxu0
  %v6489 = vpop.f32.mrf.mxu0
  %v6490 = vadd.f32 0.0, %v6489
  %v6491 = vpop.f32.mrf.mxu0
  %6492 = vmatprep.mubr.bf16.mxu0 0
  %6493 = vmatmul.mubr.bf16.gmra.mxu0 %v4468
  %v6494 = vpop.f32.mrf.mxu0
  %v6495 = vadd.f32 0.0, %v6494
  %v6496 = vpop.f32.mrf.mxu0
  %v6497 = vpop.f32.mrf.mxu0
  %v6498 = vadd.f32 0.0, %v6497
  %v6499 = vpop.f32.mrf.mxu0
  %6500 = vmatprep.mubr.bf16.mxu0 0
  %6501 = vmatmul.mubr.bf16.gmra.mxu0 %v4469
  %v6502 = vpop.f32.mrf.mxu0
  %v6503 = vadd.f32 0.0, %v6502
  %v6504 = vpop.f32.mrf.mxu0
  %v6505 = vpop.f32.mrf.mxu0
  %v6506 = vadd.f32 0.0, %v6505
  %v6507 = vpop.f32.mrf.mxu0
  %6508 = vmatprep.mubr.bf16.mxu0 0
  %6509 = vmatmul.mubr.bf16.gmra.mxu0 %v4470
  %v6510 = vpop.f32.mrf.mxu0
  %v6511 = vadd.f32 0.0, %v6510
  %v6512 = vpop.f32.mrf.mxu0
  %v6513 = vpop.f32.mrf.mxu0
  %v6514 = vadd.f32 0.0, %v6513
  %v6515 = vpop.f32.mrf.mxu0
  %6516 = vmatprep.mubr.bf16.mxu0 0
  %6517 = vmatmul.mubr.bf16.gmra.mxu0 %v4471
  %v6518 = vpop.f32.mrf.mxu0
  %v6519 = vadd.f32 0.0, %v6518
  %v6520 = vpop.f32.mrf.mxu0
  %v6521 = vpop.f32.mrf.mxu0
  %v6522 = vadd.f32 0.0, %v6521
  %v6523 = vpop.f32.mrf.mxu0
  %6524 = vmatprep.mubr.bf16.mxu0 0
  %6525 = vmatmul.mubr.bf16.gmra.mxu0 %v4472
  %v6526 = vpop.f32.mrf.mxu0
  %v6527 = vadd.f32 0.0, %v6526
  %v6528 = vpop.f32.mrf.mxu0
  %v6529 = vpop.f32.mrf.mxu0
  %v6530 = vadd.f32 0.0, %v6529
  %v6531 = vpop.f32.mrf.mxu0
  %6532 = vmatprep.mubr.bf16.mxu0 0
  %6533 = vmatmul.mubr.bf16.gmra.mxu0 %v4473
  %v6534 = vpop.f32.mrf.mxu0
  %v6535 = vadd.f32 0.0, %v6534
  %v6536 = vpop.f32.mrf.mxu0
  %v6537 = vpop.f32.mrf.mxu0
  %v6538 = vadd.f32 0.0, %v6537
  %v6539 = vpop.f32.mrf.mxu0
  %6540 = vmatprep.mubr.bf16.mxu0 0
  %6541 = vmatmul.mubr.bf16.gmra.mxu0 %v4474
  %v6542 = vpop.f32.mrf.mxu0
  %v6543 = vadd.f32 0.0, %v6542
  %v6544 = vpop.f32.mrf.mxu0
  %v6545 = vpop.f32.mrf.mxu0
  %v6546 = vadd.f32 0.0, %v6545
  %v6547 = vpop.f32.mrf.mxu0
  %6548 = vmatprep.mubr.bf16.mxu0 0
  %6549 = vmatmul.mubr.bf16.gmra.mxu0 %v4475
  %v6550 = vpop.f32.mrf.mxu0
  %v6551 = vadd.f32 0.0, %v6550
  %v6552 = vpop.f32.mrf.mxu0
  %v6553 = vpop.f32.mrf.mxu0
  %v6554 = vadd.f32 0.0, %v6553
  %v6555 = vpop.f32.mrf.mxu0
  %6556 = vmatprep.mubr.bf16.mxu0 0
  %6557 = vmatmul.mubr.bf16.gmra.mxu0 %v4476
  %v6558 = vpop.f32.mrf.mxu0
  %v6559 = vadd.f32 0.0, %v6558
  %v6560 = vpop.f32.mrf.mxu0
  %v6561 = vpop.f32.mrf.mxu0
  %v6562 = vadd.f32 0.0, %v6561
  %v6563 = vpop.f32.mrf.mxu0
  %6564 = vmatprep.mubr.bf16.mxu0 0
  %6565 = vmatmul.mubr.bf16.gmra.mxu0 %v4477
  %v6566 = vpop.f32.mrf.mxu0
  %v6567 = vadd.f32 0.0, %v6566
  %v6568 = vpop.f32.mrf.mxu0
  %v6569 = vpop.f32.mrf.mxu0
  %v6570 = vadd.f32 0.0, %v6569
  %v6571 = vpop.f32.mrf.mxu0
  %6572 = vmatprep.mubr.bf16.mxu0 0
  %6573 = vmatmul.mubr.bf16.gmra.mxu0 %v4478
  %v6574 = vpop.f32.mrf.mxu0
  %v6575 = vadd.f32 0.0, %v6574
  %v6576 = vpop.f32.mrf.mxu0
  %v6577 = vpop.f32.mrf.mxu0
  %v6578 = vadd.f32 0.0, %v6577
  %v6579 = vpop.f32.mrf.mxu0
  %6580 = vmatprep.mubr.bf16.mxu0 0
  %6581 = vmatmul.mubr.bf16.gmra.mxu0 %v4479
  %v6582 = vpop.f32.mrf.mxu0
  %v6583 = vadd.f32 0.0, %v6582
  %v6584 = vpop.f32.mrf.mxu0
  %v6585 = vpop.f32.mrf.mxu0
  %v6586 = vadd.f32 0.0, %v6585
  %v6587 = vpop.f32.mrf.mxu0
  %6588 = vmatprep.mubr.bf16.mxu0 0
  %6589 = vmatmul.mubr.bf16.gmra.mxu0 %v4480
  %v6590 = vpop.f32.mrf.mxu0
  %v6591 = vadd.f32 0.0, %v6590
  %v6592 = vpop.f32.mrf.mxu0
  %v6593 = vpop.f32.mrf.mxu0
  %v6594 = vadd.f32 0.0, %v6593
  %v6595 = vpop.f32.mrf.mxu0
  %6596 = vmatprep.mubr.bf16.mxu0 0
  %6597 = vmatmul.mubr.bf16.gmra.mxu0 %v4481
  %v6598 = vpop.f32.mrf.mxu0
  %v6599 = vadd.f32 0.0, %v6598
  %v6600 = vpop.f32.mrf.mxu0
  %v6601 = vpop.f32.mrf.mxu0
  %v6602 = vadd.f32 0.0, %v6601
  %v6603 = vpop.f32.mrf.mxu0
  %6604 = vmatprep.mubr.bf16.mxu0 0
  %6605 = vmatmul.mubr.bf16.gmra.mxu0 %v4482
  %v6606 = vpop.f32.mrf.mxu0
  %v6607 = vadd.f32 0.0, %v6606
  %v6608 = vpop.f32.mrf.mxu0
  %v6609 = vpop.f32.mrf.mxu0
  %v6610 = vadd.f32 0.0, %v6609
  %v6611 = vpop.f32.mrf.mxu0
  %6612 = vmatprep.mubr.bf16.mxu0 0
  %6613 = vmatmul.mubr.bf16.gmra.mxu0 %v4483
  %v6614 = vpop.f32.mrf.mxu0
  %v6615 = vadd.f32 0.0, %v6614
  %v6616 = vpop.f32.mrf.mxu0
  %v6617 = vpop.f32.mrf.mxu0
  %v6618 = vadd.f32 0.0, %v6617
  %v6619 = vpop.f32.mrf.mxu0
  %6620 = vmatprep.mubr.bf16.mxu0 0
  %6621 = vmatmul.mubr.bf16.gmra.mxu0 %v4484
  %v6622 = vpop.f32.mrf.mxu0
  %v6623 = vadd.f32 0.0, %v6622
  %v6624 = vpop.f32.mrf.mxu0
  %v6625 = vpop.f32.mrf.mxu0
  %v6626 = vadd.f32 0.0, %v6625
  %v6627 = vpop.f32.mrf.mxu0
  %6628 = vmatprep.mubr.bf16.mxu0 0
  %6629 = vmatmul.mubr.bf16.gmra.mxu0 %v4485
  %v6630 = vpop.f32.mrf.mxu0
  %v6631 = vadd.f32 0.0, %v6630
  %v6632 = vpop.f32.mrf.mxu0
  %v6633 = vpop.f32.mrf.mxu0
  %v6634 = vadd.f32 0.0, %v6633
  %v6635 = vpop.f32.mrf.mxu0
  %6636 = vmatprep.mubr.bf16.mxu0 0
  %6637 = vmatmul.mubr.bf16.gmra.mxu0 %v4486
  %v6638 = vpop.f32.mrf.mxu0
  %v6639 = vadd.f32 0.0, %v6638
  %v6640 = vpop.f32.mrf.mxu0
  %v6641 = vpop.f32.mrf.mxu0
  %v6642 = vadd.f32 0.0, %v6641
  %v6643 = vpop.f32.mrf.mxu0
  %6644 = vmatprep.mubr.bf16.mxu0 0
  %6645 = vmatmul.mubr.bf16.gmra.mxu0 %v4487
  %v6646 = vpop.f32.mrf.mxu0
  %v6647 = vadd.f32 0.0, %v6646
  %v6648 = vpop.f32.mrf.mxu0
  %v6649 = vpop.f32.mrf.mxu0
  %v6650 = vadd.f32 0.0, %v6649
  %v6651 = vpop.f32.mrf.mxu0
  %6652 = vmatprep.mubr.bf16.mxu0 0
  %6653 = vmatmul.mubr.bf16.gmra.mxu0 %v4488
  %v6654 = vpop.f32.mrf.mxu0
  %v6655 = vadd.f32 0.0, %v6654
  %v6656 = vpop.f32.mrf.mxu0
  %v6657 = vpop.f32.mrf.mxu0
  %v6658 = vadd.f32 0.0, %v6657
  %v6659 = vpop.f32.mrf.mxu0
  %6660 = vmatprep.mubr.bf16.mxu0 0
  %6661 = vmatmul.mubr.bf16.gmra.mxu0 %v4489
  %v6662 = vpop.f32.mrf.mxu0
  %v6663 = vadd.f32 0.0, %v6662
  %v6664 = vpop.f32.mrf.mxu0
  %v6665 = vpop.f32.mrf.mxu0
  %v6666 = vadd.f32 0.0, %v6665
  %v6667 = vpop.f32.mrf.mxu0
  %6668 = vmatprep.mubr.bf16.mxu0 0
  %6669 = vmatmul.mubr.bf16.gmra.mxu0 %v4490
  %v6670 = vpop.f32.mrf.mxu0
  %v6671 = vadd.f32 0.0, %v6670
  %v6672 = vpop.f32.mrf.mxu0
  %v6673 = vpop.f32.mrf.mxu0
  %v6674 = vadd.f32 0.0, %v6673
  %v6675 = vpop.f32.mrf.mxu0
  %6676 = vmatprep.mubr.bf16.mxu0 0
  %6677 = vmatmul.mubr.bf16.gmra.mxu0 %v4491
  %v6678 = vpop.f32.mrf.mxu0
  %v6679 = vadd.f32 0.0, %v6678
  %v6680 = vpop.f32.mrf.mxu0
  %v6681 = vpop.f32.mrf.mxu0
  %v6682 = vadd.f32 0.0, %v6681
  %v6683 = vpop.f32.mrf.mxu0
  %6684 = vmatprep.mubr.bf16.mxu0 0
  %6685 = vmatmul.mubr.bf16.gmra.mxu0 %v4492
  %v6686 = vpop.f32.mrf.mxu0
  %v6687 = vadd.f32 0.0, %v6686
  %v6688 = vpop.f32.mrf.mxu0
  %v6689 = vpop.f32.mrf.mxu0
  %v6690 = vadd.f32 0.0, %v6689
  %v6691 = vpop.f32.mrf.mxu0
  %6692 = vmatprep.mubr.bf16.mxu0 0
  %6693 = vmatmul.mubr.bf16.gmra.mxu0 %v4493
  %v6694 = vpop.f32.mrf.mxu0
  %v6695 = vadd.f32 0.0, %v6694
  %v6696 = vpop.f32.mrf.mxu0
  %v6697 = vpop.f32.mrf.mxu0
  %v6698 = vadd.f32 0.0, %v6697
  %v6699 = vpop.f32.mrf.mxu0
  %6700 = vmatprep.mubr.bf16.mxu0 0
  %6701 = vmatmul.mubr.bf16.gmra.mxu0 %v4494
  %v6702 = vpop.f32.mrf.mxu0
  %v6703 = vadd.f32 0.0, %v6702
  %v6704 = vpop.f32.mrf.mxu0
  %v6705 = vpop.f32.mrf.mxu0
  %v6706 = vadd.f32 0.0, %v6705
  %v6707 = vpop.f32.mrf.mxu0
  %6708 = vmatprep.mubr.bf16.mxu0 0
  %6709 = vmatmul.mubr.bf16.gmra.mxu0 %v4495
  %v6710 = vpop.f32.mrf.mxu0
  %v6711 = vadd.f32 0.0, %v6710
  %v6712 = vpop.f32.mrf.mxu0
  %v6713 = vpop.f32.mrf.mxu0
  %v6714 = vadd.f32 0.0, %v6713
  %v6715 = vpop.f32.mrf.mxu0
  %6716 = vmatprep.mubr.bf16.mxu0 0
  %6717 = vmatmul.mubr.bf16.gmra.mxu0 %v4496
  %v6718 = vpop.f32.mrf.mxu0
  %v6719 = vadd.f32 0.0, %v6718
  %v6720 = vpop.f32.mrf.mxu0
  %v6721 = vpop.f32.mrf.mxu0
  %v6722 = vadd.f32 0.0, %v6721
  %v6723 = vpop.f32.mrf.mxu0
  %6724 = vmatprep.mubr.bf16.mxu0 0
  %6725 = vmatmul.mubr.bf16.gmra.mxu0 %v4497
  %v6726 = vpop.f32.mrf.mxu0
  %v6727 = vadd.f32 0.0, %v6726
  %v6728 = vpop.f32.mrf.mxu0
  %v6729 = vpop.f32.mrf.mxu0
  %v6730 = vadd.f32 0.0, %v6729
  %v6731 = vpop.f32.mrf.mxu0
  %6732 = vmatprep.mubr.bf16.mxu0 0
  %6733 = vmatmul.mubr.bf16.gmra.mxu0 %v5254
  %v6734 = vpop.f32.mrf.mxu0
  %v6735 = vadd.f32 0.0, %v6734
  %v6736 = vpop.f32.mrf.mxu0
  %v6737 = vpop.f32.mrf.mxu0
  %v6738 = vadd.f32 0.0, %v6737
  %v6739 = vpop.f32.mrf.mxu0
  %6740 = vmatprep.mubr.bf16.mxu0 0
  %6741 = vmatmul.mubr.bf16.gmra.mxu0 %v5255
  %v6742 = vpop.f32.mrf.mxu0
  %v6743 = vadd.f32 0.0, %v6742
  %v6744 = vpop.f32.mrf.mxu0
  %v6745 = vpop.f32.mrf.mxu0
  %v6746 = vpop.f32.mrf.mxu0
  %6747 = vdwg.mxu0
  %v6748 = vadd.f32 %v6126, %v6487
  %v6749 = vadd.f32 %v6129, %v6490
  %v6750 = vadd.f32 %v6134, %v6495
  %v6751 = vadd.f32 %v6137, %v6498
  %v6752 = vadd.f32 %v6142, %v6503
  %v6753 = vadd.f32 %v6145, %v6506
  %v6754 = vadd.f32 %v6150, %v6511
  %v6755 = vadd.f32 %v6153, %v6514
  %v6756 = vadd.f32 %v6158, %v6519
  %v6757 = vadd.f32 %v6161, %v6522
  %v6758 = vadd.f32 %v6166, %v6527
  %v6759 = vadd.f32 %v6169, %v6530
  %v6760 = vadd.f32 %v6174, %v6535
  %v6761 = vadd.f32 %v6177, %v6538
  %v6762 = vadd.f32 %v6182, %v6543
  %v6763 = vadd.f32 %v6185, %v6546
  %v6764 = vadd.f32 %v6190, %v6551
  %v6765 = vadd.f32 %v6193, %v6554
  %v6766 = vadd.f32 %v6198, %v6559
  %v6767 = vadd.f32 %v6201, %v6562
  %v6768 = vadd.f32 %v6206, %v6567
  %v6769 = vadd.f32 %v6209, %v6570
  %v6770 = vadd.f32 %v6214, %v6575
  %v6771 = vadd.f32 %v6217, %v6578
  %v6772 = vadd.f32 %v6222, %v6583
  %v6773 = vadd.f32 %v6225, %v6586
  %v6774 = vadd.f32 %v6230, %v6591
  %v6775 = vadd.f32 %v6233, %v6594
  %v6776 = vadd.f32 %v6238, %v6599
  %v6777 = vadd.f32 %v6241, %v6602
  %v6778 = vadd.f32 %v6246, %v6607
  %v6779 = vadd.f32 %v6249, %v6610
  %v6780 = vadd.f32 %v6254, %v6615
  %v6781 = vadd.f32 %v6257, %v6618
  %v6782 = vadd.f32 %v6262, %v6623
  %v6783 = vadd.f32 %v6265, %v6626
  %v6784 = vadd.f32 %v6270, %v6631
  %v6785 = vadd.f32 %v6273, %v6634
  %v6786 = vadd.f32 %v6278, %v6639
  %v6787 = vadd.f32 %v6281, %v6642
  %v6788 = vadd.f32 %v6286, %v6647
  %v6789 = vadd.f32 %v6289, %v6650
  %v6790 = vadd.f32 %v6294, %v6655
  %v6791 = vadd.f32 %v6297, %v6658
  %v6792 = vadd.f32 %v6302, %v6663
  %v6793 = vadd.f32 %v6305, %v6666
  %v6794 = vadd.f32 %v6310, %v6671
  %v6795 = vadd.f32 %v6313, %v6674
  %v6796 = vadd.f32 %v6318, %v6679
  %v6797 = vadd.f32 %v6321, %v6682
  %v6798 = vadd.f32 %v6326, %v6687
  %v6799 = vadd.f32 %v6329, %v6690
  %v6800 = vadd.f32 %v6334, %v6695
  %v6801 = vadd.f32 %v6337, %v6698
  %v6802 = vadd.f32 %v6342, %v6703
  %v6803 = vadd.f32 %v6345, %v6706
  %v6804 = vadd.f32 %v6350, %v6711
  %v6805 = vadd.f32 %v6353, %v6714
  %v6806 = vadd.f32 %v6358, %v6719
  %v6807 = vadd.f32 %v6361, %v6722
  %v6808 = vadd.f32 %v6366, %v6727
  %v6809 = vadd.f32 %v6369, %v6730
  %v6810 = vadd.f32 %v6374, %v6735
  %v6811 = vadd.f32 %v6377, %v6738
  %v6812 = vadd.f32 %v6382, %v6743
  %v6813 = vrot.slane %v6748, 1
  %v6814 = vrot.slane %v6749, 1
  %v6815 = vrot.slane %v6750, 1
  %v6816 = vrot.slane %v6751, 1
  %v6817 = vrot.slane %v6752, 1
  %v6818 = vrot.slane %v6753, 1
  %v6819 = vrot.slane %v6754, 1
  %v6820 = vrot.slane %v6755, 1
  %v6821 = vrot.slane %v6756, 1
  %v6822 = vrot.slane %v6757, 1
  %v6823 = vrot.slane %v6758, 1
  %v6824 = vrot.slane %v6759, 1
  %v6825 = vrot.slane %v6760, 1
  %v6826 = vrot.slane %v6761, 1
  %v6827 = vrot.slane %v6762, 1
  %v6828 = vrot.slane %v6763, 1
  %v6829 = vrot.slane %v6764, 1
  %v6830 = vrot.slane %v6765, 1
  %v6831 = vrot.slane %v6766, 1
  %v6832 = vrot.slane %v6767, 1
  %v6833 = vrot.slane %v6768, 1
  %v6834 = vrot.slane %v6769, 1
  %v6835 = vrot.slane %v6770, 1
  %v6836 = vrot.slane %v6771, 1
  %v6837 = vrot.slane %v6772, 1
  %v6838 = vrot.slane %v6773, 1
  %v6839 = vrot.slane %v6774, 1
  %v6840 = vrot.slane %v6775, 1
  %v6841 = vrot.slane %v6776, 1
  %v6842 = vrot.slane %v6777, 1
  %v6843 = vrot.slane %v6778, 1
  %v6844 = vrot.slane %v6779, 1
  %v6845 = vrot.slane %v6780, 1
  %v6846 = vrot.slane %v6781, 1
  %v6847 = vrot.slane %v6782, 1
  %v6848 = vrot.slane %v6783, 1
  %v6849 = vrot.slane %v6784, 1
  %v6850 = vrot.slane %v6785, 1
  %v6851 = vrot.slane %v6786, 1
  %v6852 = vrot.slane %v6787, 1
  %v6853 = vrot.slane %v6788, 1
  %v6854 = vrot.slane %v6789, 1
  %v6855 = vrot.slane %v6790, 1
  %v6856 = vrot.slane %v6791, 1
  %v6857 = vrot.slane %v6792, 1
  %v6858 = vrot.slane %v6793, 1
  %v6859 = vrot.slane %v6794, 1
  %v6860 = vrot.slane %v6795, 1
  %v6861 = vrot.slane %v6796, 1
  %v6862 = vrot.slane %v6797, 1
  %v6863 = vrot.slane %v6798, 1
  %v6864 = vrot.slane %v6799, 1
  %v6865 = vrot.slane %v6800, 1
  %v6866 = vrot.slane %v6801, 1
  %v6867 = vrot.slane %v6802, 1
  %v6868 = vrot.slane %v6803, 1
  %v6869 = vrot.slane %v6804, 1
  %v6870 = vrot.slane %v6805, 1
  %v6871 = vrot.slane %v6806, 1
  %v6872 = vrot.slane %v6807, 1
  %v6873 = vrot.slane %v6808, 1
  %v6874 = vrot.slane %v6809, 1
  %v6875 = vrot.slane %v6810, 1
  %v6876 = vrot.slane %v6811, 1
  %v6877 = vrot.slane %v6812, 1
  %v6878 = vsel %vm2684, %v6876, %v6877
  %v6879 = vsel %vm2684, %v6875, %v6876
  %v6880 = vsel %vm2684, %v6874, %v6875
  %v6881 = vsel %vm2684, %v6873, %v6874
  %v6882 = vsel %vm2684, %v6872, %v6873
  %v6883 = vsel %vm2684, %v6871, %v6872
  %v6884 = vsel %vm2684, %v6870, %v6871
  %v6885 = vsel %vm2684, %v6869, %v6870
  %v6886 = vsel %vm2684, %v6868, %v6869
  %v6887 = vsel %vm2684, %v6867, %v6868
  %v6888 = vsel %vm2684, %v6866, %v6867
  %v6889 = vsel %vm2684, %v6865, %v6866
  %v6890 = vsel %vm2684, %v6864, %v6865
  %v6891 = vsel %vm2684, %v6863, %v6864
  %v6892 = vsel %vm2684, %v6862, %v6863
  %v6893 = vsel %vm2684, %v6861, %v6862
  %v6894 = vsel %vm2684, %v6860, %v6861
  %v6895 = vsel %vm2684, %v6859, %v6860
  %v6896 = vsel %vm2684, %v6858, %v6859
  %v6897 = vsel %vm2684, %v6857, %v6858
  %v6898 = vsel %vm2684, %v6856, %v6857
  %v6899 = vsel %vm2684, %v6855, %v6856
  %v6900 = vsel %vm2684, %v6854, %v6855
  %v6901 = vsel %vm2684, %v6853, %v6854
  %v6902 = vsel %vm2684, %v6852, %v6853
  %v6903 = vsel %vm2684, %v6851, %v6852
  %v6904 = vsel %vm2684, %v6850, %v6851
  %v6905 = vsel %vm2684, %v6849, %v6850
  %v6906 = vsel %vm2684, %v6848, %v6849
  %v6907 = vsel %vm2684, %v6847, %v6848
  %v6908 = vsel %vm2684, %v6846, %v6847
  %v6909 = vsel %vm2684, %v6845, %v6846
  %v6910 = vsel %vm2684, %v6844, %v6845
  %v6911 = vsel %vm2684, %v6843, %v6844
  %v6912 = vsel %vm2684, %v6842, %v6843
  %v6913 = vsel %vm2684, %v6841, %v6842
  %v6914 = vsel %vm2684, %v6840, %v6841
  %v6915 = vsel %vm2684, %v6839, %v6840
  %v6916 = vsel %vm2684, %v6838, %v6839
  %v6917 = vsel %vm2684, %v6837, %v6838
  %v6918 = vsel %vm2684, %v6836, %v6837
  %v6919 = vsel %vm2684, %v6835, %v6836
  %v6920 = vsel %vm2684, %v6834, %v6835
  %v6921 = vsel %vm2684, %v6833, %v6834
  %v6922 = vsel %vm2684, %v6832, %v6833
  %v6923 = vsel %vm2684, %v6831, %v6832
  %v6924 = vsel %vm2684, %v6830, %v6831
  %v6925 = vsel %vm2684, %v6829, %v6830
  %v6926 = vsel %vm2684, %v6828, %v6829
  %v6927 = vsel %vm2684, %v6827, %v6828
  %v6928 = vsel %vm2684, %v6826, %v6827
  %v6929 = vsel %vm2684, %v6825, %v6826
  %v6930 = vsel %vm2684, %v6824, %v6825
  %v6931 = vsel %vm2684, %v6823, %v6824
  %v6932 = vsel %vm2684, %v6822, %v6823
  %v6933 = vsel %vm2684, %v6821, %v6822
  %v6934 = vsel %vm2684, %v6820, %v6821
  %v6935 = vsel %vm2684, %v6819, %v6820
  %v6936 = vsel %vm2684, %v6818, %v6819
  %v6937 = vsel %vm2684, %v6817, %v6818
  %v6938 = vsel %vm2684, %v6816, %v6817
  %v6939 = vsel %vm2684, %v6815, %v6816
  %v6940 = vsel %vm2684, %v6814, %v6815
  %v6941 = vsel %vm2684, %v6813, %v6814
  %v6942 = vadd.f32 %v5601, %v6941
  %v6943 = vadd.f32 %v5602, %v6940
  %v6944 = vadd.f32 %v5603, %v6939
  %v6945 = vadd.f32 %v5604, %v6938
  %v6946 = vadd.f32 %v5605, %v6937
  %v6947 = vadd.f32 %v5606, %v6936
  %v6948 = vadd.f32 %v5607, %v6935
  %v6949 = vadd.f32 %v5608, %v6934
  %v6950 = vadd.f32 %v5609, %v6933
  %v6951 = vadd.f32 %v5610, %v6932
  %v6952 = vadd.f32 %v5611, %v6931
  %v6953 = vadd.f32 %v5612, %v6930
  %v6954 = vadd.f32 %v5613, %v6929
  %v6955 = vadd.f32 %v5614, %v6928
  %v6956 = vadd.f32 %v5615, %v6927
  %v6957 = vadd.f32 %v5616, %v6926
  %v6958 = vadd.f32 %v5617, %v6925
  %v6959 = vadd.f32 %v5618, %v6924
  %v6960 = vadd.f32 %v5619, %v6923
  %v6961 = vadd.f32 %v5620, %v6922
  %v6962 = vadd.f32 %v5621, %v6921
  %v6963 = vadd.f32 %v5622, %v6920
  %v6964 = vadd.f32 %v5623, %v6919
  %v6965 = vadd.f32 %v5624, %v6918
  %v6966 = vadd.f32 %v5625, %v6917
  %v6967 = vadd.f32 %v5626, %v6916
  %v6968 = vadd.f32 %v5627, %v6915
  %v6969 = vadd.f32 %v5628, %v6914
  %v6970 = vadd.f32 %v5629, %v6913
  %v6971 = vadd.f32 %v5630, %v6912
  %v6972 = vadd.f32 %v5631, %v6911
  %v6973 = vadd.f32 %v5632, %v6910
  %v6974 = vadd.f32 %v5633, %v6909
  %v6975 = vadd.f32 %v5634, %v6908
  %v6976 = vadd.f32 %v5635, %v6907
  %v6977 = vadd.f32 %v5636, %v6906
  %v6978 = vadd.f32 %v5637, %v6905
  %v6979 = vadd.f32 %v5638, %v6904
  %v6980 = vadd.f32 %v5639, %v6903
  %v6981 = vadd.f32 %v5640, %v6902
  %v6982 = vadd.f32 %v5641, %v6901
  %v6983 = vadd.f32 %v5642, %v6900
  %v6984 = vadd.f32 %v5643, %v6899
  %v6985 = vadd.f32 %v5644, %v6898
  %v6986 = vadd.f32 %v5645, %v6897
  %v6987 = vadd.f32 %v5646, %v6896
  %v6988 = vadd.f32 %v5647, %v6895
  %v6989 = vadd.f32 %v5648, %v6894
  %v6990 = vadd.f32 %v5649, %v6893
  %v6991 = vadd.f32 %v5650, %v6892
  %v6992 = vadd.f32 %v5651, %v6891
  %v6993 = vadd.f32 %v5652, %v6890
  %v6994 = vadd.f32 %v5653, %v6889
  %v6995 = vadd.f32 %v5654, %v6888
  %v6996 = vadd.f32 %v5655, %v6887
  %v6997 = vadd.f32 %v5656, %v6886
  %v6998 = vadd.f32 %v5657, %v6885
  %v6999 = vadd.f32 %v5658, %v6884
  %v7000 = vadd.f32 %v5659, %v6883
  %v7001 = vadd.f32 %v5660, %v6882
  %v7002 = vadd.f32 %v5661, %v6881
  %v7003 = vadd.f32 %v5662, %v6880
  %v7004 = vadd.f32 %v5663, %v6879
  %v7005 = vadd.f32 %v5664, %v6878
  %s7006 = scalar_lea.vmem %s4, 128
  %v7007 = vld [vmem:[%s7006] sm:$0xf]
  %v7008 = vld [vmem:[%s7006 + $0x4] sm:$0xf]
  %v7009 = vld [vmem:[%s7006 + $0x8] sm:$0xf]
  %v7010 = vld [vmem:[%s7006 + $0xc] sm:$0xf]
  %v7011 = vld [vmem:[%s7006 + $0x10] sm:$0xf]
  %v7012 = vld [vmem:[%s7006 + $0x14] sm:$0xf]
  %v7013 = vld [vmem:[%s7006 + $0x18] sm:$0xf]
  %v7014 = vld [vmem:[%s7006 + $0x1c] sm:$0xf]
  %v7015 = vld [vmem:[%s7006 + $0x20] sm:$0xf]
  %v7016 = vld [vmem:[%s7006 + $0x24] sm:$0xf]
  %v7017 = vld [vmem:[%s7006 + $0x28] sm:$0xf]
  %v7018 = vld [vmem:[%s7006 + $0x2c] sm:$0xf]
  %v7019 = vld [vmem:[%s7006 + $0x30] sm:$0xf]
  %v7020 = vld [vmem:[%s7006 + $0x34] sm:$0xf]
  %v7021 = vld [vmem:[%s7006 + $0x38] sm:$0xf]
  %v7022 = vld [vmem:[%s7006 + $0x3c] sm:$0xf]
  %s7023 = scalar_lea.vmem %s4, 320
  %v7024 = vld [vmem:[%s7023] sm:$0xf]
  %v7025 = vld [vmem:[%s7023 + $0x4] sm:$0xf]
  %v7026 = vld [vmem:[%s7023 + $0x8] sm:$0xf]
  %v7027 = vld [vmem:[%s7023 + $0xc] sm:$0xf]
  %v7028 = vld [vmem:[%s7023 + $0x10] sm:$0xf]
  %v7029 = vld [vmem:[%s7023 + $0x14] sm:$0xf]
  %v7030 = vld [vmem:[%s7023 + $0x18] sm:$0xf]
  %v7031 = vld [vmem:[%s7023 + $0x1c] sm:$0xf]
  %v7032 = vld [vmem:[%s7023 + $0x20] sm:$0xf]
  %v7033 = vld [vmem:[%s7023 + $0x24] sm:$0xf]
  %v7034 = vld [vmem:[%s7023 + $0x28] sm:$0xf]
  %v7035 = vld [vmem:[%s7023 + $0x2c] sm:$0xf]
  %v7036 = vld [vmem:[%s7023 + $0x30] sm:$0xf]
  %v7037 = vld [vmem:[%s7023 + $0x34] sm:$0xf]
  %v7038 = vld [vmem:[%s7023 + $0x38] sm:$0xf]
  %v7039 = vld [vmem:[%s7023 + $0x3c] sm:$0xf]
  %v7056 = vunpack.c.l.b16 %v7024
  %v7057 = vunpack.c.l.b16 %v7025
  %v7058 = vunpack.c.l.b16 %v7026
  %v7059 = vunpack.c.l.b16 %v7027
  %v7060 = vunpack.c.l.b16 %v7028
  %v7061 = vunpack.c.l.b16 %v7029
  %v7062 = vunpack.c.l.b16 %v7030
  %v7063 = vunpack.c.l.b16 %v7031
  %v7064 = vunpack.c.l.b16 %v7032
  %v7065 = vunpack.c.l.b16 %v7033
  %v7066 = vunpack.c.l.b16 %v7034
  %v7067 = vunpack.c.l.b16 %v7035
  %v7068 = vunpack.c.l.b16 %v7036
  %v7069 = vunpack.c.l.b16 %v7037
  %v7070 = vunpack.c.l.b16 %v7038
  %v7071 = vunpack.c.l.b16 %v7039
  %v7072 = vpack.c.b16 %v7057, %v7056
  %v7073 = vpack.c.b16 %v7059, %v7058
  %v7074 = vpack.c.b16 %v7061, %v7060
  %v7075 = vpack.c.b16 %v7063, %v7062
  %v7076 = vpack.c.b16 %v7065, %v7064
  %v7077 = vpack.c.b16 %v7067, %v7066
  %v7078 = vpack.c.b16 %v7069, %v7068
  %v7079 = vpack.c.b16 %v7071, %v7070
  %7088 = vmatprep.subr.bf16.mxu0 0
  %7089 = vmatpush1.bf16.msra.mxu0 %v7079
  %7090 = vmatprep.subr.bf16.mxu0 0
  %7091 = vmatpush1.bf16.msra.mxu0 %v7078
  %7092 = vmatprep.subr.bf16.mxu0 0
  %7093 = vmatpush1.bf16.msra.mxu0 %v7077
  %7094 = vmatprep.subr.bf16.mxu0 0
  %7095 = vmatpush1.bf16.msra.mxu0 %v7076
  %7096 = vmatprep.subr.bf16.mxu0 0
  %7097 = vmatpush1.bf16.msra.mxu0 %v7075
  %7098 = vmatprep.subr.bf16.mxu0 0
  %7099 = vmatpush1.bf16.msra.mxu0 %v7074
  %7100 = vmatprep.subr.bf16.mxu0 0
  %7101 = vmatpush1.bf16.msra.mxu0 %v7073
  %7102 = vmatprep.subr.bf16.mxu0 0
  %7103 = vmatpush1.bf16.msra.mxu0 %v7072
  %7104 = vmatprep.subr.bf16.mxu0 0
  %7105 = vmatpush2.bf16.msra.mxu0 0
  %7106 = vmatprep.subr.bf16.mxu0 0
  %7107 = vmatpush2.bf16.msra.mxu0 0
  %7108 = vmatprep.subr.bf16.mxu0 0
  %7109 = vmatpush2.bf16.msra.mxu0 0
  %7110 = vmatprep.subr.bf16.mxu0 0
  %7111 = vmatpush2.bf16.msra.mxu0 0
  %7112 = vmatprep.subr.bf16.mxu0 0
  %7113 = vmatpush2.bf16.msra.mxu0 0
  %7114 = vmatprep.subr.bf16.mxu0 0
  %7115 = vmatpush2.bf16.msra.mxu0 0
  %7116 = vmatprep.subr.bf16.mxu0 0
  %7117 = vmatpush2.bf16.msra.mxu0 0
  %7118 = vmatprep.subr.bf16.mxu0 0
  %7119 = vmatpush2.bf16.msra.mxu0 0
  %7120 = vmatprep.mubr.bf16.mxu0 0
  %7121 = vmatmul.mubr.bf16.gmra.mxu0 %v4465
  %v7122 = vpop.f32.mrf.mxu0
  %v7123 = vadd.f32 0.0, %v7122
  %v7124 = vpop.f32.mrf.mxu0
  %v7125 = vpop.f32.mrf.mxu0
  %v7126 = vadd.f32 0.0, %v7125
  %v7127 = vpop.f32.mrf.mxu0
  %7128 = vmatprep.mubr.bf16.mxu0 0
  %7129 = vmatmul.mubr.bf16.gmra.mxu0 %v4466
  %v7130 = vpop.f32.mrf.mxu0
  %v7131 = vadd.f32 0.0, %v7130
  %v7132 = vpop.f32.mrf.mxu0
  %v7133 = vpop.f32.mrf.mxu0
  %v7134 = vadd.f32 0.0, %v7133
  %v7135 = vpop.f32.mrf.mxu0
  %7136 = vmatprep.mubr.bf16.mxu0 0
  %7137 = vmatmul.mubr.bf16.gmra.mxu0 %v4467
  %v7138 = vpop.f32.mrf.mxu0
  %v7139 = vadd.f32 0.0, %v7138
  %v7140 = vpop.f32.mrf.mxu0
  %v7141 = vpop.f32.mrf.mxu0
  %v7142 = vadd.f32 0.0, %v7141
  %v7143 = vpop.f32.mrf.mxu0
  %7144 = vmatprep.mubr.bf16.mxu0 0
  %7145 = vmatmul.mubr.bf16.gmra.mxu0 %v4468
  %v7146 = vpop.f32.mrf.mxu0
  %v7147 = vadd.f32 0.0, %v7146
  %v7148 = vpop.f32.mrf.mxu0
  %v7149 = vpop.f32.mrf.mxu0
  %v7150 = vadd.f32 0.0, %v7149
  %v7151 = vpop.f32.mrf.mxu0
  %7152 = vmatprep.mubr.bf16.mxu0 0
  %7153 = vmatmul.mubr.bf16.gmra.mxu0 %v4469
  %v7154 = vpop.f32.mrf.mxu0
  %v7155 = vadd.f32 0.0, %v7154
  %v7156 = vpop.f32.mrf.mxu0
  %v7157 = vpop.f32.mrf.mxu0
  %v7158 = vadd.f32 0.0, %v7157
  %v7159 = vpop.f32.mrf.mxu0
  %7160 = vmatprep.mubr.bf16.mxu0 0
  %7161 = vmatmul.mubr.bf16.gmra.mxu0 %v4470
  %v7162 = vpop.f32.mrf.mxu0
  %v7163 = vadd.f32 0.0, %v7162
  %v7164 = vpop.f32.mrf.mxu0
  %v7165 = vpop.f32.mrf.mxu0
  %v7166 = vadd.f32 0.0, %v7165
  %v7167 = vpop.f32.mrf.mxu0
  %7168 = vmatprep.mubr.bf16.mxu0 0
  %7169 = vmatmul.mubr.bf16.gmra.mxu0 %v4471
  %v7170 = vpop.f32.mrf.mxu0
  %v7171 = vadd.f32 0.0, %v7170
  %v7172 = vpop.f32.mrf.mxu0
  %v7173 = vpop.f32.mrf.mxu0
  %v7174 = vadd.f32 0.0, %v7173
  %v7175 = vpop.f32.mrf.mxu0
  %7176 = vmatprep.mubr.bf16.mxu0 0
  %7177 = vmatmul.mubr.bf16.gmra.mxu0 %v4472
  %v7178 = vpop.f32.mrf.mxu0
  %v7179 = vadd.f32 0.0, %v7178
  %v7180 = vpop.f32.mrf.mxu0
  %v7181 = vpop.f32.mrf.mxu0
  %v7182 = vadd.f32 0.0, %v7181
  %v7183 = vpop.f32.mrf.mxu0
  %7184 = vmatprep.mubr.bf16.mxu0 0
  %7185 = vmatmul.mubr.bf16.gmra.mxu0 %v4473
  %v7186 = vpop.f32.mrf.mxu0
  %v7187 = vadd.f32 0.0, %v7186
  %v7188 = vpop.f32.mrf.mxu0
  %v7189 = vpop.f32.mrf.mxu0
  %v7190 = vadd.f32 0.0, %v7189
  %v7191 = vpop.f32.mrf.mxu0
  %7192 = vmatprep.mubr.bf16.mxu0 0
  %7193 = vmatmul.mubr.bf16.gmra.mxu0 %v4474
  %v7194 = vpop.f32.mrf.mxu0
  %v7195 = vadd.f32 0.0, %v7194
  %v7196 = vpop.f32.mrf.mxu0
  %v7197 = vpop.f32.mrf.mxu0
  %v7198 = vadd.f32 0.0, %v7197
  %v7199 = vpop.f32.mrf.mxu0
  %7200 = vmatprep.mubr.bf16.mxu0 0
  %7201 = vmatmul.mubr.bf16.gmra.mxu0 %v4475
  %v7202 = vpop.f32.mrf.mxu0
  %v7203 = vadd.f32 0.0, %v7202
  %v7204 = vpop.f32.mrf.mxu0
  %v7205 = vpop.f32.mrf.mxu0
  %v7206 = vadd.f32 0.0, %v7205
  %v7207 = vpop.f32.mrf.mxu0
  %7208 = vmatprep.mubr.bf16.mxu0 0
  %7209 = vmatmul.mubr.bf16.gmra.mxu0 %v4476
  %v7210 = vpop.f32.mrf.mxu0
  %v7211 = vadd.f32 0.0, %v7210
  %v7212 = vpop.f32.mrf.mxu0
  %v7213 = vpop.f32.mrf.mxu0
  %v7214 = vadd.f32 0.0, %v7213
  %v7215 = vpop.f32.mrf.mxu0
  %7216 = vmatprep.mubr.bf16.mxu0 0
  %7217 = vmatmul.mubr.bf16.gmra.mxu0 %v4477
  %v7218 = vpop.f32.mrf.mxu0
  %v7219 = vadd.f32 0.0, %v7218
  %v7220 = vpop.f32.mrf.mxu0
  %v7221 = vpop.f32.mrf.mxu0
  %v7222 = vadd.f32 0.0, %v7221
  %v7223 = vpop.f32.mrf.mxu0
  %7224 = vmatprep.mubr.bf16.mxu0 0
  %7225 = vmatmul.mubr.bf16.gmra.mxu0 %v4478
  %v7226 = vpop.f32.mrf.mxu0
  %v7227 = vadd.f32 0.0, %v7226
  %v7228 = vpop.f32.mrf.mxu0
  %v7229 = vpop.f32.mrf.mxu0
  %v7230 = vadd.f32 0.0, %v7229
  %v7231 = vpop.f32.mrf.mxu0
  %7232 = vmatprep.mubr.bf16.mxu0 0
  %7233 = vmatmul.mubr.bf16.gmra.mxu0 %v4479
  %v7234 = vpop.f32.mrf.mxu0
  %v7235 = vadd.f32 0.0, %v7234
  %v7236 = vpop.f32.mrf.mxu0
  %v7237 = vpop.f32.mrf.mxu0
  %v7238 = vadd.f32 0.0, %v7237
  %v7239 = vpop.f32.mrf.mxu0
  %7240 = vmatprep.mubr.bf16.mxu0 0
  %7241 = vmatmul.mubr.bf16.gmra.mxu0 %v4480
  %v7242 = vpop.f32.mrf.mxu0
  %v7243 = vadd.f32 0.0, %v7242
  %v7244 = vpop.f32.mrf.mxu0
  %v7245 = vpop.f32.mrf.mxu0
  %v7246 = vadd.f32 0.0, %v7245
  %v7247 = vpop.f32.mrf.mxu0
  %7248 = vmatprep.mubr.bf16.mxu0 0
  %7249 = vmatmul.mubr.bf16.gmra.mxu0 %v4481
  %v7250 = vpop.f32.mrf.mxu0
  %v7251 = vadd.f32 0.0, %v7250
  %v7252 = vpop.f32.mrf.mxu0
  %v7253 = vpop.f32.mrf.mxu0
  %v7254 = vadd.f32 0.0, %v7253
  %v7255 = vpop.f32.mrf.mxu0
  %7256 = vmatprep.mubr.bf16.mxu0 0
  %7257 = vmatmul.mubr.bf16.gmra.mxu0 %v4482
  %v7258 = vpop.f32.mrf.mxu0
  %v7259 = vadd.f32 0.0, %v7258
  %v7260 = vpop.f32.mrf.mxu0
  %v7261 = vpop.f32.mrf.mxu0
  %v7262 = vadd.f32 0.0, %v7261
  %v7263 = vpop.f32.mrf.mxu0
  %7264 = vmatprep.mubr.bf16.mxu0 0
  %7265 = vmatmul.mubr.bf16.gmra.mxu0 %v4483
  %v7266 = vpop.f32.mrf.mxu0
  %v7267 = vadd.f32 0.0, %v7266
  %v7268 = vpop.f32.mrf.mxu0
  %v7269 = vpop.f32.mrf.mxu0
  %v7270 = vadd.f32 0.0, %v7269
  %v7271 = vpop.f32.mrf.mxu0
  %7272 = vmatprep.mubr.bf16.mxu0 0
  %7273 = vmatmul.mubr.bf16.gmra.mxu0 %v4484
  %v7274 = vpop.f32.mrf.mxu0
  %v7275 = vadd.f32 0.0, %v7274
  %v7276 = vpop.f32.mrf.mxu0
  %v7277 = vpop.f32.mrf.mxu0
  %v7278 = vadd.f32 0.0, %v7277
  %v7279 = vpop.f32.mrf.mxu0
  %7280 = vmatprep.mubr.bf16.mxu0 0
  %7281 = vmatmul.mubr.bf16.gmra.mxu0 %v4485
  %v7282 = vpop.f32.mrf.mxu0
  %v7283 = vadd.f32 0.0, %v7282
  %v7284 = vpop.f32.mrf.mxu0
  %v7285 = vpop.f32.mrf.mxu0
  %v7286 = vadd.f32 0.0, %v7285
  %v7287 = vpop.f32.mrf.mxu0
  %7288 = vmatprep.mubr.bf16.mxu0 0
  %7289 = vmatmul.mubr.bf16.gmra.mxu0 %v4486
  %v7290 = vpop.f32.mrf.mxu0
  %v7291 = vadd.f32 0.0, %v7290
  %v7292 = vpop.f32.mrf.mxu0
  %v7293 = vpop.f32.mrf.mxu0
  %v7294 = vadd.f32 0.0, %v7293
  %v7295 = vpop.f32.mrf.mxu0
  %7296 = vmatprep.mubr.bf16.mxu0 0
  %7297 = vmatmul.mubr.bf16.gmra.mxu0 %v4487
  %v7298 = vpop.f32.mrf.mxu0
  %v7299 = vadd.f32 0.0, %v7298
  %v7300 = vpop.f32.mrf.mxu0
  %v7301 = vpop.f32.mrf.mxu0
  %v7302 = vadd.f32 0.0, %v7301
  %v7303 = vpop.f32.mrf.mxu0
  %7304 = vmatprep.mubr.bf16.mxu0 0
  %7305 = vmatmul.mubr.bf16.gmra.mxu0 %v4488
  %v7306 = vpop.f32.mrf.mxu0
  %v7307 = vadd.f32 0.0, %v7306
  %v7308 = vpop.f32.mrf.mxu0
  %v7309 = vpop.f32.mrf.mxu0
  %v7310 = vadd.f32 0.0, %v7309
  %v7311 = vpop.f32.mrf.mxu0
  %7312 = vmatprep.mubr.bf16.mxu0 0
  %7313 = vmatmul.mubr.bf16.gmra.mxu0 %v4489
  %v7314 = vpop.f32.mrf.mxu0
  %v7315 = vadd.f32 0.0, %v7314
  %v7316 = vpop.f32.mrf.mxu0
  %v7317 = vpop.f32.mrf.mxu0
  %v7318 = vadd.f32 0.0, %v7317
  %v7319 = vpop.f32.mrf.mxu0
  %7320 = vmatprep.mubr.bf16.mxu0 0
  %7321 = vmatmul.mubr.bf16.gmra.mxu0 %v4490
  %v7322 = vpop.f32.mrf.mxu0
  %v7323 = vadd.f32 0.0, %v7322
  %v7324 = vpop.f32.mrf.mxu0
  %v7325 = vpop.f32.mrf.mxu0
  %v7326 = vadd.f32 0.0, %v7325
  %v7327 = vpop.f32.mrf.mxu0
  %7328 = vmatprep.mubr.bf16.mxu0 0
  %7329 = vmatmul.mubr.bf16.gmra.mxu0 %v4491
  %v7330 = vpop.f32.mrf.mxu0
  %v7331 = vadd.f32 0.0, %v7330
  %v7332 = vpop.f32.mrf.mxu0
  %v7333 = vpop.f32.mrf.mxu0
  %v7334 = vadd.f32 0.0, %v7333
  %v7335 = vpop.f32.mrf.mxu0
  %7336 = vmatprep.mubr.bf16.mxu0 0
  %7337 = vmatmul.mubr.bf16.gmra.mxu0 %v4492
  %v7338 = vpop.f32.mrf.mxu0
  %v7339 = vadd.f32 0.0, %v7338
  %v7340 = vpop.f32.mrf.mxu0
  %v7341 = vpop.f32.mrf.mxu0
  %v7342 = vadd.f32 0.0, %v7341
  %v7343 = vpop.f32.mrf.mxu0
  %7344 = vmatprep.mubr.bf16.mxu0 0
  %7345 = vmatmul.mubr.bf16.gmra.mxu0 %v4493
  %v7346 = vpop.f32.mrf.mxu0
  %v7347 = vadd.f32 0.0, %v7346
  %v7348 = vpop.f32.mrf.mxu0
  %v7349 = vpop.f32.mrf.mxu0
  %v7350 = vadd.f32 0.0, %v7349
  %v7351 = vpop.f32.mrf.mxu0
  %7352 = vmatprep.mubr.bf16.mxu0 0
  %7353 = vmatmul.mubr.bf16.gmra.mxu0 %v4494
  %v7354 = vpop.f32.mrf.mxu0
  %v7355 = vadd.f32 0.0, %v7354
  %v7356 = vpop.f32.mrf.mxu0
  %v7357 = vpop.f32.mrf.mxu0
  %v7358 = vadd.f32 0.0, %v7357
  %v7359 = vpop.f32.mrf.mxu0
  %7360 = vmatprep.mubr.bf16.mxu0 0
  %7361 = vmatmul.mubr.bf16.gmra.mxu0 %v4495
  %v7362 = vpop.f32.mrf.mxu0
  %v7363 = vadd.f32 0.0, %v7362
  %v7364 = vpop.f32.mrf.mxu0
  %v7365 = vpop.f32.mrf.mxu0
  %v7366 = vadd.f32 0.0, %v7365
  %v7367 = vpop.f32.mrf.mxu0
  %7368 = vmatprep.mubr.bf16.mxu0 0
  %7369 = vmatmul.mubr.bf16.gmra.mxu0 %v4496
  %v7370 = vpop.f32.mrf.mxu0
  %v7371 = vadd.f32 0.0, %v7370
  %v7372 = vpop.f32.mrf.mxu0
  %v7373 = vpop.f32.mrf.mxu0
  %v7374 = vadd.f32 0.0, %v7373
  %v7375 = vpop.f32.mrf.mxu0
  %7376 = vmatprep.mubr.bf16.mxu0 0
  %7377 = vmatmul.mubr.bf16.gmra.mxu0 %v4497
  %v7378 = vpop.f32.mrf.mxu0
  %v7379 = vadd.f32 0.0, %v7378
  %v7380 = vpop.f32.mrf.mxu0
  %v7381 = vpop.f32.mrf.mxu0
  %v7382 = vpop.f32.mrf.mxu0
  %7383 = vdwg.mxu0
  %v7400 = vunpack.c.l.b16 %v7007
  %v7401 = vunpack.c.l.b16 %v7008
  %v7402 = vunpack.c.l.b16 %v7009
  %v7403 = vunpack.c.l.b16 %v7010
  %v7404 = vunpack.c.l.b16 %v7011
  %v7405 = vunpack.c.l.b16 %v7012
  %v7406 = vunpack.c.l.b16 %v7013
  %v7407 = vunpack.c.l.b16 %v7014
  %v7408 = vunpack.c.l.b16 %v7015
  %v7409 = vunpack.c.l.b16 %v7016
  %v7410 = vunpack.c.l.b16 %v7017
  %v7411 = vunpack.c.l.b16 %v7018
  %v7412 = vunpack.c.l.b16 %v7019
  %v7413 = vunpack.c.l.b16 %v7020
  %v7414 = vunpack.c.l.b16 %v7021
  %v7415 = vunpack.c.l.b16 %v7022
  %v7416 = vpack.c.b16 %v7401, %v7400
  %v7417 = vpack.c.b16 %v7403, %v7402
  %v7418 = vpack.c.b16 %v7405, %v7404
  %v7419 = vpack.c.b16 %v7407, %v7406
  %v7420 = vpack.c.b16 %v7409, %v7408
  %v7421 = vpack.c.b16 %v7411, %v7410
  %v7422 = vpack.c.b16 %v7413, %v7412
  %v7423 = vpack.c.b16 %v7415, %v7414
  %7432 = vmatprep.subr.bf16.mxu0 0
  %7433 = vmatpush1.bf16.msra.mxu0 %v7423
  %7434 = vmatprep.subr.bf16.mxu0 0
  %7435 = vmatpush1.bf16.msra.mxu0 %v7422
  %7436 = vmatprep.subr.bf16.mxu0 0
  %7437 = vmatpush1.bf16.msra.mxu0 %v7421
  %7438 = vmatprep.subr.bf16.mxu0 0
  %7439 = vmatpush1.bf16.msra.mxu0 %v7420
  %7440 = vmatprep.subr.bf16.mxu0 0
  %7441 = vmatpush1.bf16.msra.mxu0 %v7419
  %7442 = vmatprep.subr.bf16.mxu0 0
  %7443 = vmatpush1.bf16.msra.mxu0 %v7418
  %7444 = vmatprep.subr.bf16.mxu0 0
  %7445 = vmatpush1.bf16.msra.mxu0 %v7417
  %7446 = vmatprep.subr.bf16.mxu0 0
  %7447 = vmatpush1.bf16.msra.mxu0 %v7416
  %7448 = vmatprep.subr.bf16.mxu0 0
  %7449 = vmatpush2.bf16.msra.mxu0 0
  %7450 = vmatprep.subr.bf16.mxu0 0
  %7451 = vmatpush2.bf16.msra.mxu0 0
  %7452 = vmatprep.subr.bf16.mxu0 0
  %7453 = vmatpush2.bf16.msra.mxu0 0
  %7454 = vmatprep.subr.bf16.mxu0 0
  %7455 = vmatpush2.bf16.msra.mxu0 0
  %7456 = vmatprep.subr.bf16.mxu0 0
  %7457 = vmatpush2.bf16.msra.mxu0 0
  %7458 = vmatprep.subr.bf16.mxu0 0
  %7459 = vmatpush2.bf16.msra.mxu0 0
  %7460 = vmatprep.subr.bf16.mxu0 0
  %7461 = vmatpush2.bf16.msra.mxu0 0
  %7462 = vmatprep.subr.bf16.mxu0 0
  %7463 = vmatpush2.bf16.msra.mxu0 0
  %7464 = vmatprep.mubr.bf16.mxu0 0
  %7465 = vmatmul.mubr.bf16.gmra.mxu0 %v4882
  %v7466 = vpop.f32.mrf.mxu0
  %v7467 = vadd.f32 %v7123, %v7466
  %v7468 = vpop.f32.mrf.mxu0
  %v7469 = vpop.f32.mrf.mxu0
  %v7470 = vadd.f32 %v7126, %v7469
  %v7471 = vpop.f32.mrf.mxu0
  %7472 = vmatprep.mubr.bf16.mxu0 0
  %7473 = vmatmul.mubr.bf16.gmra.mxu0 %v4883
  %v7474 = vpop.f32.mrf.mxu0
  %v7475 = vadd.f32 %v7131, %v7474
  %v7476 = vpop.f32.mrf.mxu0
  %v7477 = vpop.f32.mrf.mxu0
  %v7478 = vadd.f32 %v7134, %v7477
  %v7479 = vpop.f32.mrf.mxu0
  %7480 = vmatprep.mubr.bf16.mxu0 0
  %7481 = vmatmul.mubr.bf16.gmra.mxu0 %v4465
  %v7482 = vpop.f32.mrf.mxu0
  %v7483 = vadd.f32 %v7139, %v7482
  %v7484 = vpop.f32.mrf.mxu0
  %v7485 = vpop.f32.mrf.mxu0
  %v7486 = vadd.f32 %v7142, %v7485
  %v7487 = vpop.f32.mrf.mxu0
  %7488 = vmatprep.mubr.bf16.mxu0 0
  %7489 = vmatmul.mubr.bf16.gmra.mxu0 %v4466
  %v7490 = vpop.f32.mrf.mxu0
  %v7491 = vadd.f32 %v7147, %v7490
  %v7492 = vpop.f32.mrf.mxu0
  %v7493 = vpop.f32.mrf.mxu0
  %v7494 = vadd.f32 %v7150, %v7493
  %v7495 = vpop.f32.mrf.mxu0
  %7496 = vmatprep.mubr.bf16.mxu0 0
  %7497 = vmatmul.mubr.bf16.gmra.mxu0 %v4467
  %v7498 = vpop.f32.mrf.mxu0
  %v7499 = vadd.f32 %v7155, %v7498
  %v7500 = vpop.f32.mrf.mxu0
  %v7501 = vpop.f32.mrf.mxu0
  %v7502 = vadd.f32 %v7158, %v7501
  %v7503 = vpop.f32.mrf.mxu0
  %7504 = vmatprep.mubr.bf16.mxu0 0
  %7505 = vmatmul.mubr.bf16.gmra.mxu0 %v4468
  %v7506 = vpop.f32.mrf.mxu0
  %v7507 = vadd.f32 %v7163, %v7506
  %v7508 = vpop.f32.mrf.mxu0
  %v7509 = vpop.f32.mrf.mxu0
  %v7510 = vadd.f32 %v7166, %v7509
  %v7511 = vpop.f32.mrf.mxu0
  %7512 = vmatprep.mubr.bf16.mxu0 0
  %7513 = vmatmul.mubr.bf16.gmra.mxu0 %v4469
  %v7514 = vpop.f32.mrf.mxu0
  %v7515 = vadd.f32 %v7171, %v7514
  %v7516 = vpop.f32.mrf.mxu0
  %v7517 = vpop.f32.mrf.mxu0
  %v7518 = vadd.f32 %v7174, %v7517
  %v7519 = vpop.f32.mrf.mxu0
  %7520 = vmatprep.mubr.bf16.mxu0 0
  %7521 = vmatmul.mubr.bf16.gmra.mxu0 %v4470
  %v7522 = vpop.f32.mrf.mxu0
  %v7523 = vadd.f32 %v7179, %v7522
  %v7524 = vpop.f32.mrf.mxu0
  %v7525 = vpop.f32.mrf.mxu0
  %v7526 = vadd.f32 %v7182, %v7525
  %v7527 = vpop.f32.mrf.mxu0
  %7528 = vmatprep.mubr.bf16.mxu0 0
  %7529 = vmatmul.mubr.bf16.gmra.mxu0 %v4471
  %v7530 = vpop.f32.mrf.mxu0
  %v7531 = vadd.f32 %v7187, %v7530
  %v7532 = vpop.f32.mrf.mxu0
  %v7533 = vpop.f32.mrf.mxu0
  %v7534 = vadd.f32 %v7190, %v7533
  %v7535 = vpop.f32.mrf.mxu0
  %7536 = vmatprep.mubr.bf16.mxu0 0
  %7537 = vmatmul.mubr.bf16.gmra.mxu0 %v4472
  %v7538 = vpop.f32.mrf.mxu0
  %v7539 = vadd.f32 %v7195, %v7538
  %v7540 = vpop.f32.mrf.mxu0
  %v7541 = vpop.f32.mrf.mxu0
  %v7542 = vadd.f32 %v7198, %v7541
  %v7543 = vpop.f32.mrf.mxu0
  %7544 = vmatprep.mubr.bf16.mxu0 0
  %7545 = vmatmul.mubr.bf16.gmra.mxu0 %v4473
  %v7546 = vpop.f32.mrf.mxu0
  %v7547 = vadd.f32 %v7203, %v7546
  %v7548 = vpop.f32.mrf.mxu0
  %v7549 = vpop.f32.mrf.mxu0
  %v7550 = vadd.f32 %v7206, %v7549
  %v7551 = vpop.f32.mrf.mxu0
  %7552 = vmatprep.mubr.bf16.mxu0 0
  %7553 = vmatmul.mubr.bf16.gmra.mxu0 %v4474
  %v7554 = vpop.f32.mrf.mxu0
  %v7555 = vadd.f32 %v7211, %v7554
  %v7556 = vpop.f32.mrf.mxu0
  %v7557 = vpop.f32.mrf.mxu0
  %v7558 = vadd.f32 %v7214, %v7557
  %v7559 = vpop.f32.mrf.mxu0
  %7560 = vmatprep.mubr.bf16.mxu0 0
  %7561 = vmatmul.mubr.bf16.gmra.mxu0 %v4475
  %v7562 = vpop.f32.mrf.mxu0
  %v7563 = vadd.f32 %v7219, %v7562
  %v7564 = vpop.f32.mrf.mxu0
  %v7565 = vpop.f32.mrf.mxu0
  %v7566 = vadd.f32 %v7222, %v7565
  %v7567 = vpop.f32.mrf.mxu0
  %7568 = vmatprep.mubr.bf16.mxu0 0
  %7569 = vmatmul.mubr.bf16.gmra.mxu0 %v4476
  %v7570 = vpop.f32.mrf.mxu0
  %v7571 = vadd.f32 %v7227, %v7570
  %v7572 = vpop.f32.mrf.mxu0
  %v7573 = vpop.f32.mrf.mxu0
  %v7574 = vadd.f32 %v7230, %v7573
  %v7575 = vpop.f32.mrf.mxu0
  %7576 = vmatprep.mubr.bf16.mxu0 0
  %7577 = vmatmul.mubr.bf16.gmra.mxu0 %v4477
  %v7578 = vpop.f32.mrf.mxu0
  %v7579 = vadd.f32 %v7235, %v7578
  %v7580 = vpop.f32.mrf.mxu0
  %v7581 = vpop.f32.mrf.mxu0
  %v7582 = vadd.f32 %v7238, %v7581
  %v7583 = vpop.f32.mrf.mxu0
  %7584 = vmatprep.mubr.bf16.mxu0 0
  %7585 = vmatmul.mubr.bf16.gmra.mxu0 %v4478
  %v7586 = vpop.f32.mrf.mxu0
  %v7587 = vadd.f32 %v7243, %v7586
  %v7588 = vpop.f32.mrf.mxu0
  %v7589 = vpop.f32.mrf.mxu0
  %v7590 = vadd.f32 %v7246, %v7589
  %v7591 = vpop.f32.mrf.mxu0
  %7592 = vmatprep.mubr.bf16.mxu0 0
  %7593 = vmatmul.mubr.bf16.gmra.mxu0 %v4479
  %v7594 = vpop.f32.mrf.mxu0
  %v7595 = vadd.f32 %v7251, %v7594
  %v7596 = vpop.f32.mrf.mxu0
  %v7597 = vpop.f32.mrf.mxu0
  %v7598 = vadd.f32 %v7254, %v7597
  %v7599 = vpop.f32.mrf.mxu0
  %7600 = vmatprep.mubr.bf16.mxu0 0
  %7601 = vmatmul.mubr.bf16.gmra.mxu0 %v4480
  %v7602 = vpop.f32.mrf.mxu0
  %v7603 = vadd.f32 %v7259, %v7602
  %v7604 = vpop.f32.mrf.mxu0
  %v7605 = vpop.f32.mrf.mxu0
  %v7606 = vadd.f32 %v7262, %v7605
  %v7607 = vpop.f32.mrf.mxu0
  %7608 = vmatprep.mubr.bf16.mxu0 0
  %7609 = vmatmul.mubr.bf16.gmra.mxu0 %v4481
  %v7610 = vpop.f32.mrf.mxu0
  %v7611 = vadd.f32 %v7267, %v7610
  %v7612 = vpop.f32.mrf.mxu0
  %v7613 = vpop.f32.mrf.mxu0
  %v7614 = vadd.f32 %v7270, %v7613
  %v7615 = vpop.f32.mrf.mxu0
  %7616 = vmatprep.mubr.bf16.mxu0 0
  %7617 = vmatmul.mubr.bf16.gmra.mxu0 %v4482
  %v7618 = vpop.f32.mrf.mxu0
  %v7619 = vadd.f32 %v7275, %v7618
  %v7620 = vpop.f32.mrf.mxu0
  %v7621 = vpop.f32.mrf.mxu0
  %v7622 = vadd.f32 %v7278, %v7621
  %v7623 = vpop.f32.mrf.mxu0
  %7624 = vmatprep.mubr.bf16.mxu0 0
  %7625 = vmatmul.mubr.bf16.gmra.mxu0 %v4483
  %v7626 = vpop.f32.mrf.mxu0
  %v7627 = vadd.f32 %v7283, %v7626
  %v7628 = vpop.f32.mrf.mxu0
  %v7629 = vpop.f32.mrf.mxu0
  %v7630 = vadd.f32 %v7286, %v7629
  %v7631 = vpop.f32.mrf.mxu0
  %7632 = vmatprep.mubr.bf16.mxu0 0
  %7633 = vmatmul.mubr.bf16.gmra.mxu0 %v4484
  %v7634 = vpop.f32.mrf.mxu0
  %v7635 = vadd.f32 %v7291, %v7634
  %v7636 = vpop.f32.mrf.mxu0
  %v7637 = vpop.f32.mrf.mxu0
  %v7638 = vadd.f32 %v7294, %v7637
  %v7639 = vpop.f32.mrf.mxu0
  %7640 = vmatprep.mubr.bf16.mxu0 0
  %7641 = vmatmul.mubr.bf16.gmra.mxu0 %v4485
  %v7642 = vpop.f32.mrf.mxu0
  %v7643 = vadd.f32 %v7299, %v7642
  %v7644 = vpop.f32.mrf.mxu0
  %v7645 = vpop.f32.mrf.mxu0
  %v7646 = vadd.f32 %v7302, %v7645
  %v7647 = vpop.f32.mrf.mxu0
  %7648 = vmatprep.mubr.bf16.mxu0 0
  %7649 = vmatmul.mubr.bf16.gmra.mxu0 %v4486
  %v7650 = vpop.f32.mrf.mxu0
  %v7651 = vadd.f32 %v7307, %v7650
  %v7652 = vpop.f32.mrf.mxu0
  %v7653 = vpop.f32.mrf.mxu0
  %v7654 = vadd.f32 %v7310, %v7653
  %v7655 = vpop.f32.mrf.mxu0
  %7656 = vmatprep.mubr.bf16.mxu0 0
  %7657 = vmatmul.mubr.bf16.gmra.mxu0 %v4487
  %v7658 = vpop.f32.mrf.mxu0
  %v7659 = vadd.f32 %v7315, %v7658
  %v7660 = vpop.f32.mrf.mxu0
  %v7661 = vpop.f32.mrf.mxu0
  %v7662 = vadd.f32 %v7318, %v7661
  %v7663 = vpop.f32.mrf.mxu0
  %7664 = vmatprep.mubr.bf16.mxu0 0
  %7665 = vmatmul.mubr.bf16.gmra.mxu0 %v4488
  %v7666 = vpop.f32.mrf.mxu0
  %v7667 = vadd.f32 %v7323, %v7666
  %v7668 = vpop.f32.mrf.mxu0
  %v7669 = vpop.f32.mrf.mxu0
  %v7670 = vadd.f32 %v7326, %v7669
  %v7671 = vpop.f32.mrf.mxu0
  %7672 = vmatprep.mubr.bf16.mxu0 0
  %7673 = vmatmul.mubr.bf16.gmra.mxu0 %v4489
  %v7674 = vpop.f32.mrf.mxu0
  %v7675 = vadd.f32 %v7331, %v7674
  %v7676 = vpop.f32.mrf.mxu0
  %v7677 = vpop.f32.mrf.mxu0
  %v7678 = vadd.f32 %v7334, %v7677
  %v7679 = vpop.f32.mrf.mxu0
  %7680 = vmatprep.mubr.bf16.mxu0 0
  %7681 = vmatmul.mubr.bf16.gmra.mxu0 %v4490
  %v7682 = vpop.f32.mrf.mxu0
  %v7683 = vadd.f32 %v7339, %v7682
  %v7684 = vpop.f32.mrf.mxu0
  %v7685 = vpop.f32.mrf.mxu0
  %v7686 = vadd.f32 %v7342, %v7685
  %v7687 = vpop.f32.mrf.mxu0
  %7688 = vmatprep.mubr.bf16.mxu0 0
  %7689 = vmatmul.mubr.bf16.gmra.mxu0 %v4491
  %v7690 = vpop.f32.mrf.mxu0
  %v7691 = vadd.f32 %v7347, %v7690
  %v7692 = vpop.f32.mrf.mxu0
  %v7693 = vpop.f32.mrf.mxu0
  %v7694 = vadd.f32 %v7350, %v7693
  %v7695 = vpop.f32.mrf.mxu0
  %7696 = vmatprep.mubr.bf16.mxu0 0
  %7697 = vmatmul.mubr.bf16.gmra.mxu0 %v4492
  %v7698 = vpop.f32.mrf.mxu0
  %v7699 = vadd.f32 %v7355, %v7698
  %v7700 = vpop.f32.mrf.mxu0
  %v7701 = vpop.f32.mrf.mxu0
  %v7702 = vadd.f32 %v7358, %v7701
  %v7703 = vpop.f32.mrf.mxu0
  %7704 = vmatprep.mubr.bf16.mxu0 0
  %7705 = vmatmul.mubr.bf16.gmra.mxu0 %v4493
  %v7706 = vpop.f32.mrf.mxu0
  %v7707 = vadd.f32 %v7363, %v7706
  %v7708 = vpop.f32.mrf.mxu0
  %v7709 = vpop.f32.mrf.mxu0
  %v7710 = vadd.f32 %v7366, %v7709
  %v7711 = vpop.f32.mrf.mxu0
  %7712 = vmatprep.mubr.bf16.mxu0 0
  %7713 = vmatmul.mubr.bf16.gmra.mxu0 %v4494
  %v7714 = vpop.f32.mrf.mxu0
  %v7715 = vadd.f32 %v7371, %v7714
  %v7716 = vpop.f32.mrf.mxu0
  %v7717 = vpop.f32.mrf.mxu0
  %v7718 = vadd.f32 %v7374, %v7717
  %v7719 = vpop.f32.mrf.mxu0
  %7720 = vmatprep.mubr.bf16.mxu0 0
  %7721 = vmatmul.mubr.bf16.gmra.mxu0 %v4495
  %v7722 = vpop.f32.mrf.mxu0
  %v7723 = vadd.f32 %v7379, %v7722
  %v7724 = vpop.f32.mrf.mxu0
  %v7725 = vpop.f32.mrf.mxu0
  %v7726 = vpop.f32.mrf.mxu0
  %7727 = vdwg.mxu0
  %s7728 = scalar_lea.vmem %s4, 512
  %v7729 = vld [vmem:[%s7728] sm:$0xf]
  %v7730 = vld [vmem:[%s7728 + $0x4] sm:$0xf]
  %v7731 = vld [vmem:[%s7728 + $0x8] sm:$0xf]
  %v7732 = vld [vmem:[%s7728 + $0xc] sm:$0xf]
  %v7733 = vld [vmem:[%s7728 + $0x10] sm:$0xf]
  %v7734 = vld [vmem:[%s7728 + $0x14] sm:$0xf]
  %v7735 = vld [vmem:[%s7728 + $0x18] sm:$0xf]
  %v7736 = vld [vmem:[%s7728 + $0x1c] sm:$0xf]
  %v7737 = vld [vmem:[%s7728 + $0x20] sm:$0xf]
  %v7738 = vld [vmem:[%s7728 + $0x24] sm:$0xf]
  %v7739 = vld [vmem:[%s7728 + $0x28] sm:$0xf]
  %v7740 = vld [vmem:[%s7728 + $0x2c] sm:$0xf]
  %v7741 = vld [vmem:[%s7728 + $0x30] sm:$0xf]
  %v7742 = vld [vmem:[%s7728 + $0x34] sm:$0xf]
  %v7743 = vld [vmem:[%s7728 + $0x38] sm:$0xf]
  %v7744 = vld [vmem:[%s7728 + $0x3c] sm:$0xf]
  %v7761 = vunpack.c.l.b16 %v7729
  %v7762 = vunpack.c.l.b16 %v7730
  %v7763 = vunpack.c.l.b16 %v7731
  %v7764 = vunpack.c.l.b16 %v7732
  %v7765 = vunpack.c.l.b16 %v7733
  %v7766 = vunpack.c.l.b16 %v7734
  %v7767 = vunpack.c.l.b16 %v7735
  %v7768 = vunpack.c.l.b16 %v7736
  %v7769 = vunpack.c.l.b16 %v7737
  %v7770 = vunpack.c.l.b16 %v7738
  %v7771 = vunpack.c.l.b16 %v7739
  %v7772 = vunpack.c.l.b16 %v7740
  %v7773 = vunpack.c.l.b16 %v7741
  %v7774 = vunpack.c.l.b16 %v7742
  %v7775 = vunpack.c.l.b16 %v7743
  %v7776 = vunpack.c.l.b16 %v7744
  %v7777 = vpack.c.b16 %v7762, %v7761
  %v7778 = vpack.c.b16 %v7764, %v7763
  %v7779 = vpack.c.b16 %v7766, %v7765
  %v7780 = vpack.c.b16 %v7768, %v7767
  %v7781 = vpack.c.b16 %v7770, %v7769
  %v7782 = vpack.c.b16 %v7772, %v7771
  %v7783 = vpack.c.b16 %v7774, %v7773
  %v7784 = vpack.c.b16 %v7776, %v7775
  %7793 = vmatprep.subr.bf16.mxu0 0
  %7794 = vmatpush1.bf16.msra.mxu0 %v7784
  %7795 = vmatprep.subr.bf16.mxu0 0
  %7796 = vmatpush1.bf16.msra.mxu0 %v7783
  %7797 = vmatprep.subr.bf16.mxu0 0
  %7798 = vmatpush1.bf16.msra.mxu0 %v7782
  %7799 = vmatprep.subr.bf16.mxu0 0
  %7800 = vmatpush1.bf16.msra.mxu0 %v7781
  %7801 = vmatprep.subr.bf16.mxu0 0
  %7802 = vmatpush1.bf16.msra.mxu0 %v7780
  %7803 = vmatprep.subr.bf16.mxu0 0
  %7804 = vmatpush1.bf16.msra.mxu0 %v7779
  %7805 = vmatprep.subr.bf16.mxu0 0
  %7806 = vmatpush1.bf16.msra.mxu0 %v7778
  %7807 = vmatprep.subr.bf16.mxu0 0
  %7808 = vmatpush1.bf16.msra.mxu0 %v7777
  %7809 = vmatprep.subr.bf16.mxu0 0
  %7810 = vmatpush2.bf16.msra.mxu0 0
  %7811 = vmatprep.subr.bf16.mxu0 0
  %7812 = vmatpush2.bf16.msra.mxu0 0
  %7813 = vmatprep.subr.bf16.mxu0 0
  %7814 = vmatpush2.bf16.msra.mxu0 0
  %7815 = vmatprep.subr.bf16.mxu0 0
  %7816 = vmatpush2.bf16.msra.mxu0 0
  %7817 = vmatprep.subr.bf16.mxu0 0
  %7818 = vmatpush2.bf16.msra.mxu0 0
  %7819 = vmatprep.subr.bf16.mxu0 0
  %7820 = vmatpush2.bf16.msra.mxu0 0
  %7821 = vmatprep.subr.bf16.mxu0 0
  %7822 = vmatpush2.bf16.msra.mxu0 0
  %7823 = vmatprep.subr.bf16.mxu0 0
  %7824 = vmatpush2.bf16.msra.mxu0 0
  %7825 = vmatprep.mubr.bf16.mxu0 0
  %7826 = vmatmul.mubr.bf16.gmra.mxu0 %v4467
  %v7827 = vpop.f32.mrf.mxu0
  %v7828 = vadd.f32 0.0, %v7827
  %v7829 = vpop.f32.mrf.mxu0
  %v7830 = vpop.f32.mrf.mxu0
  %v7831 = vadd.f32 0.0, %v7830
  %v7832 = vpop.f32.mrf.mxu0
  %7833 = vmatprep.mubr.bf16.mxu0 0
  %7834 = vmatmul.mubr.bf16.gmra.mxu0 %v4468
  %v7835 = vpop.f32.mrf.mxu0
  %v7836 = vadd.f32 0.0, %v7835
  %v7837 = vpop.f32.mrf.mxu0
  %v7838 = vpop.f32.mrf.mxu0
  %v7839 = vadd.f32 0.0, %v7838
  %v7840 = vpop.f32.mrf.mxu0
  %7841 = vmatprep.mubr.bf16.mxu0 0
  %7842 = vmatmul.mubr.bf16.gmra.mxu0 %v4469
  %v7843 = vpop.f32.mrf.mxu0
  %v7844 = vadd.f32 0.0, %v7843
  %v7845 = vpop.f32.mrf.mxu0
  %v7846 = vpop.f32.mrf.mxu0
  %v7847 = vadd.f32 0.0, %v7846
  %v7848 = vpop.f32.mrf.mxu0
  %7849 = vmatprep.mubr.bf16.mxu0 0
  %7850 = vmatmul.mubr.bf16.gmra.mxu0 %v4470
  %v7851 = vpop.f32.mrf.mxu0
  %v7852 = vadd.f32 0.0, %v7851
  %v7853 = vpop.f32.mrf.mxu0
  %v7854 = vpop.f32.mrf.mxu0
  %v7855 = vadd.f32 0.0, %v7854
  %v7856 = vpop.f32.mrf.mxu0
  %7857 = vmatprep.mubr.bf16.mxu0 0
  %7858 = vmatmul.mubr.bf16.gmra.mxu0 %v4471
  %v7859 = vpop.f32.mrf.mxu0
  %v7860 = vadd.f32 0.0, %v7859
  %v7861 = vpop.f32.mrf.mxu0
  %v7862 = vpop.f32.mrf.mxu0
  %v7863 = vadd.f32 0.0, %v7862
  %v7864 = vpop.f32.mrf.mxu0
  %7865 = vmatprep.mubr.bf16.mxu0 0
  %7866 = vmatmul.mubr.bf16.gmra.mxu0 %v4472
  %v7867 = vpop.f32.mrf.mxu0
  %v7868 = vadd.f32 0.0, %v7867
  %v7869 = vpop.f32.mrf.mxu0
  %v7870 = vpop.f32.mrf.mxu0
  %v7871 = vadd.f32 0.0, %v7870
  %v7872 = vpop.f32.mrf.mxu0
  %7873 = vmatprep.mubr.bf16.mxu0 0
  %7874 = vmatmul.mubr.bf16.gmra.mxu0 %v4473
  %v7875 = vpop.f32.mrf.mxu0
  %v7876 = vadd.f32 0.0, %v7875
  %v7877 = vpop.f32.mrf.mxu0
  %v7878 = vpop.f32.mrf.mxu0
  %v7879 = vadd.f32 0.0, %v7878
  %v7880 = vpop.f32.mrf.mxu0
  %7881 = vmatprep.mubr.bf16.mxu0 0
  %7882 = vmatmul.mubr.bf16.gmra.mxu0 %v4474
  %v7883 = vpop.f32.mrf.mxu0
  %v7884 = vadd.f32 0.0, %v7883
  %v7885 = vpop.f32.mrf.mxu0
  %v7886 = vpop.f32.mrf.mxu0
  %v7887 = vadd.f32 0.0, %v7886
  %v7888 = vpop.f32.mrf.mxu0
  %7889 = vmatprep.mubr.bf16.mxu0 0
  %7890 = vmatmul.mubr.bf16.gmra.mxu0 %v4475
  %v7891 = vpop.f32.mrf.mxu0
  %v7892 = vadd.f32 0.0, %v7891
  %v7893 = vpop.f32.mrf.mxu0
  %v7894 = vpop.f32.mrf.mxu0
  %v7895 = vadd.f32 0.0, %v7894
  %v7896 = vpop.f32.mrf.mxu0
  %7897 = vmatprep.mubr.bf16.mxu0 0
  %7898 = vmatmul.mubr.bf16.gmra.mxu0 %v4476
  %v7899 = vpop.f32.mrf.mxu0
  %v7900 = vadd.f32 0.0, %v7899
  %v7901 = vpop.f32.mrf.mxu0
  %v7902 = vpop.f32.mrf.mxu0
  %v7903 = vadd.f32 0.0, %v7902
  %v7904 = vpop.f32.mrf.mxu0
  %7905 = vmatprep.mubr.bf16.mxu0 0
  %7906 = vmatmul.mubr.bf16.gmra.mxu0 %v4477
  %v7907 = vpop.f32.mrf.mxu0
  %v7908 = vadd.f32 0.0, %v7907
  %v7909 = vpop.f32.mrf.mxu0
  %v7910 = vpop.f32.mrf.mxu0
  %v7911 = vadd.f32 0.0, %v7910
  %v7912 = vpop.f32.mrf.mxu0
  %7913 = vmatprep.mubr.bf16.mxu0 0
  %7914 = vmatmul.mubr.bf16.gmra.mxu0 %v4478
  %v7915 = vpop.f32.mrf.mxu0
  %v7916 = vadd.f32 0.0, %v7915
  %v7917 = vpop.f32.mrf.mxu0
  %v7918 = vpop.f32.mrf.mxu0
  %v7919 = vadd.f32 0.0, %v7918
  %v7920 = vpop.f32.mrf.mxu0
  %7921 = vmatprep.mubr.bf16.mxu0 0
  %7922 = vmatmul.mubr.bf16.gmra.mxu0 %v4479
  %v7923 = vpop.f32.mrf.mxu0
  %v7924 = vadd.f32 0.0, %v7923
  %v7925 = vpop.f32.mrf.mxu0
  %v7926 = vpop.f32.mrf.mxu0
  %v7927 = vadd.f32 0.0, %v7926
  %v7928 = vpop.f32.mrf.mxu0
  %7929 = vmatprep.mubr.bf16.mxu0 0
  %7930 = vmatmul.mubr.bf16.gmra.mxu0 %v4480
  %v7931 = vpop.f32.mrf.mxu0
  %v7932 = vadd.f32 0.0, %v7931
  %v7933 = vpop.f32.mrf.mxu0
  %v7934 = vpop.f32.mrf.mxu0
  %v7935 = vadd.f32 0.0, %v7934
  %v7936 = vpop.f32.mrf.mxu0
  %7937 = vmatprep.mubr.bf16.mxu0 0
  %7938 = vmatmul.mubr.bf16.gmra.mxu0 %v4481
  %v7939 = vpop.f32.mrf.mxu0
  %v7940 = vadd.f32 0.0, %v7939
  %v7941 = vpop.f32.mrf.mxu0
  %v7942 = vpop.f32.mrf.mxu0
  %v7943 = vadd.f32 0.0, %v7942
  %v7944 = vpop.f32.mrf.mxu0
  %7945 = vmatprep.mubr.bf16.mxu0 0
  %7946 = vmatmul.mubr.bf16.gmra.mxu0 %v4482
  %v7947 = vpop.f32.mrf.mxu0
  %v7948 = vadd.f32 0.0, %v7947
  %v7949 = vpop.f32.mrf.mxu0
  %v7950 = vpop.f32.mrf.mxu0
  %v7951 = vadd.f32 0.0, %v7950
  %v7952 = vpop.f32.mrf.mxu0
  %7953 = vmatprep.mubr.bf16.mxu0 0
  %7954 = vmatmul.mubr.bf16.gmra.mxu0 %v4483
  %v7955 = vpop.f32.mrf.mxu0
  %v7956 = vadd.f32 0.0, %v7955
  %v7957 = vpop.f32.mrf.mxu0
  %v7958 = vpop.f32.mrf.mxu0
  %v7959 = vadd.f32 0.0, %v7958
  %v7960 = vpop.f32.mrf.mxu0
  %7961 = vmatprep.mubr.bf16.mxu0 0
  %7962 = vmatmul.mubr.bf16.gmra.mxu0 %v4484
  %v7963 = vpop.f32.mrf.mxu0
  %v7964 = vadd.f32 0.0, %v7963
  %v7965 = vpop.f32.mrf.mxu0
  %v7966 = vpop.f32.mrf.mxu0
  %v7967 = vadd.f32 0.0, %v7966
  %v7968 = vpop.f32.mrf.mxu0
  %7969 = vmatprep.mubr.bf16.mxu0 0
  %7970 = vmatmul.mubr.bf16.gmra.mxu0 %v4485
  %v7971 = vpop.f32.mrf.mxu0
  %v7972 = vadd.f32 0.0, %v7971
  %v7973 = vpop.f32.mrf.mxu0
  %v7974 = vpop.f32.mrf.mxu0
  %v7975 = vadd.f32 0.0, %v7974
  %v7976 = vpop.f32.mrf.mxu0
  %7977 = vmatprep.mubr.bf16.mxu0 0
  %7978 = vmatmul.mubr.bf16.gmra.mxu0 %v4486
  %v7979 = vpop.f32.mrf.mxu0
  %v7980 = vadd.f32 0.0, %v7979
  %v7981 = vpop.f32.mrf.mxu0
  %v7982 = vpop.f32.mrf.mxu0
  %v7983 = vadd.f32 0.0, %v7982
  %v7984 = vpop.f32.mrf.mxu0
  %7985 = vmatprep.mubr.bf16.mxu0 0
  %7986 = vmatmul.mubr.bf16.gmra.mxu0 %v4487
  %v7987 = vpop.f32.mrf.mxu0
  %v7988 = vadd.f32 0.0, %v7987
  %v7989 = vpop.f32.mrf.mxu0
  %v7990 = vpop.f32.mrf.mxu0
  %v7991 = vadd.f32 0.0, %v7990
  %v7992 = vpop.f32.mrf.mxu0
  %7993 = vmatprep.mubr.bf16.mxu0 0
  %7994 = vmatmul.mubr.bf16.gmra.mxu0 %v4488
  %v7995 = vpop.f32.mrf.mxu0
  %v7996 = vadd.f32 0.0, %v7995
  %v7997 = vpop.f32.mrf.mxu0
  %v7998 = vpop.f32.mrf.mxu0
  %v7999 = vadd.f32 0.0, %v7998
  %v8000 = vpop.f32.mrf.mxu0
  %8001 = vmatprep.mubr.bf16.mxu0 0
  %8002 = vmatmul.mubr.bf16.gmra.mxu0 %v4489
  %v8003 = vpop.f32.mrf.mxu0
  %v8004 = vadd.f32 0.0, %v8003
  %v8005 = vpop.f32.mrf.mxu0
  %v8006 = vpop.f32.mrf.mxu0
  %v8007 = vadd.f32 0.0, %v8006
  %v8008 = vpop.f32.mrf.mxu0
  %8009 = vmatprep.mubr.bf16.mxu0 0
  %8010 = vmatmul.mubr.bf16.gmra.mxu0 %v4490
  %v8011 = vpop.f32.mrf.mxu0
  %v8012 = vadd.f32 0.0, %v8011
  %v8013 = vpop.f32.mrf.mxu0
  %v8014 = vpop.f32.mrf.mxu0
  %v8015 = vadd.f32 0.0, %v8014
  %v8016 = vpop.f32.mrf.mxu0
  %8017 = vmatprep.mubr.bf16.mxu0 0
  %8018 = vmatmul.mubr.bf16.gmra.mxu0 %v4491
  %v8019 = vpop.f32.mrf.mxu0
  %v8020 = vadd.f32 0.0, %v8019
  %v8021 = vpop.f32.mrf.mxu0
  %v8022 = vpop.f32.mrf.mxu0
  %v8023 = vadd.f32 0.0, %v8022
  %v8024 = vpop.f32.mrf.mxu0
  %8025 = vmatprep.mubr.bf16.mxu0 0
  %8026 = vmatmul.mubr.bf16.gmra.mxu0 %v4492
  %v8027 = vpop.f32.mrf.mxu0
  %v8028 = vadd.f32 0.0, %v8027
  %v8029 = vpop.f32.mrf.mxu0
  %v8030 = vpop.f32.mrf.mxu0
  %v8031 = vadd.f32 0.0, %v8030
  %v8032 = vpop.f32.mrf.mxu0
  %8033 = vmatprep.mubr.bf16.mxu0 0
  %8034 = vmatmul.mubr.bf16.gmra.mxu0 %v4493
  %v8035 = vpop.f32.mrf.mxu0
  %v8036 = vadd.f32 0.0, %v8035
  %v8037 = vpop.f32.mrf.mxu0
  %v8038 = vpop.f32.mrf.mxu0
  %v8039 = vadd.f32 0.0, %v8038
  %v8040 = vpop.f32.mrf.mxu0
  %8041 = vmatprep.mubr.bf16.mxu0 0
  %8042 = vmatmul.mubr.bf16.gmra.mxu0 %v4494
  %v8043 = vpop.f32.mrf.mxu0
  %v8044 = vadd.f32 0.0, %v8043
  %v8045 = vpop.f32.mrf.mxu0
  %v8046 = vpop.f32.mrf.mxu0
  %v8047 = vadd.f32 0.0, %v8046
  %v8048 = vpop.f32.mrf.mxu0
  %8049 = vmatprep.mubr.bf16.mxu0 0
  %8050 = vmatmul.mubr.bf16.gmra.mxu0 %v4495
  %v8051 = vpop.f32.mrf.mxu0
  %v8052 = vadd.f32 0.0, %v8051
  %v8053 = vpop.f32.mrf.mxu0
  %v8054 = vpop.f32.mrf.mxu0
  %v8055 = vadd.f32 0.0, %v8054
  %v8056 = vpop.f32.mrf.mxu0
  %8057 = vmatprep.mubr.bf16.mxu0 0
  %8058 = vmatmul.mubr.bf16.gmra.mxu0 %v4496
  %v8059 = vpop.f32.mrf.mxu0
  %v8060 = vadd.f32 0.0, %v8059
  %v8061 = vpop.f32.mrf.mxu0
  %v8062 = vpop.f32.mrf.mxu0
  %v8063 = vadd.f32 0.0, %v8062
  %v8064 = vpop.f32.mrf.mxu0
  %8065 = vmatprep.mubr.bf16.mxu0 0
  %8066 = vmatmul.mubr.bf16.gmra.mxu0 %v4497
  %v8067 = vpop.f32.mrf.mxu0
  %v8068 = vadd.f32 0.0, %v8067
  %v8069 = vpop.f32.mrf.mxu0
  %v8070 = vpop.f32.mrf.mxu0
  %v8071 = vadd.f32 0.0, %v8070
  %v8072 = vpop.f32.mrf.mxu0
  %8073 = vmatprep.mubr.bf16.mxu0 0
  %8074 = vmatmul.mubr.bf16.gmra.mxu0 %v5254
  %v8075 = vpop.f32.mrf.mxu0
  %v8076 = vadd.f32 0.0, %v8075
  %v8077 = vpop.f32.mrf.mxu0
  %v8078 = vpop.f32.mrf.mxu0
  %v8079 = vadd.f32 0.0, %v8078
  %v8080 = vpop.f32.mrf.mxu0
  %8081 = vmatprep.mubr.bf16.mxu0 0
  %8082 = vmatmul.mubr.bf16.gmra.mxu0 %v5255
  %v8083 = vpop.f32.mrf.mxu0
  %v8084 = vadd.f32 0.0, %v8083
  %v8085 = vpop.f32.mrf.mxu0
  %v8086 = vpop.f32.mrf.mxu0
  %v8087 = vpop.f32.mrf.mxu0
  %8088 = vdwg.mxu0
  %v8089 = vadd.f32 %v7467, %v7828
  %v8090 = vadd.f32 %v7470, %v7831
  %v8091 = vadd.f32 %v7475, %v7836
  %v8092 = vadd.f32 %v7478, %v7839
  %v8093 = vadd.f32 %v7483, %v7844
  %v8094 = vadd.f32 %v7486, %v7847
  %v8095 = vadd.f32 %v7491, %v7852
  %v8096 = vadd.f32 %v7494, %v7855
  %v8097 = vadd.f32 %v7499, %v7860
  %v8098 = vadd.f32 %v7502, %v7863
  %v8099 = vadd.f32 %v7507, %v7868
  %v8100 = vadd.f32 %v7510, %v7871
  %v8101 = vadd.f32 %v7515, %v7876
  %v8102 = vadd.f32 %v7518, %v7879
  %v8103 = vadd.f32 %v7523, %v7884
  %v8104 = vadd.f32 %v7526, %v7887
  %v8105 = vadd.f32 %v7531, %v7892
  %v8106 = vadd.f32 %v7534, %v7895
  %v8107 = vadd.f32 %v7539, %v7900
  %v8108 = vadd.f32 %v7542, %v7903
  %v8109 = vadd.f32 %v7547, %v7908
  %v8110 = vadd.f32 %v7550, %v7911
  %v8111 = vadd.f32 %v7555, %v7916
  %v8112 = vadd.f32 %v7558, %v7919
  %v8113 = vadd.f32 %v7563, %v7924
  %v8114 = vadd.f32 %v7566, %v7927
  %v8115 = vadd.f32 %v7571, %v7932
  %v8116 = vadd.f32 %v7574, %v7935
  %v8117 = vadd.f32 %v7579, %v7940
  %v8118 = vadd.f32 %v7582, %v7943
  %v8119 = vadd.f32 %v7587, %v7948
  %v8120 = vadd.f32 %v7590, %v7951
  %v8121 = vadd.f32 %v7595, %v7956
  %v8122 = vadd.f32 %v7598, %v7959
  %v8123 = vadd.f32 %v7603, %v7964
  %v8124 = vadd.f32 %v7606, %v7967
  %v8125 = vadd.f32 %v7611, %v7972
  %v8126 = vadd.f32 %v7614, %v7975
  %v8127 = vadd.f32 %v7619, %v7980
  %v8128 = vadd.f32 %v7622, %v7983
  %v8129 = vadd.f32 %v7627, %v7988
  %v8130 = vadd.f32 %v7630, %v7991
  %v8131 = vadd.f32 %v7635, %v7996
  %v8132 = vadd.f32 %v7638, %v7999
  %v8133 = vadd.f32 %v7643, %v8004
  %v8134 = vadd.f32 %v7646, %v8007
  %v8135 = vadd.f32 %v7651, %v8012
  %v8136 = vadd.f32 %v7654, %v8015
  %v8137 = vadd.f32 %v7659, %v8020
  %v8138 = vadd.f32 %v7662, %v8023
  %v8139 = vadd.f32 %v7667, %v8028
  %v8140 = vadd.f32 %v7670, %v8031
  %v8141 = vadd.f32 %v7675, %v8036
  %v8142 = vadd.f32 %v7678, %v8039
  %v8143 = vadd.f32 %v7683, %v8044
  %v8144 = vadd.f32 %v7686, %v8047
  %v8145 = vadd.f32 %v7691, %v8052
  %v8146 = vadd.f32 %v7694, %v8055
  %v8147 = vadd.f32 %v7699, %v8060
  %v8148 = vadd.f32 %v7702, %v8063
  %v8149 = vadd.f32 %v7707, %v8068
  %v8150 = vadd.f32 %v7710, %v8071
  %v8151 = vadd.f32 %v7715, %v8076
  %v8152 = vadd.f32 %v7718, %v8079
  %v8153 = vadd.f32 %v7723, %v8084
  %v8154 = vrot.slane %v8089, 2
  %v8155 = vrot.slane %v8090, 2
  %v8156 = vrot.slane %v8091, 2
  %v8157 = vrot.slane %v8092, 2
  %v8158 = vrot.slane %v8093, 2
  %v8159 = vrot.slane %v8094, 2
  %v8160 = vrot.slane %v8095, 2
  %v8161 = vrot.slane %v8096, 2
  %v8162 = vrot.slane %v8097, 2
  %v8163 = vrot.slane %v8098, 2
  %v8164 = vrot.slane %v8099, 2
  %v8165 = vrot.slane %v8100, 2
  %v8166 = vrot.slane %v8101, 2
  %v8167 = vrot.slane %v8102, 2
  %v8168 = vrot.slane %v8103, 2
  %v8169 = vrot.slane %v8104, 2
  %v8170 = vrot.slane %v8105, 2
  %v8171 = vrot.slane %v8106, 2
  %v8172 = vrot.slane %v8107, 2
  %v8173 = vrot.slane %v8108, 2
  %v8174 = vrot.slane %v8109, 2
  %v8175 = vrot.slane %v8110, 2
  %v8176 = vrot.slane %v8111, 2
  %v8177 = vrot.slane %v8112, 2
  %v8178 = vrot.slane %v8113, 2
  %v8179 = vrot.slane %v8114, 2
  %v8180 = vrot.slane %v8115, 2
  %v8181 = vrot.slane %v8116, 2
  %v8182 = vrot.slane %v8117, 2
  %v8183 = vrot.slane %v8118, 2
  %v8184 = vrot.slane %v8119, 2
  %v8185 = vrot.slane %v8120, 2
  %v8186 = vrot.slane %v8121, 2
  %v8187 = vrot.slane %v8122, 2
  %v8188 = vrot.slane %v8123, 2
  %v8189 = vrot.slane %v8124, 2
  %v8190 = vrot.slane %v8125, 2
  %v8191 = vrot.slane %v8126, 2
  %v8192 = vrot.slane %v8127, 2
  %v8193 = vrot.slane %v8128, 2
  %v8194 = vrot.slane %v8129, 2
  %v8195 = vrot.slane %v8130, 2
  %v8196 = vrot.slane %v8131, 2
  %v8197 = vrot.slane %v8132, 2
  %v8198 = vrot.slane %v8133, 2
  %v8199 = vrot.slane %v8134, 2
  %v8200 = vrot.slane %v8135, 2
  %v8201 = vrot.slane %v8136, 2
  %v8202 = vrot.slane %v8137, 2
  %v8203 = vrot.slane %v8138, 2
  %v8204 = vrot.slane %v8139, 2
  %v8205 = vrot.slane %v8140, 2
  %v8206 = vrot.slane %v8141, 2
  %v8207 = vrot.slane %v8142, 2
  %v8208 = vrot.slane %v8143, 2
  %v8209 = vrot.slane %v8144, 2
  %v8210 = vrot.slane %v8145, 2
  %v8211 = vrot.slane %v8146, 2
  %v8212 = vrot.slane %v8147, 2
  %v8213 = vrot.slane %v8148, 2
  %v8214 = vrot.slane %v8149, 2
  %v8215 = vrot.slane %v8150, 2
  %v8216 = vrot.slane %v8151, 2
  %v8217 = vrot.slane %v8152, 2
  %v8218 = vrot.slane %v8153, 2
  %v8219 = vsel %vm4026, %v8217, %v8218
  %v8220 = vsel %vm4026, %v8216, %v8217
  %v8221 = vsel %vm4026, %v8215, %v8216
  %v8222 = vsel %vm4026, %v8214, %v8215
  %v8223 = vsel %vm4026, %v8213, %v8214
  %v8224 = vsel %vm4026, %v8212, %v8213
  %v8225 = vsel %vm4026, %v8211, %v8212
  %v8226 = vsel %vm4026, %v8210, %v8211
  %v8227 = vsel %vm4026, %v8209, %v8210
  %v8228 = vsel %vm4026, %v8208, %v8209
  %v8229 = vsel %vm4026, %v8207, %v8208
  %v8230 = vsel %vm4026, %v8206, %v8207
  %v8231 = vsel %vm4026, %v8205, %v8206
  %v8232 = vsel %vm4026, %v8204, %v8205
  %v8233 = vsel %vm4026, %v8203, %v8204
  %v8234 = vsel %vm4026, %v8202, %v8203
  %v8235 = vsel %vm4026, %v8201, %v8202
  %v8236 = vsel %vm4026, %v8200, %v8201
  %v8237 = vsel %vm4026, %v8199, %v8200
  %v8238 = vsel %vm4026, %v8198, %v8199
  %v8239 = vsel %vm4026, %v8197, %v8198
  %v8240 = vsel %vm4026, %v8196, %v8197
  %v8241 = vsel %vm4026, %v8195, %v8196
  %v8242 = vsel %vm4026, %v8194, %v8195
  %v8243 = vsel %vm4026, %v8193, %v8194
  %v8244 = vsel %vm4026, %v8192, %v8193
  %v8245 = vsel %vm4026, %v8191, %v8192
  %v8246 = vsel %vm4026, %v8190, %v8191
  %v8247 = vsel %vm4026, %v8189, %v8190
  %v8248 = vsel %vm4026, %v8188, %v8189
  %v8249 = vsel %vm4026, %v8187, %v8188
  %v8250 = vsel %vm4026, %v8186, %v8187
  %v8251 = vsel %vm4026, %v8185, %v8186
  %v8252 = vsel %vm4026, %v8184, %v8185
  %v8253 = vsel %vm4026, %v8183, %v8184
  %v8254 = vsel %vm4026, %v8182, %v8183
  %v8255 = vsel %vm4026, %v8181, %v8182
  %v8256 = vsel %vm4026, %v8180, %v8181
  %v8257 = vsel %vm4026, %v8179, %v8180
  %v8258 = vsel %vm4026, %v8178, %v8179
  %v8259 = vsel %vm4026, %v8177, %v8178
  %v8260 = vsel %vm4026, %v8176, %v8177
  %v8261 = vsel %vm4026, %v8175, %v8176
  %v8262 = vsel %vm4026, %v8174, %v8175
  %v8263 = vsel %vm4026, %v8173, %v8174
  %v8264 = vsel %vm4026, %v8172, %v8173
  %v8265 = vsel %vm4026, %v8171, %v8172
  %v8266 = vsel %vm4026, %v8170, %v8171
  %v8267 = vsel %vm4026, %v8169, %v8170
  %v8268 = vsel %vm4026, %v8168, %v8169
  %v8269 = vsel %vm4026, %v8167, %v8168
  %v8270 = vsel %vm4026, %v8166, %v8167
  %v8271 = vsel %vm4026, %v8165, %v8166
  %v8272 = vsel %vm4026, %v8164, %v8165
  %v8273 = vsel %vm4026, %v8163, %v8164
  %v8274 = vsel %vm4026, %v8162, %v8163
  %v8275 = vsel %vm4026, %v8161, %v8162
  %v8276 = vsel %vm4026, %v8160, %v8161
  %v8277 = vsel %vm4026, %v8159, %v8160
  %v8278 = vsel %vm4026, %v8158, %v8159
  %v8279 = vsel %vm4026, %v8157, %v8158
  %v8280 = vsel %vm4026, %v8156, %v8157
  %v8281 = vsel %vm4026, %v8155, %v8156
  %v8282 = vsel %vm4026, %v8154, %v8155
  %v8283 = vadd.f32 %v6942, %v8282
  %v8284 = vadd.f32 %v6943, %v8281
  %v8285 = vadd.f32 %v6944, %v8280
  %v8286 = vadd.f32 %v6945, %v8279
  %v8287 = vadd.f32 %v6946, %v8278
  %v8288 = vadd.f32 %v6947, %v8277
  %v8289 = vadd.f32 %v6948, %v8276
  %v8290 = vadd.f32 %v6949, %v8275
  %v8291 = vadd.f32 %v6950, %v8274
  %v8292 = vadd.f32 %v6951, %v8273
  %v8293 = vadd.f32 %v6952, %v8272
  %v8294 = vadd.f32 %v6953, %v8271
  %v8295 = vadd.f32 %v6954, %v8270
  %v8296 = vadd.f32 %v6955, %v8269
  %v8297 = vadd.f32 %v6956, %v8268
  %v8298 = vadd.f32 %v6957, %v8267
  %v8299 = vadd.f32 %v6958, %v8266
  %v8300 = vadd.f32 %v6959, %v8265
  %v8301 = vadd.f32 %v6960, %v8264
  %v8302 = vadd.f32 %v6961, %v8263
  %v8303 = vadd.f32 %v6962, %v8262
  %v8304 = vadd.f32 %v6963, %v8261
  %v8305 = vadd.f32 %v6964, %v8260
  %v8306 = vadd.f32 %v6965, %v8259
  %v8307 = vadd.f32 %v6966, %v8258
  %v8308 = vadd.f32 %v6967, %v8257
  %v8309 = vadd.f32 %v6968, %v8256
  %v8310 = vadd.f32 %v6969, %v8255
  %v8311 = vadd.f32 %v6970, %v8254
  %v8312 = vadd.f32 %v6971, %v8253
  %v8313 = vadd.f32 %v6972, %v8252
  %v8314 = vadd.f32 %v6973, %v8251
  %v8315 = vadd.f32 %v6974, %v8250
  %v8316 = vadd.f32 %v6975, %v8249
  %v8317 = vadd.f32 %v6976, %v8248
  %v8318 = vadd.f32 %v6977, %v8247
  %v8319 = vadd.f32 %v6978, %v8246
  %v8320 = vadd.f32 %v6979, %v8245
  %v8321 = vadd.f32 %v6980, %v8244
  %v8322 = vadd.f32 %v6981, %v8243
  %v8323 = vadd.f32 %v6982, %v8242
  %v8324 = vadd.f32 %v6983, %v8241
  %v8325 = vadd.f32 %v6984, %v8240
  %v8326 = vadd.f32 %v6985, %v8239
  %v8327 = vadd.f32 %v6986, %v8238
  %v8328 = vadd.f32 %v6987, %v8237
  %v8329 = vadd.f32 %v6988, %v8236
  %v8330 = vadd.f32 %v6989, %v8235
  %v8331 = vadd.f32 %v6990, %v8234
  %v8332 = vadd.f32 %v6991, %v8233
  %v8333 = vadd.f32 %v6992, %v8232
  %v8334 = vadd.f32 %v6993, %v8231
  %v8335 = vadd.f32 %v6994, %v8230
  %v8336 = vadd.f32 %v6995, %v8229
  %v8337 = vadd.f32 %v6996, %v8228
  %v8338 = vadd.f32 %v6997, %v8227
  %v8339 = vadd.f32 %v6998, %v8226
  %v8340 = vadd.f32 %v6999, %v8225
  %v8341 = vadd.f32 %v7000, %v8224
  %v8342 = vadd.f32 %v7001, %v8223
  %v8343 = vadd.f32 %v7002, %v8222
  %v8344 = vadd.f32 %v7003, %v8221
  %v8345 = vadd.f32 %v7004, %v8220
  %v8346 = vadd.f32 %v7005, %v8219
  %v8347 = vld [vmem:[%s5] sm:$0x1]
  %v8349 = vlaneseq
  %v8350 = vshrl.u32 %v8349, 7
  %v8351 = vsub.s32 0, %v8350
  %v8352 = vrot.slane %v8347, %v8351
  %v8354 = vadd.f32 %v8283, %v8352
  %v8355 = vadd.f32 %v8284, %v8352
  %v8356 = vadd.f32 %v8285, %v8352
  %v8357 = vadd.f32 %v8286, %v8352
  %v8358 = vadd.f32 %v8287, %v8352
  %v8359 = vadd.f32 %v8288, %v8352
  %v8360 = vadd.f32 %v8289, %v8352
  %v8361 = vadd.f32 %v8290, %v8352
  %v8362 = vadd.f32 %v8291, %v8352
  %v8363 = vadd.f32 %v8292, %v8352
  %v8364 = vadd.f32 %v8293, %v8352
  %v8365 = vadd.f32 %v8294, %v8352
  %v8366 = vadd.f32 %v8295, %v8352
  %v8367 = vadd.f32 %v8296, %v8352
  %v8368 = vadd.f32 %v8297, %v8352
  %v8369 = vadd.f32 %v8298, %v8352
  %v8370 = vadd.f32 %v8299, %v8352
  %v8371 = vadd.f32 %v8300, %v8352
  %v8372 = vadd.f32 %v8301, %v8352
  %v8373 = vadd.f32 %v8302, %v8352
  %v8374 = vadd.f32 %v8303, %v8352
  %v8375 = vadd.f32 %v8304, %v8352
  %v8376 = vadd.f32 %v8305, %v8352
  %v8377 = vadd.f32 %v8306, %v8352
  %v8378 = vadd.f32 %v8307, %v8352
  %v8379 = vadd.f32 %v8308, %v8352
  %v8380 = vadd.f32 %v8309, %v8352
  %v8381 = vadd.f32 %v8310, %v8352
  %v8382 = vadd.f32 %v8311, %v8352
  %v8383 = vadd.f32 %v8312, %v8352
  %v8384 = vadd.f32 %v8313, %v8352
  %v8385 = vadd.f32 %v8314, %v8352
  %v8386 = vadd.f32 %v8315, %v8352
  %v8387 = vadd.f32 %v8316, %v8352
  %v8388 = vadd.f32 %v8317, %v8352
  %v8389 = vadd.f32 %v8318, %v8352
  %v8390 = vadd.f32 %v8319, %v8352
  %v8391 = vadd.f32 %v8320, %v8352
  %v8392 = vadd.f32 %v8321, %v8352
  %v8393 = vadd.f32 %v8322, %v8352
  %v8394 = vadd.f32 %v8323, %v8352
  %v8395 = vadd.f32 %v8324, %v8352
  %v8396 = vadd.f32 %v8325, %v8352
  %v8397 = vadd.f32 %v8326, %v8352
  %v8398 = vadd.f32 %v8327, %v8352
  %v8399 = vadd.f32 %v8328, %v8352
  %v8400 = vadd.f32 %v8329, %v8352
  %v8401 = vadd.f32 %v8330, %v8352
  %v8402 = vadd.f32 %v8331, %v8352
  %v8403 = vadd.f32 %v8332, %v8352
  %v8404 = vadd.f32 %v8333, %v8352
  %v8405 = vadd.f32 %v8334, %v8352
  %v8406 = vadd.f32 %v8335, %v8352
  %v8407 = vadd.f32 %v8336, %v8352
  %v8408 = vadd.f32 %v8337, %v8352
  %v8409 = vadd.f32 %v8338, %v8352
  %v8410 = vadd.f32 %v8339, %v8352
  %v8411 = vadd.f32 %v8340, %v8352
  %v8412 = vadd.f32 %v8341, %v8352
  %v8413 = vadd.f32 %v8342, %v8352
  %v8414 = vadd.f32 %v8343, %v8352
  %v8415 = vadd.f32 %v8344, %v8352
  %v8416 = vadd.f32 %v8345, %v8352
  %v8417 = vadd.f32 %v8346, %v8352
  %v8418 = vmul.f32 %v8354, %v4162
  %v8419 = vmul.f32 %v8355, %v4163
  %v8420 = vmul.f32 %v8356, %v4164
  %v8421 = vmul.f32 %v8357, %v4165
  %v8422 = vmul.f32 %v8358, %v4166
  %v8423 = vmul.f32 %v8359, %v4167
  %v8424 = vmul.f32 %v8360, %v4168
  %v8425 = vmul.f32 %v8361, %v4169
  %v8426 = vmul.f32 %v8362, %v4170
  %v8427 = vmul.f32 %v8363, %v4171
  %v8428 = vmul.f32 %v8364, %v4172
  %v8429 = vmul.f32 %v8365, %v4173
  %v8430 = vmul.f32 %v8366, %v4174
  %v8431 = vmul.f32 %v8367, %v4175
  %v8432 = vmul.f32 %v8368, %v4176
  %v8433 = vmul.f32 %v8369, %v4177
  %v8434 = vmul.f32 %v8370, %v4178
  %v8435 = vmul.f32 %v8371, %v4179
  %v8436 = vmul.f32 %v8372, %v4180
  %v8437 = vmul.f32 %v8373, %v4181
  %v8438 = vmul.f32 %v8374, %v4182
  %v8439 = vmul.f32 %v8375, %v4183
  %v8440 = vmul.f32 %v8376, %v4184
  %v8441 = vmul.f32 %v8377, %v4185
  %v8442 = vmul.f32 %v8378, %v4186
  %v8443 = vmul.f32 %v8379, %v4187
  %v8444 = vmul.f32 %v8380, %v4188
  %v8445 = vmul.f32 %v8381, %v4189
  %v8446 = vmul.f32 %v8382, %v4190
  %v8447 = vmul.f32 %v8383, %v4191
  %v8448 = vmul.f32 %v8384, %v4192
  %v8449 = vmul.f32 %v8385, %v4193
  %v8450 = vmul.f32 %v8386, %v4194
  %v8451 = vmul.f32 %v8387, %v4195
  %v8452 = vmul.f32 %v8388, %v4196
  %v8453 = vmul.f32 %v8389, %v4197
  %v8454 = vmul.f32 %v8390, %v4198
  %v8455 = vmul.f32 %v8391, %v4199
  %v8456 = vmul.f32 %v8392, %v4200
  %v8457 = vmul.f32 %v8393, %v4201
  %v8458 = vmul.f32 %v8394, %v4202
  %v8459 = vmul.f32 %v8395, %v4203
  %v8460 = vmul.f32 %v8396, %v4204
  %v8461 = vmul.f32 %v8397, %v4205
  %v8462 = vmul.f32 %v8398, %v4206
  %v8463 = vmul.f32 %v8399, %v4207
  %v8464 = vmul.f32 %v8400, %v4208
  %v8465 = vmul.f32 %v8401, %v4209
  %v8466 = vmul.f32 %v8402, %v4210
  %v8467 = vmul.f32 %v8403, %v4211
  %v8468 = vmul.f32 %v8404, %v4212
  %v8469 = vmul.f32 %v8405, %v4213
  %v8470 = vmul.f32 %v8406, %v4214
  %v8471 = vmul.f32 %v8407, %v4215
  %v8472 = vmul.f32 %v8408, %v4216
  %v8473 = vmul.f32 %v8409, %v4217
  %v8474 = vmul.f32 %v8410, %v4218
  %v8475 = vmul.f32 %v8411, %v4219
  %v8476 = vmul.f32 %v8412, %v4220
  %v8477 = vmul.f32 %v8413, %v4221
  %v8478 = vmul.f32 %v8414, %v4222
  %v8479 = vmul.f32 %v8415, %v4223
  %v8480 = vmul.f32 %v8416, %v4224
  %v8481 = vmul.f32 %v8417, %v4225
  %v8482 = vpack.c.bf16 %v8419, %v8418
  %v8483 = vpack.c.bf16 %v8421, %v8420
  %v8484 = vpack.c.bf16 %v8423, %v8422
  %v8485 = vpack.c.bf16 %v8425, %v8424
  %v8486 = vpack.c.bf16 %v8427, %v8426
  %v8487 = vpack.c.bf16 %v8429, %v8428
  %v8488 = vpack.c.bf16 %v8431, %v8430
  %v8489 = vpack.c.bf16 %v8433, %v8432
  %v8490 = vpack.c.bf16 %v8435, %v8434
  %v8491 = vpack.c.bf16 %v8437, %v8436
  %v8492 = vpack.c.bf16 %v8439, %v8438
  %v8493 = vpack.c.bf16 %v8441, %v8440
  %v8494 = vpack.c.bf16 %v8443, %v8442
  %v8495 = vpack.c.bf16 %v8445, %v8444
  %v8496 = vpack.c.bf16 %v8447, %v8446
  %v8497 = vpack.c.bf16 %v8449, %v8448
  %v8498 = vpack.c.bf16 %v8451, %v8450
  %v8499 = vpack.c.bf16 %v8453, %v8452
  %v8500 = vpack.c.bf16 %v8455, %v8454
  %v8501 = vpack.c.bf16 %v8457, %v8456
  %v8502 = vpack.c.bf16 %v8459, %v8458
  %v8503 = vpack.c.bf16 %v8461, %v8460
  %v8504 = vpack.c.bf16 %v8463, %v8462
  %v8505 = vpack.c.bf16 %v8465, %v8464
  %v8506 = vpack.c.bf16 %v8467, %v8466
  %v8507 = vpack.c.bf16 %v8469, %v8468
  %v8508 = vpack.c.bf16 %v8471, %v8470
  %v8509 = vpack.c.bf16 %v8473, %v8472
  %v8510 = vpack.c.bf16 %v8475, %v8474
  %v8511 = vpack.c.bf16 %v8477, %v8476
  %v8512 = vpack.c.bf16 %v8479, %v8478
  %v8513 = vpack.c.bf16 %v8481, %v8480
  %v8514 = vld [vmem:[%s6] sm:$0xf]
  %v8515 = vld [vmem:[%s6 + $0x4] sm:$0xf]
  %v8516 = vld [vmem:[%s6 + $0x8] sm:$0xf]
  %v8517 = vld [vmem:[%s6 + $0xc] sm:$0xf]
  %v8518 = vld [vmem:[%s6 + $0x10] sm:$0xf]
  %v8519 = vld [vmem:[%s6 + $0x14] sm:$0xf]
  %v8520 = vld [vmem:[%s6 + $0x18] sm:$0xf]
  %v8521 = vld [vmem:[%s6 + $0x1c] sm:$0xf]
  %v8522 = vld [vmem:[%s6 + $0x20] sm:$0xf]
  %v8523 = vld [vmem:[%s6 + $0x24] sm:$0xf]
  %v8524 = vld [vmem:[%s6 + $0x28] sm:$0xf]
  %v8525 = vld [vmem:[%s6 + $0x2c] sm:$0xf]
  %v8526 = vld [vmem:[%s6 + $0x30] sm:$0xf]
  %v8527 = vld [vmem:[%s6 + $0x34] sm:$0xf]
  %v8528 = vld [vmem:[%s6 + $0x38] sm:$0xf]
  %v8529 = vld [vmem:[%s6 + $0x3c] sm:$0xf]
  %v8530 = vld [vmem:[%s7] sm:$0x1]
  %v8532 = vlaneseq
  %v8533 = vshrl.u32 %v8532, 7
  %v8534 = vsub.s32 0, %v8533
  %v8535 = vrot.slane %v8530, %v8534
  %v8553 = vunpack.c.l.b16 %v8514
  %v8554 = vunpack.c.l.b16 %v8515
  %v8555 = vunpack.c.l.b16 %v8516
  %v8556 = vunpack.c.l.b16 %v8517
  %v8557 = vunpack.c.l.b16 %v8518
  %v8558 = vunpack.c.l.b16 %v8519
  %v8559 = vunpack.c.l.b16 %v8520
  %v8560 = vunpack.c.l.b16 %v8521
  %v8561 = vunpack.c.l.b16 %v8522
  %v8562 = vunpack.c.l.b16 %v8523
  %v8563 = vunpack.c.l.b16 %v8524
  %v8564 = vunpack.c.l.b16 %v8525
  %v8565 = vunpack.c.l.b16 %v8526
  %v8566 = vunpack.c.l.b16 %v8527
  %v8567 = vunpack.c.l.b16 %v8528
  %v8568 = vunpack.c.l.b16 %v8529
  %v8569 = vpack.c.b16 %v8554, %v8553
  %v8570 = vpack.c.b16 %v8556, %v8555
  %v8571 = vpack.c.b16 %v8558, %v8557
  %v8572 = vpack.c.b16 %v8560, %v8559
  %v8573 = vpack.c.b16 %v8562, %v8561
  %v8574 = vpack.c.b16 %v8564, %v8563
  %v8575 = vpack.c.b16 %v8566, %v8565
  %v8576 = vpack.c.b16 %v8568, %v8567
  %8585 = vmatprep.subr.bf16.mxu0 0
  %8586 = vmatpush1.bf16.msra.mxu0 %v8576
  %8587 = vmatprep.subr.bf16.mxu0 0
  %8588 = vmatpush1.bf16.msra.mxu0 %v8575
  %8589 = vmatprep.subr.bf16.mxu0 0
  %8590 = vmatpush1.bf16.msra.mxu0 %v8574
  %8591 = vmatprep.subr.bf16.mxu0 0
  %8592 = vmatpush1.bf16.msra.mxu0 %v8573
  %8593 = vmatprep.subr.bf16.mxu0 0
  %8594 = vmatpush1.bf16.msra.mxu0 %v8572
  %8595 = vmatprep.subr.bf16.mxu0 0
  %8596 = vmatpush1.bf16.msra.mxu0 %v8571
  %8597 = vmatprep.subr.bf16.mxu0 0
  %8598 = vmatpush1.bf16.msra.mxu0 %v8570
  %8599 = vmatprep.subr.bf16.mxu0 0
  %8600 = vmatpush1.bf16.msra.mxu0 %v8569
  %8601 = vmatprep.subr.bf16.mxu0 0
  %8602 = vmatpush2.bf16.msra.mxu0 0
  %8603 = vmatprep.subr.bf16.mxu0 0
  %8604 = vmatpush2.bf16.msra.mxu0 0
  %8605 = vmatprep.subr.bf16.mxu0 0
  %8606 = vmatpush2.bf16.msra.mxu0 0
  %8607 = vmatprep.subr.bf16.mxu0 0
  %8608 = vmatpush2.bf16.msra.mxu0 0
  %8609 = vmatprep.subr.bf16.mxu0 0
  %8610 = vmatpush2.bf16.msra.mxu0 0
  %8611 = vmatprep.subr.bf16.mxu0 0
  %8612 = vmatpush2.bf16.msra.mxu0 0
  %8613 = vmatprep.subr.bf16.mxu0 0
  %8614 = vmatpush2.bf16.msra.mxu0 0
  %8615 = vmatprep.subr.bf16.mxu0 0
  %8616 = vmatpush2.bf16.msra.mxu0 0
  %8617 = vmatprep.mubr.bf16.mxu0 0
  %8618 = vmatmul.mubr.bf16.gmra.mxu0 %v8482
  %v8619 = vpop.f32.mrf.mxu0
  %v8620 = vadd.f32 %v8535, %v8619
  %v8621 = vpop.f32.mrf.mxu0
  %v8622 = vpop.f32.mrf.mxu0
  %v8623 = vadd.f32 %v8535, %v8622
  %v8624 = vpop.f32.mrf.mxu0
  %8625 = vmatprep.mubr.bf16.mxu0 0
  %8626 = vmatmul.mubr.bf16.gmra.mxu0 %v8483
  %v8627 = vpop.f32.mrf.mxu0
  %v8628 = vadd.f32 %v8535, %v8627
  %v8629 = vpop.f32.mrf.mxu0
  %v8630 = vpop.f32.mrf.mxu0
  %v8631 = vadd.f32 %v8535, %v8630
  %v8632 = vpop.f32.mrf.mxu0
  %8633 = vmatprep.mubr.bf16.mxu0 0
  %8634 = vmatmul.mubr.bf16.gmra.mxu0 %v8484
  %v8635 = vpop.f32.mrf.mxu0
  %v8636 = vadd.f32 %v8535, %v8635
  %v8637 = vpop.f32.mrf.mxu0
  %v8638 = vpop.f32.mrf.mxu0
  %v8639 = vadd.f32 %v8535, %v8638
  %v8640 = vpop.f32.mrf.mxu0
  %8641 = vmatprep.mubr.bf16.mxu0 0
  %8642 = vmatmul.mubr.bf16.gmra.mxu0 %v8485
  %v8643 = vpop.f32.mrf.mxu0
  %v8644 = vadd.f32 %v8535, %v8643
  %v8645 = vpop.f32.mrf.mxu0
  %v8646 = vpop.f32.mrf.mxu0
  %v8647 = vadd.f32 %v8535, %v8646
  %v8648 = vpop.f32.mrf.mxu0
  %8649 = vmatprep.mubr.bf16.mxu0 0
  %8650 = vmatmul.mubr.bf16.gmra.mxu0 %v8486
  %v8651 = vpop.f32.mrf.mxu0
  %v8652 = vadd.f32 %v8535, %v8651
  %v8653 = vpop.f32.mrf.mxu0
  %v8654 = vpop.f32.mrf.mxu0
  %v8655 = vadd.f32 %v8535, %v8654
  %v8656 = vpop.f32.mrf.mxu0
  %8657 = vmatprep.mubr.bf16.mxu0 0
  %8658 = vmatmul.mubr.bf16.gmra.mxu0 %v8487
  %v8659 = vpop.f32.mrf.mxu0
  %v8660 = vadd.f32 %v8535, %v8659
  %v8661 = vpop.f32.mrf.mxu0
  %v8662 = vpop.f32.mrf.mxu0
  %v8663 = vadd.f32 %v8535, %v8662
  %v8664 = vpop.f32.mrf.mxu0
  %8665 = vmatprep.mubr.bf16.mxu0 0
  %8666 = vmatmul.mubr.bf16.gmra.mxu0 %v8488
  %v8667 = vpop.f32.mrf.mxu0
  %v8668 = vadd.f32 %v8535, %v8667
  %v8669 = vpop.f32.mrf.mxu0
  %v8670 = vpop.f32.mrf.mxu0
  %v8671 = vadd.f32 %v8535, %v8670
  %v8672 = vpop.f32.mrf.mxu0
  %8673 = vmatprep.mubr.bf16.mxu0 0
  %8674 = vmatmul.mubr.bf16.gmra.mxu0 %v8489
  %v8675 = vpop.f32.mrf.mxu0
  %v8676 = vadd.f32 %v8535, %v8675
  %v8677 = vpop.f32.mrf.mxu0
  %v8678 = vpop.f32.mrf.mxu0
  %v8679 = vadd.f32 %v8535, %v8678
  %v8680 = vpop.f32.mrf.mxu0
  %8681 = vmatprep.mubr.bf16.mxu0 0
  %8682 = vmatmul.mubr.bf16.gmra.mxu0 %v8490
  %v8683 = vpop.f32.mrf.mxu0
  %v8684 = vadd.f32 %v8535, %v8683
  %v8685 = vpop.f32.mrf.mxu0
  %v8686 = vpop.f32.mrf.mxu0
  %v8687 = vadd.f32 %v8535, %v8686
  %v8688 = vpop.f32.mrf.mxu0
  %8689 = vmatprep.mubr.bf16.mxu0 0
  %8690 = vmatmul.mubr.bf16.gmra.mxu0 %v8491
  %v8691 = vpop.f32.mrf.mxu0
  %v8692 = vadd.f32 %v8535, %v8691
  %v8693 = vpop.f32.mrf.mxu0
  %v8694 = vpop.f32.mrf.mxu0
  %v8695 = vadd.f32 %v8535, %v8694
  %v8696 = vpop.f32.mrf.mxu0
  %8697 = vmatprep.mubr.bf16.mxu0 0
  %8698 = vmatmul.mubr.bf16.gmra.mxu0 %v8492
  %v8699 = vpop.f32.mrf.mxu0
  %v8700 = vadd.f32 %v8535, %v8699
  %v8701 = vpop.f32.mrf.mxu0
  %v8702 = vpop.f32.mrf.mxu0
  %v8703 = vadd.f32 %v8535, %v8702
  %v8704 = vpop.f32.mrf.mxu0
  %8705 = vmatprep.mubr.bf16.mxu0 0
  %8706 = vmatmul.mubr.bf16.gmra.mxu0 %v8493
  %v8707 = vpop.f32.mrf.mxu0
  %v8708 = vadd.f32 %v8535, %v8707
  %v8709 = vpop.f32.mrf.mxu0
  %v8710 = vpop.f32.mrf.mxu0
  %v8711 = vadd.f32 %v8535, %v8710
  %v8712 = vpop.f32.mrf.mxu0
  %8713 = vmatprep.mubr.bf16.mxu0 0
  %8714 = vmatmul.mubr.bf16.gmra.mxu0 %v8494
  %v8715 = vpop.f32.mrf.mxu0
  %v8716 = vadd.f32 %v8535, %v8715
  %v8717 = vpop.f32.mrf.mxu0
  %v8718 = vpop.f32.mrf.mxu0
  %v8719 = vadd.f32 %v8535, %v8718
  %v8720 = vpop.f32.mrf.mxu0
  %8721 = vmatprep.mubr.bf16.mxu0 0
  %8722 = vmatmul.mubr.bf16.gmra.mxu0 %v8495
  %v8723 = vpop.f32.mrf.mxu0
  %v8724 = vadd.f32 %v8535, %v8723
  %v8725 = vpop.f32.mrf.mxu0
  %v8726 = vpop.f32.mrf.mxu0
  %v8727 = vadd.f32 %v8535, %v8726
  %v8728 = vpop.f32.mrf.mxu0
  %8729 = vmatprep.mubr.bf16.mxu0 0
  %8730 = vmatmul.mubr.bf16.gmra.mxu0 %v8496
  %v8731 = vpop.f32.mrf.mxu0
  %v8732 = vadd.f32 %v8535, %v8731
  %v8733 = vpop.f32.mrf.mxu0
  %v8734 = vpop.f32.mrf.mxu0
  %v8735 = vadd.f32 %v8535, %v8734
  %v8736 = vpop.f32.mrf.mxu0
  %8737 = vmatprep.mubr.bf16.mxu0 0
  %8738 = vmatmul.mubr.bf16.gmra.mxu0 %v8497
  %v8739 = vpop.f32.mrf.mxu0
  %v8740 = vadd.f32 %v8535, %v8739
  %v8741 = vpop.f32.mrf.mxu0
  %v8742 = vpop.f32.mrf.mxu0
  %v8743 = vadd.f32 %v8535, %v8742
  %v8744 = vpop.f32.mrf.mxu0
  %8745 = vmatprep.mubr.bf16.mxu0 0
  %8746 = vmatmul.mubr.bf16.gmra.mxu0 %v8498
  %v8747 = vpop.f32.mrf.mxu0
  %v8748 = vadd.f32 %v8535, %v8747
  %v8749 = vpop.f32.mrf.mxu0
  %v8750 = vpop.f32.mrf.mxu0
  %v8751 = vadd.f32 %v8535, %v8750
  %v8752 = vpop.f32.mrf.mxu0
  %8753 = vmatprep.mubr.bf16.mxu0 0
  %8754 = vmatmul.mubr.bf16.gmra.mxu0 %v8499
  %v8755 = vpop.f32.mrf.mxu0
  %v8756 = vadd.f32 %v8535, %v8755
  %v8757 = vpop.f32.mrf.mxu0
  %v8758 = vpop.f32.mrf.mxu0
  %v8759 = vadd.f32 %v8535, %v8758
  %v8760 = vpop.f32.mrf.mxu0
  %8761 = vmatprep.mubr.bf16.mxu0 0
  %8762 = vmatmul.mubr.bf16.gmra.mxu0 %v8500
  %v8763 = vpop.f32.mrf.mxu0
  %v8764 = vadd.f32 %v8535, %v8763
  %v8765 = vpop.f32.mrf.mxu0
  %v8766 = vpop.f32.mrf.mxu0
  %v8767 = vadd.f32 %v8535, %v8766
  %v8768 = vpop.f32.mrf.mxu0
  %8769 = vmatprep.mubr.bf16.mxu0 0
  %8770 = vmatmul.mubr.bf16.gmra.mxu0 %v8501
  %v8771 = vpop.f32.mrf.mxu0
  %v8772 = vadd.f32 %v8535, %v8771
  %v8773 = vpop.f32.mrf.mxu0
  %v8774 = vpop.f32.mrf.mxu0
  %v8775 = vadd.f32 %v8535, %v8774
  %v8776 = vpop.f32.mrf.mxu0
  %8777 = vmatprep.mubr.bf16.mxu0 0
  %8778 = vmatmul.mubr.bf16.gmra.mxu0 %v8502
  %v8779 = vpop.f32.mrf.mxu0
  %v8780 = vadd.f32 %v8535, %v8779
  %v8781 = vpop.f32.mrf.mxu0
  %v8782 = vpop.f32.mrf.mxu0
  %v8783 = vadd.f32 %v8535, %v8782
  %v8784 = vpop.f32.mrf.mxu0
  %8785 = vmatprep.mubr.bf16.mxu0 0
  %8786 = vmatmul.mubr.bf16.gmra.mxu0 %v8503
  %v8787 = vpop.f32.mrf.mxu0
  %v8788 = vadd.f32 %v8535, %v8787
  %v8789 = vpop.f32.mrf.mxu0
  %v8790 = vpop.f32.mrf.mxu0
  %v8791 = vadd.f32 %v8535, %v8790
  %v8792 = vpop.f32.mrf.mxu0
  %8793 = vmatprep.mubr.bf16.mxu0 0
  %8794 = vmatmul.mubr.bf16.gmra.mxu0 %v8504
  %v8795 = vpop.f32.mrf.mxu0
  %v8796 = vadd.f32 %v8535, %v8795
  %v8797 = vpop.f32.mrf.mxu0
  %v8798 = vpop.f32.mrf.mxu0
  %v8799 = vadd.f32 %v8535, %v8798
  %v8800 = vpop.f32.mrf.mxu0
  %8801 = vmatprep.mubr.bf16.mxu0 0
  %8802 = vmatmul.mubr.bf16.gmra.mxu0 %v8505
  %v8803 = vpop.f32.mrf.mxu0
  %v8804 = vadd.f32 %v8535, %v8803
  %v8805 = vpop.f32.mrf.mxu0
  %v8806 = vpop.f32.mrf.mxu0
  %v8807 = vadd.f32 %v8535, %v8806
  %v8808 = vpop.f32.mrf.mxu0
  %8809 = vmatprep.mubr.bf16.mxu0 0
  %8810 = vmatmul.mubr.bf16.gmra.mxu0 %v8506
  %v8811 = vpop.f32.mrf.mxu0
  %v8812 = vadd.f32 %v8535, %v8811
  %v8813 = vpop.f32.mrf.mxu0
  %v8814 = vpop.f32.mrf.mxu0
  %v8815 = vadd.f32 %v8535, %v8814
  %v8816 = vpop.f32.mrf.mxu0
  %8817 = vmatprep.mubr.bf16.mxu0 0
  %8818 = vmatmul.mubr.bf16.gmra.mxu0 %v8507
  %v8819 = vpop.f32.mrf.mxu0
  %v8820 = vadd.f32 %v8535, %v8819
  %v8821 = vpop.f32.mrf.mxu0
  %v8822 = vpop.f32.mrf.mxu0
  %v8823 = vadd.f32 %v8535, %v8822
  %v8824 = vpop.f32.mrf.mxu0
  %8825 = vmatprep.mubr.bf16.mxu0 0
  %8826 = vmatmul.mubr.bf16.gmra.mxu0 %v8508
  %v8827 = vpop.f32.mrf.mxu0
  %v8828 = vadd.f32 %v8535, %v8827
  %v8829 = vpop.f32.mrf.mxu0
  %v8830 = vpop.f32.mrf.mxu0
  %v8831 = vadd.f32 %v8535, %v8830
  %v8832 = vpop.f32.mrf.mxu0
  %8833 = vmatprep.mubr.bf16.mxu0 0
  %8834 = vmatmul.mubr.bf16.gmra.mxu0 %v8509
  %v8835 = vpop.f32.mrf.mxu0
  %v8836 = vadd.f32 %v8535, %v8835
  %v8837 = vpop.f32.mrf.mxu0
  %v8838 = vpop.f32.mrf.mxu0
  %v8839 = vadd.f32 %v8535, %v8838
  %v8840 = vpop.f32.mrf.mxu0
  %8841 = vmatprep.mubr.bf16.mxu0 0
  %8842 = vmatmul.mubr.bf16.gmra.mxu0 %v8510
  %v8843 = vpop.f32.mrf.mxu0
  %v8844 = vadd.f32 %v8535, %v8843
  %v8845 = vpop.f32.mrf.mxu0
  %v8846 = vpop.f32.mrf.mxu0
  %v8847 = vadd.f32 %v8535, %v8846
  %v8848 = vpop.f32.mrf.mxu0
  %8849 = vmatprep.mubr.bf16.mxu0 0
  %8850 = vmatmul.mubr.bf16.gmra.mxu0 %v8511
  %v8851 = vpop.f32.mrf.mxu0
  %v8852 = vadd.f32 %v8535, %v8851
  %v8853 = vpop.f32.mrf.mxu0
  %v8854 = vpop.f32.mrf.mxu0
  %v8855 = vadd.f32 %v8535, %v8854
  %v8856 = vpop.f32.mrf.mxu0
  %8857 = vmatprep.mubr.bf16.mxu0 0
  %8858 = vmatmul.mubr.bf16.gmra.mxu0 %v8512
  %v8859 = vpop.f32.mrf.mxu0
  %v8860 = vadd.f32 %v8535, %v8859
  %v8861 = vpop.f32.mrf.mxu0
  %v8862 = vpop.f32.mrf.mxu0
  %v8863 = vadd.f32 %v8535, %v8862
  %v8864 = vpop.f32.mrf.mxu0
  %8865 = vmatprep.mubr.bf16.mxu0 0
  %8866 = vmatmul.mubr.bf16.gmra.mxu0 %v8513
  %v8867 = vpop.f32.mrf.mxu0
  %v8868 = vadd.f32 %v8535, %v8867
  %v8869 = vpop.f32.mrf.mxu0
  %v8870 = vpop.f32.mrf.mxu0
  %v8871 = vadd.f32 %v8535, %v8870
  %v8872 = vpop.f32.mrf.mxu0
  %8873 = vdwg.mxu0
  %8874 = vst [vmem:[%s8] sm:$0xff] %v8620
  %8875 = vst [vmem:[%s8 + $0x8] sm:$0xff] %v8623
  %8876 = vst [vmem:[%s8 + $0x10] sm:$0xff] %v8628
  %8877 = vst [vmem:[%s8 + $0x18] sm:$0xff] %v8631
  %8878 = vst [vmem:[%s8 + $0x20] sm:$0xff] %v8636
  %8879 = vst [vmem:[%s8 + $0x28] sm:$0xff] %v8639
  %8880 = vst [vmem:[%s8 + $0x30] sm:$0xff] %v8644
  %8881 = vst [vmem:[%s8 + $0x38] sm:$0xff] %v8647
  %8882 = vst [vmem:[%s8 + $0x40] sm:$0xff] %v8652
  %8883 = vst [vmem:[%s8 + $0x48] sm:$0xff] %v8655
  %8884 = vst [vmem:[%s8 + $0x50] sm:$0xff] %v8660
  %8885 = vst [vmem:[%s8 + $0x58] sm:$0xff] %v8663
  %8886 = vst [vmem:[%s8 + $0x60] sm:$0xff] %v8668
  %8887 = vst [vmem:[%s8 + $0x68] sm:$0xff] %v8671
  %8888 = vst [vmem:[%s8 + $0x70] sm:$0xff] %v8676
  %8889 = vst [vmem:[%s8 + $0x78] sm:$0xff] %v8679
  %8890 = vst [vmem:[%s8 + $0x80] sm:$0xff] %v8684
  %8891 = vst [vmem:[%s8 + $0x88] sm:$0xff] %v8687
  %8892 = vst [vmem:[%s8 + $0x90] sm:$0xff] %v8692
  %8893 = vst [vmem:[%s8 + $0x98] sm:$0xff] %v8695
  %8894 = vst [vmem:[%s8 + $0xa0] sm:$0xff] %v8700
  %8895 = vst [vmem:[%s8 + $0xa8] sm:$0xff] %v8703
  %8896 = vst [vmem:[%s8 + $0xb0] sm:$0xff] %v8708
  %8897 = vst [vmem:[%s8 + $0xb8] sm:$0xff] %v8711
  %8898 = vst [vmem:[%s8 + $0xc0] sm:$0xff] %v8716
  %8899 = vst [vmem:[%s8 + $0xc8] sm:$0xff] %v8719
  %8900 = vst [vmem:[%s8 + $0xd0] sm:$0xff] %v8724
  %8901 = vst [vmem:[%s8 + $0xd8] sm:$0xff] %v8727
  %8902 = vst [vmem:[%s8 + $0xe0] sm:$0xff] %v8732
  %8903 = vst [vmem:[%s8 + $0xe8] sm:$0xff] %v8735
  %8904 = vst [vmem:[%s8 + $0xf0] sm:$0xff] %v8740
  %8905 = vst [vmem:[%s8 + $0xf8] sm:$0xff] %v8743
  %8906 = vst [vmem:[%s8 + $0x100] sm:$0xff] %v8748
  %8907 = vst [vmem:[%s8 + $0x108] sm:$0xff] %v8751
  %8908 = vst [vmem:[%s8 + $0x110] sm:$0xff] %v8756
  %8909 = vst [vmem:[%s8 + $0x118] sm:$0xff] %v8759
  %8910 = vst [vmem:[%s8 + $0x120] sm:$0xff] %v8764
  %8911 = vst [vmem:[%s8 + $0x128] sm:$0xff] %v8767
  %8912 = vst [vmem:[%s8 + $0x130] sm:$0xff] %v8772
  %8913 = vst [vmem:[%s8 + $0x138] sm:$0xff] %v8775
  %8914 = vst [vmem:[%s8 + $0x140] sm:$0xff] %v8780
  %8915 = vst [vmem:[%s8 + $0x148] sm:$0xff] %v8783
  %8916 = vst [vmem:[%s8 + $0x150] sm:$0xff] %v8788
  %8917 = vst [vmem:[%s8 + $0x158] sm:$0xff] %v8791
  %8918 = vst [vmem:[%s8 + $0x160] sm:$0xff] %v8796
  %8919 = vst [vmem:[%s8 + $0x168] sm:$0xff] %v8799
  %8920 = vst [vmem:[%s8 + $0x170] sm:$0xff] %v8804
  %8921 = vst [vmem:[%s8 + $0x178] sm:$0xff] %v8807
  %8922 = vst [vmem:[%s8 + $0x180] sm:$0xff] %v8812
  %8923 = vst [vmem:[%s8 + $0x188] sm:$0xff] %v8815
  %8924 = vst [vmem:[%s8 + $0x190] sm:$0xff] %v8820
  %8925 = vst [vmem:[%s8 + $0x198] sm:$0xff] %v8823
  %8926 = vst [vmem:[%s8 + $0x1a0] sm:$0xff] %v8828
  %8927 = vst [vmem:[%s8 + $0x1a8] sm:$0xff] %v8831
  %8928 = vst [vmem:[%s8 + $0x1b0] sm:$0xff] %v8836
  %8929 = vst [vmem:[%s8 + $0x1b8] sm:$0xff] %v8839
  %8930 = vst [vmem:[%s8 + $0x1c0] sm:$0xff] %v8844
  %8931 = vst [vmem:[%s8 + $0x1c8] sm:$0xff] %v8847
  %8932 = vst [vmem:[%s8 + $0x1d0] sm:$0xff] %v8852
  %8933 = vst [vmem:[%s8 + $0x1d8] sm:$0xff] %v8855
  %8934 = vst [vmem:[%s8 + $0x1e0] sm:$0xff] %v8860
  %8935 = vst [vmem:[%s8 + $0x1e8] sm:$0xff] %v8863
  %8936 = vst [vmem:[%s8 + $0x1f0] sm:$0xff] %v8868
  %8937 = vst [vmem:[%s8 + $0x1f8] sm:$0xff] %v8871
  // Predicated region
  $region34: #{rcnn_modulator.1} parent=0 // pred_check
    _
  $region35: #{rcnn_modulator.1} parent=0 // pred_check_branch
    %8939 = sbr.rel (0) target = $region37
  $region36: #{rcnn_modulator.1} parent=0 // pred_region
    _
  $region37: #{rcnn_modulator.1} parent=0 // pred_fallthru
    _
  // Predicated region
  $region38: #{rcnn_modulator.1} parent=0 // pred_check
    _
  $region39: #{rcnn_modulator.1} parent=0 // pred_check_branch
    %8941 = sbr.rel (0) target = $region41
  $region40: #{rcnn_modulator.1} parent=0 // pred_region
    _
  $region41: #{rcnn_modulator.1} parent=0 // pred_fallthru
    _

</llo_original>
